<compile_context>
chip_gen: v7x
topology: tpu7x:2x2x1
jax: 0.10.0
libtpu: 0.0.40
codegen_flags: <defaults>
</compile_context>

<pallas_src>
import functools
import numpy as np
import jax
import jax.numpy as jnp
from jax.experimental import pallas as pl
from jax.experimental.pallas import tpu as pltpu

F32 = jnp.float32
BF16 = jnp.bfloat16

# Fixed order in which weight arrays are passed to the fused kernel.
W_ORDER = (
    # structural constants (built in wrapper, depend on batch-chunk size)
    "rmat", "smat", "n2e", "attn_bias", "head_mask",
    # learned parameters (packed slabs)
    "msg_w1", "msg_w2", "msg_b",
    "inp_w", "inp_b",
    "attn_qkv_w", "attn_qkv_b",      # [2,L,H,3H]: 0 = encoder self, 1 = decoder self
    "attn_hw", "attn_hb",            # [4,L,H,H]: 0=enc out, 1=dec-self out, 2=dec-cross out, 3=dec-cross q
    "ca_kv_w", "ca_kv_b",            # [L,H,2H] fused K/V for cross-attention
    "ffn_w1", "ffn_b1", "ffn_w2", "ffn_b2",   # [2,L,...]: 0 = encoder, 1 = decoder
    "ln",                            # [L,5,2,1,H]: {enc0,enc1,dec0,dec1,dec2} x {gamma,beta}
    "final_ln",                      # [2,2,1,H]:   {encoder,decoder} x {gamma,beta}
    "out_w12", "out_b12", "out3_w", "out3_b",
)

# Weights that feed the MXU -> cast to bf16 in the wrapper.
_BF16_NAMES = frozenset({
    "rmat", "smat", "n2e", "msg_w1", "msg_w2", "inp_w",
    "attn_qkv_w", "attn_hw", "ca_kv_w", "ffn_w1", "ffn_w2",
    "out_w12", "out3_w",
})


def _const_index_map(p, t, *, nd):
    # Constant block index -> weight stays resident in VMEM across the grid.
    return (0,) * nd


# --------------------------------------------------------------------------------------
# Fused single-step kernel: grid = (P, T); one grid point = one (batch-shard, time) step.
# --------------------------------------------------------------------------------------

def _fused_step_kernel(x0_ref, e_ref, *rest, cfg):
    n_w = len(W_ORDER)
    W = dict(zip(W_ORDER, rest[:n_w]))
    out_ref = rest[n_w]           # [1, T, Bc*V, I]  (T-resident output block)
    hid_scr = rest[n_w + 1]       # [Bc*V, H] recurrent hidden state
    prd_scr = rest[n_w + 2]       # [Bc*V, I] autoregressive previous prediction

    V = cfg["num_vars"]
    H = cfg["decoder_hidden"]
    ET = cfg["num_edge_types"]
    L = cfg["num_layers"]
    nhead = cfg["num_heads"]
    dh = H // nhead
    scale = 1.0 / float(np.sqrt(dh))
    eps = 1e-5

    t = pl.program_id(1)

    @pl.when(t == 0)
    def _init():
        hid_scr[...] = jnp.zeros_like(hid_scr)          # state=None -> zeros
        prd_scr[...] = x0_ref[0].astype(F32)            # step 0 uses ground-truth input

    ins = prd_scr[...]                                  # [N, I], N = Bc*V
    h = hid_scr[...]                                    # [N, H]
    rel = e_ref[0, 0].astype(F32)                       # [Bc*E, ET]
    attn_bias = W["attn_bias"][...]                     # [N, N] block-diag (0 / -1e9)
    hmasks = [W["head_mask"][hh] for hh in range(nhead)]  # nhead x [1, H]

    def dot(a, b):
        return jnp.dot(a.astype(BF16), b.astype(BF16), preferred_element_type=F32)

    def dot_t(a, b):   # a @ b.T without materializing the transpose
        return jax.lax.dot_general(a.astype(BF16), b.astype(BF16),
                                   (((1,), (1,)), ((), ())),
                                   preferred_element_type=F32)

    def layernorm(x, g, b):
        mu = jnp.mean(x, axis=-1, keepdims=True)
        var = jnp.mean(jnp.square(x - mu), axis=-1, keepdims=True)
        return (x - mu) * jax.lax.rsqrt(var + eps) * g + b

    def attend(q, k, v, out_w, out_b):
        q = q * scale
        o = jnp.zeros((q.shape[0], H), F32)
        for hm in hmasks:                               # heads partition the H lanes
            s = dot_t(q * hm, k) + attn_bias            # [N, N], this head only
            s = s - jnp.max(s, axis=-1, keepdims=True)
            p = jnp.exp(s)
            p = p / jnp.sum(p, axis=-1, keepdims=True)  # exact softmax (parity)
            o = o + dot(p, v * hm)                      # fills this head's lanes
        return dot(o, out_w) + out_b

    def self_attn(x, qkv_w, qkv_b, out_w, out_b):
        qkv = dot(x, qkv_w) + qkv_b                     # fused QKV: one [H,3H] matmul
        return attend(qkv[:, :H], qkv[:, H:2 * H], qkv[:, 2 * H:], out_w, out_b)

    def cross_attn(x, mem, l):
        q = dot(x, W["attn_hw"][3, l]) + W["attn_hb"][3, l]
        kv = dot(mem, W["ca_kv_w"][l]) + W["ca_kv_b"][l]   # fused K/V: one [H,2H] matmul
        return attend(q, kv[:, :H], kv[:, H:], W["attn_hw"][2, l], W["attn_hb"][2, l])

    # ---------------- edge message passing (all Bc samples folded into rows) --------
    recv = dot(W["rmat"][...], h)                       # hidden[recv_edges]  [Bc*E, H]
    send = dot(W["smat"][...], h)                       # hidden[send_edges]  [Bc*E, H]
    pre_msg = jnp.concatenate([recv, send], axis=-1)    # [Bc*E, 2H] (single K=2H dot)
    start_idx = 1 if cfg["skip_first"] else 0
    norm = float(ET - 1) if cfg["skip_first"] else float(ET)
    acc = jnp.zeros((pre_msg.shape[0], H), F32)
    for i in range(start_idx, ET):
        m = jnp.tanh(dot(pre_msg, W["msg_w1"][i]) + W["msg_b"][i, 0])
        m = jnp.tanh(dot(m, W["msg_w2"][i]) + W["msg_b"][i, 1])
        acc = acc + (m * rel[:, i:i + 1]) * (1.0 / norm)
    agg = dot(W["n2e"][...], acc) * (1.0 / float(V - 1))   # [Bc*V, H]

    # ---------------- transformer (post-LN): src = input_proj(ins), tgt = agg -------
    mem = dot(ins, W["inp_w"][...]) + W["inp_b"][...]
    for l in range(L):
        a = self_attn(mem, W["attn_qkv_w"][0, l], W["attn_qkv_b"][0, l],
                      W["attn_hw"][0, l], W["attn_hb"][0, l])
        mem = layernorm(mem + a, W["ln"][l, 0, 0], W["ln"][l, 0, 1])
        f = jnp.maximum(dot(mem, W["ffn_w1"][0, l]) + W["ffn_b1"][0, l], 0.0)
        f = dot(f, W["ffn_w2"][0, l]) + W["ffn_b2"][0, l]
        mem = layernorm(mem + f, W["ln"][l, 1, 0], W["ln"][l, 1, 1])
    mem = layernorm(mem, W["final_ln"][0, 0], W["final_ln"][0, 1])

    x = agg
    for l in range(L):
        a = self_attn(x, W["attn_qkv_w"][1, l], W["attn_qkv_b"][1, l],
                      W["attn_hw"][1, l], W["attn_hb"][1, l])
        x = layernorm(x + a, W["ln"][l, 2, 0], W["ln"][l, 2, 1])
        a = cross_attn(x, mem, l)
        x = layernorm(x + a, W["ln"][l, 3, 0], W["ln"][l, 3, 1])
        f = jnp.maximum(dot(x, W["ffn_w1"][1, l]) + W["ffn_b1"][1, l], 0.0)
        f = dot(f, W["ffn_w2"][1, l]) + W["ffn_b2"][1, l]
        x = layernorm(x + f, W["ln"][l, 4, 0], W["ln"][l, 4, 1])
    hidden_new = layernorm(x, W["final_ln"][1, 0], W["final_ln"][1, 1])

    # ---------------- output MLP + residual ----------------
    p1 = jnp.maximum(dot(hidden_new, W["out_w12"][0]) + W["out_b12"][0], 0.0)
    p2 = jnp.maximum(dot(p1, W["out_w12"][1]) + W["out_b12"][1], 0.0)
    pred = ins + dot(p2, W["out3_w"][...]) + W["out3_b"][...]

    out_ref[0, t] = pred.astype(out_ref.dtype)   # VMEM-resident slab; HBM writeback once
    prd_scr[...] = pred                          # input of step t+1
    hid_scr[...] = hidden_new                    # recurrent hidden state


# --------------------------------------------------------------------------------------
# Host-side structural constants (edge gather matrices, block-diag attention bias,
# per-head lane masks).  Depend only on (num_vars, chunk_b, H, nhead).
# --------------------------------------------------------------------------------------

def _build_structural(cfg, chunk_b):
    V = cfg["num_vars"]
    H = cfg["decoder_hidden"]
    nhead = cfg["num_heads"]
    dh = H // nhead
    adj = np.ones((V, V), np.float32) - np.eye(V, dtype=np.float32)
    send_edges = np.where(adj)[0]
    recv_edges = np.where(adj)[1]
    E = len(send_edges)
    rmat = np.zeros((E, V), np.float32); rmat[np.arange(E), recv_edges] = 1.0
    smat = np.zeros((E, V), np.float32); smat[np.arange(E), send_edges] = 1.0
    n2e = rmat.T.copy()                      # edge2node_mat (one-hot recv) transposed
    eye = np.eye(chunk_b, dtype=np.float32)
    head_mask = np.zeros((nhead, 1, H), np.float32)
    for hh in range(nhead):
        head_mask[hh, 0, hh * dh:(hh + 1) * dh] = 1.0
    return dict(
        rmat=np.kron(eye, rmat),                                   # [Bc*E, Bc*V]
        smat=np.kron(eye, smat),                                   # [Bc*E, Bc*V]
        n2e=np.kron(eye, n2e),                                     # [Bc*V, Bc*E]
        attn_bias=(np.kron(eye, np.ones((V, V), np.float32)) - 1.0) * 1e9,  # 0 / -1e9
        head_mask=head_mask,                                       # [nhead, 1, H]
    )


# --------------------------------------------------------------------------------------
# Wrapper: whole forward (all batches, all timesteps) = one pallas_call.
# --------------------------------------------------------------------------------------

def graph_rnn_decoder_forward(params, inputs, sampled_edges, cfg, num_batch_shards=1):
    """Equivalent of GraphRNNDecoder.forward with default kwargs
    (teacher_forcing=False, prediction_steps=-1, state=None, burn_in_masks=None)."""
    B, T, V, I = inputs.shape
    H = cfg["decoder_hidden"]
    E = V * (V - 1)
    ET = cfg["num_edge_types"]

    P = num_batch_shards                       # 1 on v5e/v6e; 2 on v7x (two TensorCores)
    assert B % P == 0, "batch must divide evenly across shards"
    Bc = B // P                                # samples folded into matmul rows per shard
    NV, NE = Bc * V, Bc * E

    # Only step-0 ground truth is ever consumed (teacher_forcing=False) -> no per-step DMA.
    x0 = inputs[:, 0].astype(F32).reshape(P, NV, I)

    # Edges stay (B, E, ET): resident across the whole T rollout (no broadcast over T).
    if sampled_edges.ndim == 3:
        edges = sampled_edges.astype(F32).reshape(P, 1, NE, ET)
        e_spec = pl.BlockSpec((1, 1, NE, ET), lambda p, t: (p, 0, 0, 0))
    else:  # time-varying 4-D edges (B, T, E, ET)
        edges = sampled_edges.astype(F32).reshape(P, Bc, T, E, ET)
        edges = jnp.transpose(edges, (0, 2, 1, 3, 4)).reshape(P, T, NE, ET)
        e_spec = pl.BlockSpec((1, 1, NE, ET), lambda p, t: (p, t, 0, 0))

    all_w = dict(_build_structural(cfg, Bc))
    all_w.update(params)
    weights = [jnp.asarray(all_w[n]).astype(BF16 if n in _BF16_NAMES else F32)
               for n in W_ORDER]

    in_specs = [
        pl.BlockSpec((1, NV, I), lambda p, t: (p, 0, 0)),       # inputs[:, 0] per shard
        e_spec,                                                  # edges per shard
    ]
    for warr in weights:                                         # resident weights
        shp = warr.shape
        in_specs.append(
            pl.BlockSpec(shp, functools.partial(_const_index_map, nd=len(shp))))

    kernel = functools.partial(_fused_step_kernel, cfg=cfg)
    out = pl.pallas_call(
        kernel,
        out_shape=jax.ShapeDtypeStruct((P, T, NV, I), F32),
        grid_spec=pltpu.PrefetchScalarGridSpec(
            num_scalar_prefetch=0,
            grid=(P, T),
            in_specs=in_specs,
            # Output block resident across T: one HBM writeback per shard.
            out_specs=pl.BlockSpec((1, T, NV, I), lambda p, t: (p, 0, 0, 0)),
            scratch_shapes=[
                pltpu.VMEM((NV, H), F32),    # recurrent hidden state
                pltpu.VMEM((NV, I), F32),    # autoregressive previous prediction
            ]),
        compiler_params=pltpu.CompilerParams(
            dimension_semantics=("parallel", "arbitrary")),
    )(x0, edges, *weights)

    return out.reshape(P, T, Bc, V, I).transpose(0, 2, 1, 3, 4).reshape(B, T, V, I)


# --------------------------------------------------------------------------------------
# Deterministic parameter construction (packed slabs)
# --------------------------------------------------------------------------------------

def init_params(key, cfg):
    H, FF, I = cfg["decoder_hidden"], cfg["ffn_dim"], cfg["input_size"]
    ET, L = cfg["num_edge_types"], cfg["num_layers"]
    keys = iter(jax.random.split(key, 32))

    def w(shape, scale=0.1):
        return (scale * jax.random.normal(next(keys), shape)).astype(F32)

    def b(shape):
        return (0.01 * jax.random.normal(next(keys), shape)).astype(F32)

    def ln_pack(*lead):   # gamma=1, beta=0 packed along a new axis
        g = jnp.ones(lead + (1, 1, H), F32)
        z = jnp.zeros(lead + (1, 1, H), F32)
        return jnp.concatenate([g, z], axis=len(lead))

    return dict(
        msg_w1=w((ET, 2 * H, H)), msg_w2=w((ET, H, H)), msg_b=b((ET, 2, 1, H)),
        inp_w=w((I, H)), inp_b=b((1, H)),
        attn_qkv_w=w((2, L, H, 3 * H)), attn_qkv_b=b((2, L, 1, 3 * H)),
        attn_hw=w((4, L, H, H)), attn_hb=b((4, L, 1, H)),
        ca_kv_w=w((L, H, 2 * H)), ca_kv_b=b((L, 1, 2 * H)),
        ffn_w1=w((2, L, H, FF)), ffn_b1=b((2, L, 1, FF)),
        ffn_w2=w((2, L, FF, H)), ffn_b2=b((2, L, 1, H)),
        ln=ln_pack(L, 5), final_ln=ln_pack(2),
        out_w12=w((2, H, H)), out_b12=b((2, 1, H)),
        out3_w=w((H, I)), out3_b=b((1, I)),
    )


# --------------------------------------------------------------------------------------

if __name__ == "__main__":
    cfg = dict(num_vars=5, input_size=4, gpu=False, decoder_hidden=32,
               num_edge_types=2, skip_first=True, decoder_dropout=0.0,  # dropout=0 -> identity
               num_heads=4, num_layers=2, ffn_dim=64)
    B, T = 2, 4
    V = cfg["num_vars"]
    E = V * (V - 1)

    key = jax.random.PRNGKey(0)
    kp, ki, ke = jax.random.split(key, 3)
    params = init_params(kp, cfg)

    inputs = jax.random.normal(ki, (B, T, V, cfg["input_size"]), F32)
    sampled_edges = jax.nn.softmax(
        jax.random.normal(ke, (B, E, cfg["num_edge_types"]), F32), axis=-1)

    # num_batch_shards=1 folds the whole batch into matmul rows (best on v5e/v6e);
    # on v7x use num_batch_shards=2 so the "parallel" axis splits across both TCs.
    fwd = jax.jit(functools.partial(graph_rnn_decoder_forward, cfg=cfg,
                                    num_batch_shards=1))
    preds = jax.block_until_ready(fwd(params, inputs, sampled_edges))
    assert preds.shape == (B, T, V, cfg["input_size"])
    assert bool(jnp.all(jnp.isfinite(preds)))
    print("KERNEL_OK")
</pallas_src>

<mosaic_0001>
module attributes {stable_mosaic.version = 11 : i64} {
  func.func @_fused_step_kernel(%arg0: i32, %arg1: i32, %arg2: memref<1x10x4xf32, #tpu.memory_space<vmem>>, %arg3: memref<1x1x40x2xf32, #tpu.memory_space<vmem>>, %arg4: memref<40x10xbf16, #tpu.memory_space<vmem>>, %arg5: memref<40x10xbf16, #tpu.memory_space<vmem>>, %arg6: memref<10x40xbf16, #tpu.memory_space<vmem>>, %arg7: memref<10x10xf32, #tpu.memory_space<vmem>>, %arg8: memref<4x1x32xf32, #tpu.memory_space<vmem>>, %arg9: memref<2x64x32xbf16, #tpu.memory_space<vmem>>, %arg10: memref<2x32x32xbf16, #tpu.memory_space<vmem>>, %arg11: memref<2x2x1x32xf32, #tpu.memory_space<vmem>>, %arg12: memref<4x32xbf16, #tpu.memory_space<vmem>>, %arg13: memref<1x32xf32, #tpu.memory_space<vmem>>, %arg14: memref<2x2x32x96xbf16, #tpu.memory_space<vmem>>, %arg15: memref<2x2x1x96xf32, #tpu.memory_space<vmem>>, %arg16: memref<4x2x32x32xbf16, #tpu.memory_space<vmem>>, %arg17: memref<4x2x1x32xf32, #tpu.memory_space<vmem>>, %arg18: memref<2x32x64xbf16, #tpu.memory_space<vmem>>, %arg19: memref<2x1x64xf32, #tpu.memory_space<vmem>>, %arg20: memref<2x2x32x64xbf16, #tpu.memory_space<vmem>>, %arg21: memref<2x2x1x64xf32, #tpu.memory_space<vmem>>, %arg22: memref<2x2x64x32xbf16, #tpu.memory_space<vmem>>, %arg23: memref<2x2x1x32xf32, #tpu.memory_space<vmem>>, %arg24: memref<2x5x2x1x32xf32, #tpu.memory_space<vmem>>, %arg25: memref<2x2x1x32xf32, #tpu.memory_space<vmem>>, %arg26: memref<2x32x32xbf16, #tpu.memory_space<vmem>>, %arg27: memref<2x1x32xf32, #tpu.memory_space<vmem>>, %arg28: memref<32x4xbf16, #tpu.memory_space<vmem>>, %arg29: memref<1x4xf32, #tpu.memory_space<vmem>>, %arg30: memref<1x4x10x4xf32, #tpu.memory_space<vmem>>, %arg31: memref<10x32xf32, #tpu.memory_space<vmem>>, %arg32: memref<10x4xf32, #tpu.memory_space<vmem>>) attributes {dimension_semantics = [#tpu.dimension_semantics<parallel>, #tpu.dimension_semantics<arbitrary>], iteration_bounds = array<i64: 1, 4>, scalar_prefetch = 0 : i64, scratch_operands = 2 : i64, tpu.core_type = #tpu.core_type<tc>, window_params = [{transform_indices = @transform_0, window_bounds = array<i64: 1, 10, 4>}, {transform_indices = @transform_1, window_bounds = array<i64: 1, 1, 40, 2>}, {pipeline_mode = #tpu.pipeline_mode<synchronous>, transform_indices = @transform_2, window_bounds = array<i64: 40, 10>}, {pipeline_mode = #tpu.pipeline_mode<synchronous>, transform_indices = @transform_3, window_bounds = array<i64: 40, 10>}, {pipeline_mode = #tpu.pipeline_mode<synchronous>, transform_indices = @transform_4, window_bounds = array<i64: 10, 40>}, {pipeline_mode = #tpu.pipeline_mode<synchronous>, transform_indices = @transform_5, window_bounds = array<i64: 10, 10>}, {pipeline_mode = #tpu.pipeline_mode<synchronous>, transform_indices = @transform_6, window_bounds = array<i64: 4, 1, 32>}, {pipeline_mode = #tpu.pipeline_mode<synchronous>, transform_indices = @transform_7, window_bounds = array<i64: 2, 64, 32>}, {pipeline_mode = #tpu.pipeline_mode<synchronous>, transform_indices = @transform_8, window_bounds = array<i64: 2, 32, 32>}, {pipeline_mode = #tpu.pipeline_mode<synchronous>, transform_indices = @transform_9, window_bounds = array<i64: 2, 2, 1, 32>}, {pipeline_mode = #tpu.pipeline_mode<synchronous>, transform_indices = @transform_10, window_bounds = array<i64: 4, 32>}, {pipeline_mode = #tpu.pipeline_mode<synchronous>, transform_indices = @transform_11, window_bounds = array<i64: 1, 32>}, {pipeline_mode = #tpu.pipeline_mode<synchronous>, transform_indices = @transform_12, window_bounds = array<i64: 2, 2, 32, 96>}, {pipeline_mode = #tpu.pipeline_mode<synchronous>, transform_indices = @transform_13, window_bounds = array<i64: 2, 2, 1, 96>}, {pipeline_mode = #tpu.pipeline_mode<synchronous>, transform_indices = @transform_14, window_bounds = array<i64: 4, 2, 32, 32>}, {pipeline_mode = #tpu.pipeline_mode<synchronous>, transform_indices = @transform_15, window_bounds = array<i64: 4, 2, 1, 32>}, {pipeline_mode = #tpu.pipeline_mode<synchronous>, transform_indices = @transform_16, window_bounds = array<i64: 2, 32, 64>}, {pipeline_mode = #tpu.pipeline_mode<synchronous>, transform_indices = @transform_17, window_bounds = array<i64: 2, 1, 64>}, {pipeline_mode = #tpu.pipeline_mode<synchronous>, transform_indices = @transform_18, window_bounds = array<i64: 2, 2, 32, 64>}, {pipeline_mode = #tpu.pipeline_mode<synchronous>, transform_indices = @transform_19, window_bounds = array<i64: 2, 2, 1, 64>}, {pipeline_mode = #tpu.pipeline_mode<synchronous>, transform_indices = @transform_20, window_bounds = array<i64: 2, 2, 64, 32>}, {pipeline_mode = #tpu.pipeline_mode<synchronous>, transform_indices = @transform_21, window_bounds = array<i64: 2, 2, 1, 32>}, {pipeline_mode = #tpu.pipeline_mode<synchronous>, transform_indices = @transform_22, window_bounds = array<i64: 2, 5, 2, 1, 32>}, {pipeline_mode = #tpu.pipeline_mode<synchronous>, transform_indices = @transform_23, window_bounds = array<i64: 2, 2, 1, 32>}, {pipeline_mode = #tpu.pipeline_mode<synchronous>, transform_indices = @transform_24, window_bounds = array<i64: 2, 32, 32>}, {pipeline_mode = #tpu.pipeline_mode<synchronous>, transform_indices = @transform_25, window_bounds = array<i64: 2, 1, 32>}, {pipeline_mode = #tpu.pipeline_mode<synchronous>, transform_indices = @transform_26, window_bounds = array<i64: 32, 4>}, {pipeline_mode = #tpu.pipeline_mode<synchronous>, transform_indices = @transform_27, window_bounds = array<i64: 1, 4>}, {transform_indices = @transform_28, window_bounds = array<i64: 1, 4, 10, 4>}]} {
    %c0_i32 = arith.constant 0 : i32
    %0 = arith.cmpi eq, %arg1, %c0_i32 : i32
    %1 = arith.extui %0 : i1 to i32
    %c0_i32_0 = arith.constant 0 : i32
    %2 = arith.cmpi ne, %1, %c0_i32_0 : i32
    scf.if %2 {
      %cst_560 = arith.constant 0.000000e+00 : f32
      %1136 = vector.broadcast %cst_560 : f32 to vector<10x32xf32>
      %c0_561 = arith.constant 0 : index
      %c0_562 = arith.constant 0 : index
      %1137 = vector.load %arg31[%c0_561, %c0_562] : memref<10x32xf32, #tpu.memory_space<vmem>>, vector<10x32xf32>
      tpu.vector_store %arg31[%c0_561, %c0_562], %1136 {strides = array<i32>} : memref<10x32xf32, #tpu.memory_space<vmem>>, vector<10x32xf32>,
      %c0_563 = arith.constant 0 : index
      %c0_564 = arith.constant 0 : index
      %c0_565 = arith.constant 0 : index
      %1138 = vector.load %arg2[%c0_563, %c0_564, %c0_565] : memref<1x10x4xf32, #tpu.memory_space<vmem>>, vector<1x10x4xf32>
      %1139 = vector.shape_cast %1138 : vector<1x10x4xf32> to vector<10x4xf32>
      %c0_566 = arith.constant 0 : index
      %c0_567 = arith.constant 0 : index
      %1140 = vector.load %arg32[%c0_566, %c0_567] : memref<10x4xf32, #tpu.memory_space<vmem>>, vector<10x4xf32>
      tpu.vector_store %arg32[%c0_566, %c0_567], %1139 {strides = array<i32>} : memref<10x4xf32, #tpu.memory_space<vmem>>, vector<10x4xf32>,
    } else {
    }
    %c0 = arith.constant 0 : index
    %c0_1 = arith.constant 0 : index
    %3 = vector.load %arg32[%c0, %c0_1] : memref<10x4xf32, #tpu.memory_space<vmem>>, vector<10x4xf32>
    %c0_2 = arith.constant 0 : index
    %c0_3 = arith.constant 0 : index
    %4 = vector.load %arg31[%c0_2, %c0_3] : memref<10x32xf32, #tpu.memory_space<vmem>>, vector<10x32xf32>
    %c0_4 = arith.constant 0 : index
    %c0_5 = arith.constant 0 : index
    %c0_6 = arith.constant 0 : index
    %c0_7 = arith.constant 0 : index
    %5 = vector.load %arg3[%c0_4, %c0_5, %c0_6, %c0_7] : memref<1x1x40x2xf32, #tpu.memory_space<vmem>>, vector<1x1x40x2xf32>
    %6 = vector.shape_cast %5 : vector<1x1x40x2xf32> to vector<40x2xf32>
    %c0_8 = arith.constant 0 : index
    %c0_9 = arith.constant 0 : index
    %7 = vector.load %arg7[%c0_8, %c0_9] : memref<10x10xf32, #tpu.memory_space<vmem>>, vector<10x10xf32>
    %c0_10 = arith.constant 0 : index
    %c0_11 = arith.constant 0 : index
    %c0_12 = arith.constant 0 : index
    %8 = vector.load %arg8[%c0_10, %c0_11, %c0_12] : memref<4x1x32xf32, #tpu.memory_space<vmem>>, vector<1x1x32xf32>
    %9 = vector.shape_cast %8 : vector<1x1x32xf32> to vector<1x32xf32>
    %c1 = arith.constant 1 : index
    %c0_13 = arith.constant 0 : index
    %c0_14 = arith.constant 0 : index
    %10 = vector.load %arg8[%c1, %c0_13, %c0_14] : memref<4x1x32xf32, #tpu.memory_space<vmem>>, vector<1x1x32xf32>
    %11 = vector.shape_cast %10 : vector<1x1x32xf32> to vector<1x32xf32>
    %c2 = arith.constant 2 : index
    %c0_15 = arith.constant 0 : index
    %c0_16 = arith.constant 0 : index
    %12 = vector.load %arg8[%c2, %c0_15, %c0_16] : memref<4x1x32xf32, #tpu.memory_space<vmem>>, vector<1x1x32xf32>
    %13 = vector.shape_cast %12 : vector<1x1x32xf32> to vector<1x32xf32>
    %c3 = arith.constant 3 : index
    %c0_17 = arith.constant 0 : index
    %c0_18 = arith.constant 0 : index
    %14 = vector.load %arg8[%c3, %c0_17, %c0_18] : memref<4x1x32xf32, #tpu.memory_space<vmem>>, vector<1x1x32xf32>
    %15 = vector.shape_cast %14 : vector<1x1x32xf32> to vector<1x32xf32>
    %c0_19 = arith.constant 0 : index
    %c0_20 = arith.constant 0 : index
    %16 = vector.load %arg4[%c0_19, %c0_20] : memref<40x10xbf16, #tpu.memory_space<vmem>>, vector<40x10xbf16>
    %17 = arith.truncf %4 : vector<10x32xf32> to vector<10x32xbf16>
    %cst = arith.constant dense<0.000000e+00> : vector<40x32xf32>
    %18 = tpu.matmul %16, %17, %cst {dimension_numbers = #tpu.dot_dimension_numbers<[1], [0], [0], [1], [0, 0, 1, 1], [], []>} : vector<40x10xbf16>, vector<10x32xbf16>, vector<40x32xf32> -> vector<40x32xf32>
    %c0_21 = arith.constant 0 : index
    %c0_22 = arith.constant 0 : index
    %19 = vector.load %arg5[%c0_21, %c0_22] : memref<40x10xbf16, #tpu.memory_space<vmem>>, vector<40x10xbf16>
    %20 = arith.truncf %4 : vector<10x32xf32> to vector<10x32xbf16>
    %cst_23 = arith.constant dense<0.000000e+00> : vector<40x32xf32>
    %21 = tpu.matmul %19, %20, %cst_23 {dimension_numbers = #tpu.dot_dimension_numbers<[1], [0], [0], [1], [0, 0, 1, 1], [], []>} : vector<40x10xbf16>, vector<10x32xbf16>, vector<40x32xf32> -> vector<40x32xf32>
    %22 = tpu.concatenate %18, %21 in 1 : vector<40x32xf32>, vector<40x32xf32> -> vector<40x64xf32>
    %cst_24 = arith.constant 0.000000e+00 : f32
    %23 = vector.broadcast %cst_24 : f32 to vector<40x32xf32>
    %c1_25 = arith.constant 1 : index
    %c0_26 = arith.constant 0 : index
    %c0_27 = arith.constant 0 : index
    %24 = vector.load %arg9[%c1_25, %c0_26, %c0_27] : memref<2x64x32xbf16, #tpu.memory_space<vmem>>, vector<1x64x32xbf16>
    %25 = vector.shape_cast %24 : vector<1x64x32xbf16> to vector<64x32xbf16>
    %26 = arith.truncf %22 : vector<40x64xf32> to vector<40x64xbf16>
    %cst_28 = arith.constant dense<0.000000e+00> : vector<40x32xf32>
    %27 = tpu.matmul %26, %25, %cst_28 {dimension_numbers = #tpu.dot_dimension_numbers<[1], [0], [0], [1], [0, 0, 1, 1], [], []>} : vector<40x64xbf16>, vector<64x32xbf16>, vector<40x32xf32> -> vector<40x32xf32>
    %c1_29 = arith.constant 1 : index
    %c0_30 = arith.constant 0 : index
    %c0_31 = arith.constant 0 : index
    %c0_32 = arith.constant 0 : index
    %28 = vector.load %arg11[%c1_29, %c0_30, %c0_31, %c0_32] : memref<2x2x1x32xf32, #tpu.memory_space<vmem>>, vector<1x1x1x32xf32>
    %29 = vector.shape_cast %28 : vector<1x1x1x32xf32> to vector<1x32xf32>
    %30 = vector.broadcast %29 : vector<1x32xf32> to vector<40x32xf32>
    %31 = arith.addf %27, %30 : vector<40x32xf32>
    %32 = math.tanh %31 : vector<40x32xf32>
    %c1_33 = arith.constant 1 : index
    %c0_34 = arith.constant 0 : index
    %c0_35 = arith.constant 0 : index
    %33 = vector.load %arg10[%c1_33, %c0_34, %c0_35] : memref<2x32x32xbf16, #tpu.memory_space<vmem>>, vector<1x32x32xbf16>
    %34 = vector.shape_cast %33 : vector<1x32x32xbf16> to vector<32x32xbf16>
    %35 = arith.truncf %32 : vector<40x32xf32> to vector<40x32xbf16>
    %cst_36 = arith.constant dense<0.000000e+00> : vector<40x32xf32>
    %36 = tpu.matmul %35, %34, %cst_36 {dimension_numbers = #tpu.dot_dimension_numbers<[1], [0], [0], [1], [0, 0, 1, 1], [], []>} : vector<40x32xbf16>, vector<32x32xbf16>, vector<40x32xf32> -> vector<40x32xf32>
    %c1_37 = arith.constant 1 : index
    %c1_38 = arith.constant 1 : index
    %c0_39 = arith.constant 0 : index
    %c0_40 = arith.constant 0 : index
    %37 = vector.load %arg11[%c1_37, %c1_38, %c0_39, %c0_40] : memref<2x2x1x32xf32, #tpu.memory_space<vmem>>, vector<1x1x1x32xf32>
    %38 = vector.shape_cast %37 : vector<1x1x1x32xf32> to vector<1x32xf32>
    %39 = vector.broadcast %38 : vector<1x32xf32> to vector<40x32xf32>
    %40 = arith.addf %36, %39 : vector<40x32xf32>
    %41 = math.tanh %40 : vector<40x32xf32>
    %42 = vector.extract_strided_slice %6 {offsets = [0, 1], sizes = [40, 1], strides = [1, 1]} : vector<40x2xf32> to vector<40x1xf32>
    %43 = vector.broadcast %42 : vector<40x1xf32> to vector<40x32xf32>
    %44 = arith.mulf %41, %43 : vector<40x32xf32>
    %cst_41 = arith.constant 1.000000e+00 : f32
    %45 = vector.broadcast %cst_41 : f32 to vector<40x32xf32>
    %46 = arith.mulf %44, %45 : vector<40x32xf32>
    %47 = arith.addf %23, %46 : vector<40x32xf32>
    %c0_42 = arith.constant 0 : index
    %c0_43 = arith.constant 0 : index
    %48 = vector.load %arg6[%c0_42, %c0_43] : memref<10x40xbf16, #tpu.memory_space<vmem>>, vector<10x40xbf16>
    %49 = arith.truncf %47 : vector<40x32xf32> to vector<40x32xbf16>
    %cst_44 = arith.constant dense<0.000000e+00> : vector<10x32xf32>
    %50 = tpu.matmul %48, %49, %cst_44 {dimension_numbers = #tpu.dot_dimension_numbers<[1], [0], [0], [1], [0, 0, 1, 1], [], []>} : vector<10x40xbf16>, vector<40x32xbf16>, vector<10x32xf32> -> vector<10x32xf32>
    %cst_45 = arith.constant 2.500000e-01 : f32
    %51 = vector.broadcast %cst_45 : f32 to vector<10x32xf32>
    %52 = arith.mulf %50, %51 : vector<10x32xf32>
    %c0_46 = arith.constant 0 : index
    %c0_47 = arith.constant 0 : index
    %53 = vector.load %arg12[%c0_46, %c0_47] : memref<4x32xbf16, #tpu.memory_space<vmem>>, vector<4x32xbf16>
    %54 = arith.truncf %3 : vector<10x4xf32> to vector<10x4xbf16>
    %cst_48 = arith.constant dense<0.000000e+00> : vector<10x32xf32>
    %55 = tpu.matmul %54, %53, %cst_48 {dimension_numbers = #tpu.dot_dimension_numbers<[1], [0], [0], [1], [0, 0, 1, 1], [], []>} : vector<10x4xbf16>, vector<4x32xbf16>, vector<10x32xf32> -> vector<10x32xf32>
    %c0_49 = arith.constant 0 : index
    %c0_50 = arith.constant 0 : index
    %56 = vector.load %arg13[%c0_49, %c0_50] : memref<1x32xf32, #tpu.memory_space<vmem>>, vector<1x32xf32>
    %57 = vector.broadcast %56 : vector<1x32xf32> to vector<10x32xf32>
    %58 = arith.addf %55, %57 : vector<10x32xf32>
    %c0_51 = arith.constant 0 : index
    %c0_52 = arith.constant 0 : index
    %c0_53 = arith.constant 0 : index
    %c0_54 = arith.constant 0 : index
    %59 = vector.load %arg14[%c0_51, %c0_52, %c0_53, %c0_54] : memref<2x2x32x96xbf16, #tpu.memory_space<vmem>>, vector<1x1x32x96xbf16>
    %60 = vector.shape_cast %59 : vector<1x1x32x96xbf16> to vector<32x96xbf16>
    %c0_55 = arith.constant 0 : index
    %c0_56 = arith.constant 0 : index
    %c0_57 = arith.constant 0 : index
    %c0_58 = arith.constant 0 : index
    %61 = vector.load %arg15[%c0_55, %c0_56, %c0_57, %c0_58] : memref<2x2x1x96xf32, #tpu.memory_space<vmem>>, vector<1x1x1x96xf32>
    %62 = vector.shape_cast %61 : vector<1x1x1x96xf32> to vector<1x96xf32>
    %c0_59 = arith.constant 0 : index
    %c0_60 = arith.constant 0 : index
    %c0_61 = arith.constant 0 : index
    %c0_62 = arith.constant 0 : index
    %63 = vector.load %arg16[%c0_59, %c0_60, %c0_61, %c0_62] : memref<4x2x32x32xbf16, #tpu.memory_space<vmem>>, vector<1x1x32x32xbf16>
    %64 = vector.shape_cast %63 : vector<1x1x32x32xbf16> to vector<32x32xbf16>
    %c0_63 = arith.constant 0 : index
    %c0_64 = arith.constant 0 : index
    %c0_65 = arith.constant 0 : index
    %c0_66 = arith.constant 0 : index
    %65 = vector.load %arg17[%c0_63, %c0_64, %c0_65, %c0_66] : memref<4x2x1x32xf32, #tpu.memory_space<vmem>>, vector<1x1x1x32xf32>
    %66 = vector.shape_cast %65 : vector<1x1x1x32xf32> to vector<1x32xf32>
    %67 = arith.truncf %58 : vector<10x32xf32> to vector<10x32xbf16>
    %cst_67 = arith.constant dense<0.000000e+00> : vector<10x96xf32>
    %68 = tpu.matmul %67, %60, %cst_67 {dimension_numbers = #tpu.dot_dimension_numbers<[1], [0], [0], [1], [0, 0, 1, 1], [], []>} : vector<10x32xbf16>, vector<32x96xbf16>, vector<10x96xf32> -> vector<10x96xf32>
    %69 = vector.broadcast %62 : vector<1x96xf32> to vector<10x96xf32>
    %70 = arith.addf %68, %69 : vector<10x96xf32>
    %71 = vector.extract_strided_slice %70 {offsets = [0, 0], sizes = [10, 32], strides = [1, 1]} : vector<10x96xf32> to vector<10x32xf32>
    %72 = vector.extract_strided_slice %70 {offsets = [0, 32], sizes = [10, 32], strides = [1, 1]} : vector<10x96xf32> to vector<10x32xf32>
    %73 = vector.extract_strided_slice %70 {offsets = [0, 64], sizes = [10, 32], strides = [1, 1]} : vector<10x96xf32> to vector<10x32xf32>
    %cst_68 = arith.constant 0.353553385 : f32
    %74 = vector.broadcast %cst_68 : f32 to vector<10x32xf32>
    %75 = arith.mulf %71, %74 : vector<10x32xf32>
    %cst_69 = arith.constant 0.000000e+00 : f32
    %76 = vector.broadcast %cst_69 : f32 to vector<10x32xf32>
    %77 = vector.broadcast %9 : vector<1x32xf32> to vector<10x32xf32>
    %78 = arith.mulf %75, %77 : vector<10x32xf32>
    %79 = arith.truncf %78 : vector<10x32xf32> to vector<10x32xbf16>
    %80 = arith.truncf %72 : vector<10x32xf32> to vector<10x32xbf16>
    %cst_70 = arith.constant dense<0.000000e+00> : vector<10x10xf32>
    %81 = tpu.matmul %79, %80, %cst_70 {dimension_numbers = #tpu.dot_dimension_numbers<[1], [1], [0], [0], [0, 0, 1, 0], [], []>} : vector<10x32xbf16>, vector<10x32xbf16>, vector<10x10xf32> -> vector<10x10xf32>
    %82 = arith.addf %81, %7 : vector<10x10xf32>
    %cst_71 = arith.constant dense<0xFF800000> : vector<10xf32>
    %83 = vector.multi_reduction <maximumf>, %82, %cst_71 [1] : vector<10x10xf32> to vector<10xf32>
    %84 = vector.shape_cast %83 : vector<10xf32> to vector<10x1xf32>
    %85 = vector.broadcast %84 : vector<10x1xf32> to vector<10x10xf32>
    %86 = arith.subf %82, %85 : vector<10x10xf32>
    %87 = math.exp %86 : vector<10x10xf32>
    %cst_72 = arith.constant dense<0.000000e+00> : vector<10xf32>
    %88 = vector.multi_reduction <add>, %87, %cst_72 [1] : vector<10x10xf32> to vector<10xf32>
    %89 = vector.shape_cast %88 : vector<10xf32> to vector<10x1xf32>
    %90 = vector.broadcast %89 : vector<10x1xf32> to vector<10x10xf32>
    %91 = arith.divf %87, %90 : vector<10x10xf32>
    %92 = vector.broadcast %9 : vector<1x32xf32> to vector<10x32xf32>
    %93 = arith.mulf %73, %92 : vector<10x32xf32>
    %94 = arith.truncf %91 : vector<10x10xf32> to vector<10x10xbf16>
    %95 = arith.truncf %93 : vector<10x32xf32> to vector<10x32xbf16>
    %cst_73 = arith.constant dense<0.000000e+00> : vector<10x32xf32>
    %96 = tpu.matmul %94, %95, %cst_73 {dimension_numbers = #tpu.dot_dimension_numbers<[1], [0], [0], [1], [0, 0, 1, 1], [], []>} : vector<10x10xbf16>, vector<10x32xbf16>, vector<10x32xf32> -> vector<10x32xf32>
    %97 = arith.addf %76, %96 : vector<10x32xf32>
    %98 = vector.broadcast %11 : vector<1x32xf32> to vector<10x32xf32>
    %99 = arith.mulf %75, %98 : vector<10x32xf32>
    %100 = arith.truncf %99 : vector<10x32xf32> to vector<10x32xbf16>
    %101 = arith.truncf %72 : vector<10x32xf32> to vector<10x32xbf16>
    %cst_74 = arith.constant dense<0.000000e+00> : vector<10x10xf32>
    %102 = tpu.matmul %100, %101, %cst_74 {dimension_numbers = #tpu.dot_dimension_numbers<[1], [1], [0], [0], [0, 0, 1, 0], [], []>} : vector<10x32xbf16>, vector<10x32xbf16>, vector<10x10xf32> -> vector<10x10xf32>
    %103 = arith.addf %102, %7 : vector<10x10xf32>
    %cst_75 = arith.constant dense<0xFF800000> : vector<10xf32>
    %104 = vector.multi_reduction <maximumf>, %103, %cst_75 [1] : vector<10x10xf32> to vector<10xf32>
    %105 = vector.shape_cast %104 : vector<10xf32> to vector<10x1xf32>
    %106 = vector.broadcast %105 : vector<10x1xf32> to vector<10x10xf32>
    %107 = arith.subf %103, %106 : vector<10x10xf32>
    %108 = math.exp %107 : vector<10x10xf32>
    %cst_76 = arith.constant dense<0.000000e+00> : vector<10xf32>
    %109 = vector.multi_reduction <add>, %108, %cst_76 [1] : vector<10x10xf32> to vector<10xf32>
    %110 = vector.shape_cast %109 : vector<10xf32> to vector<10x1xf32>
    %111 = vector.broadcast %110 : vector<10x1xf32> to vector<10x10xf32>
    %112 = arith.divf %108, %111 : vector<10x10xf32>
    %113 = vector.broadcast %11 : vector<1x32xf32> to vector<10x32xf32>
    %114 = arith.mulf %73, %113 : vector<10x32xf32>
    %115 = arith.truncf %112 : vector<10x10xf32> to vector<10x10xbf16>
    %116 = arith.truncf %114 : vector<10x32xf32> to vector<10x32xbf16>
    %cst_77 = arith.constant dense<0.000000e+00> : vector<10x32xf32>
    %117 = tpu.matmul %115, %116, %cst_77 {dimension_numbers = #tpu.dot_dimension_numbers<[1], [0], [0], [1], [0, 0, 1, 1], [], []>} : vector<10x10xbf16>, vector<10x32xbf16>, vector<10x32xf32> -> vector<10x32xf32>
    %118 = arith.addf %97, %117 : vector<10x32xf32>
    %119 = vector.broadcast %13 : vector<1x32xf32> to vector<10x32xf32>
    %120 = arith.mulf %75, %119 : vector<10x32xf32>
    %121 = arith.truncf %120 : vector<10x32xf32> to vector<10x32xbf16>
    %122 = arith.truncf %72 : vector<10x32xf32> to vector<10x32xbf16>
    %cst_78 = arith.constant dense<0.000000e+00> : vector<10x10xf32>
    %123 = tpu.matmul %121, %122, %cst_78 {dimension_numbers = #tpu.dot_dimension_numbers<[1], [1], [0], [0], [0, 0, 1, 0], [], []>} : vector<10x32xbf16>, vector<10x32xbf16>, vector<10x10xf32> -> vector<10x10xf32>
    %124 = arith.addf %123, %7 : vector<10x10xf32>
    %cst_79 = arith.constant dense<0xFF800000> : vector<10xf32>
    %125 = vector.multi_reduction <maximumf>, %124, %cst_79 [1] : vector<10x10xf32> to vector<10xf32>
    %126 = vector.shape_cast %125 : vector<10xf32> to vector<10x1xf32>
    %127 = vector.broadcast %126 : vector<10x1xf32> to vector<10x10xf32>
    %128 = arith.subf %124, %127 : vector<10x10xf32>
    %129 = math.exp %128 : vector<10x10xf32>
    %cst_80 = arith.constant dense<0.000000e+00> : vector<10xf32>
    %130 = vector.multi_reduction <add>, %129, %cst_80 [1] : vector<10x10xf32> to vector<10xf32>
    %131 = vector.shape_cast %130 : vector<10xf32> to vector<10x1xf32>
    %132 = vector.broadcast %131 : vector<10x1xf32> to vector<10x10xf32>
    %133 = arith.divf %129, %132 : vector<10x10xf32>
    %134 = vector.broadcast %13 : vector<1x32xf32> to vector<10x32xf32>
    %135 = arith.mulf %73, %134 : vector<10x32xf32>
    %136 = arith.truncf %133 : vector<10x10xf32> to vector<10x10xbf16>
    %137 = arith.truncf %135 : vector<10x32xf32> to vector<10x32xbf16>
    %cst_81 = arith.constant dense<0.000000e+00> : vector<10x32xf32>
    %138 = tpu.matmul %136, %137, %cst_81 {dimension_numbers = #tpu.dot_dimension_numbers<[1], [0], [0], [1], [0, 0, 1, 1], [], []>} : vector<10x10xbf16>, vector<10x32xbf16>, vector<10x32xf32> -> vector<10x32xf32>
    %139 = arith.addf %118, %138 : vector<10x32xf32>
    %140 = vector.broadcast %15 : vector<1x32xf32> to vector<10x32xf32>
    %141 = arith.mulf %75, %140 : vector<10x32xf32>
    %142 = arith.truncf %141 : vector<10x32xf32> to vector<10x32xbf16>
    %143 = arith.truncf %72 : vector<10x32xf32> to vector<10x32xbf16>
    %cst_82 = arith.constant dense<0.000000e+00> : vector<10x10xf32>
    %144 = tpu.matmul %142, %143, %cst_82 {dimension_numbers = #tpu.dot_dimension_numbers<[1], [1], [0], [0], [0, 0, 1, 0], [], []>} : vector<10x32xbf16>, vector<10x32xbf16>, vector<10x10xf32> -> vector<10x10xf32>
    %145 = arith.addf %144, %7 : vector<10x10xf32>
    %cst_83 = arith.constant dense<0xFF800000> : vector<10xf32>
    %146 = vector.multi_reduction <maximumf>, %145, %cst_83 [1] : vector<10x10xf32> to vector<10xf32>
    %147 = vector.shape_cast %146 : vector<10xf32> to vector<10x1xf32>
    %148 = vector.broadcast %147 : vector<10x1xf32> to vector<10x10xf32>
    %149 = arith.subf %145, %148 : vector<10x10xf32>
    %150 = math.exp %149 : vector<10x10xf32>
    %cst_84 = arith.constant dense<0.000000e+00> : vector<10xf32>
    %151 = vector.multi_reduction <add>, %150, %cst_84 [1] : vector<10x10xf32> to vector<10xf32>
    %152 = vector.shape_cast %151 : vector<10xf32> to vector<10x1xf32>
    %153 = vector.broadcast %152 : vector<10x1xf32> to vector<10x10xf32>
    %154 = arith.divf %150, %153 : vector<10x10xf32>
    %155 = vector.broadcast %15 : vector<1x32xf32> to vector<10x32xf32>
    %156 = arith.mulf %73, %155 : vector<10x32xf32>
    %157 = arith.truncf %154 : vector<10x10xf32> to vector<10x10xbf16>
    %158 = arith.truncf %156 : vector<10x32xf32> to vector<10x32xbf16>
    %cst_85 = arith.constant dense<0.000000e+00> : vector<10x32xf32>
    %159 = tpu.matmul %157, %158, %cst_85 {dimension_numbers = #tpu.dot_dimension_numbers<[1], [0], [0], [1], [0, 0, 1, 1], [], []>} : vector<10x10xbf16>, vector<10x32xbf16>, vector<10x32xf32> -> vector<10x32xf32>
    %160 = arith.addf %139, %159 : vector<10x32xf32>
    %161 = arith.truncf %160 : vector<10x32xf32> to vector<10x32xbf16>
    %cst_86 = arith.constant dense<0.000000e+00> : vector<10x32xf32>
    %162 = tpu.matmul %161, %64, %cst_86 {dimension_numbers = #tpu.dot_dimension_numbers<[1], [0], [0], [1], [0, 0, 1, 1], [], []>} : vector<10x32xbf16>, vector<32x32xbf16>, vector<10x32xf32> -> vector<10x32xf32>
    %163 = vector.broadcast %66 : vector<1x32xf32> to vector<10x32xf32>
    %164 = arith.addf %162, %163 : vector<10x32xf32>
    %165 = arith.addf %58, %164 : vector<10x32xf32>
    %c0_87 = arith.constant 0 : index
    %c0_88 = arith.constant 0 : index
    %c0_89 = arith.constant 0 : index
    %c0_90 = arith.constant 0 : index
    %c0_91 = arith.constant 0 : index
    %166 = vector.load %arg24[%c0_87, %c0_88, %c0_89, %c0_90, %c0_91] : memref<2x5x2x1x32xf32, #tpu.memory_space<vmem>>, vector<1x1x1x1x32xf32>
    %167 = vector.shape_cast %166 : vector<1x1x1x1x32xf32> to vector<1x32xf32>
    %c0_92 = arith.constant 0 : index
    %c0_93 = arith.constant 0 : index
    %c1_94 = arith.constant 1 : index
    %c0_95 = arith.constant 0 : index
    %c0_96 = arith.constant 0 : index
    %168 = vector.load %arg24[%c0_92, %c0_93, %c1_94, %c0_95, %c0_96] : memref<2x5x2x1x32xf32, #tpu.memory_space<vmem>>, vector<1x1x1x1x32xf32>
    %169 = vector.shape_cast %168 : vector<1x1x1x1x32xf32> to vector<1x32xf32>
    %cst_97 = arith.constant dense<0.000000e+00> : vector<10xf32>
    %170 = vector.multi_reduction <add>, %165, %cst_97 [1] : vector<10x32xf32> to vector<10xf32>
    %171 = vector.shape_cast %170 : vector<10xf32> to vector<10x1xf32>
    %cst_98 = arith.constant 3.200000e+01 : f32
    %172 = vector.broadcast %cst_98 : f32 to vector<10x1xf32>
    %173 = arith.divf %171, %172 : vector<10x1xf32>
    %174 = vector.broadcast %173 : vector<10x1xf32> to vector<10x32xf32>
    %175 = arith.subf %165, %174 : vector<10x32xf32>
    %176 = arith.mulf %175, %175 : vector<10x32xf32>
    %cst_99 = arith.constant dense<0.000000e+00> : vector<10xf32>
    %177 = vector.multi_reduction <add>, %176, %cst_99 [1] : vector<10x32xf32> to vector<10xf32>
    %178 = vector.shape_cast %177 : vector<10xf32> to vector<10x1xf32>
    %cst_100 = arith.constant 3.200000e+01 : f32
    %179 = vector.broadcast %cst_100 : f32 to vector<10x1xf32>
    %180 = arith.divf %178, %179 : vector<10x1xf32>
    %181 = vector.broadcast %173 : vector<10x1xf32> to vector<10x32xf32>
    %182 = arith.subf %165, %181 : vector<10x32xf32>
    %cst_101 = arith.constant 9.99999974E-6 : f32
    %183 = vector.broadcast %cst_101 : f32 to vector<10x1xf32>
    %184 = arith.addf %180, %183 : vector<10x1xf32>
    %185 = math.rsqrt %184 : vector<10x1xf32>
    %186 = vector.broadcast %185 : vector<10x1xf32> to vector<10x32xf32>
    %187 = arith.mulf %182, %186 : vector<10x32xf32>
    %188 = vector.broadcast %167 : vector<1x32xf32> to vector<10x32xf32>
    %189 = arith.mulf %187, %188 : vector<10x32xf32>
    %190 = vector.broadcast %169 : vector<1x32xf32> to vector<10x32xf32>
    %191 = arith.addf %189, %190 : vector<10x32xf32>
    %c0_102 = arith.constant 0 : index
    %c0_103 = arith.constant 0 : index
    %c0_104 = arith.constant 0 : index
    %c0_105 = arith.constant 0 : index
    %192 = vector.load %arg20[%c0_102, %c0_103, %c0_104, %c0_105] : memref<2x2x32x64xbf16, #tpu.memory_space<vmem>>, vector<1x1x32x64xbf16>
    %193 = vector.shape_cast %192 : vector<1x1x32x64xbf16> to vector<32x64xbf16>
    %194 = arith.truncf %191 : vector<10x32xf32> to vector<10x32xbf16>
    %cst_106 = arith.constant dense<0.000000e+00> : vector<10x64xf32>
    %195 = tpu.matmul %194, %193, %cst_106 {dimension_numbers = #tpu.dot_dimension_numbers<[1], [0], [0], [1], [0, 0, 1, 1], [], []>} : vector<10x32xbf16>, vector<32x64xbf16>, vector<10x64xf32> -> vector<10x64xf32>
    %c0_107 = arith.constant 0 : index
    %c0_108 = arith.constant 0 : index
    %c0_109 = arith.constant 0 : index
    %c0_110 = arith.constant 0 : index
    %196 = vector.load %arg21[%c0_107, %c0_108, %c0_109, %c0_110] : memref<2x2x1x64xf32, #tpu.memory_space<vmem>>, vector<1x1x1x64xf32>
    %197 = vector.shape_cast %196 : vector<1x1x1x64xf32> to vector<1x64xf32>
    %198 = vector.broadcast %197 : vector<1x64xf32> to vector<10x64xf32>
    %199 = arith.addf %195, %198 : vector<10x64xf32>
    %cst_111 = arith.constant 0.000000e+00 : f32
    %200 = vector.broadcast %cst_111 : f32 to vector<10x64xf32>
    %201 = arith.maximumf %199, %200 : vector<10x64xf32>
    %c0_112 = arith.constant 0 : index
    %c0_113 = arith.constant 0 : index
    %c0_114 = arith.constant 0 : index
    %c0_115 = arith.constant 0 : index
    %202 = vector.load %arg22[%c0_112, %c0_113, %c0_114, %c0_115] : memref<2x2x64x32xbf16, #tpu.memory_space<vmem>>, vector<1x1x64x32xbf16>
    %203 = vector.shape_cast %202 : vector<1x1x64x32xbf16> to vector<64x32xbf16>
    %204 = arith.truncf %201 : vector<10x64xf32> to vector<10x64xbf16>
    %cst_116 = arith.constant dense<0.000000e+00> : vector<10x32xf32>
    %205 = tpu.matmul %204, %203, %cst_116 {dimension_numbers = #tpu.dot_dimension_numbers<[1], [0], [0], [1], [0, 0, 1, 1], [], []>} : vector<10x64xbf16>, vector<64x32xbf16>, vector<10x32xf32> -> vector<10x32xf32>
    %c0_117 = arith.constant 0 : index
    %c0_118 = arith.constant 0 : index
    %c0_119 = arith.constant 0 : index
    %c0_120 = arith.constant 0 : index
    %206 = vector.load %arg23[%c0_117, %c0_118, %c0_119, %c0_120] : memref<2x2x1x32xf32, #tpu.memory_space<vmem>>, vector<1x1x1x32xf32>
    %207 = vector.shape_cast %206 : vector<1x1x1x32xf32> to vector<1x32xf32>
    %208 = vector.broadcast %207 : vector<1x32xf32> to vector<10x32xf32>
    %209 = arith.addf %205, %208 : vector<10x32xf32>
    %210 = arith.addf %191, %209 : vector<10x32xf32>
    %c0_121 = arith.constant 0 : index
    %c1_122 = arith.constant 1 : index
    %c0_123 = arith.constant 0 : index
    %c0_124 = arith.constant 0 : index
    %c0_125 = arith.constant 0 : index
    %211 = vector.load %arg24[%c0_121, %c1_122, %c0_123, %c0_124, %c0_125] : memref<2x5x2x1x32xf32, #tpu.memory_space<vmem>>, vector<1x1x1x1x32xf32>
    %212 = vector.shape_cast %211 : vector<1x1x1x1x32xf32> to vector<1x32xf32>
    %c0_126 = arith.constant 0 : index
    %c1_127 = arith.constant 1 : index
    %c1_128 = arith.constant 1 : index
    %c0_129 = arith.constant 0 : index
    %c0_130 = arith.constant 0 : index
    %213 = vector.load %arg24[%c0_126, %c1_127, %c1_128, %c0_129, %c0_130] : memref<2x5x2x1x32xf32, #tpu.memory_space<vmem>>, vector<1x1x1x1x32xf32>
    %214 = vector.shape_cast %213 : vector<1x1x1x1x32xf32> to vector<1x32xf32>
    %cst_131 = arith.constant dense<0.000000e+00> : vector<10xf32>
    %215 = vector.multi_reduction <add>, %210, %cst_131 [1] : vector<10x32xf32> to vector<10xf32>
    %216 = vector.shape_cast %215 : vector<10xf32> to vector<10x1xf32>
    %cst_132 = arith.constant 3.200000e+01 : f32
    %217 = vector.broadcast %cst_132 : f32 to vector<10x1xf32>
    %218 = arith.divf %216, %217 : vector<10x1xf32>
    %219 = vector.broadcast %218 : vector<10x1xf32> to vector<10x32xf32>
    %220 = arith.subf %210, %219 : vector<10x32xf32>
    %221 = arith.mulf %220, %220 : vector<10x32xf32>
    %cst_133 = arith.constant dense<0.000000e+00> : vector<10xf32>
    %222 = vector.multi_reduction <add>, %221, %cst_133 [1] : vector<10x32xf32> to vector<10xf32>
    %223 = vector.shape_cast %222 : vector<10xf32> to vector<10x1xf32>
    %cst_134 = arith.constant 3.200000e+01 : f32
    %224 = vector.broadcast %cst_134 : f32 to vector<10x1xf32>
    %225 = arith.divf %223, %224 : vector<10x1xf32>
    %226 = vector.broadcast %218 : vector<10x1xf32> to vector<10x32xf32>
    %227 = arith.subf %210, %226 : vector<10x32xf32>
    %cst_135 = arith.constant 9.99999974E-6 : f32
    %228 = vector.broadcast %cst_135 : f32 to vector<10x1xf32>
    %229 = arith.addf %225, %228 : vector<10x1xf32>
    %230 = math.rsqrt %229 : vector<10x1xf32>
    %231 = vector.broadcast %230 : vector<10x1xf32> to vector<10x32xf32>
    %232 = arith.mulf %227, %231 : vector<10x32xf32>
    %233 = vector.broadcast %212 : vector<1x32xf32> to vector<10x32xf32>
    %234 = arith.mulf %232, %233 : vector<10x32xf32>
    %235 = vector.broadcast %214 : vector<1x32xf32> to vector<10x32xf32>
    %236 = arith.addf %234, %235 : vector<10x32xf32>
    %c0_136 = arith.constant 0 : index
    %c1_137 = arith.constant 1 : index
    %c0_138 = arith.constant 0 : index
    %c0_139 = arith.constant 0 : index
    %237 = vector.load %arg14[%c0_136, %c1_137, %c0_138, %c0_139] : memref<2x2x32x96xbf16, #tpu.memory_space<vmem>>, vector<1x1x32x96xbf16>
    %238 = vector.shape_cast %237 : vector<1x1x32x96xbf16> to vector<32x96xbf16>
    %c0_140 = arith.constant 0 : index
    %c1_141 = arith.constant 1 : index
    %c0_142 = arith.constant 0 : index
    %c0_143 = arith.constant 0 : index
    %239 = vector.load %arg15[%c0_140, %c1_141, %c0_142, %c0_143] : memref<2x2x1x96xf32, #tpu.memory_space<vmem>>, vector<1x1x1x96xf32>
    %240 = vector.shape_cast %239 : vector<1x1x1x96xf32> to vector<1x96xf32>
    %c0_144 = arith.constant 0 : index
    %c1_145 = arith.constant 1 : index
    %c0_146 = arith.constant 0 : index
    %c0_147 = arith.constant 0 : index
    %241 = vector.load %arg16[%c0_144, %c1_145, %c0_146, %c0_147] : memref<4x2x32x32xbf16, #tpu.memory_space<vmem>>, vector<1x1x32x32xbf16>
    %242 = vector.shape_cast %241 : vector<1x1x32x32xbf16> to vector<32x32xbf16>
    %c0_148 = arith.constant 0 : index
    %c1_149 = arith.constant 1 : index
    %c0_150 = arith.constant 0 : index
    %c0_151 = arith.constant 0 : index
    %243 = vector.load %arg17[%c0_148, %c1_149, %c0_150, %c0_151] : memref<4x2x1x32xf32, #tpu.memory_space<vmem>>, vector<1x1x1x32xf32>
    %244 = vector.shape_cast %243 : vector<1x1x1x32xf32> to vector<1x32xf32>
    %245 = arith.truncf %236 : vector<10x32xf32> to vector<10x32xbf16>
    %cst_152 = arith.constant dense<0.000000e+00> : vector<10x96xf32>
    %246 = tpu.matmul %245, %238, %cst_152 {dimension_numbers = #tpu.dot_dimension_numbers<[1], [0], [0], [1], [0, 0, 1, 1], [], []>} : vector<10x32xbf16>, vector<32x96xbf16>, vector<10x96xf32> -> vector<10x96xf32>
    %247 = vector.broadcast %240 : vector<1x96xf32> to vector<10x96xf32>
    %248 = arith.addf %246, %247 : vector<10x96xf32>
    %249 = vector.extract_strided_slice %248 {offsets = [0, 0], sizes = [10, 32], strides = [1, 1]} : vector<10x96xf32> to vector<10x32xf32>
    %250 = vector.extract_strided_slice %248 {offsets = [0, 32], sizes = [10, 32], strides = [1, 1]} : vector<10x96xf32> to vector<10x32xf32>
    %251 = vector.extract_strided_slice %248 {offsets = [0, 64], sizes = [10, 32], strides = [1, 1]} : vector<10x96xf32> to vector<10x32xf32>
    %cst_153 = arith.constant 0.353553385 : f32
    %252 = vector.broadcast %cst_153 : f32 to vector<10x32xf32>
    %253 = arith.mulf %249, %252 : vector<10x32xf32>
    %cst_154 = arith.constant 0.000000e+00 : f32
    %254 = vector.broadcast %cst_154 : f32 to vector<10x32xf32>
    %255 = vector.broadcast %9 : vector<1x32xf32> to vector<10x32xf32>
    %256 = arith.mulf %253, %255 : vector<10x32xf32>
    %257 = arith.truncf %256 : vector<10x32xf32> to vector<10x32xbf16>
    %258 = arith.truncf %250 : vector<10x32xf32> to vector<10x32xbf16>
    %cst_155 = arith.constant dense<0.000000e+00> : vector<10x10xf32>
    %259 = tpu.matmul %257, %258, %cst_155 {dimension_numbers = #tpu.dot_dimension_numbers<[1], [1], [0], [0], [0, 0, 1, 0], [], []>} : vector<10x32xbf16>, vector<10x32xbf16>, vector<10x10xf32> -> vector<10x10xf32>
    %260 = arith.addf %259, %7 : vector<10x10xf32>
    %cst_156 = arith.constant dense<0xFF800000> : vector<10xf32>
    %261 = vector.multi_reduction <maximumf>, %260, %cst_156 [1] : vector<10x10xf32> to vector<10xf32>
    %262 = vector.shape_cast %261 : vector<10xf32> to vector<10x1xf32>
    %263 = vector.broadcast %262 : vector<10x1xf32> to vector<10x10xf32>
    %264 = arith.subf %260, %263 : vector<10x10xf32>
    %265 = math.exp %264 : vector<10x10xf32>
    %cst_157 = arith.constant dense<0.000000e+00> : vector<10xf32>
    %266 = vector.multi_reduction <add>, %265, %cst_157 [1] : vector<10x10xf32> to vector<10xf32>
    %267 = vector.shape_cast %266 : vector<10xf32> to vector<10x1xf32>
    %268 = vector.broadcast %267 : vector<10x1xf32> to vector<10x10xf32>
    %269 = arith.divf %265, %268 : vector<10x10xf32>
    %270 = vector.broadcast %9 : vector<1x32xf32> to vector<10x32xf32>
    %271 = arith.mulf %251, %270 : vector<10x32xf32>
    %272 = arith.truncf %269 : vector<10x10xf32> to vector<10x10xbf16>
    %273 = arith.truncf %271 : vector<10x32xf32> to vector<10x32xbf16>
    %cst_158 = arith.constant dense<0.000000e+00> : vector<10x32xf32>
    %274 = tpu.matmul %272, %273, %cst_158 {dimension_numbers = #tpu.dot_dimension_numbers<[1], [0], [0], [1], [0, 0, 1, 1], [], []>} : vector<10x10xbf16>, vector<10x32xbf16>, vector<10x32xf32> -> vector<10x32xf32>
    %275 = arith.addf %254, %274 : vector<10x32xf32>
    %276 = vector.broadcast %11 : vector<1x32xf32> to vector<10x32xf32>
    %277 = arith.mulf %253, %276 : vector<10x32xf32>
    %278 = arith.truncf %277 : vector<10x32xf32> to vector<10x32xbf16>
    %279 = arith.truncf %250 : vector<10x32xf32> to vector<10x32xbf16>
    %cst_159 = arith.constant dense<0.000000e+00> : vector<10x10xf32>
    %280 = tpu.matmul %278, %279, %cst_159 {dimension_numbers = #tpu.dot_dimension_numbers<[1], [1], [0], [0], [0, 0, 1, 0], [], []>} : vector<10x32xbf16>, vector<10x32xbf16>, vector<10x10xf32> -> vector<10x10xf32>
    %281 = arith.addf %280, %7 : vector<10x10xf32>
    %cst_160 = arith.constant dense<0xFF800000> : vector<10xf32>
    %282 = vector.multi_reduction <maximumf>, %281, %cst_160 [1] : vector<10x10xf32> to vector<10xf32>
    %283 = vector.shape_cast %282 : vector<10xf32> to vector<10x1xf32>
    %284 = vector.broadcast %283 : vector<10x1xf32> to vector<10x10xf32>
    %285 = arith.subf %281, %284 : vector<10x10xf32>
    %286 = math.exp %285 : vector<10x10xf32>
    %cst_161 = arith.constant dense<0.000000e+00> : vector<10xf32>
    %287 = vector.multi_reduction <add>, %286, %cst_161 [1] : vector<10x10xf32> to vector<10xf32>
    %288 = vector.shape_cast %287 : vector<10xf32> to vector<10x1xf32>
    %289 = vector.broadcast %288 : vector<10x1xf32> to vector<10x10xf32>
    %290 = arith.divf %286, %289 : vector<10x10xf32>
    %291 = vector.broadcast %11 : vector<1x32xf32> to vector<10x32xf32>
    %292 = arith.mulf %251, %291 : vector<10x32xf32>
    %293 = arith.truncf %290 : vector<10x10xf32> to vector<10x10xbf16>
    %294 = arith.truncf %292 : vector<10x32xf32> to vector<10x32xbf16>
    %cst_162 = arith.constant dense<0.000000e+00> : vector<10x32xf32>
    %295 = tpu.matmul %293, %294, %cst_162 {dimension_numbers = #tpu.dot_dimension_numbers<[1], [0], [0], [1], [0, 0, 1, 1], [], []>} : vector<10x10xbf16>, vector<10x32xbf16>, vector<10x32xf32> -> vector<10x32xf32>
    %296 = arith.addf %275, %295 : vector<10x32xf32>
    %297 = vector.broadcast %13 : vector<1x32xf32> to vector<10x32xf32>
    %298 = arith.mulf %253, %297 : vector<10x32xf32>
    %299 = arith.truncf %298 : vector<10x32xf32> to vector<10x32xbf16>
    %300 = arith.truncf %250 : vector<10x32xf32> to vector<10x32xbf16>
    %cst_163 = arith.constant dense<0.000000e+00> : vector<10x10xf32>
    %301 = tpu.matmul %299, %300, %cst_163 {dimension_numbers = #tpu.dot_dimension_numbers<[1], [1], [0], [0], [0, 0, 1, 0], [], []>} : vector<10x32xbf16>, vector<10x32xbf16>, vector<10x10xf32> -> vector<10x10xf32>
    %302 = arith.addf %301, %7 : vector<10x10xf32>
    %cst_164 = arith.constant dense<0xFF800000> : vector<10xf32>
    %303 = vector.multi_reduction <maximumf>, %302, %cst_164 [1] : vector<10x10xf32> to vector<10xf32>
    %304 = vector.shape_cast %303 : vector<10xf32> to vector<10x1xf32>
    %305 = vector.broadcast %304 : vector<10x1xf32> to vector<10x10xf32>
    %306 = arith.subf %302, %305 : vector<10x10xf32>
    %307 = math.exp %306 : vector<10x10xf32>
    %cst_165 = arith.constant dense<0.000000e+00> : vector<10xf32>
    %308 = vector.multi_reduction <add>, %307, %cst_165 [1] : vector<10x10xf32> to vector<10xf32>
    %309 = vector.shape_cast %308 : vector<10xf32> to vector<10x1xf32>
    %310 = vector.broadcast %309 : vector<10x1xf32> to vector<10x10xf32>
    %311 = arith.divf %307, %310 : vector<10x10xf32>
    %312 = vector.broadcast %13 : vector<1x32xf32> to vector<10x32xf32>
    %313 = arith.mulf %251, %312 : vector<10x32xf32>
    %314 = arith.truncf %311 : vector<10x10xf32> to vector<10x10xbf16>
    %315 = arith.truncf %313 : vector<10x32xf32> to vector<10x32xbf16>
    %cst_166 = arith.constant dense<0.000000e+00> : vector<10x32xf32>
    %316 = tpu.matmul %314, %315, %cst_166 {dimension_numbers = #tpu.dot_dimension_numbers<[1], [0], [0], [1], [0, 0, 1, 1], [], []>} : vector<10x10xbf16>, vector<10x32xbf16>, vector<10x32xf32> -> vector<10x32xf32>
    %317 = arith.addf %296, %316 : vector<10x32xf32>
    %318 = vector.broadcast %15 : vector<1x32xf32> to vector<10x32xf32>
    %319 = arith.mulf %253, %318 : vector<10x32xf32>
    %320 = arith.truncf %319 : vector<10x32xf32> to vector<10x32xbf16>
    %321 = arith.truncf %250 : vector<10x32xf32> to vector<10x32xbf16>
    %cst_167 = arith.constant dense<0.000000e+00> : vector<10x10xf32>
    %322 = tpu.matmul %320, %321, %cst_167 {dimension_numbers = #tpu.dot_dimension_numbers<[1], [1], [0], [0], [0, 0, 1, 0], [], []>} : vector<10x32xbf16>, vector<10x32xbf16>, vector<10x10xf32> -> vector<10x10xf32>
    %323 = arith.addf %322, %7 : vector<10x10xf32>
    %cst_168 = arith.constant dense<0xFF800000> : vector<10xf32>
    %324 = vector.multi_reduction <maximumf>, %323, %cst_168 [1] : vector<10x10xf32> to vector<10xf32>
    %325 = vector.shape_cast %324 : vector<10xf32> to vector<10x1xf32>
    %326 = vector.broadcast %325 : vector<10x1xf32> to vector<10x10xf32>
    %327 = arith.subf %323, %326 : vector<10x10xf32>
    %328 = math.exp %327 : vector<10x10xf32>
    %cst_169 = arith.constant dense<0.000000e+00> : vector<10xf32>
    %329 = vector.multi_reduction <add>, %328, %cst_169 [1] : vector<10x10xf32> to vector<10xf32>
    %330 = vector.shape_cast %329 : vector<10xf32> to vector<10x1xf32>
    %331 = vector.broadcast %330 : vector<10x1xf32> to vector<10x10xf32>
    %332 = arith.divf %328, %331 : vector<10x10xf32>
    %333 = vector.broadcast %15 : vector<1x32xf32> to vector<10x32xf32>
    %334 = arith.mulf %251, %333 : vector<10x32xf32>
    %335 = arith.truncf %332 : vector<10x10xf32> to vector<10x10xbf16>
    %336 = arith.truncf %334 : vector<10x32xf32> to vector<10x32xbf16>
    %cst_170 = arith.constant dense<0.000000e+00> : vector<10x32xf32>
    %337 = tpu.matmul %335, %336, %cst_170 {dimension_numbers = #tpu.dot_dimension_numbers<[1], [0], [0], [1], [0, 0, 1, 1], [], []>} : vector<10x10xbf16>, vector<10x32xbf16>, vector<10x32xf32> -> vector<10x32xf32>
    %338 = arith.addf %317, %337 : vector<10x32xf32>
    %339 = arith.truncf %338 : vector<10x32xf32> to vector<10x32xbf16>
    %cst_171 = arith.constant dense<0.000000e+00> : vector<10x32xf32>
    %340 = tpu.matmul %339, %242, %cst_171 {dimension_numbers = #tpu.dot_dimension_numbers<[1], [0], [0], [1], [0, 0, 1, 1], [], []>} : vector<10x32xbf16>, vector<32x32xbf16>, vector<10x32xf32> -> vector<10x32xf32>
    %341 = vector.broadcast %244 : vector<1x32xf32> to vector<10x32xf32>
    %342 = arith.addf %340, %341 : vector<10x32xf32>
    %343 = arith.addf %236, %342 : vector<10x32xf32>
    %c1_172 = arith.constant 1 : index
    %c0_173 = arith.constant 0 : index
    %c0_174 = arith.constant 0 : index
    %c0_175 = arith.constant 0 : index
    %c0_176 = arith.constant 0 : index
    %344 = vector.load %arg24[%c1_172, %c0_173, %c0_174, %c0_175, %c0_176] : memref<2x5x2x1x32xf32, #tpu.memory_space<vmem>>, vector<1x1x1x1x32xf32>
    %345 = vector.shape_cast %344 : vector<1x1x1x1x32xf32> to vector<1x32xf32>
    %c1_177 = arith.constant 1 : index
    %c0_178 = arith.constant 0 : index
    %c1_179 = arith.constant 1 : index
    %c0_180 = arith.constant 0 : index
    %c0_181 = arith.constant 0 : index
    %346 = vector.load %arg24[%c1_177, %c0_178, %c1_179, %c0_180, %c0_181] : memref<2x5x2x1x32xf32, #tpu.memory_space<vmem>>, vector<1x1x1x1x32xf32>
    %347 = vector.shape_cast %346 : vector<1x1x1x1x32xf32> to vector<1x32xf32>
    %cst_182 = arith.constant dense<0.000000e+00> : vector<10xf32>
    %348 = vector.multi_reduction <add>, %343, %cst_182 [1] : vector<10x32xf32> to vector<10xf32>
    %349 = vector.shape_cast %348 : vector<10xf32> to vector<10x1xf32>
    %cst_183 = arith.constant 3.200000e+01 : f32
    %350 = vector.broadcast %cst_183 : f32 to vector<10x1xf32>
    %351 = arith.divf %349, %350 : vector<10x1xf32>
    %352 = vector.broadcast %351 : vector<10x1xf32> to vector<10x32xf32>
    %353 = arith.subf %343, %352 : vector<10x32xf32>
    %354 = arith.mulf %353, %353 : vector<10x32xf32>
    %cst_184 = arith.constant dense<0.000000e+00> : vector<10xf32>
    %355 = vector.multi_reduction <add>, %354, %cst_184 [1] : vector<10x32xf32> to vector<10xf32>
    %356 = vector.shape_cast %355 : vector<10xf32> to vector<10x1xf32>
    %cst_185 = arith.constant 3.200000e+01 : f32
    %357 = vector.broadcast %cst_185 : f32 to vector<10x1xf32>
    %358 = arith.divf %356, %357 : vector<10x1xf32>
    %359 = vector.broadcast %351 : vector<10x1xf32> to vector<10x32xf32>
    %360 = arith.subf %343, %359 : vector<10x32xf32>
    %cst_186 = arith.constant 9.99999974E-6 : f32
    %361 = vector.broadcast %cst_186 : f32 to vector<10x1xf32>
    %362 = arith.addf %358, %361 : vector<10x1xf32>
    %363 = math.rsqrt %362 : vector<10x1xf32>
    %364 = vector.broadcast %363 : vector<10x1xf32> to vector<10x32xf32>
    %365 = arith.mulf %360, %364 : vector<10x32xf32>
    %366 = vector.broadcast %345 : vector<1x32xf32> to vector<10x32xf32>
    %367 = arith.mulf %365, %366 : vector<10x32xf32>
    %368 = vector.broadcast %347 : vector<1x32xf32> to vector<10x32xf32>
    %369 = arith.addf %367, %368 : vector<10x32xf32>
    %c0_187 = arith.constant 0 : index
    %c1_188 = arith.constant 1 : index
    %c0_189 = arith.constant 0 : index
    %c0_190 = arith.constant 0 : index
    %370 = vector.load %arg20[%c0_187, %c1_188, %c0_189, %c0_190] : memref<2x2x32x64xbf16, #tpu.memory_space<vmem>>, vector<1x1x32x64xbf16>
    %371 = vector.shape_cast %370 : vector<1x1x32x64xbf16> to vector<32x64xbf16>
    %372 = arith.truncf %369 : vector<10x32xf32> to vector<10x32xbf16>
    %cst_191 = arith.constant dense<0.000000e+00> : vector<10x64xf32>
    %373 = tpu.matmul %372, %371, %cst_191 {dimension_numbers = #tpu.dot_dimension_numbers<[1], [0], [0], [1], [0, 0, 1, 1], [], []>} : vector<10x32xbf16>, vector<32x64xbf16>, vector<10x64xf32> -> vector<10x64xf32>
    %c0_192 = arith.constant 0 : index
    %c1_193 = arith.constant 1 : index
    %c0_194 = arith.constant 0 : index
    %c0_195 = arith.constant 0 : index
    %374 = vector.load %arg21[%c0_192, %c1_193, %c0_194, %c0_195] : memref<2x2x1x64xf32, #tpu.memory_space<vmem>>, vector<1x1x1x64xf32>
    %375 = vector.shape_cast %374 : vector<1x1x1x64xf32> to vector<1x64xf32>
    %376 = vector.broadcast %375 : vector<1x64xf32> to vector<10x64xf32>
    %377 = arith.addf %373, %376 : vector<10x64xf32>
    %cst_196 = arith.constant 0.000000e+00 : f32
    %378 = vector.broadcast %cst_196 : f32 to vector<10x64xf32>
    %379 = arith.maximumf %377, %378 : vector<10x64xf32>
    %c0_197 = arith.constant 0 : index
    %c1_198 = arith.constant 1 : index
    %c0_199 = arith.constant 0 : index
    %c0_200 = arith.constant 0 : index
    %380 = vector.load %arg22[%c0_197, %c1_198, %c0_199, %c0_200] : memref<2x2x64x32xbf16, #tpu.memory_space<vmem>>, vector<1x1x64x32xbf16>
    %381 = vector.shape_cast %380 : vector<1x1x64x32xbf16> to vector<64x32xbf16>
    %382 = arith.truncf %379 : vector<10x64xf32> to vector<10x64xbf16>
    %cst_201 = arith.constant dense<0.000000e+00> : vector<10x32xf32>
    %383 = tpu.matmul %382, %381, %cst_201 {dimension_numbers = #tpu.dot_dimension_numbers<[1], [0], [0], [1], [0, 0, 1, 1], [], []>} : vector<10x64xbf16>, vector<64x32xbf16>, vector<10x32xf32> -> vector<10x32xf32>
    %c0_202 = arith.constant 0 : index
    %c1_203 = arith.constant 1 : index
    %c0_204 = arith.constant 0 : index
    %c0_205 = arith.constant 0 : index
    %384 = vector.load %arg23[%c0_202, %c1_203, %c0_204, %c0_205] : memref<2x2x1x32xf32, #tpu.memory_space<vmem>>, vector<1x1x1x32xf32>
    %385 = vector.shape_cast %384 : vector<1x1x1x32xf32> to vector<1x32xf32>
    %386 = vector.broadcast %385 : vector<1x32xf32> to vector<10x32xf32>
    %387 = arith.addf %383, %386 : vector<10x32xf32>
    %388 = arith.addf %369, %387 : vector<10x32xf32>
    %c1_206 = arith.constant 1 : index
    %c1_207 = arith.constant 1 : index
    %c0_208 = arith.constant 0 : index
    %c0_209 = arith.constant 0 : index
    %c0_210 = arith.constant 0 : index
    %389 = vector.load %arg24[%c1_206, %c1_207, %c0_208, %c0_209, %c0_210] : memref<2x5x2x1x32xf32, #tpu.memory_space<vmem>>, vector<1x1x1x1x32xf32>
    %390 = vector.shape_cast %389 : vector<1x1x1x1x32xf32> to vector<1x32xf32>
    %c1_211 = arith.constant 1 : index
    %c1_212 = arith.constant 1 : index
    %c1_213 = arith.constant 1 : index
    %c0_214 = arith.constant 0 : index
    %c0_215 = arith.constant 0 : index
    %391 = vector.load %arg24[%c1_211, %c1_212, %c1_213, %c0_214, %c0_215] : memref<2x5x2x1x32xf32, #tpu.memory_space<vmem>>, vector<1x1x1x1x32xf32>
    %392 = vector.shape_cast %391 : vector<1x1x1x1x32xf32> to vector<1x32xf32>
    %cst_216 = arith.constant dense<0.000000e+00> : vector<10xf32>
    %393 = vector.multi_reduction <add>, %388, %cst_216 [1] : vector<10x32xf32> to vector<10xf32>
    %394 = vector.shape_cast %393 : vector<10xf32> to vector<10x1xf32>
    %cst_217 = arith.constant 3.200000e+01 : f32
    %395 = vector.broadcast %cst_217 : f32 to vector<10x1xf32>
    %396 = arith.divf %394, %395 : vector<10x1xf32>
    %397 = vector.broadcast %396 : vector<10x1xf32> to vector<10x32xf32>
    %398 = arith.subf %388, %397 : vector<10x32xf32>
    %399 = arith.mulf %398, %398 : vector<10x32xf32>
    %cst_218 = arith.constant dense<0.000000e+00> : vector<10xf32>
    %400 = vector.multi_reduction <add>, %399, %cst_218 [1] : vector<10x32xf32> to vector<10xf32>
    %401 = vector.shape_cast %400 : vector<10xf32> to vector<10x1xf32>
    %cst_219 = arith.constant 3.200000e+01 : f32
    %402 = vector.broadcast %cst_219 : f32 to vector<10x1xf32>
    %403 = arith.divf %401, %402 : vector<10x1xf32>
    %404 = vector.broadcast %396 : vector<10x1xf32> to vector<10x32xf32>
    %405 = arith.subf %388, %404 : vector<10x32xf32>
    %cst_220 = arith.constant 9.99999974E-6 : f32
    %406 = vector.broadcast %cst_220 : f32 to vector<10x1xf32>
    %407 = arith.addf %403, %406 : vector<10x1xf32>
    %408 = math.rsqrt %407 : vector<10x1xf32>
    %409 = vector.broadcast %408 : vector<10x1xf32> to vector<10x32xf32>
    %410 = arith.mulf %405, %409 : vector<10x32xf32>
    %411 = vector.broadcast %390 : vector<1x32xf32> to vector<10x32xf32>
    %412 = arith.mulf %410, %411 : vector<10x32xf32>
    %413 = vector.broadcast %392 : vector<1x32xf32> to vector<10x32xf32>
    %414 = arith.addf %412, %413 : vector<10x32xf32>
    %c0_221 = arith.constant 0 : index
    %c0_222 = arith.constant 0 : index
    %c0_223 = arith.constant 0 : index
    %c0_224 = arith.constant 0 : index
    %415 = vector.load %arg25[%c0_221, %c0_222, %c0_223, %c0_224] : memref<2x2x1x32xf32, #tpu.memory_space<vmem>>, vector<1x1x1x32xf32>
    %416 = vector.shape_cast %415 : vector<1x1x1x32xf32> to vector<1x32xf32>
    %c0_225 = arith.constant 0 : index
    %c1_226 = arith.constant 1 : index
    %c0_227 = arith.constant 0 : index
    %c0_228 = arith.constant 0 : index
    %417 = vector.load %arg25[%c0_225, %c1_226, %c0_227, %c0_228] : memref<2x2x1x32xf32, #tpu.memory_space<vmem>>, vector<1x1x1x32xf32>
    %418 = vector.shape_cast %417 : vector<1x1x1x32xf32> to vector<1x32xf32>
    %cst_229 = arith.constant dense<0.000000e+00> : vector<10xf32>
    %419 = vector.multi_reduction <add>, %414, %cst_229 [1] : vector<10x32xf32> to vector<10xf32>
    %420 = vector.shape_cast %419 : vector<10xf32> to vector<10x1xf32>
    %cst_230 = arith.constant 3.200000e+01 : f32
    %421 = vector.broadcast %cst_230 : f32 to vector<10x1xf32>
    %422 = arith.divf %420, %421 : vector<10x1xf32>
    %423 = vector.broadcast %422 : vector<10x1xf32> to vector<10x32xf32>
    %424 = arith.subf %414, %423 : vector<10x32xf32>
    %425 = arith.mulf %424, %424 : vector<10x32xf32>
    %cst_231 = arith.constant dense<0.000000e+00> : vector<10xf32>
    %426 = vector.multi_reduction <add>, %425, %cst_231 [1] : vector<10x32xf32> to vector<10xf32>
    %427 = vector.shape_cast %426 : vector<10xf32> to vector<10x1xf32>
    %cst_232 = arith.constant 3.200000e+01 : f32
    %428 = vector.broadcast %cst_232 : f32 to vector<10x1xf32>
    %429 = arith.divf %427, %428 : vector<10x1xf32>
    %430 = vector.broadcast %422 : vector<10x1xf32> to vector<10x32xf32>
    %431 = arith.subf %414, %430 : vector<10x32xf32>
    %cst_233 = arith.constant 9.99999974E-6 : f32
    %432 = vector.broadcast %cst_233 : f32 to vector<10x1xf32>
    %433 = arith.addf %429, %432 : vector<10x1xf32>
    %434 = math.rsqrt %433 : vector<10x1xf32>
    %435 = vector.broadcast %434 : vector<10x1xf32> to vector<10x32xf32>
    %436 = arith.mulf %431, %435 : vector<10x32xf32>
    %437 = vector.broadcast %416 : vector<1x32xf32> to vector<10x32xf32>
    %438 = arith.mulf %436, %437 : vector<10x32xf32>
    %439 = vector.broadcast %418 : vector<1x32xf32> to vector<10x32xf32>
    %440 = arith.addf %438, %439 : vector<10x32xf32>
    %c1_234 = arith.constant 1 : index
    %c0_235 = arith.constant 0 : index
    %c0_236 = arith.constant 0 : index
    %c0_237 = arith.constant 0 : index
    %441 = vector.load %arg14[%c1_234, %c0_235, %c0_236, %c0_237] : memref<2x2x32x96xbf16, #tpu.memory_space<vmem>>, vector<1x1x32x96xbf16>
    %442 = vector.shape_cast %441 : vector<1x1x32x96xbf16> to vector<32x96xbf16>
    %c1_238 = arith.constant 1 : index
    %c0_239 = arith.constant 0 : index
    %c0_240 = arith.constant 0 : index
    %c0_241 = arith.constant 0 : index
    %443 = vector.load %arg15[%c1_238, %c0_239, %c0_240, %c0_241] : memref<2x2x1x96xf32, #tpu.memory_space<vmem>>, vector<1x1x1x96xf32>
    %444 = vector.shape_cast %443 : vector<1x1x1x96xf32> to vector<1x96xf32>
    %c1_242 = arith.constant 1 : index
    %c0_243 = arith.constant 0 : index
    %c0_244 = arith.constant 0 : index
    %c0_245 = arith.constant 0 : index
    %445 = vector.load %arg16[%c1_242, %c0_243, %c0_244, %c0_245] : memref<4x2x32x32xbf16, #tpu.memory_space<vmem>>, vector<1x1x32x32xbf16>
    %446 = vector.shape_cast %445 : vector<1x1x32x32xbf16> to vector<32x32xbf16>
    %c1_246 = arith.constant 1 : index
    %c0_247 = arith.constant 0 : index
    %c0_248 = arith.constant 0 : index
    %c0_249 = arith.constant 0 : index
    %447 = vector.load %arg17[%c1_246, %c0_247, %c0_248, %c0_249] : memref<4x2x1x32xf32, #tpu.memory_space<vmem>>, vector<1x1x1x32xf32>
    %448 = vector.shape_cast %447 : vector<1x1x1x32xf32> to vector<1x32xf32>
    %449 = arith.truncf %52 : vector<10x32xf32> to vector<10x32xbf16>
    %cst_250 = arith.constant dense<0.000000e+00> : vector<10x96xf32>
    %450 = tpu.matmul %449, %442, %cst_250 {dimension_numbers = #tpu.dot_dimension_numbers<[1], [0], [0], [1], [0, 0, 1, 1], [], []>} : vector<10x32xbf16>, vector<32x96xbf16>, vector<10x96xf32> -> vector<10x96xf32>
    %451 = vector.broadcast %444 : vector<1x96xf32> to vector<10x96xf32>
    %452 = arith.addf %450, %451 : vector<10x96xf32>
    %453 = vector.extract_strided_slice %452 {offsets = [0, 0], sizes = [10, 32], strides = [1, 1]} : vector<10x96xf32> to vector<10x32xf32>
    %454 = vector.extract_strided_slice %452 {offsets = [0, 32], sizes = [10, 32], strides = [1, 1]} : vector<10x96xf32> to vector<10x32xf32>
    %455 = vector.extract_strided_slice %452 {offsets = [0, 64], sizes = [10, 32], strides = [1, 1]} : vector<10x96xf32> to vector<10x32xf32>
    %cst_251 = arith.constant 0.353553385 : f32
    %456 = vector.broadcast %cst_251 : f32 to vector<10x32xf32>
    %457 = arith.mulf %453, %456 : vector<10x32xf32>
    %cst_252 = arith.constant 0.000000e+00 : f32
    %458 = vector.broadcast %cst_252 : f32 to vector<10x32xf32>
    %459 = vector.broadcast %9 : vector<1x32xf32> to vector<10x32xf32>
    %460 = arith.mulf %457, %459 : vector<10x32xf32>
    %461 = arith.truncf %460 : vector<10x32xf32> to vector<10x32xbf16>
    %462 = arith.truncf %454 : vector<10x32xf32> to vector<10x32xbf16>
    %cst_253 = arith.constant dense<0.000000e+00> : vector<10x10xf32>
    %463 = tpu.matmul %461, %462, %cst_253 {dimension_numbers = #tpu.dot_dimension_numbers<[1], [1], [0], [0], [0, 0, 1, 0], [], []>} : vector<10x32xbf16>, vector<10x32xbf16>, vector<10x10xf32> -> vector<10x10xf32>
    %464 = arith.addf %463, %7 : vector<10x10xf32>
    %cst_254 = arith.constant dense<0xFF800000> : vector<10xf32>
    %465 = vector.multi_reduction <maximumf>, %464, %cst_254 [1] : vector<10x10xf32> to vector<10xf32>
    %466 = vector.shape_cast %465 : vector<10xf32> to vector<10x1xf32>
    %467 = vector.broadcast %466 : vector<10x1xf32> to vector<10x10xf32>
    %468 = arith.subf %464, %467 : vector<10x10xf32>
    %469 = math.exp %468 : vector<10x10xf32>
    %cst_255 = arith.constant dense<0.000000e+00> : vector<10xf32>
    %470 = vector.multi_reduction <add>, %469, %cst_255 [1] : vector<10x10xf32> to vector<10xf32>
    %471 = vector.shape_cast %470 : vector<10xf32> to vector<10x1xf32>
    %472 = vector.broadcast %471 : vector<10x1xf32> to vector<10x10xf32>
    %473 = arith.divf %469, %472 : vector<10x10xf32>
    %474 = vector.broadcast %9 : vector<1x32xf32> to vector<10x32xf32>
    %475 = arith.mulf %455, %474 : vector<10x32xf32>
    %476 = arith.truncf %473 : vector<10x10xf32> to vector<10x10xbf16>
    %477 = arith.truncf %475 : vector<10x32xf32> to vector<10x32xbf16>
    %cst_256 = arith.constant dense<0.000000e+00> : vector<10x32xf32>
    %478 = tpu.matmul %476, %477, %cst_256 {dimension_numbers = #tpu.dot_dimension_numbers<[1], [0], [0], [1], [0, 0, 1, 1], [], []>} : vector<10x10xbf16>, vector<10x32xbf16>, vector<10x32xf32> -> vector<10x32xf32>
    %479 = arith.addf %458, %478 : vector<10x32xf32>
    %480 = vector.broadcast %11 : vector<1x32xf32> to vector<10x32xf32>
    %481 = arith.mulf %457, %480 : vector<10x32xf32>
    %482 = arith.truncf %481 : vector<10x32xf32> to vector<10x32xbf16>
    %483 = arith.truncf %454 : vector<10x32xf32> to vector<10x32xbf16>
    %cst_257 = arith.constant dense<0.000000e+00> : vector<10x10xf32>
    %484 = tpu.matmul %482, %483, %cst_257 {dimension_numbers = #tpu.dot_dimension_numbers<[1], [1], [0], [0], [0, 0, 1, 0], [], []>} : vector<10x32xbf16>, vector<10x32xbf16>, vector<10x10xf32> -> vector<10x10xf32>
    %485 = arith.addf %484, %7 : vector<10x10xf32>
    %cst_258 = arith.constant dense<0xFF800000> : vector<10xf32>
    %486 = vector.multi_reduction <maximumf>, %485, %cst_258 [1] : vector<10x10xf32> to vector<10xf32>
    %487 = vector.shape_cast %486 : vector<10xf32> to vector<10x1xf32>
    %488 = vector.broadcast %487 : vector<10x1xf32> to vector<10x10xf32>
    %489 = arith.subf %485, %488 : vector<10x10xf32>
    %490 = math.exp %489 : vector<10x10xf32>
    %cst_259 = arith.constant dense<0.000000e+00> : vector<10xf32>
    %491 = vector.multi_reduction <add>, %490, %cst_259 [1] : vector<10x10xf32> to vector<10xf32>
    %492 = vector.shape_cast %491 : vector<10xf32> to vector<10x1xf32>
    %493 = vector.broadcast %492 : vector<10x1xf32> to vector<10x10xf32>
    %494 = arith.divf %490, %493 : vector<10x10xf32>
    %495 = vector.broadcast %11 : vector<1x32xf32> to vector<10x32xf32>
    %496 = arith.mulf %455, %495 : vector<10x32xf32>
    %497 = arith.truncf %494 : vector<10x10xf32> to vector<10x10xbf16>
    %498 = arith.truncf %496 : vector<10x32xf32> to vector<10x32xbf16>
    %cst_260 = arith.constant dense<0.000000e+00> : vector<10x32xf32>
    %499 = tpu.matmul %497, %498, %cst_260 {dimension_numbers = #tpu.dot_dimension_numbers<[1], [0], [0], [1], [0, 0, 1, 1], [], []>} : vector<10x10xbf16>, vector<10x32xbf16>, vector<10x32xf32> -> vector<10x32xf32>
    %500 = arith.addf %479, %499 : vector<10x32xf32>
    %501 = vector.broadcast %13 : vector<1x32xf32> to vector<10x32xf32>
    %502 = arith.mulf %457, %501 : vector<10x32xf32>
    %503 = arith.truncf %502 : vector<10x32xf32> to vector<10x32xbf16>
    %504 = arith.truncf %454 : vector<10x32xf32> to vector<10x32xbf16>
    %cst_261 = arith.constant dense<0.000000e+00> : vector<10x10xf32>
    %505 = tpu.matmul %503, %504, %cst_261 {dimension_numbers = #tpu.dot_dimension_numbers<[1], [1], [0], [0], [0, 0, 1, 0], [], []>} : vector<10x32xbf16>, vector<10x32xbf16>, vector<10x10xf32> -> vector<10x10xf32>
    %506 = arith.addf %505, %7 : vector<10x10xf32>
    %cst_262 = arith.constant dense<0xFF800000> : vector<10xf32>
    %507 = vector.multi_reduction <maximumf>, %506, %cst_262 [1] : vector<10x10xf32> to vector<10xf32>
    %508 = vector.shape_cast %507 : vector<10xf32> to vector<10x1xf32>
    %509 = vector.broadcast %508 : vector<10x1xf32> to vector<10x10xf32>
    %510 = arith.subf %506, %509 : vector<10x10xf32>
    %511 = math.exp %510 : vector<10x10xf32>
    %cst_263 = arith.constant dense<0.000000e+00> : vector<10xf32>
    %512 = vector.multi_reduction <add>, %511, %cst_263 [1] : vector<10x10xf32> to vector<10xf32>
    %513 = vector.shape_cast %512 : vector<10xf32> to vector<10x1xf32>
    %514 = vector.broadcast %513 : vector<10x1xf32> to vector<10x10xf32>
    %515 = arith.divf %511, %514 : vector<10x10xf32>
    %516 = vector.broadcast %13 : vector<1x32xf32> to vector<10x32xf32>
    %517 = arith.mulf %455, %516 : vector<10x32xf32>
    %518 = arith.truncf %515 : vector<10x10xf32> to vector<10x10xbf16>
    %519 = arith.truncf %517 : vector<10x32xf32> to vector<10x32xbf16>
    %cst_264 = arith.constant dense<0.000000e+00> : vector<10x32xf32>
    %520 = tpu.matmul %518, %519, %cst_264 {dimension_numbers = #tpu.dot_dimension_numbers<[1], [0], [0], [1], [0, 0, 1, 1], [], []>} : vector<10x10xbf16>, vector<10x32xbf16>, vector<10x32xf32> -> vector<10x32xf32>
    %521 = arith.addf %500, %520 : vector<10x32xf32>
    %522 = vector.broadcast %15 : vector<1x32xf32> to vector<10x32xf32>
    %523 = arith.mulf %457, %522 : vector<10x32xf32>
    %524 = arith.truncf %523 : vector<10x32xf32> to vector<10x32xbf16>
    %525 = arith.truncf %454 : vector<10x32xf32> to vector<10x32xbf16>
    %cst_265 = arith.constant dense<0.000000e+00> : vector<10x10xf32>
    %526 = tpu.matmul %524, %525, %cst_265 {dimension_numbers = #tpu.dot_dimension_numbers<[1], [1], [0], [0], [0, 0, 1, 0], [], []>} : vector<10x32xbf16>, vector<10x32xbf16>, vector<10x10xf32> -> vector<10x10xf32>
    %527 = arith.addf %526, %7 : vector<10x10xf32>
    %cst_266 = arith.constant dense<0xFF800000> : vector<10xf32>
    %528 = vector.multi_reduction <maximumf>, %527, %cst_266 [1] : vector<10x10xf32> to vector<10xf32>
    %529 = vector.shape_cast %528 : vector<10xf32> to vector<10x1xf32>
    %530 = vector.broadcast %529 : vector<10x1xf32> to vector<10x10xf32>
    %531 = arith.subf %527, %530 : vector<10x10xf32>
    %532 = math.exp %531 : vector<10x10xf32>
    %cst_267 = arith.constant dense<0.000000e+00> : vector<10xf32>
    %533 = vector.multi_reduction <add>, %532, %cst_267 [1] : vector<10x10xf32> to vector<10xf32>
    %534 = vector.shape_cast %533 : vector<10xf32> to vector<10x1xf32>
    %535 = vector.broadcast %534 : vector<10x1xf32> to vector<10x10xf32>
    %536 = arith.divf %532, %535 : vector<10x10xf32>
    %537 = vector.broadcast %15 : vector<1x32xf32> to vector<10x32xf32>
    %538 = arith.mulf %455, %537 : vector<10x32xf32>
    %539 = arith.truncf %536 : vector<10x10xf32> to vector<10x10xbf16>
    %540 = arith.truncf %538 : vector<10x32xf32> to vector<10x32xbf16>
    %cst_268 = arith.constant dense<0.000000e+00> : vector<10x32xf32>
    %541 = tpu.matmul %539, %540, %cst_268 {dimension_numbers = #tpu.dot_dimension_numbers<[1], [0], [0], [1], [0, 0, 1, 1], [], []>} : vector<10x10xbf16>, vector<10x32xbf16>, vector<10x32xf32> -> vector<10x32xf32>
    %542 = arith.addf %521, %541 : vector<10x32xf32>
    %543 = arith.truncf %542 : vector<10x32xf32> to vector<10x32xbf16>
    %cst_269 = arith.constant dense<0.000000e+00> : vector<10x32xf32>
    %544 = tpu.matmul %543, %446, %cst_269 {dimension_numbers = #tpu.dot_dimension_numbers<[1], [0], [0], [1], [0, 0, 1, 1], [], []>} : vector<10x32xbf16>, vector<32x32xbf16>, vector<10x32xf32> -> vector<10x32xf32>
    %545 = vector.broadcast %448 : vector<1x32xf32> to vector<10x32xf32>
    %546 = arith.addf %544, %545 : vector<10x32xf32>
    %547 = arith.addf %52, %546 : vector<10x32xf32>
    %c0_270 = arith.constant 0 : index
    %c2_271 = arith.constant 2 : index
    %c0_272 = arith.constant 0 : index
    %c0_273 = arith.constant 0 : index
    %c0_274 = arith.constant 0 : index
    %548 = vector.load %arg24[%c0_270, %c2_271, %c0_272, %c0_273, %c0_274] : memref<2x5x2x1x32xf32, #tpu.memory_space<vmem>>, vector<1x1x1x1x32xf32>
    %549 = vector.shape_cast %548 : vector<1x1x1x1x32xf32> to vector<1x32xf32>
    %c0_275 = arith.constant 0 : index
    %c2_276 = arith.constant 2 : index
    %c1_277 = arith.constant 1 : index
    %c0_278 = arith.constant 0 : index
    %c0_279 = arith.constant 0 : index
    %550 = vector.load %arg24[%c0_275, %c2_276, %c1_277, %c0_278, %c0_279] : memref<2x5x2x1x32xf32, #tpu.memory_space<vmem>>, vector<1x1x1x1x32xf32>
    %551 = vector.shape_cast %550 : vector<1x1x1x1x32xf32> to vector<1x32xf32>
    %cst_280 = arith.constant dense<0.000000e+00> : vector<10xf32>
    %552 = vector.multi_reduction <add>, %547, %cst_280 [1] : vector<10x32xf32> to vector<10xf32>
    %553 = vector.shape_cast %552 : vector<10xf32> to vector<10x1xf32>
    %cst_281 = arith.constant 3.200000e+01 : f32
    %554 = vector.broadcast %cst_281 : f32 to vector<10x1xf32>
    %555 = arith.divf %553, %554 : vector<10x1xf32>
    %556 = vector.broadcast %555 : vector<10x1xf32> to vector<10x32xf32>
    %557 = arith.subf %547, %556 : vector<10x32xf32>
    %558 = arith.mulf %557, %557 : vector<10x32xf32>
    %cst_282 = arith.constant dense<0.000000e+00> : vector<10xf32>
    %559 = vector.multi_reduction <add>, %558, %cst_282 [1] : vector<10x32xf32> to vector<10xf32>
    %560 = vector.shape_cast %559 : vector<10xf32> to vector<10x1xf32>
    %cst_283 = arith.constant 3.200000e+01 : f32
    %561 = vector.broadcast %cst_283 : f32 to vector<10x1xf32>
    %562 = arith.divf %560, %561 : vector<10x1xf32>
    %563 = vector.broadcast %555 : vector<10x1xf32> to vector<10x32xf32>
    %564 = arith.subf %547, %563 : vector<10x32xf32>
    %cst_284 = arith.constant 9.99999974E-6 : f32
    %565 = vector.broadcast %cst_284 : f32 to vector<10x1xf32>
    %566 = arith.addf %562, %565 : vector<10x1xf32>
    %567 = math.rsqrt %566 : vector<10x1xf32>
    %568 = vector.broadcast %567 : vector<10x1xf32> to vector<10x32xf32>
    %569 = arith.mulf %564, %568 : vector<10x32xf32>
    %570 = vector.broadcast %549 : vector<1x32xf32> to vector<10x32xf32>
    %571 = arith.mulf %569, %570 : vector<10x32xf32>
    %572 = vector.broadcast %551 : vector<1x32xf32> to vector<10x32xf32>
    %573 = arith.addf %571, %572 : vector<10x32xf32>
    %c3_285 = arith.constant 3 : index
    %c0_286 = arith.constant 0 : index
    %c0_287 = arith.constant 0 : index
    %c0_288 = arith.constant 0 : index
    %574 = vector.load %arg16[%c3_285, %c0_286, %c0_287, %c0_288] : memref<4x2x32x32xbf16, #tpu.memory_space<vmem>>, vector<1x1x32x32xbf16>
    %575 = vector.shape_cast %574 : vector<1x1x32x32xbf16> to vector<32x32xbf16>
    %576 = arith.truncf %573 : vector<10x32xf32> to vector<10x32xbf16>
    %cst_289 = arith.constant dense<0.000000e+00> : vector<10x32xf32>
    %577 = tpu.matmul %576, %575, %cst_289 {dimension_numbers = #tpu.dot_dimension_numbers<[1], [0], [0], [1], [0, 0, 1, 1], [], []>} : vector<10x32xbf16>, vector<32x32xbf16>, vector<10x32xf32> -> vector<10x32xf32>
    %c3_290 = arith.constant 3 : index
    %c0_291 = arith.constant 0 : index
    %c0_292 = arith.constant 0 : index
    %c0_293 = arith.constant 0 : index
    %578 = vector.load %arg17[%c3_290, %c0_291, %c0_292, %c0_293] : memref<4x2x1x32xf32, #tpu.memory_space<vmem>>, vector<1x1x1x32xf32>
    %579 = vector.shape_cast %578 : vector<1x1x1x32xf32> to vector<1x32xf32>
    %580 = vector.broadcast %579 : vector<1x32xf32> to vector<10x32xf32>
    %581 = arith.addf %577, %580 : vector<10x32xf32>
    %c0_294 = arith.constant 0 : index
    %c0_295 = arith.constant 0 : index
    %c0_296 = arith.constant 0 : index
    %582 = vector.load %arg18[%c0_294, %c0_295, %c0_296] : memref<2x32x64xbf16, #tpu.memory_space<vmem>>, vector<1x32x64xbf16>
    %583 = vector.shape_cast %582 : vector<1x32x64xbf16> to vector<32x64xbf16>
    %584 = arith.truncf %440 : vector<10x32xf32> to vector<10x32xbf16>
    %cst_297 = arith.constant dense<0.000000e+00> : vector<10x64xf32>
    %585 = tpu.matmul %584, %583, %cst_297 {dimension_numbers = #tpu.dot_dimension_numbers<[1], [0], [0], [1], [0, 0, 1, 1], [], []>} : vector<10x32xbf16>, vector<32x64xbf16>, vector<10x64xf32> -> vector<10x64xf32>
    %c0_298 = arith.constant 0 : index
    %c0_299 = arith.constant 0 : index
    %c0_300 = arith.constant 0 : index
    %586 = vector.load %arg19[%c0_298, %c0_299, %c0_300] : memref<2x1x64xf32, #tpu.memory_space<vmem>>, vector<1x1x64xf32>
    %587 = vector.shape_cast %586 : vector<1x1x64xf32> to vector<1x64xf32>
    %588 = vector.broadcast %587 : vector<1x64xf32> to vector<10x64xf32>
    %589 = arith.addf %585, %588 : vector<10x64xf32>
    %590 = vector.extract_strided_slice %589 {offsets = [0, 0], sizes = [10, 32], strides = [1, 1]} : vector<10x64xf32> to vector<10x32xf32>
    %591 = vector.extract_strided_slice %589 {offsets = [0, 32], sizes = [10, 32], strides = [1, 1]} : vector<10x64xf32> to vector<10x32xf32>
    %c2_301 = arith.constant 2 : index
    %c0_302 = arith.constant 0 : index
    %c0_303 = arith.constant 0 : index
    %c0_304 = arith.constant 0 : index
    %592 = vector.load %arg16[%c2_301, %c0_302, %c0_303, %c0_304] : memref<4x2x32x32xbf16, #tpu.memory_space<vmem>>, vector<1x1x32x32xbf16>
    %593 = vector.shape_cast %592 : vector<1x1x32x32xbf16> to vector<32x32xbf16>
    %c2_305 = arith.constant 2 : index
    %c0_306 = arith.constant 0 : index
    %c0_307 = arith.constant 0 : index
    %c0_308 = arith.constant 0 : index
    %594 = vector.load %arg17[%c2_305, %c0_306, %c0_307, %c0_308] : memref<4x2x1x32xf32, #tpu.memory_space<vmem>>, vector<1x1x1x32xf32>
    %595 = vector.shape_cast %594 : vector<1x1x1x32xf32> to vector<1x32xf32>
    %cst_309 = arith.constant 0.353553385 : f32
    %596 = vector.broadcast %cst_309 : f32 to vector<10x32xf32>
    %597 = arith.mulf %581, %596 : vector<10x32xf32>
    %cst_310 = arith.constant 0.000000e+00 : f32
    %598 = vector.broadcast %cst_310 : f32 to vector<10x32xf32>
    %599 = vector.broadcast %9 : vector<1x32xf32> to vector<10x32xf32>
    %600 = arith.mulf %597, %599 : vector<10x32xf32>
    %601 = arith.truncf %600 : vector<10x32xf32> to vector<10x32xbf16>
    %602 = arith.truncf %590 : vector<10x32xf32> to vector<10x32xbf16>
    %cst_311 = arith.constant dense<0.000000e+00> : vector<10x10xf32>
    %603 = tpu.matmul %601, %602, %cst_311 {dimension_numbers = #tpu.dot_dimension_numbers<[1], [1], [0], [0], [0, 0, 1, 0], [], []>} : vector<10x32xbf16>, vector<10x32xbf16>, vector<10x10xf32> -> vector<10x10xf32>
    %604 = arith.addf %603, %7 : vector<10x10xf32>
    %cst_312 = arith.constant dense<0xFF800000> : vector<10xf32>
    %605 = vector.multi_reduction <maximumf>, %604, %cst_312 [1] : vector<10x10xf32> to vector<10xf32>
    %606 = vector.shape_cast %605 : vector<10xf32> to vector<10x1xf32>
    %607 = vector.broadcast %606 : vector<10x1xf32> to vector<10x10xf32>
    %608 = arith.subf %604, %607 : vector<10x10xf32>
    %609 = math.exp %608 : vector<10x10xf32>
    %cst_313 = arith.constant dense<0.000000e+00> : vector<10xf32>
    %610 = vector.multi_reduction <add>, %609, %cst_313 [1] : vector<10x10xf32> to vector<10xf32>
    %611 = vector.shape_cast %610 : vector<10xf32> to vector<10x1xf32>
    %612 = vector.broadcast %611 : vector<10x1xf32> to vector<10x10xf32>
    %613 = arith.divf %609, %612 : vector<10x10xf32>
    %614 = vector.broadcast %9 : vector<1x32xf32> to vector<10x32xf32>
    %615 = arith.mulf %591, %614 : vector<10x32xf32>
    %616 = arith.truncf %613 : vector<10x10xf32> to vector<10x10xbf16>
    %617 = arith.truncf %615 : vector<10x32xf32> to vector<10x32xbf16>
    %cst_314 = arith.constant dense<0.000000e+00> : vector<10x32xf32>
    %618 = tpu.matmul %616, %617, %cst_314 {dimension_numbers = #tpu.dot_dimension_numbers<[1], [0], [0], [1], [0, 0, 1, 1], [], []>} : vector<10x10xbf16>, vector<10x32xbf16>, vector<10x32xf32> -> vector<10x32xf32>
    %619 = arith.addf %598, %618 : vector<10x32xf32>
    %620 = vector.broadcast %11 : vector<1x32xf32> to vector<10x32xf32>
    %621 = arith.mulf %597, %620 : vector<10x32xf32>
    %622 = arith.truncf %621 : vector<10x32xf32> to vector<10x32xbf16>
    %623 = arith.truncf %590 : vector<10x32xf32> to vector<10x32xbf16>
    %cst_315 = arith.constant dense<0.000000e+00> : vector<10x10xf32>
    %624 = tpu.matmul %622, %623, %cst_315 {dimension_numbers = #tpu.dot_dimension_numbers<[1], [1], [0], [0], [0, 0, 1, 0], [], []>} : vector<10x32xbf16>, vector<10x32xbf16>, vector<10x10xf32> -> vector<10x10xf32>
    %625 = arith.addf %624, %7 : vector<10x10xf32>
    %cst_316 = arith.constant dense<0xFF800000> : vector<10xf32>
    %626 = vector.multi_reduction <maximumf>, %625, %cst_316 [1] : vector<10x10xf32> to vector<10xf32>
    %627 = vector.shape_cast %626 : vector<10xf32> to vector<10x1xf32>
    %628 = vector.broadcast %627 : vector<10x1xf32> to vector<10x10xf32>
    %629 = arith.subf %625, %628 : vector<10x10xf32>
    %630 = math.exp %629 : vector<10x10xf32>
    %cst_317 = arith.constant dense<0.000000e+00> : vector<10xf32>
    %631 = vector.multi_reduction <add>, %630, %cst_317 [1] : vector<10x10xf32> to vector<10xf32>
    %632 = vector.shape_cast %631 : vector<10xf32> to vector<10x1xf32>
    %633 = vector.broadcast %632 : vector<10x1xf32> to vector<10x10xf32>
    %634 = arith.divf %630, %633 : vector<10x10xf32>
    %635 = vector.broadcast %11 : vector<1x32xf32> to vector<10x32xf32>
    %636 = arith.mulf %591, %635 : vector<10x32xf32>
    %637 = arith.truncf %634 : vector<10x10xf32> to vector<10x10xbf16>
    %638 = arith.truncf %636 : vector<10x32xf32> to vector<10x32xbf16>
    %cst_318 = arith.constant dense<0.000000e+00> : vector<10x32xf32>
    %639 = tpu.matmul %637, %638, %cst_318 {dimension_numbers = #tpu.dot_dimension_numbers<[1], [0], [0], [1], [0, 0, 1, 1], [], []>} : vector<10x10xbf16>, vector<10x32xbf16>, vector<10x32xf32> -> vector<10x32xf32>
    %640 = arith.addf %619, %639 : vector<10x32xf32>
    %641 = vector.broadcast %13 : vector<1x32xf32> to vector<10x32xf32>
    %642 = arith.mulf %597, %641 : vector<10x32xf32>
    %643 = arith.truncf %642 : vector<10x32xf32> to vector<10x32xbf16>
    %644 = arith.truncf %590 : vector<10x32xf32> to vector<10x32xbf16>
    %cst_319 = arith.constant dense<0.000000e+00> : vector<10x10xf32>
    %645 = tpu.matmul %643, %644, %cst_319 {dimension_numbers = #tpu.dot_dimension_numbers<[1], [1], [0], [0], [0, 0, 1, 0], [], []>} : vector<10x32xbf16>, vector<10x32xbf16>, vector<10x10xf32> -> vector<10x10xf32>
    %646 = arith.addf %645, %7 : vector<10x10xf32>
    %cst_320 = arith.constant dense<0xFF800000> : vector<10xf32>
    %647 = vector.multi_reduction <maximumf>, %646, %cst_320 [1] : vector<10x10xf32> to vector<10xf32>
    %648 = vector.shape_cast %647 : vector<10xf32> to vector<10x1xf32>
    %649 = vector.broadcast %648 : vector<10x1xf32> to vector<10x10xf32>
    %650 = arith.subf %646, %649 : vector<10x10xf32>
    %651 = math.exp %650 : vector<10x10xf32>
    %cst_321 = arith.constant dense<0.000000e+00> : vector<10xf32>
    %652 = vector.multi_reduction <add>, %651, %cst_321 [1] : vector<10x10xf32> to vector<10xf32>
    %653 = vector.shape_cast %652 : vector<10xf32> to vector<10x1xf32>
    %654 = vector.broadcast %653 : vector<10x1xf32> to vector<10x10xf32>
    %655 = arith.divf %651, %654 : vector<10x10xf32>
    %656 = vector.broadcast %13 : vector<1x32xf32> to vector<10x32xf32>
    %657 = arith.mulf %591, %656 : vector<10x32xf32>
    %658 = arith.truncf %655 : vector<10x10xf32> to vector<10x10xbf16>
    %659 = arith.truncf %657 : vector<10x32xf32> to vector<10x32xbf16>
    %cst_322 = arith.constant dense<0.000000e+00> : vector<10x32xf32>
    %660 = tpu.matmul %658, %659, %cst_322 {dimension_numbers = #tpu.dot_dimension_numbers<[1], [0], [0], [1], [0, 0, 1, 1], [], []>} : vector<10x10xbf16>, vector<10x32xbf16>, vector<10x32xf32> -> vector<10x32xf32>
    %661 = arith.addf %640, %660 : vector<10x32xf32>
    %662 = vector.broadcast %15 : vector<1x32xf32> to vector<10x32xf32>
    %663 = arith.mulf %597, %662 : vector<10x32xf32>
    %664 = arith.truncf %663 : vector<10x32xf32> to vector<10x32xbf16>
    %665 = arith.truncf %590 : vector<10x32xf32> to vector<10x32xbf16>
    %cst_323 = arith.constant dense<0.000000e+00> : vector<10x10xf32>
    %666 = tpu.matmul %664, %665, %cst_323 {dimension_numbers = #tpu.dot_dimension_numbers<[1], [1], [0], [0], [0, 0, 1, 0], [], []>} : vector<10x32xbf16>, vector<10x32xbf16>, vector<10x10xf32> -> vector<10x10xf32>
    %667 = arith.addf %666, %7 : vector<10x10xf32>
    %cst_324 = arith.constant dense<0xFF800000> : vector<10xf32>
    %668 = vector.multi_reduction <maximumf>, %667, %cst_324 [1] : vector<10x10xf32> to vector<10xf32>
    %669 = vector.shape_cast %668 : vector<10xf32> to vector<10x1xf32>
    %670 = vector.broadcast %669 : vector<10x1xf32> to vector<10x10xf32>
    %671 = arith.subf %667, %670 : vector<10x10xf32>
    %672 = math.exp %671 : vector<10x10xf32>
    %cst_325 = arith.constant dense<0.000000e+00> : vector<10xf32>
    %673 = vector.multi_reduction <add>, %672, %cst_325 [1] : vector<10x10xf32> to vector<10xf32>
    %674 = vector.shape_cast %673 : vector<10xf32> to vector<10x1xf32>
    %675 = vector.broadcast %674 : vector<10x1xf32> to vector<10x10xf32>
    %676 = arith.divf %672, %675 : vector<10x10xf32>
    %677 = vector.broadcast %15 : vector<1x32xf32> to vector<10x32xf32>
    %678 = arith.mulf %591, %677 : vector<10x32xf32>
    %679 = arith.truncf %676 : vector<10x10xf32> to vector<10x10xbf16>
    %680 = arith.truncf %678 : vector<10x32xf32> to vector<10x32xbf16>
    %cst_326 = arith.constant dense<0.000000e+00> : vector<10x32xf32>
    %681 = tpu.matmul %679, %680, %cst_326 {dimension_numbers = #tpu.dot_dimension_numbers<[1], [0], [0], [1], [0, 0, 1, 1], [], []>} : vector<10x10xbf16>, vector<10x32xbf16>, vector<10x32xf32> -> vector<10x32xf32>
    %682 = arith.addf %661, %681 : vector<10x32xf32>
    %683 = arith.truncf %682 : vector<10x32xf32> to vector<10x32xbf16>
    %cst_327 = arith.constant dense<0.000000e+00> : vector<10x32xf32>
    %684 = tpu.matmul %683, %593, %cst_327 {dimension_numbers = #tpu.dot_dimension_numbers<[1], [0], [0], [1], [0, 0, 1, 1], [], []>} : vector<10x32xbf16>, vector<32x32xbf16>, vector<10x32xf32> -> vector<10x32xf32>
    %685 = vector.broadcast %595 : vector<1x32xf32> to vector<10x32xf32>
    %686 = arith.addf %684, %685 : vector<10x32xf32>
    %687 = arith.addf %573, %686 : vector<10x32xf32>
    %c0_328 = arith.constant 0 : index
    %c3_329 = arith.constant 3 : index
    %c0_330 = arith.constant 0 : index
    %c0_331 = arith.constant 0 : index
    %c0_332 = arith.constant 0 : index
    %688 = vector.load %arg24[%c0_328, %c3_329, %c0_330, %c0_331, %c0_332] : memref<2x5x2x1x32xf32, #tpu.memory_space<vmem>>, vector<1x1x1x1x32xf32>
    %689 = vector.shape_cast %688 : vector<1x1x1x1x32xf32> to vector<1x32xf32>
    %c0_333 = arith.constant 0 : index
    %c3_334 = arith.constant 3 : index
    %c1_335 = arith.constant 1 : index
    %c0_336 = arith.constant 0 : index
    %c0_337 = arith.constant 0 : index
    %690 = vector.load %arg24[%c0_333, %c3_334, %c1_335, %c0_336, %c0_337] : memref<2x5x2x1x32xf32, #tpu.memory_space<vmem>>, vector<1x1x1x1x32xf32>
    %691 = vector.shape_cast %690 : vector<1x1x1x1x32xf32> to vector<1x32xf32>
    %cst_338 = arith.constant dense<0.000000e+00> : vector<10xf32>
    %692 = vector.multi_reduction <add>, %687, %cst_338 [1] : vector<10x32xf32> to vector<10xf32>
    %693 = vector.shape_cast %692 : vector<10xf32> to vector<10x1xf32>
    %cst_339 = arith.constant 3.200000e+01 : f32
    %694 = vector.broadcast %cst_339 : f32 to vector<10x1xf32>
    %695 = arith.divf %693, %694 : vector<10x1xf32>
    %696 = vector.broadcast %695 : vector<10x1xf32> to vector<10x32xf32>
    %697 = arith.subf %687, %696 : vector<10x32xf32>
    %698 = arith.mulf %697, %697 : vector<10x32xf32>
    %cst_340 = arith.constant dense<0.000000e+00> : vector<10xf32>
    %699 = vector.multi_reduction <add>, %698, %cst_340 [1] : vector<10x32xf32> to vector<10xf32>
    %700 = vector.shape_cast %699 : vector<10xf32> to vector<10x1xf32>
    %cst_341 = arith.constant 3.200000e+01 : f32
    %701 = vector.broadcast %cst_341 : f32 to vector<10x1xf32>
    %702 = arith.divf %700, %701 : vector<10x1xf32>
    %703 = vector.broadcast %695 : vector<10x1xf32> to vector<10x32xf32>
    %704 = arith.subf %687, %703 : vector<10x32xf32>
    %cst_342 = arith.constant 9.99999974E-6 : f32
    %705 = vector.broadcast %cst_342 : f32 to vector<10x1xf32>
    %706 = arith.addf %702, %705 : vector<10x1xf32>
    %707 = math.rsqrt %706 : vector<10x1xf32>
    %708 = vector.broadcast %707 : vector<10x1xf32> to vector<10x32xf32>
    %709 = arith.mulf %704, %708 : vector<10x32xf32>
    %710 = vector.broadcast %689 : vector<1x32xf32> to vector<10x32xf32>
    %711 = arith.mulf %709, %710 : vector<10x32xf32>
    %712 = vector.broadcast %691 : vector<1x32xf32> to vector<10x32xf32>
    %713 = arith.addf %711, %712 : vector<10x32xf32>
    %c1_343 = arith.constant 1 : index
    %c0_344 = arith.constant 0 : index
    %c0_345 = arith.constant 0 : index
    %c0_346 = arith.constant 0 : index
    %714 = vector.load %arg20[%c1_343, %c0_344, %c0_345, %c0_346] : memref<2x2x32x64xbf16, #tpu.memory_space<vmem>>, vector<1x1x32x64xbf16>
    %715 = vector.shape_cast %714 : vector<1x1x32x64xbf16> to vector<32x64xbf16>
    %716 = arith.truncf %713 : vector<10x32xf32> to vector<10x32xbf16>
    %cst_347 = arith.constant dense<0.000000e+00> : vector<10x64xf32>
    %717 = tpu.matmul %716, %715, %cst_347 {dimension_numbers = #tpu.dot_dimension_numbers<[1], [0], [0], [1], [0, 0, 1, 1], [], []>} : vector<10x32xbf16>, vector<32x64xbf16>, vector<10x64xf32> -> vector<10x64xf32>
    %c1_348 = arith.constant 1 : index
    %c0_349 = arith.constant 0 : index
    %c0_350 = arith.constant 0 : index
    %c0_351 = arith.constant 0 : index
    %718 = vector.load %arg21[%c1_348, %c0_349, %c0_350, %c0_351] : memref<2x2x1x64xf32, #tpu.memory_space<vmem>>, vector<1x1x1x64xf32>
    %719 = vector.shape_cast %718 : vector<1x1x1x64xf32> to vector<1x64xf32>
    %720 = vector.broadcast %719 : vector<1x64xf32> to vector<10x64xf32>
    %721 = arith.addf %717, %720 : vector<10x64xf32>
    %cst_352 = arith.constant 0.000000e+00 : f32
    %722 = vector.broadcast %cst_352 : f32 to vector<10x64xf32>
    %723 = arith.maximumf %721, %722 : vector<10x64xf32>
    %c1_353 = arith.constant 1 : index
    %c0_354 = arith.constant 0 : index
    %c0_355 = arith.constant 0 : index
    %c0_356 = arith.constant 0 : index
    %724 = vector.load %arg22[%c1_353, %c0_354, %c0_355, %c0_356] : memref<2x2x64x32xbf16, #tpu.memory_space<vmem>>, vector<1x1x64x32xbf16>
    %725 = vector.shape_cast %724 : vector<1x1x64x32xbf16> to vector<64x32xbf16>
    %726 = arith.truncf %723 : vector<10x64xf32> to vector<10x64xbf16>
    %cst_357 = arith.constant dense<0.000000e+00> : vector<10x32xf32>
    %727 = tpu.matmul %726, %725, %cst_357 {dimension_numbers = #tpu.dot_dimension_numbers<[1], [0], [0], [1], [0, 0, 1, 1], [], []>} : vector<10x64xbf16>, vector<64x32xbf16>, vector<10x32xf32> -> vector<10x32xf32>
    %c1_358 = arith.constant 1 : index
    %c0_359 = arith.constant 0 : index
    %c0_360 = arith.constant 0 : index
    %c0_361 = arith.constant 0 : index
    %728 = vector.load %arg23[%c1_358, %c0_359, %c0_360, %c0_361] : memref<2x2x1x32xf32, #tpu.memory_space<vmem>>, vector<1x1x1x32xf32>
    %729 = vector.shape_cast %728 : vector<1x1x1x32xf32> to vector<1x32xf32>
    %730 = vector.broadcast %729 : vector<1x32xf32> to vector<10x32xf32>
    %731 = arith.addf %727, %730 : vector<10x32xf32>
    %732 = arith.addf %713, %731 : vector<10x32xf32>
    %c0_362 = arith.constant 0 : index
    %c4 = arith.constant 4 : index
    %c0_363 = arith.constant 0 : index
    %c0_364 = arith.constant 0 : index
    %c0_365 = arith.constant 0 : index
    %733 = vector.load %arg24[%c0_362, %c4, %c0_363, %c0_364, %c0_365] : memref<2x5x2x1x32xf32, #tpu.memory_space<vmem>>, vector<1x1x1x1x32xf32>
    %734 = vector.shape_cast %733 : vector<1x1x1x1x32xf32> to vector<1x32xf32>
    %c0_366 = arith.constant 0 : index
    %c4_367 = arith.constant 4 : index
    %c1_368 = arith.constant 1 : index
    %c0_369 = arith.constant 0 : index
    %c0_370 = arith.constant 0 : index
    %735 = vector.load %arg24[%c0_366, %c4_367, %c1_368, %c0_369, %c0_370] : memref<2x5x2x1x32xf32, #tpu.memory_space<vmem>>, vector<1x1x1x1x32xf32>
    %736 = vector.shape_cast %735 : vector<1x1x1x1x32xf32> to vector<1x32xf32>
    %cst_371 = arith.constant dense<0.000000e+00> : vector<10xf32>
    %737 = vector.multi_reduction <add>, %732, %cst_371 [1] : vector<10x32xf32> to vector<10xf32>
    %738 = vector.shape_cast %737 : vector<10xf32> to vector<10x1xf32>
    %cst_372 = arith.constant 3.200000e+01 : f32
    %739 = vector.broadcast %cst_372 : f32 to vector<10x1xf32>
    %740 = arith.divf %738, %739 : vector<10x1xf32>
    %741 = vector.broadcast %740 : vector<10x1xf32> to vector<10x32xf32>
    %742 = arith.subf %732, %741 : vector<10x32xf32>
    %743 = arith.mulf %742, %742 : vector<10x32xf32>
    %cst_373 = arith.constant dense<0.000000e+00> : vector<10xf32>
    %744 = vector.multi_reduction <add>, %743, %cst_373 [1] : vector<10x32xf32> to vector<10xf32>
    %745 = vector.shape_cast %744 : vector<10xf32> to vector<10x1xf32>
    %cst_374 = arith.constant 3.200000e+01 : f32
    %746 = vector.broadcast %cst_374 : f32 to vector<10x1xf32>
    %747 = arith.divf %745, %746 : vector<10x1xf32>
    %748 = vector.broadcast %740 : vector<10x1xf32> to vector<10x32xf32>
    %749 = arith.subf %732, %748 : vector<10x32xf32>
    %cst_375 = arith.constant 9.99999974E-6 : f32
    %750 = vector.broadcast %cst_375 : f32 to vector<10x1xf32>
    %751 = arith.addf %747, %750 : vector<10x1xf32>
    %752 = math.rsqrt %751 : vector<10x1xf32>
    %753 = vector.broadcast %752 : vector<10x1xf32> to vector<10x32xf32>
    %754 = arith.mulf %749, %753 : vector<10x32xf32>
    %755 = vector.broadcast %734 : vector<1x32xf32> to vector<10x32xf32>
    %756 = arith.mulf %754, %755 : vector<10x32xf32>
    %757 = vector.broadcast %736 : vector<1x32xf32> to vector<10x32xf32>
    %758 = arith.addf %756, %757 : vector<10x32xf32>
    %c1_376 = arith.constant 1 : index
    %c1_377 = arith.constant 1 : index
    %c0_378 = arith.constant 0 : index
    %c0_379 = arith.constant 0 : index
    %759 = vector.load %arg14[%c1_376, %c1_377, %c0_378, %c0_379] : memref<2x2x32x96xbf16, #tpu.memory_space<vmem>>, vector<1x1x32x96xbf16>
    %760 = vector.shape_cast %759 : vector<1x1x32x96xbf16> to vector<32x96xbf16>
    %c1_380 = arith.constant 1 : index
    %c1_381 = arith.constant 1 : index
    %c0_382 = arith.constant 0 : index
    %c0_383 = arith.constant 0 : index
    %761 = vector.load %arg15[%c1_380, %c1_381, %c0_382, %c0_383] : memref<2x2x1x96xf32, #tpu.memory_space<vmem>>, vector<1x1x1x96xf32>
    %762 = vector.shape_cast %761 : vector<1x1x1x96xf32> to vector<1x96xf32>
    %c1_384 = arith.constant 1 : index
    %c1_385 = arith.constant 1 : index
    %c0_386 = arith.constant 0 : index
    %c0_387 = arith.constant 0 : index
    %763 = vector.load %arg16[%c1_384, %c1_385, %c0_386, %c0_387] : memref<4x2x32x32xbf16, #tpu.memory_space<vmem>>, vector<1x1x32x32xbf16>
    %764 = vector.shape_cast %763 : vector<1x1x32x32xbf16> to vector<32x32xbf16>
    %c1_388 = arith.constant 1 : index
    %c1_389 = arith.constant 1 : index
    %c0_390 = arith.constant 0 : index
    %c0_391 = arith.constant 0 : index
    %765 = vector.load %arg17[%c1_388, %c1_389, %c0_390, %c0_391] : memref<4x2x1x32xf32, #tpu.memory_space<vmem>>, vector<1x1x1x32xf32>
    %766 = vector.shape_cast %765 : vector<1x1x1x32xf32> to vector<1x32xf32>
    %767 = arith.truncf %758 : vector<10x32xf32> to vector<10x32xbf16>
    %cst_392 = arith.constant dense<0.000000e+00> : vector<10x96xf32>
    %768 = tpu.matmul %767, %760, %cst_392 {dimension_numbers = #tpu.dot_dimension_numbers<[1], [0], [0], [1], [0, 0, 1, 1], [], []>} : vector<10x32xbf16>, vector<32x96xbf16>, vector<10x96xf32> -> vector<10x96xf32>
    %769 = vector.broadcast %762 : vector<1x96xf32> to vector<10x96xf32>
    %770 = arith.addf %768, %769 : vector<10x96xf32>
    %771 = vector.extract_strided_slice %770 {offsets = [0, 0], sizes = [10, 32], strides = [1, 1]} : vector<10x96xf32> to vector<10x32xf32>
    %772 = vector.extract_strided_slice %770 {offsets = [0, 32], sizes = [10, 32], strides = [1, 1]} : vector<10x96xf32> to vector<10x32xf32>
    %773 = vector.extract_strided_slice %770 {offsets = [0, 64], sizes = [10, 32], strides = [1, 1]} : vector<10x96xf32> to vector<10x32xf32>
    %cst_393 = arith.constant 0.353553385 : f32
    %774 = vector.broadcast %cst_393 : f32 to vector<10x32xf32>
    %775 = arith.mulf %771, %774 : vector<10x32xf32>
    %cst_394 = arith.constant 0.000000e+00 : f32
    %776 = vector.broadcast %cst_394 : f32 to vector<10x32xf32>
    %777 = vector.broadcast %9 : vector<1x32xf32> to vector<10x32xf32>
    %778 = arith.mulf %775, %777 : vector<10x32xf32>
    %779 = arith.truncf %778 : vector<10x32xf32> to vector<10x32xbf16>
    %780 = arith.truncf %772 : vector<10x32xf32> to vector<10x32xbf16>
    %cst_395 = arith.constant dense<0.000000e+00> : vector<10x10xf32>
    %781 = tpu.matmul %779, %780, %cst_395 {dimension_numbers = #tpu.dot_dimension_numbers<[1], [1], [0], [0], [0, 0, 1, 0], [], []>} : vector<10x32xbf16>, vector<10x32xbf16>, vector<10x10xf32> -> vector<10x10xf32>
    %782 = arith.addf %781, %7 : vector<10x10xf32>
    %cst_396 = arith.constant dense<0xFF800000> : vector<10xf32>
    %783 = vector.multi_reduction <maximumf>, %782, %cst_396 [1] : vector<10x10xf32> to vector<10xf32>
    %784 = vector.shape_cast %783 : vector<10xf32> to vector<10x1xf32>
    %785 = vector.broadcast %784 : vector<10x1xf32> to vector<10x10xf32>
    %786 = arith.subf %782, %785 : vector<10x10xf32>
    %787 = math.exp %786 : vector<10x10xf32>
    %cst_397 = arith.constant dense<0.000000e+00> : vector<10xf32>
    %788 = vector.multi_reduction <add>, %787, %cst_397 [1] : vector<10x10xf32> to vector<10xf32>
    %789 = vector.shape_cast %788 : vector<10xf32> to vector<10x1xf32>
    %790 = vector.broadcast %789 : vector<10x1xf32> to vector<10x10xf32>
    %791 = arith.divf %787, %790 : vector<10x10xf32>
    %792 = vector.broadcast %9 : vector<1x32xf32> to vector<10x32xf32>
    %793 = arith.mulf %773, %792 : vector<10x32xf32>
    %794 = arith.truncf %791 : vector<10x10xf32> to vector<10x10xbf16>
    %795 = arith.truncf %793 : vector<10x32xf32> to vector<10x32xbf16>
    %cst_398 = arith.constant dense<0.000000e+00> : vector<10x32xf32>
    %796 = tpu.matmul %794, %795, %cst_398 {dimension_numbers = #tpu.dot_dimension_numbers<[1], [0], [0], [1], [0, 0, 1, 1], [], []>} : vector<10x10xbf16>, vector<10x32xbf16>, vector<10x32xf32> -> vector<10x32xf32>
    %797 = arith.addf %776, %796 : vector<10x32xf32>
    %798 = vector.broadcast %11 : vector<1x32xf32> to vector<10x32xf32>
    %799 = arith.mulf %775, %798 : vector<10x32xf32>
    %800 = arith.truncf %799 : vector<10x32xf32> to vector<10x32xbf16>
    %801 = arith.truncf %772 : vector<10x32xf32> to vector<10x32xbf16>
    %cst_399 = arith.constant dense<0.000000e+00> : vector<10x10xf32>
    %802 = tpu.matmul %800, %801, %cst_399 {dimension_numbers = #tpu.dot_dimension_numbers<[1], [1], [0], [0], [0, 0, 1, 0], [], []>} : vector<10x32xbf16>, vector<10x32xbf16>, vector<10x10xf32> -> vector<10x10xf32>
    %803 = arith.addf %802, %7 : vector<10x10xf32>
    %cst_400 = arith.constant dense<0xFF800000> : vector<10xf32>
    %804 = vector.multi_reduction <maximumf>, %803, %cst_400 [1] : vector<10x10xf32> to vector<10xf32>
    %805 = vector.shape_cast %804 : vector<10xf32> to vector<10x1xf32>
    %806 = vector.broadcast %805 : vector<10x1xf32> to vector<10x10xf32>
    %807 = arith.subf %803, %806 : vector<10x10xf32>
    %808 = math.exp %807 : vector<10x10xf32>
    %cst_401 = arith.constant dense<0.000000e+00> : vector<10xf32>
    %809 = vector.multi_reduction <add>, %808, %cst_401 [1] : vector<10x10xf32> to vector<10xf32>
    %810 = vector.shape_cast %809 : vector<10xf32> to vector<10x1xf32>
    %811 = vector.broadcast %810 : vector<10x1xf32> to vector<10x10xf32>
    %812 = arith.divf %808, %811 : vector<10x10xf32>
    %813 = vector.broadcast %11 : vector<1x32xf32> to vector<10x32xf32>
    %814 = arith.mulf %773, %813 : vector<10x32xf32>
    %815 = arith.truncf %812 : vector<10x10xf32> to vector<10x10xbf16>
    %816 = arith.truncf %814 : vector<10x32xf32> to vector<10x32xbf16>
    %cst_402 = arith.constant dense<0.000000e+00> : vector<10x32xf32>
    %817 = tpu.matmul %815, %816, %cst_402 {dimension_numbers = #tpu.dot_dimension_numbers<[1], [0], [0], [1], [0, 0, 1, 1], [], []>} : vector<10x10xbf16>, vector<10x32xbf16>, vector<10x32xf32> -> vector<10x32xf32>
    %818 = arith.addf %797, %817 : vector<10x32xf32>
    %819 = vector.broadcast %13 : vector<1x32xf32> to vector<10x32xf32>
    %820 = arith.mulf %775, %819 : vector<10x32xf32>
    %821 = arith.truncf %820 : vector<10x32xf32> to vector<10x32xbf16>
    %822 = arith.truncf %772 : vector<10x32xf32> to vector<10x32xbf16>
    %cst_403 = arith.constant dense<0.000000e+00> : vector<10x10xf32>
    %823 = tpu.matmul %821, %822, %cst_403 {dimension_numbers = #tpu.dot_dimension_numbers<[1], [1], [0], [0], [0, 0, 1, 0], [], []>} : vector<10x32xbf16>, vector<10x32xbf16>, vector<10x10xf32> -> vector<10x10xf32>
    %824 = arith.addf %823, %7 : vector<10x10xf32>
    %cst_404 = arith.constant dense<0xFF800000> : vector<10xf32>
    %825 = vector.multi_reduction <maximumf>, %824, %cst_404 [1] : vector<10x10xf32> to vector<10xf32>
    %826 = vector.shape_cast %825 : vector<10xf32> to vector<10x1xf32>
    %827 = vector.broadcast %826 : vector<10x1xf32> to vector<10x10xf32>
    %828 = arith.subf %824, %827 : vector<10x10xf32>
    %829 = math.exp %828 : vector<10x10xf32>
    %cst_405 = arith.constant dense<0.000000e+00> : vector<10xf32>
    %830 = vector.multi_reduction <add>, %829, %cst_405 [1] : vector<10x10xf32> to vector<10xf32>
    %831 = vector.shape_cast %830 : vector<10xf32> to vector<10x1xf32>
    %832 = vector.broadcast %831 : vector<10x1xf32> to vector<10x10xf32>
    %833 = arith.divf %829, %832 : vector<10x10xf32>
    %834 = vector.broadcast %13 : vector<1x32xf32> to vector<10x32xf32>
    %835 = arith.mulf %773, %834 : vector<10x32xf32>
    %836 = arith.truncf %833 : vector<10x10xf32> to vector<10x10xbf16>
    %837 = arith.truncf %835 : vector<10x32xf32> to vector<10x32xbf16>
    %cst_406 = arith.constant dense<0.000000e+00> : vector<10x32xf32>
    %838 = tpu.matmul %836, %837, %cst_406 {dimension_numbers = #tpu.dot_dimension_numbers<[1], [0], [0], [1], [0, 0, 1, 1], [], []>} : vector<10x10xbf16>, vector<10x32xbf16>, vector<10x32xf32> -> vector<10x32xf32>
    %839 = arith.addf %818, %838 : vector<10x32xf32>
    %840 = vector.broadcast %15 : vector<1x32xf32> to vector<10x32xf32>
    %841 = arith.mulf %775, %840 : vector<10x32xf32>
    %842 = arith.truncf %841 : vector<10x32xf32> to vector<10x32xbf16>
    %843 = arith.truncf %772 : vector<10x32xf32> to vector<10x32xbf16>
    %cst_407 = arith.constant dense<0.000000e+00> : vector<10x10xf32>
    %844 = tpu.matmul %842, %843, %cst_407 {dimension_numbers = #tpu.dot_dimension_numbers<[1], [1], [0], [0], [0, 0, 1, 0], [], []>} : vector<10x32xbf16>, vector<10x32xbf16>, vector<10x10xf32> -> vector<10x10xf32>
    %845 = arith.addf %844, %7 : vector<10x10xf32>
    %cst_408 = arith.constant dense<0xFF800000> : vector<10xf32>
    %846 = vector.multi_reduction <maximumf>, %845, %cst_408 [1] : vector<10x10xf32> to vector<10xf32>
    %847 = vector.shape_cast %846 : vector<10xf32> to vector<10x1xf32>
    %848 = vector.broadcast %847 : vector<10x1xf32> to vector<10x10xf32>
    %849 = arith.subf %845, %848 : vector<10x10xf32>
    %850 = math.exp %849 : vector<10x10xf32>
    %cst_409 = arith.constant dense<0.000000e+00> : vector<10xf32>
    %851 = vector.multi_reduction <add>, %850, %cst_409 [1] : vector<10x10xf32> to vector<10xf32>
    %852 = vector.shape_cast %851 : vector<10xf32> to vector<10x1xf32>
    %853 = vector.broadcast %852 : vector<10x1xf32> to vector<10x10xf32>
    %854 = arith.divf %850, %853 : vector<10x10xf32>
    %855 = vector.broadcast %15 : vector<1x32xf32> to vector<10x32xf32>
    %856 = arith.mulf %773, %855 : vector<10x32xf32>
    %857 = arith.truncf %854 : vector<10x10xf32> to vector<10x10xbf16>
    %858 = arith.truncf %856 : vector<10x32xf32> to vector<10x32xbf16>
    %cst_410 = arith.constant dense<0.000000e+00> : vector<10x32xf32>
    %859 = tpu.matmul %857, %858, %cst_410 {dimension_numbers = #tpu.dot_dimension_numbers<[1], [0], [0], [1], [0, 0, 1, 1], [], []>} : vector<10x10xbf16>, vector<10x32xbf16>, vector<10x32xf32> -> vector<10x32xf32>
    %860 = arith.addf %839, %859 : vector<10x32xf32>
    %861 = arith.truncf %860 : vector<10x32xf32> to vector<10x32xbf16>
    %cst_411 = arith.constant dense<0.000000e+00> : vector<10x32xf32>
    %862 = tpu.matmul %861, %764, %cst_411 {dimension_numbers = #tpu.dot_dimension_numbers<[1], [0], [0], [1], [0, 0, 1, 1], [], []>} : vector<10x32xbf16>, vector<32x32xbf16>, vector<10x32xf32> -> vector<10x32xf32>
    %863 = vector.broadcast %766 : vector<1x32xf32> to vector<10x32xf32>
    %864 = arith.addf %862, %863 : vector<10x32xf32>
    %865 = arith.addf %758, %864 : vector<10x32xf32>
    %c1_412 = arith.constant 1 : index
    %c2_413 = arith.constant 2 : index
    %c0_414 = arith.constant 0 : index
    %c0_415 = arith.constant 0 : index
    %c0_416 = arith.constant 0 : index
    %866 = vector.load %arg24[%c1_412, %c2_413, %c0_414, %c0_415, %c0_416] : memref<2x5x2x1x32xf32, #tpu.memory_space<vmem>>, vector<1x1x1x1x32xf32>
    %867 = vector.shape_cast %866 : vector<1x1x1x1x32xf32> to vector<1x32xf32>
    %c1_417 = arith.constant 1 : index
    %c2_418 = arith.constant 2 : index
    %c1_419 = arith.constant 1 : index
    %c0_420 = arith.constant 0 : index
    %c0_421 = arith.constant 0 : index
    %868 = vector.load %arg24[%c1_417, %c2_418, %c1_419, %c0_420, %c0_421] : memref<2x5x2x1x32xf32, #tpu.memory_space<vmem>>, vector<1x1x1x1x32xf32>
    %869 = vector.shape_cast %868 : vector<1x1x1x1x32xf32> to vector<1x32xf32>
    %cst_422 = arith.constant dense<0.000000e+00> : vector<10xf32>
    %870 = vector.multi_reduction <add>, %865, %cst_422 [1] : vector<10x32xf32> to vector<10xf32>
    %871 = vector.shape_cast %870 : vector<10xf32> to vector<10x1xf32>
    %cst_423 = arith.constant 3.200000e+01 : f32
    %872 = vector.broadcast %cst_423 : f32 to vector<10x1xf32>
    %873 = arith.divf %871, %872 : vector<10x1xf32>
    %874 = vector.broadcast %873 : vector<10x1xf32> to vector<10x32xf32>
    %875 = arith.subf %865, %874 : vector<10x32xf32>
    %876 = arith.mulf %875, %875 : vector<10x32xf32>
    %cst_424 = arith.constant dense<0.000000e+00> : vector<10xf32>
    %877 = vector.multi_reduction <add>, %876, %cst_424 [1] : vector<10x32xf32> to vector<10xf32>
    %878 = vector.shape_cast %877 : vector<10xf32> to vector<10x1xf32>
    %cst_425 = arith.constant 3.200000e+01 : f32
    %879 = vector.broadcast %cst_425 : f32 to vector<10x1xf32>
    %880 = arith.divf %878, %879 : vector<10x1xf32>
    %881 = vector.broadcast %873 : vector<10x1xf32> to vector<10x32xf32>
    %882 = arith.subf %865, %881 : vector<10x32xf32>
    %cst_426 = arith.constant 9.99999974E-6 : f32
    %883 = vector.broadcast %cst_426 : f32 to vector<10x1xf32>
    %884 = arith.addf %880, %883 : vector<10x1xf32>
    %885 = math.rsqrt %884 : vector<10x1xf32>
    %886 = vector.broadcast %885 : vector<10x1xf32> to vector<10x32xf32>
    %887 = arith.mulf %882, %886 : vector<10x32xf32>
    %888 = vector.broadcast %867 : vector<1x32xf32> to vector<10x32xf32>
    %889 = arith.mulf %887, %888 : vector<10x32xf32>
    %890 = vector.broadcast %869 : vector<1x32xf32> to vector<10x32xf32>
    %891 = arith.addf %889, %890 : vector<10x32xf32>
    %c3_427 = arith.constant 3 : index
    %c1_428 = arith.constant 1 : index
    %c0_429 = arith.constant 0 : index
    %c0_430 = arith.constant 0 : index
    %892 = vector.load %arg16[%c3_427, %c1_428, %c0_429, %c0_430] : memref<4x2x32x32xbf16, #tpu.memory_space<vmem>>, vector<1x1x32x32xbf16>
    %893 = vector.shape_cast %892 : vector<1x1x32x32xbf16> to vector<32x32xbf16>
    %894 = arith.truncf %891 : vector<10x32xf32> to vector<10x32xbf16>
    %cst_431 = arith.constant dense<0.000000e+00> : vector<10x32xf32>
    %895 = tpu.matmul %894, %893, %cst_431 {dimension_numbers = #tpu.dot_dimension_numbers<[1], [0], [0], [1], [0, 0, 1, 1], [], []>} : vector<10x32xbf16>, vector<32x32xbf16>, vector<10x32xf32> -> vector<10x32xf32>
    %c3_432 = arith.constant 3 : index
    %c1_433 = arith.constant 1 : index
    %c0_434 = arith.constant 0 : index
    %c0_435 = arith.constant 0 : index
    %896 = vector.load %arg17[%c3_432, %c1_433, %c0_434, %c0_435] : memref<4x2x1x32xf32, #tpu.memory_space<vmem>>, vector<1x1x1x32xf32>
    %897 = vector.shape_cast %896 : vector<1x1x1x32xf32> to vector<1x32xf32>
    %898 = vector.broadcast %897 : vector<1x32xf32> to vector<10x32xf32>
    %899 = arith.addf %895, %898 : vector<10x32xf32>
    %c1_436 = arith.constant 1 : index
    %c0_437 = arith.constant 0 : index
    %c0_438 = arith.constant 0 : index
    %900 = vector.load %arg18[%c1_436, %c0_437, %c0_438] : memref<2x32x64xbf16, #tpu.memory_space<vmem>>, vector<1x32x64xbf16>
    %901 = vector.shape_cast %900 : vector<1x32x64xbf16> to vector<32x64xbf16>
    %902 = arith.truncf %440 : vector<10x32xf32> to vector<10x32xbf16>
    %cst_439 = arith.constant dense<0.000000e+00> : vector<10x64xf32>
    %903 = tpu.matmul %902, %901, %cst_439 {dimension_numbers = #tpu.dot_dimension_numbers<[1], [0], [0], [1], [0, 0, 1, 1], [], []>} : vector<10x32xbf16>, vector<32x64xbf16>, vector<10x64xf32> -> vector<10x64xf32>
    %c1_440 = arith.constant 1 : index
    %c0_441 = arith.constant 0 : index
    %c0_442 = arith.constant 0 : index
    %904 = vector.load %arg19[%c1_440, %c0_441, %c0_442] : memref<2x1x64xf32, #tpu.memory_space<vmem>>, vector<1x1x64xf32>
    %905 = vector.shape_cast %904 : vector<1x1x64xf32> to vector<1x64xf32>
    %906 = vector.broadcast %905 : vector<1x64xf32> to vector<10x64xf32>
    %907 = arith.addf %903, %906 : vector<10x64xf32>
    %908 = vector.extract_strided_slice %907 {offsets = [0, 0], sizes = [10, 32], strides = [1, 1]} : vector<10x64xf32> to vector<10x32xf32>
    %909 = vector.extract_strided_slice %907 {offsets = [0, 32], sizes = [10, 32], strides = [1, 1]} : vector<10x64xf32> to vector<10x32xf32>
    %c2_443 = arith.constant 2 : index
    %c1_444 = arith.constant 1 : index
    %c0_445 = arith.constant 0 : index
    %c0_446 = arith.constant 0 : index
    %910 = vector.load %arg16[%c2_443, %c1_444, %c0_445, %c0_446] : memref<4x2x32x32xbf16, #tpu.memory_space<vmem>>, vector<1x1x32x32xbf16>
    %911 = vector.shape_cast %910 : vector<1x1x32x32xbf16> to vector<32x32xbf16>
    %c2_447 = arith.constant 2 : index
    %c1_448 = arith.constant 1 : index
    %c0_449 = arith.constant 0 : index
    %c0_450 = arith.constant 0 : index
    %912 = vector.load %arg17[%c2_447, %c1_448, %c0_449, %c0_450] : memref<4x2x1x32xf32, #tpu.memory_space<vmem>>, vector<1x1x1x32xf32>
    %913 = vector.shape_cast %912 : vector<1x1x1x32xf32> to vector<1x32xf32>
    %cst_451 = arith.constant 0.353553385 : f32
    %914 = vector.broadcast %cst_451 : f32 to vector<10x32xf32>
    %915 = arith.mulf %899, %914 : vector<10x32xf32>
    %cst_452 = arith.constant 0.000000e+00 : f32
    %916 = vector.broadcast %cst_452 : f32 to vector<10x32xf32>
    %917 = vector.broadcast %9 : vector<1x32xf32> to vector<10x32xf32>
    %918 = arith.mulf %915, %917 : vector<10x32xf32>
    %919 = arith.truncf %918 : vector<10x32xf32> to vector<10x32xbf16>
    %920 = arith.truncf %908 : vector<10x32xf32> to vector<10x32xbf16>
    %cst_453 = arith.constant dense<0.000000e+00> : vector<10x10xf32>
    %921 = tpu.matmul %919, %920, %cst_453 {dimension_numbers = #tpu.dot_dimension_numbers<[1], [1], [0], [0], [0, 0, 1, 0], [], []>} : vector<10x32xbf16>, vector<10x32xbf16>, vector<10x10xf32> -> vector<10x10xf32>
    %922 = arith.addf %921, %7 : vector<10x10xf32>
    %cst_454 = arith.constant dense<0xFF800000> : vector<10xf32>
    %923 = vector.multi_reduction <maximumf>, %922, %cst_454 [1] : vector<10x10xf32> to vector<10xf32>
    %924 = vector.shape_cast %923 : vector<10xf32> to vector<10x1xf32>
    %925 = vector.broadcast %924 : vector<10x1xf32> to vector<10x10xf32>
    %926 = arith.subf %922, %925 : vector<10x10xf32>
    %927 = math.exp %926 : vector<10x10xf32>
    %cst_455 = arith.constant dense<0.000000e+00> : vector<10xf32>
    %928 = vector.multi_reduction <add>, %927, %cst_455 [1] : vector<10x10xf32> to vector<10xf32>
    %929 = vector.shape_cast %928 : vector<10xf32> to vector<10x1xf32>
    %930 = vector.broadcast %929 : vector<10x1xf32> to vector<10x10xf32>
    %931 = arith.divf %927, %930 : vector<10x10xf32>
    %932 = vector.broadcast %9 : vector<1x32xf32> to vector<10x32xf32>
    %933 = arith.mulf %909, %932 : vector<10x32xf32>
    %934 = arith.truncf %931 : vector<10x10xf32> to vector<10x10xbf16>
    %935 = arith.truncf %933 : vector<10x32xf32> to vector<10x32xbf16>
    %cst_456 = arith.constant dense<0.000000e+00> : vector<10x32xf32>
    %936 = tpu.matmul %934, %935, %cst_456 {dimension_numbers = #tpu.dot_dimension_numbers<[1], [0], [0], [1], [0, 0, 1, 1], [], []>} : vector<10x10xbf16>, vector<10x32xbf16>, vector<10x32xf32> -> vector<10x32xf32>
    %937 = arith.addf %916, %936 : vector<10x32xf32>
    %938 = vector.broadcast %11 : vector<1x32xf32> to vector<10x32xf32>
    %939 = arith.mulf %915, %938 : vector<10x32xf32>
    %940 = arith.truncf %939 : vector<10x32xf32> to vector<10x32xbf16>
    %941 = arith.truncf %908 : vector<10x32xf32> to vector<10x32xbf16>
    %cst_457 = arith.constant dense<0.000000e+00> : vector<10x10xf32>
    %942 = tpu.matmul %940, %941, %cst_457 {dimension_numbers = #tpu.dot_dimension_numbers<[1], [1], [0], [0], [0, 0, 1, 0], [], []>} : vector<10x32xbf16>, vector<10x32xbf16>, vector<10x10xf32> -> vector<10x10xf32>
    %943 = arith.addf %942, %7 : vector<10x10xf32>
    %cst_458 = arith.constant dense<0xFF800000> : vector<10xf32>
    %944 = vector.multi_reduction <maximumf>, %943, %cst_458 [1] : vector<10x10xf32> to vector<10xf32>
    %945 = vector.shape_cast %944 : vector<10xf32> to vector<10x1xf32>
    %946 = vector.broadcast %945 : vector<10x1xf32> to vector<10x10xf32>
    %947 = arith.subf %943, %946 : vector<10x10xf32>
    %948 = math.exp %947 : vector<10x10xf32>
    %cst_459 = arith.constant dense<0.000000e+00> : vector<10xf32>
    %949 = vector.multi_reduction <add>, %948, %cst_459 [1] : vector<10x10xf32> to vector<10xf32>
    %950 = vector.shape_cast %949 : vector<10xf32> to vector<10x1xf32>
    %951 = vector.broadcast %950 : vector<10x1xf32> to vector<10x10xf32>
    %952 = arith.divf %948, %951 : vector<10x10xf32>
    %953 = vector.broadcast %11 : vector<1x32xf32> to vector<10x32xf32>
    %954 = arith.mulf %909, %953 : vector<10x32xf32>
    %955 = arith.truncf %952 : vector<10x10xf32> to vector<10x10xbf16>
    %956 = arith.truncf %954 : vector<10x32xf32> to vector<10x32xbf16>
    %cst_460 = arith.constant dense<0.000000e+00> : vector<10x32xf32>
    %957 = tpu.matmul %955, %956, %cst_460 {dimension_numbers = #tpu.dot_dimension_numbers<[1], [0], [0], [1], [0, 0, 1, 1], [], []>} : vector<10x10xbf16>, vector<10x32xbf16>, vector<10x32xf32> -> vector<10x32xf32>
    %958 = arith.addf %937, %957 : vector<10x32xf32>
    %959 = vector.broadcast %13 : vector<1x32xf32> to vector<10x32xf32>
    %960 = arith.mulf %915, %959 : vector<10x32xf32>
    %961 = arith.truncf %960 : vector<10x32xf32> to vector<10x32xbf16>
    %962 = arith.truncf %908 : vector<10x32xf32> to vector<10x32xbf16>
    %cst_461 = arith.constant dense<0.000000e+00> : vector<10x10xf32>
    %963 = tpu.matmul %961, %962, %cst_461 {dimension_numbers = #tpu.dot_dimension_numbers<[1], [1], [0], [0], [0, 0, 1, 0], [], []>} : vector<10x32xbf16>, vector<10x32xbf16>, vector<10x10xf32> -> vector<10x10xf32>
    %964 = arith.addf %963, %7 : vector<10x10xf32>
    %cst_462 = arith.constant dense<0xFF800000> : vector<10xf32>
    %965 = vector.multi_reduction <maximumf>, %964, %cst_462 [1] : vector<10x10xf32> to vector<10xf32>
    %966 = vector.shape_cast %965 : vector<10xf32> to vector<10x1xf32>
    %967 = vector.broadcast %966 : vector<10x1xf32> to vector<10x10xf32>
    %968 = arith.subf %964, %967 : vector<10x10xf32>
    %969 = math.exp %968 : vector<10x10xf32>
    %cst_463 = arith.constant dense<0.000000e+00> : vector<10xf32>
    %970 = vector.multi_reduction <add>, %969, %cst_463 [1] : vector<10x10xf32> to vector<10xf32>
    %971 = vector.shape_cast %970 : vector<10xf32> to vector<10x1xf32>
    %972 = vector.broadcast %971 : vector<10x1xf32> to vector<10x10xf32>
    %973 = arith.divf %969, %972 : vector<10x10xf32>
    %974 = vector.broadcast %13 : vector<1x32xf32> to vector<10x32xf32>
    %975 = arith.mulf %909, %974 : vector<10x32xf32>
    %976 = arith.truncf %973 : vector<10x10xf32> to vector<10x10xbf16>
    %977 = arith.truncf %975 : vector<10x32xf32> to vector<10x32xbf16>
    %cst_464 = arith.constant dense<0.000000e+00> : vector<10x32xf32>
    %978 = tpu.matmul %976, %977, %cst_464 {dimension_numbers = #tpu.dot_dimension_numbers<[1], [0], [0], [1], [0, 0, 1, 1], [], []>} : vector<10x10xbf16>, vector<10x32xbf16>, vector<10x32xf32> -> vector<10x32xf32>
    %979 = arith.addf %958, %978 : vector<10x32xf32>
    %980 = vector.broadcast %15 : vector<1x32xf32> to vector<10x32xf32>
    %981 = arith.mulf %915, %980 : vector<10x32xf32>
    %982 = arith.truncf %981 : vector<10x32xf32> to vector<10x32xbf16>
    %983 = arith.truncf %908 : vector<10x32xf32> to vector<10x32xbf16>
    %cst_465 = arith.constant dense<0.000000e+00> : vector<10x10xf32>
    %984 = tpu.matmul %982, %983, %cst_465 {dimension_numbers = #tpu.dot_dimension_numbers<[1], [1], [0], [0], [0, 0, 1, 0], [], []>} : vector<10x32xbf16>, vector<10x32xbf16>, vector<10x10xf32> -> vector<10x10xf32>
    %985 = arith.addf %984, %7 : vector<10x10xf32>
    %cst_466 = arith.constant dense<0xFF800000> : vector<10xf32>
    %986 = vector.multi_reduction <maximumf>, %985, %cst_466 [1] : vector<10x10xf32> to vector<10xf32>
    %987 = vector.shape_cast %986 : vector<10xf32> to vector<10x1xf32>
    %988 = vector.broadcast %987 : vector<10x1xf32> to vector<10x10xf32>
    %989 = arith.subf %985, %988 : vector<10x10xf32>
    %990 = math.exp %989 : vector<10x10xf32>
    %cst_467 = arith.constant dense<0.000000e+00> : vector<10xf32>
    %991 = vector.multi_reduction <add>, %990, %cst_467 [1] : vector<10x10xf32> to vector<10xf32>
    %992 = vector.shape_cast %991 : vector<10xf32> to vector<10x1xf32>
    %993 = vector.broadcast %992 : vector<10x1xf32> to vector<10x10xf32>
    %994 = arith.divf %990, %993 : vector<10x10xf32>
    %995 = vector.broadcast %15 : vector<1x32xf32> to vector<10x32xf32>
    %996 = arith.mulf %909, %995 : vector<10x32xf32>
    %997 = arith.truncf %994 : vector<10x10xf32> to vector<10x10xbf16>
    %998 = arith.truncf %996 : vector<10x32xf32> to vector<10x32xbf16>
    %cst_468 = arith.constant dense<0.000000e+00> : vector<10x32xf32>
    %999 = tpu.matmul %997, %998, %cst_468 {dimension_numbers = #tpu.dot_dimension_numbers<[1], [0], [0], [1], [0, 0, 1, 1], [], []>} : vector<10x10xbf16>, vector<10x32xbf16>, vector<10x32xf32> -> vector<10x32xf32>
    %1000 = arith.addf %979, %999 : vector<10x32xf32>
    %1001 = arith.truncf %1000 : vector<10x32xf32> to vector<10x32xbf16>
    %cst_469 = arith.constant dense<0.000000e+00> : vector<10x32xf32>
    %1002 = tpu.matmul %1001, %911, %cst_469 {dimension_numbers = #tpu.dot_dimension_numbers<[1], [0], [0], [1], [0, 0, 1, 1], [], []>} : vector<10x32xbf16>, vector<32x32xbf16>, vector<10x32xf32> -> vector<10x32xf32>
    %1003 = vector.broadcast %913 : vector<1x32xf32> to vector<10x32xf32>
    %1004 = arith.addf %1002, %1003 : vector<10x32xf32>
    %1005 = arith.addf %891, %1004 : vector<10x32xf32>
    %c1_470 = arith.constant 1 : index
    %c3_471 = arith.constant 3 : index
    %c0_472 = arith.constant 0 : index
    %c0_473 = arith.constant 0 : index
    %c0_474 = arith.constant 0 : index
    %1006 = vector.load %arg24[%c1_470, %c3_471, %c0_472, %c0_473, %c0_474] : memref<2x5x2x1x32xf32, #tpu.memory_space<vmem>>, vector<1x1x1x1x32xf32>
    %1007 = vector.shape_cast %1006 : vector<1x1x1x1x32xf32> to vector<1x32xf32>
    %c1_475 = arith.constant 1 : index
    %c3_476 = arith.constant 3 : index
    %c1_477 = arith.constant 1 : index
    %c0_478 = arith.constant 0 : index
    %c0_479 = arith.constant 0 : index
    %1008 = vector.load %arg24[%c1_475, %c3_476, %c1_477, %c0_478, %c0_479] : memref<2x5x2x1x32xf32, #tpu.memory_space<vmem>>, vector<1x1x1x1x32xf32>
    %1009 = vector.shape_cast %1008 : vector<1x1x1x1x32xf32> to vector<1x32xf32>
    %cst_480 = arith.constant dense<0.000000e+00> : vector<10xf32>
    %1010 = vector.multi_reduction <add>, %1005, %cst_480 [1] : vector<10x32xf32> to vector<10xf32>
    %1011 = vector.shape_cast %1010 : vector<10xf32> to vector<10x1xf32>
    %cst_481 = arith.constant 3.200000e+01 : f32
    %1012 = vector.broadcast %cst_481 : f32 to vector<10x1xf32>
    %1013 = arith.divf %1011, %1012 : vector<10x1xf32>
    %1014 = vector.broadcast %1013 : vector<10x1xf32> to vector<10x32xf32>
    %1015 = arith.subf %1005, %1014 : vector<10x32xf32>
    %1016 = arith.mulf %1015, %1015 : vector<10x32xf32>
    %cst_482 = arith.constant dense<0.000000e+00> : vector<10xf32>
    %1017 = vector.multi_reduction <add>, %1016, %cst_482 [1] : vector<10x32xf32> to vector<10xf32>
    %1018 = vector.shape_cast %1017 : vector<10xf32> to vector<10x1xf32>
    %cst_483 = arith.constant 3.200000e+01 : f32
    %1019 = vector.broadcast %cst_483 : f32 to vector<10x1xf32>
    %1020 = arith.divf %1018, %1019 : vector<10x1xf32>
    %1021 = vector.broadcast %1013 : vector<10x1xf32> to vector<10x32xf32>
    %1022 = arith.subf %1005, %1021 : vector<10x32xf32>
    %cst_484 = arith.constant 9.99999974E-6 : f32
    %1023 = vector.broadcast %cst_484 : f32 to vector<10x1xf32>
    %1024 = arith.addf %1020, %1023 : vector<10x1xf32>
    %1025 = math.rsqrt %1024 : vector<10x1xf32>
    %1026 = vector.broadcast %1025 : vector<10x1xf32> to vector<10x32xf32>
    %1027 = arith.mulf %1022, %1026 : vector<10x32xf32>
    %1028 = vector.broadcast %1007 : vector<1x32xf32> to vector<10x32xf32>
    %1029 = arith.mulf %1027, %1028 : vector<10x32xf32>
    %1030 = vector.broadcast %1009 : vector<1x32xf32> to vector<10x32xf32>
    %1031 = arith.addf %1029, %1030 : vector<10x32xf32>
    %c1_485 = arith.constant 1 : index
    %c1_486 = arith.constant 1 : index
    %c0_487 = arith.constant 0 : index
    %c0_488 = arith.constant 0 : index
    %1032 = vector.load %arg20[%c1_485, %c1_486, %c0_487, %c0_488] : memref<2x2x32x64xbf16, #tpu.memory_space<vmem>>, vector<1x1x32x64xbf16>
    %1033 = vector.shape_cast %1032 : vector<1x1x32x64xbf16> to vector<32x64xbf16>
    %1034 = arith.truncf %1031 : vector<10x32xf32> to vector<10x32xbf16>
    %cst_489 = arith.constant dense<0.000000e+00> : vector<10x64xf32>
    %1035 = tpu.matmul %1034, %1033, %cst_489 {dimension_numbers = #tpu.dot_dimension_numbers<[1], [0], [0], [1], [0, 0, 1, 1], [], []>} : vector<10x32xbf16>, vector<32x64xbf16>, vector<10x64xf32> -> vector<10x64xf32>
    %c1_490 = arith.constant 1 : index
    %c1_491 = arith.constant 1 : index
    %c0_492 = arith.constant 0 : index
    %c0_493 = arith.constant 0 : index
    %1036 = vector.load %arg21[%c1_490, %c1_491, %c0_492, %c0_493] : memref<2x2x1x64xf32, #tpu.memory_space<vmem>>, vector<1x1x1x64xf32>
    %1037 = vector.shape_cast %1036 : vector<1x1x1x64xf32> to vector<1x64xf32>
    %1038 = vector.broadcast %1037 : vector<1x64xf32> to vector<10x64xf32>
    %1039 = arith.addf %1035, %1038 : vector<10x64xf32>
    %cst_494 = arith.constant 0.000000e+00 : f32
    %1040 = vector.broadcast %cst_494 : f32 to vector<10x64xf32>
    %1041 = arith.maximumf %1039, %1040 : vector<10x64xf32>
    %c1_495 = arith.constant 1 : index
    %c1_496 = arith.constant 1 : index
    %c0_497 = arith.constant 0 : index
    %c0_498 = arith.constant 0 : index
    %1042 = vector.load %arg22[%c1_495, %c1_496, %c0_497, %c0_498] : memref<2x2x64x32xbf16, #tpu.memory_space<vmem>>, vector<1x1x64x32xbf16>
    %1043 = vector.shape_cast %1042 : vector<1x1x64x32xbf16> to vector<64x32xbf16>
    %1044 = arith.truncf %1041 : vector<10x64xf32> to vector<10x64xbf16>
    %cst_499 = arith.constant dense<0.000000e+00> : vector<10x32xf32>
    %1045 = tpu.matmul %1044, %1043, %cst_499 {dimension_numbers = #tpu.dot_dimension_numbers<[1], [0], [0], [1], [0, 0, 1, 1], [], []>} : vector<10x64xbf16>, vector<64x32xbf16>, vector<10x32xf32> -> vector<10x32xf32>
    %c1_500 = arith.constant 1 : index
    %c1_501 = arith.constant 1 : index
    %c0_502 = arith.constant 0 : index
    %c0_503 = arith.constant 0 : index
    %1046 = vector.load %arg23[%c1_500, %c1_501, %c0_502, %c0_503] : memref<2x2x1x32xf32, #tpu.memory_space<vmem>>, vector<1x1x1x32xf32>
    %1047 = vector.shape_cast %1046 : vector<1x1x1x32xf32> to vector<1x32xf32>
    %1048 = vector.broadcast %1047 : vector<1x32xf32> to vector<10x32xf32>
    %1049 = arith.addf %1045, %1048 : vector<10x32xf32>
    %1050 = arith.addf %1031, %1049 : vector<10x32xf32>
    %c1_504 = arith.constant 1 : index
    %c4_505 = arith.constant 4 : index
    %c0_506 = arith.constant 0 : index
    %c0_507 = arith.constant 0 : index
    %c0_508 = arith.constant 0 : index
    %1051 = vector.load %arg24[%c1_504, %c4_505, %c0_506, %c0_507, %c0_508] : memref<2x5x2x1x32xf32, #tpu.memory_space<vmem>>, vector<1x1x1x1x32xf32>
    %1052 = vector.shape_cast %1051 : vector<1x1x1x1x32xf32> to vector<1x32xf32>
    %c1_509 = arith.constant 1 : index
    %c4_510 = arith.constant 4 : index
    %c1_511 = arith.constant 1 : index
    %c0_512 = arith.constant 0 : index
    %c0_513 = arith.constant 0 : index
    %1053 = vector.load %arg24[%c1_509, %c4_510, %c1_511, %c0_512, %c0_513] : memref<2x5x2x1x32xf32, #tpu.memory_space<vmem>>, vector<1x1x1x1x32xf32>
    %1054 = vector.shape_cast %1053 : vector<1x1x1x1x32xf32> to vector<1x32xf32>
    %cst_514 = arith.constant dense<0.000000e+00> : vector<10xf32>
    %1055 = vector.multi_reduction <add>, %1050, %cst_514 [1] : vector<10x32xf32> to vector<10xf32>
    %1056 = vector.shape_cast %1055 : vector<10xf32> to vector<10x1xf32>
    %cst_515 = arith.constant 3.200000e+01 : f32
    %1057 = vector.broadcast %cst_515 : f32 to vector<10x1xf32>
    %1058 = arith.divf %1056, %1057 : vector<10x1xf32>
    %1059 = vector.broadcast %1058 : vector<10x1xf32> to vector<10x32xf32>
    %1060 = arith.subf %1050, %1059 : vector<10x32xf32>
    %1061 = arith.mulf %1060, %1060 : vector<10x32xf32>
    %cst_516 = arith.constant dense<0.000000e+00> : vector<10xf32>
    %1062 = vector.multi_reduction <add>, %1061, %cst_516 [1] : vector<10x32xf32> to vector<10xf32>
    %1063 = vector.shape_cast %1062 : vector<10xf32> to vector<10x1xf32>
    %cst_517 = arith.constant 3.200000e+01 : f32
    %1064 = vector.broadcast %cst_517 : f32 to vector<10x1xf32>
    %1065 = arith.divf %1063, %1064 : vector<10x1xf32>
    %1066 = vector.broadcast %1058 : vector<10x1xf32> to vector<10x32xf32>
    %1067 = arith.subf %1050, %1066 : vector<10x32xf32>
    %cst_518 = arith.constant 9.99999974E-6 : f32
    %1068 = vector.broadcast %cst_518 : f32 to vector<10x1xf32>
    %1069 = arith.addf %1065, %1068 : vector<10x1xf32>
    %1070 = math.rsqrt %1069 : vector<10x1xf32>
    %1071 = vector.broadcast %1070 : vector<10x1xf32> to vector<10x32xf32>
    %1072 = arith.mulf %1067, %1071 : vector<10x32xf32>
    %1073 = vector.broadcast %1052 : vector<1x32xf32> to vector<10x32xf32>
    %1074 = arith.mulf %1072, %1073 : vector<10x32xf32>
    %1075 = vector.broadcast %1054 : vector<1x32xf32> to vector<10x32xf32>
    %1076 = arith.addf %1074, %1075 : vector<10x32xf32>
    %c1_519 = arith.constant 1 : index
    %c0_520 = arith.constant 0 : index
    %c0_521 = arith.constant 0 : index
    %c0_522 = arith.constant 0 : index
    %1077 = vector.load %arg25[%c1_519, %c0_520, %c0_521, %c0_522] : memref<2x2x1x32xf32, #tpu.memory_space<vmem>>, vector<1x1x1x32xf32>
    %1078 = vector.shape_cast %1077 : vector<1x1x1x32xf32> to vector<1x32xf32>
    %c1_523 = arith.constant 1 : index
    %c1_524 = arith.constant 1 : index
    %c0_525 = arith.constant 0 : index
    %c0_526 = arith.constant 0 : index
    %1079 = vector.load %arg25[%c1_523, %c1_524, %c0_525, %c0_526] : memref<2x2x1x32xf32, #tpu.memory_space<vmem>>, vector<1x1x1x32xf32>
    %1080 = vector.shape_cast %1079 : vector<1x1x1x32xf32> to vector<1x32xf32>
    %cst_527 = arith.constant dense<0.000000e+00> : vector<10xf32>
    %1081 = vector.multi_reduction <add>, %1076, %cst_527 [1] : vector<10x32xf32> to vector<10xf32>
    %1082 = vector.shape_cast %1081 : vector<10xf32> to vector<10x1xf32>
    %cst_528 = arith.constant 3.200000e+01 : f32
    %1083 = vector.broadcast %cst_528 : f32 to vector<10x1xf32>
    %1084 = arith.divf %1082, %1083 : vector<10x1xf32>
    %1085 = vector.broadcast %1084 : vector<10x1xf32> to vector<10x32xf32>
    %1086 = arith.subf %1076, %1085 : vector<10x32xf32>
    %1087 = arith.mulf %1086, %1086 : vector<10x32xf32>
    %cst_529 = arith.constant dense<0.000000e+00> : vector<10xf32>
    %1088 = vector.multi_reduction <add>, %1087, %cst_529 [1] : vector<10x32xf32> to vector<10xf32>
    %1089 = vector.shape_cast %1088 : vector<10xf32> to vector<10x1xf32>
    %cst_530 = arith.constant 3.200000e+01 : f32
    %1090 = vector.broadcast %cst_530 : f32 to vector<10x1xf32>
    %1091 = arith.divf %1089, %1090 : vector<10x1xf32>
    %1092 = vector.broadcast %1084 : vector<10x1xf32> to vector<10x32xf32>
    %1093 = arith.subf %1076, %1092 : vector<10x32xf32>
    %cst_531 = arith.constant 9.99999974E-6 : f32
    %1094 = vector.broadcast %cst_531 : f32 to vector<10x1xf32>
    %1095 = arith.addf %1091, %1094 : vector<10x1xf32>
    %1096 = math.rsqrt %1095 : vector<10x1xf32>
    %1097 = vector.broadcast %1096 : vector<10x1xf32> to vector<10x32xf32>
    %1098 = arith.mulf %1093, %1097 : vector<10x32xf32>
    %1099 = vector.broadcast %1078 : vector<1x32xf32> to vector<10x32xf32>
    %1100 = arith.mulf %1098, %1099 : vector<10x32xf32>
    %1101 = vector.broadcast %1080 : vector<1x32xf32> to vector<10x32xf32>
    %1102 = arith.addf %1100, %1101 : vector<10x32xf32>
    %c0_532 = arith.constant 0 : index
    %c0_533 = arith.constant 0 : index
    %c0_534 = arith.constant 0 : index
    %1103 = vector.load %arg26[%c0_532, %c0_533, %c0_534] : memref<2x32x32xbf16, #tpu.memory_space<vmem>>, vector<1x32x32xbf16>
    %1104 = vector.shape_cast %1103 : vector<1x32x32xbf16> to vector<32x32xbf16>
    %1105 = arith.truncf %1102 : vector<10x32xf32> to vector<10x32xbf16>
    %cst_535 = arith.constant dense<0.000000e+00> : vector<10x32xf32>
    %1106 = tpu.matmul %1105, %1104, %cst_535 {dimension_numbers = #tpu.dot_dimension_numbers<[1], [0], [0], [1], [0, 0, 1, 1], [], []>} : vector<10x32xbf16>, vector<32x32xbf16>, vector<10x32xf32> -> vector<10x32xf32>
    %c0_536 = arith.constant 0 : index
    %c0_537 = arith.constant 0 : index
    %c0_538 = arith.constant 0 : index
    %1107 = vector.load %arg27[%c0_536, %c0_537, %c0_538] : memref<2x1x32xf32, #tpu.memory_space<vmem>>, vector<1x1x32xf32>
    %1108 = vector.shape_cast %1107 : vector<1x1x32xf32> to vector<1x32xf32>
    %1109 = vector.broadcast %1108 : vector<1x32xf32> to vector<10x32xf32>
    %1110 = arith.addf %1106, %1109 : vector<10x32xf32>
    %cst_539 = arith.constant 0.000000e+00 : f32
    %1111 = vector.broadcast %cst_539 : f32 to vector<10x32xf32>
    %1112 = arith.maximumf %1110, %1111 : vector<10x32xf32>
    %c1_540 = arith.constant 1 : index
    %c0_541 = arith.constant 0 : index
    %c0_542 = arith.constant 0 : index
    %1113 = vector.load %arg26[%c1_540, %c0_541, %c0_542] : memref<2x32x32xbf16, #tpu.memory_space<vmem>>, vector<1x32x32xbf16>
    %1114 = vector.shape_cast %1113 : vector<1x32x32xbf16> to vector<32x32xbf16>
    %1115 = arith.truncf %1112 : vector<10x32xf32> to vector<10x32xbf16>
    %cst_543 = arith.constant dense<0.000000e+00> : vector<10x32xf32>
    %1116 = tpu.matmul %1115, %1114, %cst_543 {dimension_numbers = #tpu.dot_dimension_numbers<[1], [0], [0], [1], [0, 0, 1, 1], [], []>} : vector<10x32xbf16>, vector<32x32xbf16>, vector<10x32xf32> -> vector<10x32xf32>
    %c1_544 = arith.constant 1 : index
    %c0_545 = arith.constant 0 : index
    %c0_546 = arith.constant 0 : index
    %1117 = vector.load %arg27[%c1_544, %c0_545, %c0_546] : memref<2x1x32xf32, #tpu.memory_space<vmem>>, vector<1x1x32xf32>
    %1118 = vector.shape_cast %1117 : vector<1x1x32xf32> to vector<1x32xf32>
    %1119 = vector.broadcast %1118 : vector<1x32xf32> to vector<10x32xf32>
    %1120 = arith.addf %1116, %1119 : vector<10x32xf32>
    %cst_547 = arith.constant 0.000000e+00 : f32
    %1121 = vector.broadcast %cst_547 : f32 to vector<10x32xf32>
    %1122 = arith.maximumf %1120, %1121 : vector<10x32xf32>
    %c0_548 = arith.constant 0 : index
    %c0_549 = arith.constant 0 : index
    %1123 = vector.load %arg28[%c0_548, %c0_549] : memref<32x4xbf16, #tpu.memory_space<vmem>>, vector<32x4xbf16>
    %1124 = arith.truncf %1122 : vector<10x32xf32> to vector<10x32xbf16>
    %cst_550 = arith.constant dense<0.000000e+00> : vector<10x4xf32>
    %1125 = tpu.matmul %1124, %1123, %cst_550 {dimension_numbers = #tpu.dot_dimension_numbers<[1], [0], [0], [1], [0, 0, 1, 1], [], []>} : vector<10x32xbf16>, vector<32x4xbf16>, vector<10x4xf32> -> vector<10x4xf32>
    %1126 = arith.addf %3, %1125 : vector<10x4xf32>
    %c0_551 = arith.constant 0 : index
    %c0_552 = arith.constant 0 : index
    %1127 = vector.load %arg29[%c0_551, %c0_552] : memref<1x4xf32, #tpu.memory_space<vmem>>, vector<1x4xf32>
    %1128 = vector.broadcast %1127 : vector<1x4xf32> to vector<10x4xf32>
    %1129 = arith.addf %1126, %1128 : vector<10x4xf32>
    %c0_553 = arith.constant 0 : index
    %1130 = arith.index_cast %arg1 : i32 to index
    %c0_554 = arith.constant 0 : index
    %c0_555 = arith.constant 0 : index
    %1131 = vector.load %arg30[%c0_553, %1130, %c0_554, %c0_555] : memref<1x4x10x4xf32, #tpu.memory_space<vmem>>, vector<1x1x10x4xf32>
    %1132 = vector.shape_cast %1131 : vector<1x1x10x4xf32> to vector<10x4xf32>
    %1133 = vector.shape_cast %1129 : vector<10x4xf32> to vector<1x1x10x4xf32>
    tpu.vector_store %arg30[%c0_553, %1130, %c0_554, %c0_555], %1133 {strides = array<i32>} : memref<1x4x10x4xf32, #tpu.memory_space<vmem>>, vector<1x1x10x4xf32>,
    %c0_556 = arith.constant 0 : index
    %c0_557 = arith.constant 0 : index
    %1134 = vector.load %arg32[%c0_556, %c0_557] : memref<10x4xf32, #tpu.memory_space<vmem>>, vector<10x4xf32>
    tpu.vector_store %arg32[%c0_556, %c0_557], %1129 {strides = array<i32>} : memref<10x4xf32, #tpu.memory_space<vmem>>, vector<10x4xf32>,
    %c0_558 = arith.constant 0 : index
    %c0_559 = arith.constant 0 : index
    %1135 = vector.load %arg31[%c0_558, %c0_559] : memref<10x32xf32, #tpu.memory_space<vmem>>, vector<10x32xf32>
    tpu.vector_store %arg31[%c0_558, %c0_559], %1102 {strides = array<i32>} : memref<10x32xf32, #tpu.memory_space<vmem>>, vector<10x32xf32>,
    return
  }
  func.func @transform_0(%arg0: i32, %arg1: i32) -> (i32, i32, i32) {
    %c0_i32 = arith.constant 0 : i32
    %c0_i32_0 = arith.constant 0 : i32
    %c0_i32_1 = arith.constant 0 : i32
    return %arg0, %c0_i32, %c0_i32_0 : i32, i32, i32
  }
  func.func @transform_1(%arg0: i32, %arg1: i32) -> (i32, i32, i32, i32) {
    %c0_i32 = arith.constant 0 : i32
    %c0_i32_0 = arith.constant 0 : i32
    %c0_i32_1 = arith.constant 0 : i32
    %c0_i32_2 = arith.constant 0 : i32
    return %arg0, %c0_i32, %c0_i32_0, %c0_i32_1 : i32, i32, i32, i32
  }
  func.func @transform_2(%arg0: i32, %arg1: i32) -> (i32, i32) {
    %c0_i32 = arith.constant 0 : i32
    %c0_i32_0 = arith.constant 0 : i32
    %c0_i32_1 = arith.constant 0 : i32
    return %c0_i32, %c0_i32_0 : i32, i32
  }
  func.func @transform_3(%arg0: i32, %arg1: i32) -> (i32, i32) {
    %c0_i32 = arith.constant 0 : i32
    %c0_i32_0 = arith.constant 0 : i32
    %c0_i32_1 = arith.constant 0 : i32
    return %c0_i32, %c0_i32_0 : i32, i32
  }
  func.func @transform_4(%arg0: i32, %arg1: i32) -> (i32, i32) {
    %c0_i32 = arith.constant 0 : i32
    %c0_i32_0 = arith.constant 0 : i32
    %c0_i32_1 = arith.constant 0 : i32
    return %c0_i32, %c0_i32_0 : i32, i32
  }
  func.func @transform_5(%arg0: i32, %arg1: i32) -> (i32, i32) {
    %c0_i32 = arith.constant 0 : i32
    %c0_i32_0 = arith.constant 0 : i32
    %c0_i32_1 = arith.constant 0 : i32
    return %c0_i32, %c0_i32_0 : i32, i32
  }
  func.func @transform_6(%arg0: i32, %arg1: i32) -> (i32, i32, i32) {
    %c0_i32 = arith.constant 0 : i32
    %c0_i32_0 = arith.constant 0 : i32
    %c0_i32_1 = arith.constant 0 : i32
    %c0_i32_2 = arith.constant 0 : i32
    return %c0_i32, %c0_i32_0, %c0_i32_1 : i32, i32, i32
  }
  func.func @transform_7(%arg0: i32, %arg1: i32) -> (i32, i32, i32) {
    %c0_i32 = arith.constant 0 : i32
    %c0_i32_0 = arith.constant 0 : i32
    %c0_i32_1 = arith.constant 0 : i32
    %c0_i32_2 = arith.constant 0 : i32
    return %c0_i32, %c0_i32_0, %c0_i32_1 : i32, i32, i32
  }
  func.func @transform_8(%arg0: i32, %arg1: i32) -> (i32, i32, i32) {
    %c0_i32 = arith.constant 0 : i32
    %c0_i32_0 = arith.constant 0 : i32
    %c0_i32_1 = arith.constant 0 : i32
    %c0_i32_2 = arith.constant 0 : i32
    return %c0_i32, %c0_i32_0, %c0_i32_1 : i32, i32, i32
  }
  func.func @transform_9(%arg0: i32, %arg1: i32) -> (i32, i32, i32, i32) {
    %c0_i32 = arith.constant 0 : i32
    %c0_i32_0 = arith.constant 0 : i32
    %c0_i32_1 = arith.constant 0 : i32
    %c0_i32_2 = arith.constant 0 : i32
    %c0_i32_3 = arith.constant 0 : i32
    return %c0_i32, %c0_i32_0, %c0_i32_1, %c0_i32_2 : i32, i32, i32, i32
  }
  func.func @transform_10(%arg0: i32, %arg1: i32) -> (i32, i32) {
    %c0_i32 = arith.constant 0 : i32
    %c0_i32_0 = arith.constant 0 : i32
    %c0_i32_1 = arith.constant 0 : i32
    return %c0_i32, %c0_i32_0 : i32, i32
  }
  func.func @transform_11(%arg0: i32, %arg1: i32) -> (i32, i32) {
    %c0_i32 = arith.constant 0 : i32
    %c0_i32_0 = arith.constant 0 : i32
    %c0_i32_1 = arith.constant 0 : i32
    return %c0_i32, %c0_i32_0 : i32, i32
  }
  func.func @transform_12(%arg0: i32, %arg1: i32) -> (i32, i32, i32, i32) {
    %c0_i32 = arith.constant 0 : i32
    %c0_i32_0 = arith.constant 0 : i32
    %c0_i32_1 = arith.constant 0 : i32
    %c0_i32_2 = arith.constant 0 : i32
    %c0_i32_3 = arith.constant 0 : i32
    return %c0_i32, %c0_i32_0, %c0_i32_1, %c0_i32_2 : i32, i32, i32, i32
  }
  func.func @transform_13(%arg0: i32, %arg1: i32) -> (i32, i32, i32, i32) {
    %c0_i32 = arith.constant 0 : i32
    %c0_i32_0 = arith.constant 0 : i32
    %c0_i32_1 = arith.constant 0 : i32
    %c0_i32_2 = arith.constant 0 : i32
    %c0_i32_3 = arith.constant 0 : i32
    return %c0_i32, %c0_i32_0, %c0_i32_1, %c0_i32_2 : i32, i32, i32, i32
  }
  func.func @transform_14(%arg0: i32, %arg1: i32) -> (i32, i32, i32, i32) {
    %c0_i32 = arith.constant 0 : i32
    %c0_i32_0 = arith.constant 0 : i32
    %c0_i32_1 = arith.constant 0 : i32
    %c0_i32_2 = arith.constant 0 : i32
    %c0_i32_3 = arith.constant 0 : i32
    return %c0_i32, %c0_i32_0, %c0_i32_1, %c0_i32_2 : i32, i32, i32, i32
  }
  func.func @transform_15(%arg0: i32, %arg1: i32) -> (i32, i32, i32, i32) {
    %c0_i32 = arith.constant 0 : i32
    %c0_i32_0 = arith.constant 0 : i32
    %c0_i32_1 = arith.constant 0 : i32
    %c0_i32_2 = arith.constant 0 : i32
    %c0_i32_3 = arith.constant 0 : i32
    return %c0_i32, %c0_i32_0, %c0_i32_1, %c0_i32_2 : i32, i32, i32, i32
  }
  func.func @transform_16(%arg0: i32, %arg1: i32) -> (i32, i32, i32) {
    %c0_i32 = arith.constant 0 : i32
    %c0_i32_0 = arith.constant 0 : i32
    %c0_i32_1 = arith.constant 0 : i32
    %c0_i32_2 = arith.constant 0 : i32
    return %c0_i32, %c0_i32_0, %c0_i32_1 : i32, i32, i32
  }
  func.func @transform_17(%arg0: i32, %arg1: i32) -> (i32, i32, i32) {
    %c0_i32 = arith.constant 0 : i32
    %c0_i32_0 = arith.constant 0 : i32
    %c0_i32_1 = arith.constant 0 : i32
    %c0_i32_2 = arith.constant 0 : i32
    return %c0_i32, %c0_i32_0, %c0_i32_1 : i32, i32, i32
  }
  func.func @transform_18(%arg0: i32, %arg1: i32) -> (i32, i32, i32, i32) {
    %c0_i32 = arith.constant 0 : i32
    %c0_i32_0 = arith.constant 0 : i32
    %c0_i32_1 = arith.constant 0 : i32
    %c0_i32_2 = arith.constant 0 : i32
    %c0_i32_3 = arith.constant 0 : i32
    return %c0_i32, %c0_i32_0, %c0_i32_1, %c0_i32_2 : i32, i32, i32, i32
  }
  func.func @transform_19(%arg0: i32, %arg1: i32) -> (i32, i32, i32, i32) {
    %c0_i32 = arith.constant 0 : i32
    %c0_i32_0 = arith.constant 0 : i32
    %c0_i32_1 = arith.constant 0 : i32
    %c0_i32_2 = arith.constant 0 : i32
    %c0_i32_3 = arith.constant 0 : i32
    return %c0_i32, %c0_i32_0, %c0_i32_1, %c0_i32_2 : i32, i32, i32, i32
  }
  func.func @transform_20(%arg0: i32, %arg1: i32) -> (i32, i32, i32, i32) {
    %c0_i32 = arith.constant 0 : i32
    %c0_i32_0 = arith.constant 0 : i32
    %c0_i32_1 = arith.constant 0 : i32
    %c0_i32_2 = arith.constant 0 : i32
    %c0_i32_3 = arith.constant 0 : i32
    return %c0_i32, %c0_i32_0, %c0_i32_1, %c0_i32_2 : i32, i32, i32, i32
  }
  func.func @transform_21(%arg0: i32, %arg1: i32) -> (i32, i32, i32, i32) {
    %c0_i32 = arith.constant 0 : i32
    %c0_i32_0 = arith.constant 0 : i32
    %c0_i32_1 = arith.constant 0 : i32
    %c0_i32_2 = arith.constant 0 : i32
    %c0_i32_3 = arith.constant 0 : i32
    return %c0_i32, %c0_i32_0, %c0_i32_1, %c0_i32_2 : i32, i32, i32, i32
  }
  func.func @transform_22(%arg0: i32, %arg1: i32) -> (i32, i32, i32, i32, i32) {
    %c0_i32 = arith.constant 0 : i32
    %c0_i32_0 = arith.constant 0 : i32
    %c0_i32_1 = arith.constant 0 : i32
    %c0_i32_2 = arith.constant 0 : i32
    %c0_i32_3 = arith.constant 0 : i32
    %c0_i32_4 = arith.constant 0 : i32
    return %c0_i32, %c0_i32_0, %c0_i32_1, %c0_i32_2, %c0_i32_3 : i32, i32, i32, i32, i32
  }
  func.func @transform_23(%arg0: i32, %arg1: i32) -> (i32, i32, i32, i32) {
    %c0_i32 = arith.constant 0 : i32
    %c0_i32_0 = arith.constant 0 : i32
    %c0_i32_1 = arith.constant 0 : i32
    %c0_i32_2 = arith.constant 0 : i32
    %c0_i32_3 = arith.constant 0 : i32
    return %c0_i32, %c0_i32_0, %c0_i32_1, %c0_i32_2 : i32, i32, i32, i32
  }
  func.func @transform_24(%arg0: i32, %arg1: i32) -> (i32, i32, i32) {
    %c0_i32 = arith.constant 0 : i32
    %c0_i32_0 = arith.constant 0 : i32
    %c0_i32_1 = arith.constant 0 : i32
    %c0_i32_2 = arith.constant 0 : i32
    return %c0_i32, %c0_i32_0, %c0_i32_1 : i32, i32, i32
  }
  func.func @transform_25(%arg0: i32, %arg1: i32) -> (i32, i32, i32) {
    %c0_i32 = arith.constant 0 : i32
    %c0_i32_0 = arith.constant 0 : i32
    %c0_i32_1 = arith.constant 0 : i32
    %c0_i32_2 = arith.constant 0 : i32
    return %c0_i32, %c0_i32_0, %c0_i32_1 : i32, i32, i32
  }
  func.func @transform_26(%arg0: i32, %arg1: i32) -> (i32, i32) {
    %c0_i32 = arith.constant 0 : i32
    %c0_i32_0 = arith.constant 0 : i32
    %c0_i32_1 = arith.constant 0 : i32
    return %c0_i32, %c0_i32_0 : i32, i32
  }
  func.func @transform_27(%arg0: i32, %arg1: i32) -> (i32, i32) {
    %c0_i32 = arith.constant 0 : i32
    %c0_i32_0 = arith.constant 0 : i32
    %c0_i32_1 = arith.constant 0 : i32
    return %c0_i32, %c0_i32_0 : i32, i32
  }
  func.func @transform_28(%arg0: i32, %arg1: i32) -> (i32, i32, i32, i32) {
    %c0_i32 = arith.constant 0 : i32
    %c0_i32_0 = arith.constant 0 : i32
    %c0_i32_1 = arith.constant 0 : i32
    %c0_i32_2 = arith.constant 0 : i32
    return %arg0, %c0_i32, %c0_i32_0, %c0_i32_1 : i32, i32, i32, i32
  }
}

</mosaic_0001>

<llo_original>
// kernel: squeeze.1
$region0: #{squeeze.1}
  %s0 = inlined_call_operand.vmem [shape: f32[2,1,5,4], index: 0, kind: input, shape index: {}]
  %s1 = inlined_call_operand.vmem [shape: f32[1,10,4], index: 1, kind: output, shape index: {}]
  $region1: #{squeeze.1} parent=0
    #allocation0 [shape = 'u8[4096]{0}', space=vmem, size = 0x1000, scoped, tag = 'scoped mem for output reshape']
    #allocation1 [shape = 'u8[16384]{0}', space=vmem, size = 0x4000, scoped, tag = 'scoped mem for input reshape']
    %s3 = sshllo.u32 0, 2
    %s4 = smul.addr 2, 3
    %s5 = scalar_lea.vmem %s0, %s4
    %v6 = vld [vmem:[%s5] sm:%s3]
    %s7 = scalar_lea.vmem [#allocation1], 24
    %8 = vst [vmem:[%s7] sm:%s3] %v6
    %s9 = smul.addr 2, 2
    %s10 = scalar_lea.vmem %s0, %s9
    %v11 = vld [vmem:[%s10] sm:%s3]
    %s12 = scalar_lea.vmem [#allocation1], 16
    %13 = vst [vmem:[%s12] sm:%s3] %v11
    %s14 = scalar_lea.vmem %s0, 2
    %v15 = vld [vmem:[%s14] sm:%s3]
    %s16 = scalar_lea.vmem [#allocation1], 8
    %17 = vst [vmem:[%s16] sm:%s3] %v15
    %v18 = vld [vmem:[%s0] sm:%s3]
    %19 = vst [vmem:[#allocation1] sm:%s3] %v18
    %v20 = vld [vmem:[#allocation1] ss:$8 sm:$0xf]
    %vm21 = vcmask 39936
    %22 = vst.msk [vmem:[#allocation0] sm:$0xf] %vm21, %v20
    %s23 = scalar_lea.vmem [#allocation1], 1
    %v24 = vld [vmem:[%s23] ss:$8 sm:$0xf]
    %25 = vrot.lane.b32.xlu0 %v24, 5
    %v26 = vpop.permute.xlu0 %25
    %vm27 = vcmask 80936
    %28 = vst.msk [vmem:[#allocation0] sm:$0xf] %vm27, %v26
    %s30 = sshllo.u32 0, 4
    %v32 = vld [vmem:[#allocation0] sm:%s30]
    %s33 = sshllo.u32 0, 4
    %34 = vst [vmem:[%s1] sm:%s33] %v32

// kernel: graph_rnn_decoder_forward.1
$region0: #{graph_rnn_decoder_forward.1}
  #allocation0 [shape = 'u32[]', space=smem, size = 0x4, offset = 0x4, fixed_abs, tag = 'smem constant byte address 0x4 - core index']
  #allocation1 [shape = 'u32[144,128]{1,0:T(1,128)}', space=vmem, size = 0x12000, scoped, tag = 'internal scratch']
  #allocation2 [shape = 'f32[10,32]{1,0:T(8,128)}', space=vmem, size = 0x2000, scoped, tag = 'scratch operand']
  #allocation3 [shape = 'f32[10,4]{1,0:T(8,128)}', space=vmem, size = 0x2000, scoped, tag = 'scratch operand']
  %s0 = inlined_call_operand.vmem [shape: f32[1,10,4], index: 0, kind: input, shape index: {}]
  %s1 = inlined_call_operand.vmem [shape: f32[1,1,40,2], index: 1, kind: input, shape index: {}]
  %s2 = inlined_call_operand.vmem [shape: bf16[40,10], index: 2, kind: input, shape index: {}]
  %s3 = inlined_call_operand.vmem [shape: bf16[40,10], index: 3, kind: input, shape index: {}]
  %s4 = inlined_call_operand.vmem [shape: bf16[10,40], index: 4, kind: input, shape index: {}]
  %s5 = inlined_call_operand.vmem [shape: f32[10,10], index: 5, kind: input, shape index: {}]
  %s6 = inlined_call_operand.vmem [shape: f32[4,1,32], index: 6, kind: input, shape index: {}]
  %s7 = inlined_call_operand.vmem [shape: bf16[2,64,32], index: 7, kind: input, shape index: {}]
  %s8 = inlined_call_operand.vmem [shape: bf16[2,32,32], index: 8, kind: input, shape index: {}]
  %s9 = inlined_call_operand.vmem [shape: f32[2,2,1,32], index: 9, kind: input, shape index: {}]
  %s10 = inlined_call_operand.vmem [shape: bf16[4,32], index: 10, kind: input, shape index: {}]
  %s11 = inlined_call_operand.vmem [shape: f32[1,32], index: 11, kind: input, shape index: {}]
  %s12 = inlined_call_operand.vmem [shape: bf16[2,2,32,96], index: 12, kind: input, shape index: {}]
  %s13 = inlined_call_operand.vmem [shape: f32[2,2,1,96], index: 13, kind: input, shape index: {}]
  %s14 = inlined_call_operand.vmem [shape: bf16[4,2,32,32], index: 14, kind: input, shape index: {}]
  %s15 = inlined_call_operand.vmem [shape: f32[4,2,1,32], index: 15, kind: input, shape index: {}]
  %s16 = inlined_call_operand.vmem [shape: bf16[2,32,64], index: 16, kind: input, shape index: {}]
  %s17 = inlined_call_operand.vmem [shape: f32[2,1,64], index: 17, kind: input, shape index: {}]
  %s18 = inlined_call_operand.vmem [shape: bf16[2,2,32,64], index: 18, kind: input, shape index: {}]
  %s19 = inlined_call_operand.vmem [shape: f32[2,2,1,64], index: 19, kind: input, shape index: {}]
  %s20 = inlined_call_operand.vmem [shape: bf16[2,2,64,32], index: 20, kind: input, shape index: {}]
  %s21 = inlined_call_operand.vmem [shape: f32[2,2,1,32], index: 21, kind: input, shape index: {}]
  %s22 = inlined_call_operand.vmem [shape: f32[2,5,2,1,32], index: 22, kind: input, shape index: {}]
  %s23 = inlined_call_operand.vmem [shape: f32[2,2,1,32], index: 23, kind: input, shape index: {}]
  %s24 = inlined_call_operand.vmem [shape: bf16[2,32,32], index: 24, kind: input, shape index: {}]
  %s25 = inlined_call_operand.vmem [shape: f32[2,1,32], index: 25, kind: input, shape index: {}]
  %s26 = inlined_call_operand.vmem [shape: bf16[32,4], index: 26, kind: input, shape index: {}]
  %s27 = inlined_call_operand.vmem [shape: f32[1,4], index: 27, kind: input, shape index: {}]
  %s28 = inlined_call_operand.vmem [shape: f32[1,4,10,4], index: 28, kind: output, shape index: {}]
  %s29 = sld [smem:[#allocation0]]
  $region149: #{graph_rnn_decoder_forward.1} parent=0
    _
  %s31 = ssub.s32 1, %s29
  %s32 = scalar_select 0, %s31, %s29
  loop: start=0, step=1, limit=6
  $region2: #{graph_rnn_decoder_forward.1} parent=0 // loop_pre_header
    _
  $region3: #{graph_rnn_decoder_forward.1} parent=0 // loop_header
    %s34 = sphi 0, %s38
    %p35 = scmp.ge.s32.totalorder %s34, 6
    %s41 = sphi 0, %s53
    %s42 = sphi 0, %s49
    %s43 = sphi 0, %s41
    %s44 = sphi 0, %s42
    %s45 = sphi 0, %s43
    %s46 = sphi 0, %s44
    %s56 = sphi 0, %s58
    %s59 = sphi 0, %s56
    %s60 = sphi 0, %s59
    %s76 = sphi 0, %s60
    %s82 = sphi 0, %s84
    %s85 = sphi 0, %s82
    %s86 = sphi 0, %s85
    %s102 = sphi 0, %s86
    %s106 = sphi 0, %s106
    %s108 = sphi 0, %s106
    %s109 = sphi 0, %s108
    %s123 = sphi 0, %s109
    %s127 = sphi 0, %s127
    %s129 = sphi 0, %s127
    %s130 = sphi 0, %s129
    %s144 = sphi 0, %s130
    %s148 = sphi 0, %s148
    %s150 = sphi 0, %s148
    %s151 = sphi 0, %s150
    %s165 = sphi 0, %s151
    %s169 = sphi 0, %s169
    %s171 = sphi 0, %s169
    %s172 = sphi 0, %s171
    %s186 = sphi 0, %s172
    %s190 = sphi 0, %s190
    %s192 = sphi 0, %s190
    %s193 = sphi 0, %s192
    %s207 = sphi 0, %s193
    %s211 = sphi 0, %s211
    %s213 = sphi 0, %s211
    %s214 = sphi 0, %s213
    %s228 = sphi 0, %s214
    %s232 = sphi 0, %s232
    %s234 = sphi 0, %s232
    %s235 = sphi 0, %s234
    %s249 = sphi 0, %s235
    %s253 = sphi 0, %s253
    %s255 = sphi 0, %s253
    %s256 = sphi 0, %s255
    %s270 = sphi 0, %s256
    %s274 = sphi 0, %s274
    %s276 = sphi 0, %s274
    %s277 = sphi 0, %s276
    %s291 = sphi 0, %s277
    %s295 = sphi 0, %s295
    %s297 = sphi 0, %s295
    %s298 = sphi 0, %s297
    %s312 = sphi 0, %s298
    %s316 = sphi 0, %s316
    %s318 = sphi 0, %s316
    %s319 = sphi 0, %s318
    %s333 = sphi 0, %s319
    %s337 = sphi 0, %s337
    %s339 = sphi 0, %s337
    %s340 = sphi 0, %s339
    %s354 = sphi 0, %s340
    %s358 = sphi 0, %s358
    %s360 = sphi 0, %s358
    %s361 = sphi 0, %s360
    %s375 = sphi 0, %s361
    %s379 = sphi 0, %s379
    %s381 = sphi 0, %s379
    %s382 = sphi 0, %s381
    %s396 = sphi 0, %s382
    %s400 = sphi 0, %s400
    %s402 = sphi 0, %s400
    %s403 = sphi 0, %s402
    %s417 = sphi 0, %s403
    %s421 = sphi 0, %s421
    %s423 = sphi 0, %s421
    %s424 = sphi 0, %s423
    %s438 = sphi 0, %s424
    %s442 = sphi 0, %s442
    %s444 = sphi 0, %s442
    %s445 = sphi 0, %s444
    %s459 = sphi 0, %s445
    %s463 = sphi 0, %s463
    %s465 = sphi 0, %s463
    %s466 = sphi 0, %s465
    %s480 = sphi 0, %s466
    %s484 = sphi 0, %s484
    %s486 = sphi 0, %s484
    %s487 = sphi 0, %s486
    %s501 = sphi 0, %s487
    %s505 = sphi 0, %s505
    %s507 = sphi 0, %s505
    %s508 = sphi 0, %s507
    %s522 = sphi 0, %s508
    %s526 = sphi 0, %s526
    %s528 = sphi 0, %s526
    %s529 = sphi 0, %s528
    %s543 = sphi 0, %s529
    %s547 = sphi 0, %s547
    %s549 = sphi 0, %s547
    %s550 = sphi 0, %s549
    %s564 = sphi 0, %s550
    %s568 = sphi 0, %s568
    %s570 = sphi 0, %s568
    %s571 = sphi 0, %s570
    %s585 = sphi 0, %s571
    %s589 = sphi 0, %s589
    %s591 = sphi 0, %s589
    %s592 = sphi 0, %s591
    %s606 = sphi 0, %s592
    %s610 = sphi 0, %s610
    %s612 = sphi 0, %s610
    %s613 = sphi 0, %s612
    %s627 = sphi 0, %s613
    %s631 = sphi 0, %s631
    %s633 = sphi 0, %s631
    %s634 = sphi 0, %s633
    %s648 = sphi 0, %s634
    %s654 = sphi 0, %s656
    %s657 = sphi 0, %s654
    %s658 = sphi 0, %s657
    %s674 = sphi 0, %s658
  $region4: #{graph_rnn_decoder_forward.1} parent=0 // loop_header_branch
    %37 = sbr.rel (%p35) target = $region8
  $region5: #{graph_rnn_decoder_forward.1} parent=0 // loop_body
    %s39 = ssub.s32 %s34, 1
    %s40 = ssub.s32 %s34, 2
    %s47 = sadd.s32 1, %s42
    %p48 = scmp.ge.s32.totalorder %s47, 4
    %s49 = scalar_select %p48, 0, %s47
    %s50 = sadd.s32 1, %s41
    %s51 = scalar_select %p48, %s50, %s41
    %p52 = scmp.ge.s32.totalorder %s51, 1
    %s53 = scalar_select %p52, 0, %s51
    %s54 = ssub.s32 %s41, %s53
    %p55 = scmp.eq.s32.totalorder %s54, 0
    %s57 = sadd.s32 %s56, 1
    %s58 = scalar_select %p55, %s56, %s57
    %p61 = pneg %p55
    %p62 = scmp.eq.s32.totalorder %s34, 3
    %p63 = por %p61, %p62
    %p64 = scmp.ne.s32.totalorder %s56, %s59
    %p65 = scmp.eq.s32.totalorder %s34, 0
    %p66 = por %p64, %p65
    %p67 = scmp.ne.s32.totalorder %s56, %s59
    %p68 = scmp.eq.s32.totalorder %s39, 3
    %p69 = por %p67, %p68
    %p70 = scmp.ne.s32.totalorder %s59, %s60
    %p71 = scmp.eq.s32.totalorder %s39, 0
    %p72 = por %p70, %p71
    %p73 = scmp.ne.s32.totalorder %s59, %s60
    %p74 = scmp.eq.s32.totalorder %s40, 3
    %p75 = por %p73, %p74
    %p77 = scmp.ne.s32.totalorder %s60, %s76
    %p78 = scmp.eq.s32.totalorder %s40, 0
    %p79 = por %p77, %p78
    %s80 = ssub.s32 %s41, %s53
    %p81 = scmp.eq.s32.totalorder %s80, 0
    %s83 = sadd.s32 %s82, 1
    %s84 = scalar_select %p81, %s82, %s83
    %p87 = pneg %p81
    %p88 = scmp.eq.s32.totalorder %s34, 3
    %p89 = por %p87, %p88
    %p90 = scmp.ne.s32.totalorder %s82, %s85
    %p91 = scmp.eq.s32.totalorder %s34, 0
    %p92 = por %p90, %p91
    %p93 = scmp.ne.s32.totalorder %s82, %s85
    %p94 = scmp.eq.s32.totalorder %s39, 3
    %p95 = por %p93, %p94
    %p96 = scmp.ne.s32.totalorder %s85, %s86
    %p97 = scmp.eq.s32.totalorder %s39, 0
    %p98 = por %p96, %p97
    %p99 = scmp.ne.s32.totalorder %s85, %s86
    %p100 = scmp.eq.s32.totalorder %s40, 3
    %p101 = por %p99, %p100
    %p103 = scmp.ne.s32.totalorder %s86, %s102
    %p104 = scmp.eq.s32.totalorder %s40, 0
    %p105 = por %p103, %p104
    %s107 = sadd.s32 %s106, 1
    %p110 = scmp.eq.s32.totalorder %s34, 3
    %p111 = scmp.ne.s32.totalorder %s106, %s108
    %p112 = scmp.eq.s32.totalorder %s34, 0
    %p113 = por %p111, %p112
    %p114 = scmp.ne.s32.totalorder %s106, %s108
    %p115 = scmp.eq.s32.totalorder %s39, 3
    %p116 = por %p114, %p115
    %p117 = scmp.ne.s32.totalorder %s108, %s109
    %p118 = scmp.eq.s32.totalorder %s39, 0
    %p119 = por %p117, %p118
    %p120 = scmp.ne.s32.totalorder %s108, %s109
    %p121 = scmp.eq.s32.totalorder %s40, 3
    %p122 = por %p120, %p121
    %p124 = scmp.ne.s32.totalorder %s109, %s123
    %p125 = scmp.eq.s32.totalorder %s40, 0
    %p126 = por %p124, %p125
    %s128 = sadd.s32 %s127, 1
    %p131 = scmp.eq.s32.totalorder %s34, 3
    %p132 = scmp.ne.s32.totalorder %s127, %s129
    %p133 = scmp.eq.s32.totalorder %s34, 0
    %p134 = por %p132, %p133
    %p135 = scmp.ne.s32.totalorder %s127, %s129
    %p136 = scmp.eq.s32.totalorder %s39, 3
    %p137 = por %p135, %p136
    %p138 = scmp.ne.s32.totalorder %s129, %s130
    %p139 = scmp.eq.s32.totalorder %s39, 0
    %p140 = por %p138, %p139
    %p141 = scmp.ne.s32.totalorder %s129, %s130
    %p142 = scmp.eq.s32.totalorder %s40, 3
    %p143 = por %p141, %p142
    %p145 = scmp.ne.s32.totalorder %s130, %s144
    %p146 = scmp.eq.s32.totalorder %s40, 0
    %p147 = por %p145, %p146
    %s149 = sadd.s32 %s148, 1
    %p152 = scmp.eq.s32.totalorder %s34, 3
    %p153 = scmp.ne.s32.totalorder %s148, %s150
    %p154 = scmp.eq.s32.totalorder %s34, 0
    %p155 = por %p153, %p154
    %p156 = scmp.ne.s32.totalorder %s148, %s150
    %p157 = scmp.eq.s32.totalorder %s39, 3
    %p158 = por %p156, %p157
    %p159 = scmp.ne.s32.totalorder %s150, %s151
    %p160 = scmp.eq.s32.totalorder %s39, 0
    %p161 = por %p159, %p160
    %p162 = scmp.ne.s32.totalorder %s150, %s151
    %p163 = scmp.eq.s32.totalorder %s40, 3
    %p164 = por %p162, %p163
    %p166 = scmp.ne.s32.totalorder %s151, %s165
    %p167 = scmp.eq.s32.totalorder %s40, 0
    %p168 = por %p166, %p167
    %s170 = sadd.s32 %s169, 1
    %p173 = scmp.eq.s32.totalorder %s34, 3
    %p174 = scmp.ne.s32.totalorder %s169, %s171
    %p175 = scmp.eq.s32.totalorder %s34, 0
    %p176 = por %p174, %p175
    %p177 = scmp.ne.s32.totalorder %s169, %s171
    %p178 = scmp.eq.s32.totalorder %s39, 3
    %p179 = por %p177, %p178
    %p180 = scmp.ne.s32.totalorder %s171, %s172
    %p181 = scmp.eq.s32.totalorder %s39, 0
    %p182 = por %p180, %p181
    %p183 = scmp.ne.s32.totalorder %s171, %s172
    %p184 = scmp.eq.s32.totalorder %s40, 3
    %p185 = por %p183, %p184
    %p187 = scmp.ne.s32.totalorder %s172, %s186
    %p188 = scmp.eq.s32.totalorder %s40, 0
    %p189 = por %p187, %p188
    %s191 = sadd.s32 %s190, 1
    %p194 = scmp.eq.s32.totalorder %s34, 3
    %p195 = scmp.ne.s32.totalorder %s190, %s192
    %p196 = scmp.eq.s32.totalorder %s34, 0
    %p197 = por %p195, %p196
    %p198 = scmp.ne.s32.totalorder %s190, %s192
    %p199 = scmp.eq.s32.totalorder %s39, 3
    %p200 = por %p198, %p199
    %p201 = scmp.ne.s32.totalorder %s192, %s193
    %p202 = scmp.eq.s32.totalorder %s39, 0
    %p203 = por %p201, %p202
    %p204 = scmp.ne.s32.totalorder %s192, %s193
    %p205 = scmp.eq.s32.totalorder %s40, 3
    %p206 = por %p204, %p205
    %p208 = scmp.ne.s32.totalorder %s193, %s207
    %p209 = scmp.eq.s32.totalorder %s40, 0
    %p210 = por %p208, %p209
    %s212 = sadd.s32 %s211, 1
    %p215 = scmp.eq.s32.totalorder %s34, 3
    %p216 = scmp.ne.s32.totalorder %s211, %s213
    %p217 = scmp.eq.s32.totalorder %s34, 0
    %p218 = por %p216, %p217
    %p219 = scmp.ne.s32.totalorder %s211, %s213
    %p220 = scmp.eq.s32.totalorder %s39, 3
    %p221 = por %p219, %p220
    %p222 = scmp.ne.s32.totalorder %s213, %s214
    %p223 = scmp.eq.s32.totalorder %s39, 0
    %p224 = por %p222, %p223
    %p225 = scmp.ne.s32.totalorder %s213, %s214
    %p226 = scmp.eq.s32.totalorder %s40, 3
    %p227 = por %p225, %p226
    %p229 = scmp.ne.s32.totalorder %s214, %s228
    %p230 = scmp.eq.s32.totalorder %s40, 0
    %p231 = por %p229, %p230
    %s233 = sadd.s32 %s232, 1
    %p236 = scmp.eq.s32.totalorder %s34, 3
    %p237 = scmp.ne.s32.totalorder %s232, %s234
    %p238 = scmp.eq.s32.totalorder %s34, 0
    %p239 = por %p237, %p238
    %p240 = scmp.ne.s32.totalorder %s232, %s234
    %p241 = scmp.eq.s32.totalorder %s39, 3
    %p242 = por %p240, %p241
    %p243 = scmp.ne.s32.totalorder %s234, %s235
    %p244 = scmp.eq.s32.totalorder %s39, 0
    %p245 = por %p243, %p244
    %p246 = scmp.ne.s32.totalorder %s234, %s235
    %p247 = scmp.eq.s32.totalorder %s40, 3
    %p248 = por %p246, %p247
    %p250 = scmp.ne.s32.totalorder %s235, %s249
    %p251 = scmp.eq.s32.totalorder %s40, 0
    %p252 = por %p250, %p251
    %s254 = sadd.s32 %s253, 1
    %p257 = scmp.eq.s32.totalorder %s34, 3
    %p258 = scmp.ne.s32.totalorder %s253, %s255
    %p259 = scmp.eq.s32.totalorder %s34, 0
    %p260 = por %p258, %p259
    %p261 = scmp.ne.s32.totalorder %s253, %s255
    %p262 = scmp.eq.s32.totalorder %s39, 3
    %p263 = por %p261, %p262
    %p264 = scmp.ne.s32.totalorder %s255, %s256
    %p265 = scmp.eq.s32.totalorder %s39, 0
    %p266 = por %p264, %p265
    %p267 = scmp.ne.s32.totalorder %s255, %s256
    %p268 = scmp.eq.s32.totalorder %s40, 3
    %p269 = por %p267, %p268
    %p271 = scmp.ne.s32.totalorder %s256, %s270
    %p272 = scmp.eq.s32.totalorder %s40, 0
    %p273 = por %p271, %p272
    %s275 = sadd.s32 %s274, 1
    %p278 = scmp.eq.s32.totalorder %s34, 3
    %p279 = scmp.ne.s32.totalorder %s274, %s276
    %p280 = scmp.eq.s32.totalorder %s34, 0
    %p281 = por %p279, %p280
    %p282 = scmp.ne.s32.totalorder %s274, %s276
    %p283 = scmp.eq.s32.totalorder %s39, 3
    %p284 = por %p282, %p283
    %p285 = scmp.ne.s32.totalorder %s276, %s277
    %p286 = scmp.eq.s32.totalorder %s39, 0
    %p287 = por %p285, %p286
    %p288 = scmp.ne.s32.totalorder %s276, %s277
    %p289 = scmp.eq.s32.totalorder %s40, 3
    %p290 = por %p288, %p289
    %p292 = scmp.ne.s32.totalorder %s277, %s291
    %p293 = scmp.eq.s32.totalorder %s40, 0
    %p294 = por %p292, %p293
    %s296 = sadd.s32 %s295, 1
    %p299 = scmp.eq.s32.totalorder %s34, 3
    %p300 = scmp.ne.s32.totalorder %s295, %s297
    %p301 = scmp.eq.s32.totalorder %s34, 0
    %p302 = por %p300, %p301
    %p303 = scmp.ne.s32.totalorder %s295, %s297
    %p304 = scmp.eq.s32.totalorder %s39, 3
    %p305 = por %p303, %p304
    %p306 = scmp.ne.s32.totalorder %s297, %s298
    %p307 = scmp.eq.s32.totalorder %s39, 0
    %p308 = por %p306, %p307
    %p309 = scmp.ne.s32.totalorder %s297, %s298
    %p310 = scmp.eq.s32.totalorder %s40, 3
    %p311 = por %p309, %p310
    %p313 = scmp.ne.s32.totalorder %s298, %s312
    %p314 = scmp.eq.s32.totalorder %s40, 0
    %p315 = por %p313, %p314
    %s317 = sadd.s32 %s316, 1
    %p320 = scmp.eq.s32.totalorder %s34, 3
    %p321 = scmp.ne.s32.totalorder %s316, %s318
    %p322 = scmp.eq.s32.totalorder %s34, 0
    %p323 = por %p321, %p322
    %p324 = scmp.ne.s32.totalorder %s316, %s318
    %p325 = scmp.eq.s32.totalorder %s39, 3
    %p326 = por %p324, %p325
    %p327 = scmp.ne.s32.totalorder %s318, %s319
    %p328 = scmp.eq.s32.totalorder %s39, 0
    %p329 = por %p327, %p328
    %p330 = scmp.ne.s32.totalorder %s318, %s319
    %p331 = scmp.eq.s32.totalorder %s40, 3
    %p332 = por %p330, %p331
    %p334 = scmp.ne.s32.totalorder %s319, %s333
    %p335 = scmp.eq.s32.totalorder %s40, 0
    %p336 = por %p334, %p335
    %s338 = sadd.s32 %s337, 1
    %p341 = scmp.eq.s32.totalorder %s34, 3
    %p342 = scmp.ne.s32.totalorder %s337, %s339
    %p343 = scmp.eq.s32.totalorder %s34, 0
    %p344 = por %p342, %p343
    %p345 = scmp.ne.s32.totalorder %s337, %s339
    %p346 = scmp.eq.s32.totalorder %s39, 3
    %p347 = por %p345, %p346
    %p348 = scmp.ne.s32.totalorder %s339, %s340
    %p349 = scmp.eq.s32.totalorder %s39, 0
    %p350 = por %p348, %p349
    %p351 = scmp.ne.s32.totalorder %s339, %s340
    %p352 = scmp.eq.s32.totalorder %s40, 3
    %p353 = por %p351, %p352
    %p355 = scmp.ne.s32.totalorder %s340, %s354
    %p356 = scmp.eq.s32.totalorder %s40, 0
    %p357 = por %p355, %p356
    %s359 = sadd.s32 %s358, 1
    %p362 = scmp.eq.s32.totalorder %s34, 3
    %p363 = scmp.ne.s32.totalorder %s358, %s360
    %p364 = scmp.eq.s32.totalorder %s34, 0
    %p365 = por %p363, %p364
    %p366 = scmp.ne.s32.totalorder %s358, %s360
    %p367 = scmp.eq.s32.totalorder %s39, 3
    %p368 = por %p366, %p367
    %p369 = scmp.ne.s32.totalorder %s360, %s361
    %p370 = scmp.eq.s32.totalorder %s39, 0
    %p371 = por %p369, %p370
    %p372 = scmp.ne.s32.totalorder %s360, %s361
    %p373 = scmp.eq.s32.totalorder %s40, 3
    %p374 = por %p372, %p373
    %p376 = scmp.ne.s32.totalorder %s361, %s375
    %p377 = scmp.eq.s32.totalorder %s40, 0
    %p378 = por %p376, %p377
    %s380 = sadd.s32 %s379, 1
    %p383 = scmp.eq.s32.totalorder %s34, 3
    %p384 = scmp.ne.s32.totalorder %s379, %s381
    %p385 = scmp.eq.s32.totalorder %s34, 0
    %p386 = por %p384, %p385
    %p387 = scmp.ne.s32.totalorder %s379, %s381
    %p388 = scmp.eq.s32.totalorder %s39, 3
    %p389 = por %p387, %p388
    %p390 = scmp.ne.s32.totalorder %s381, %s382
    %p391 = scmp.eq.s32.totalorder %s39, 0
    %p392 = por %p390, %p391
    %p393 = scmp.ne.s32.totalorder %s381, %s382
    %p394 = scmp.eq.s32.totalorder %s40, 3
    %p395 = por %p393, %p394
    %p397 = scmp.ne.s32.totalorder %s382, %s396
    %p398 = scmp.eq.s32.totalorder %s40, 0
    %p399 = por %p397, %p398
    %s401 = sadd.s32 %s400, 1
    %p404 = scmp.eq.s32.totalorder %s34, 3
    %p405 = scmp.ne.s32.totalorder %s400, %s402
    %p406 = scmp.eq.s32.totalorder %s34, 0
    %p407 = por %p405, %p406
    %p408 = scmp.ne.s32.totalorder %s400, %s402
    %p409 = scmp.eq.s32.totalorder %s39, 3
    %p410 = por %p408, %p409
    %p411 = scmp.ne.s32.totalorder %s402, %s403
    %p412 = scmp.eq.s32.totalorder %s39, 0
    %p413 = por %p411, %p412
    %p414 = scmp.ne.s32.totalorder %s402, %s403
    %p415 = scmp.eq.s32.totalorder %s40, 3
    %p416 = por %p414, %p415
    %p418 = scmp.ne.s32.totalorder %s403, %s417
    %p419 = scmp.eq.s32.totalorder %s40, 0
    %p420 = por %p418, %p419
    %s422 = sadd.s32 %s421, 1
    %p425 = scmp.eq.s32.totalorder %s34, 3
    %p426 = scmp.ne.s32.totalorder %s421, %s423
    %p427 = scmp.eq.s32.totalorder %s34, 0
    %p428 = por %p426, %p427
    %p429 = scmp.ne.s32.totalorder %s421, %s423
    %p430 = scmp.eq.s32.totalorder %s39, 3
    %p431 = por %p429, %p430
    %p432 = scmp.ne.s32.totalorder %s423, %s424
    %p433 = scmp.eq.s32.totalorder %s39, 0
    %p434 = por %p432, %p433
    %p435 = scmp.ne.s32.totalorder %s423, %s424
    %p436 = scmp.eq.s32.totalorder %s40, 3
    %p437 = por %p435, %p436
    %p439 = scmp.ne.s32.totalorder %s424, %s438
    %p440 = scmp.eq.s32.totalorder %s40, 0
    %p441 = por %p439, %p440
    %s443 = sadd.s32 %s442, 1
    %p446 = scmp.eq.s32.totalorder %s34, 3
    %p447 = scmp.ne.s32.totalorder %s442, %s444
    %p448 = scmp.eq.s32.totalorder %s34, 0
    %p449 = por %p447, %p448
    %p450 = scmp.ne.s32.totalorder %s442, %s444
    %p451 = scmp.eq.s32.totalorder %s39, 3
    %p452 = por %p450, %p451
    %p453 = scmp.ne.s32.totalorder %s444, %s445
    %p454 = scmp.eq.s32.totalorder %s39, 0
    %p455 = por %p453, %p454
    %p456 = scmp.ne.s32.totalorder %s444, %s445
    %p457 = scmp.eq.s32.totalorder %s40, 3
    %p458 = por %p456, %p457
    %p460 = scmp.ne.s32.totalorder %s445, %s459
    %p461 = scmp.eq.s32.totalorder %s40, 0
    %p462 = por %p460, %p461
    %s464 = sadd.s32 %s463, 1
    %p467 = scmp.eq.s32.totalorder %s34, 3
    %p468 = scmp.ne.s32.totalorder %s463, %s465
    %p469 = scmp.eq.s32.totalorder %s34, 0
    %p470 = por %p468, %p469
    %p471 = scmp.ne.s32.totalorder %s463, %s465
    %p472 = scmp.eq.s32.totalorder %s39, 3
    %p473 = por %p471, %p472
    %p474 = scmp.ne.s32.totalorder %s465, %s466
    %p475 = scmp.eq.s32.totalorder %s39, 0
    %p476 = por %p474, %p475
    %p477 = scmp.ne.s32.totalorder %s465, %s466
    %p478 = scmp.eq.s32.totalorder %s40, 3
    %p479 = por %p477, %p478
    %p481 = scmp.ne.s32.totalorder %s466, %s480
    %p482 = scmp.eq.s32.totalorder %s40, 0
    %p483 = por %p481, %p482
    %s485 = sadd.s32 %s484, 1
    %p488 = scmp.eq.s32.totalorder %s34, 3
    %p489 = scmp.ne.s32.totalorder %s484, %s486
    %p490 = scmp.eq.s32.totalorder %s34, 0
    %p491 = por %p489, %p490
    %p492 = scmp.ne.s32.totalorder %s484, %s486
    %p493 = scmp.eq.s32.totalorder %s39, 3
    %p494 = por %p492, %p493
    %p495 = scmp.ne.s32.totalorder %s486, %s487
    %p496 = scmp.eq.s32.totalorder %s39, 0
    %p497 = por %p495, %p496
    %p498 = scmp.ne.s32.totalorder %s486, %s487
    %p499 = scmp.eq.s32.totalorder %s40, 3
    %p500 = por %p498, %p499
    %p502 = scmp.ne.s32.totalorder %s487, %s501
    %p503 = scmp.eq.s32.totalorder %s40, 0
    %p504 = por %p502, %p503
    %s506 = sadd.s32 %s505, 1
    %p509 = scmp.eq.s32.totalorder %s34, 3
    %p510 = scmp.ne.s32.totalorder %s505, %s507
    %p511 = scmp.eq.s32.totalorder %s34, 0
    %p512 = por %p510, %p511
    %p513 = scmp.ne.s32.totalorder %s505, %s507
    %p514 = scmp.eq.s32.totalorder %s39, 3
    %p515 = por %p513, %p514
    %p516 = scmp.ne.s32.totalorder %s507, %s508
    %p517 = scmp.eq.s32.totalorder %s39, 0
    %p518 = por %p516, %p517
    %p519 = scmp.ne.s32.totalorder %s507, %s508
    %p520 = scmp.eq.s32.totalorder %s40, 3
    %p521 = por %p519, %p520
    %p523 = scmp.ne.s32.totalorder %s508, %s522
    %p524 = scmp.eq.s32.totalorder %s40, 0
    %p525 = por %p523, %p524
    %s527 = sadd.s32 %s526, 1
    %p530 = scmp.eq.s32.totalorder %s34, 3
    %p531 = scmp.ne.s32.totalorder %s526, %s528
    %p532 = scmp.eq.s32.totalorder %s34, 0
    %p533 = por %p531, %p532
    %p534 = scmp.ne.s32.totalorder %s526, %s528
    %p535 = scmp.eq.s32.totalorder %s39, 3
    %p536 = por %p534, %p535
    %p537 = scmp.ne.s32.totalorder %s528, %s529
    %p538 = scmp.eq.s32.totalorder %s39, 0
    %p539 = por %p537, %p538
    %p540 = scmp.ne.s32.totalorder %s528, %s529
    %p541 = scmp.eq.s32.totalorder %s40, 3
    %p542 = por %p540, %p541
    %p544 = scmp.ne.s32.totalorder %s529, %s543
    %p545 = scmp.eq.s32.totalorder %s40, 0
    %p546 = por %p544, %p545
    %s548 = sadd.s32 %s547, 1
    %p551 = scmp.eq.s32.totalorder %s34, 3
    %p552 = scmp.ne.s32.totalorder %s547, %s549
    %p553 = scmp.eq.s32.totalorder %s34, 0
    %p554 = por %p552, %p553
    %p555 = scmp.ne.s32.totalorder %s547, %s549
    %p556 = scmp.eq.s32.totalorder %s39, 3
    %p557 = por %p555, %p556
    %p558 = scmp.ne.s32.totalorder %s549, %s550
    %p559 = scmp.eq.s32.totalorder %s39, 0
    %p560 = por %p558, %p559
    %p561 = scmp.ne.s32.totalorder %s549, %s550
    %p562 = scmp.eq.s32.totalorder %s40, 3
    %p563 = por %p561, %p562
    %p565 = scmp.ne.s32.totalorder %s550, %s564
    %p566 = scmp.eq.s32.totalorder %s40, 0
    %p567 = por %p565, %p566
    %s569 = sadd.s32 %s568, 1
    %p572 = scmp.eq.s32.totalorder %s34, 3
    %p573 = scmp.ne.s32.totalorder %s568, %s570
    %p574 = scmp.eq.s32.totalorder %s34, 0
    %p575 = por %p573, %p574
    %p576 = scmp.ne.s32.totalorder %s568, %s570
    %p577 = scmp.eq.s32.totalorder %s39, 3
    %p578 = por %p576, %p577
    %p579 = scmp.ne.s32.totalorder %s570, %s571
    %p580 = scmp.eq.s32.totalorder %s39, 0
    %p581 = por %p579, %p580
    %p582 = scmp.ne.s32.totalorder %s570, %s571
    %p583 = scmp.eq.s32.totalorder %s40, 3
    %p584 = por %p582, %p583
    %p586 = scmp.ne.s32.totalorder %s571, %s585
    %p587 = scmp.eq.s32.totalorder %s40, 0
    %p588 = por %p586, %p587
    %s590 = sadd.s32 %s589, 1
    %p593 = scmp.eq.s32.totalorder %s34, 3
    %p594 = scmp.ne.s32.totalorder %s589, %s591
    %p595 = scmp.eq.s32.totalorder %s34, 0
    %p596 = por %p594, %p595
    %p597 = scmp.ne.s32.totalorder %s589, %s591
    %p598 = scmp.eq.s32.totalorder %s39, 3
    %p599 = por %p597, %p598
    %p600 = scmp.ne.s32.totalorder %s591, %s592
    %p601 = scmp.eq.s32.totalorder %s39, 0
    %p602 = por %p600, %p601
    %p603 = scmp.ne.s32.totalorder %s591, %s592
    %p604 = scmp.eq.s32.totalorder %s40, 3
    %p605 = por %p603, %p604
    %p607 = scmp.ne.s32.totalorder %s592, %s606
    %p608 = scmp.eq.s32.totalorder %s40, 0
    %p609 = por %p607, %p608
    %s611 = sadd.s32 %s610, 1
    %p614 = scmp.eq.s32.totalorder %s34, 3
    %p615 = scmp.ne.s32.totalorder %s610, %s612
    %p616 = scmp.eq.s32.totalorder %s34, 0
    %p617 = por %p615, %p616
    %p618 = scmp.ne.s32.totalorder %s610, %s612
    %p619 = scmp.eq.s32.totalorder %s39, 3
    %p620 = por %p618, %p619
    %p621 = scmp.ne.s32.totalorder %s612, %s613
    %p622 = scmp.eq.s32.totalorder %s39, 0
    %p623 = por %p621, %p622
    %p624 = scmp.ne.s32.totalorder %s612, %s613
    %p625 = scmp.eq.s32.totalorder %s40, 3
    %p626 = por %p624, %p625
    %p628 = scmp.ne.s32.totalorder %s613, %s627
    %p629 = scmp.eq.s32.totalorder %s40, 0
    %p630 = por %p628, %p629
    %s632 = sadd.s32 %s631, 1
    %p635 = scmp.eq.s32.totalorder %s34, 3
    %p636 = scmp.ne.s32.totalorder %s631, %s633
    %p637 = scmp.eq.s32.totalorder %s34, 0
    %p638 = por %p636, %p637
    %p639 = scmp.ne.s32.totalorder %s631, %s633
    %p640 = scmp.eq.s32.totalorder %s39, 3
    %p641 = por %p639, %p640
    %p642 = scmp.ne.s32.totalorder %s633, %s634
    %p643 = scmp.eq.s32.totalorder %s39, 0
    %p644 = por %p642, %p643
    %p645 = scmp.ne.s32.totalorder %s633, %s634
    %p646 = scmp.eq.s32.totalorder %s40, 3
    %p647 = por %p645, %p646
    %p649 = scmp.ne.s32.totalorder %s634, %s648
    %p650 = scmp.eq.s32.totalorder %s40, 0
    %p651 = por %p649, %p650
    %s652 = ssub.s32 %s41, %s53
    %p653 = scmp.eq.s32.totalorder %s652, 0
    %s655 = sadd.s32 %s654, 1
    %s656 = scalar_select %p653, %s654, %s655
    %p659 = pneg %p653
    %p660 = scmp.eq.s32.totalorder %s34, 3
    %p661 = por %p659, %p660
    %p662 = scmp.ne.s32.totalorder %s654, %s657
    %p663 = scmp.eq.s32.totalorder %s34, 0
    %p664 = por %p662, %p663
    %p665 = scmp.ne.s32.totalorder %s654, %s657
    %p666 = scmp.eq.s32.totalorder %s39, 3
    %p667 = por %p665, %p666
    %p668 = scmp.ne.s32.totalorder %s657, %s658
    %p669 = scmp.eq.s32.totalorder %s39, 0
    %p670 = por %p668, %p669
    %p671 = scmp.ne.s32.totalorder %s657, %s658
    %p672 = scmp.eq.s32.totalorder %s40, 3
    %p673 = por %p671, %p672
    %p675 = scmp.ne.s32.totalorder %s658, %s674
    %p676 = scmp.eq.s32.totalorder %s40, 0
    %p677 = por %p675, %p676
    %p678 = scmp.le.s32.totalorder 1, %s34
    %p679 = scmp.lt.s32.totalorder %s34, 5
    %p680 = pnand %p678, %p679
    %p681 = pneg %p680
    // Predicated region
    $region9: #{graph_rnn_decoder_forward.1} parent=5 // pred_check
      _
    $region10: #{graph_rnn_decoder_forward.1} parent=5 // pred_check_branch
      %683 = sbr.rel (%p680) target = $region12
    $region11: #{graph_rnn_decoder_forward.1} parent=5 // pred_region
      %s684 = ssub.s32 %s34, 1
      // Predicated region
      $region13: #{graph_rnn_decoder_forward.1} parent=11 // pred_check
        %p685 = pneg %p72
      $region14: #{graph_rnn_decoder_forward.1} parent=11 // pred_check_branch
        %687 = sbr.rel (%p685) target = $region16
      $region15: #{graph_rnn_decoder_forward.1} parent=11 // pred_region
        %p688 = scmp.lt.s32.totalorder %s43, 0
        %s689 = scalar_select %p688, %s43, 0
        %s690 = smul.addr %s689, 2
        %s691 = smul.addr %s690, 8
        %s692 = scalar_lea.vmem %s0, %s691
      $region16: #{graph_rnn_decoder_forward.1} parent=11 // pred_fallthru
        _
      // Predicated region
      $region17: #{graph_rnn_decoder_forward.1} parent=11 // pred_check
        %p693 = pneg %p98
      $region18: #{graph_rnn_decoder_forward.1} parent=11 // pred_check_branch
        %695 = sbr.rel (%p693) target = $region20
      $region19: #{graph_rnn_decoder_forward.1} parent=11 // pred_region
        %p696 = scmp.lt.s32.totalorder %s43, 0
        %s697 = scalar_select %p696, %s43, 0
        %s698 = smul.addr %s697, 5
        %s699 = smul.addr %s698, 8
        %s700 = scalar_lea.vmem %s1, %s699
      $region20: #{graph_rnn_decoder_forward.1} parent=11 // pred_fallthru
        _
      // Predicated region
      $region21: #{graph_rnn_decoder_forward.1} parent=11 // pred_check
        %p701 = pneg %p119
      $region22: #{graph_rnn_decoder_forward.1} parent=11 // pred_check_branch
        %703 = sbr.rel (%p701) target = $region24
      $region23: #{graph_rnn_decoder_forward.1} parent=11 // pred_region
        _
      $region24: #{graph_rnn_decoder_forward.1} parent=11 // pred_fallthru
        _
      // Predicated region
      $region25: #{graph_rnn_decoder_forward.1} parent=11 // pred_check
        %p704 = pneg %p140
      $region26: #{graph_rnn_decoder_forward.1} parent=11 // pred_check_branch
        %706 = sbr.rel (%p704) target = $region28
      $region27: #{graph_rnn_decoder_forward.1} parent=11 // pred_region
        _
      $region28: #{graph_rnn_decoder_forward.1} parent=11 // pred_fallthru
        _
      // Predicated region
      $region29: #{graph_rnn_decoder_forward.1} parent=11 // pred_check
        %p707 = pneg %p161
      $region30: #{graph_rnn_decoder_forward.1} parent=11 // pred_check_branch
        %709 = sbr.rel (%p707) target = $region32
      $region31: #{graph_rnn_decoder_forward.1} parent=11 // pred_region
        _
      $region32: #{graph_rnn_decoder_forward.1} parent=11 // pred_fallthru
        _
      // Predicated region
      $region33: #{graph_rnn_decoder_forward.1} parent=11 // pred_check
        %p710 = pneg %p182
      $region34: #{graph_rnn_decoder_forward.1} parent=11 // pred_check_branch
        %712 = sbr.rel (%p710) target = $region36
      $region35: #{graph_rnn_decoder_forward.1} parent=11 // pred_region
        _
      $region36: #{graph_rnn_decoder_forward.1} parent=11 // pred_fallthru
        _
      // Predicated region
      $region37: #{graph_rnn_decoder_forward.1} parent=11 // pred_check
        %p713 = pneg %p203
      $region38: #{graph_rnn_decoder_forward.1} parent=11 // pred_check_branch
        %715 = sbr.rel (%p713) target = $region40
      $region39: #{graph_rnn_decoder_forward.1} parent=11 // pred_region
        _
      $region40: #{graph_rnn_decoder_forward.1} parent=11 // pred_fallthru
        _
      // Predicated region
      $region41: #{graph_rnn_decoder_forward.1} parent=11 // pred_check
        %p716 = pneg %p224
      $region42: #{graph_rnn_decoder_forward.1} parent=11 // pred_check_branch
        %718 = sbr.rel (%p716) target = $region44
      $region43: #{graph_rnn_decoder_forward.1} parent=11 // pred_region
        _
      $region44: #{graph_rnn_decoder_forward.1} parent=11 // pred_fallthru
        _
      // Predicated region
      $region45: #{graph_rnn_decoder_forward.1} parent=11 // pred_check
        %p719 = pneg %p245
      $region46: #{graph_rnn_decoder_forward.1} parent=11 // pred_check_branch
        %721 = sbr.rel (%p719) target = $region48
      $region47: #{graph_rnn_decoder_forward.1} parent=11 // pred_region
        _
      $region48: #{graph_rnn_decoder_forward.1} parent=11 // pred_fallthru
        _
      // Predicated region
      $region49: #{graph_rnn_decoder_forward.1} parent=11 // pred_check
        %p722 = pneg %p266
      $region50: #{graph_rnn_decoder_forward.1} parent=11 // pred_check_branch
        %724 = sbr.rel (%p722) target = $region52
      $region51: #{graph_rnn_decoder_forward.1} parent=11 // pred_region
        _
      $region52: #{graph_rnn_decoder_forward.1} parent=11 // pred_fallthru
        _
      // Predicated region
      $region53: #{graph_rnn_decoder_forward.1} parent=11 // pred_check
        %p725 = pneg %p287
      $region54: #{graph_rnn_decoder_forward.1} parent=11 // pred_check_branch
        %727 = sbr.rel (%p725) target = $region56
      $region55: #{graph_rnn_decoder_forward.1} parent=11 // pred_region
        _
      $region56: #{graph_rnn_decoder_forward.1} parent=11 // pred_fallthru
        _
      // Predicated region
      $region57: #{graph_rnn_decoder_forward.1} parent=11 // pred_check
        %p728 = pneg %p308
      $region58: #{graph_rnn_decoder_forward.1} parent=11 // pred_check_branch
        %730 = sbr.rel (%p728) target = $region60
      $region59: #{graph_rnn_decoder_forward.1} parent=11 // pred_region
        _
      $region60: #{graph_rnn_decoder_forward.1} parent=11 // pred_fallthru
        _
      // Predicated region
      $region61: #{graph_rnn_decoder_forward.1} parent=11 // pred_check
        %p731 = pneg %p329
      $region62: #{graph_rnn_decoder_forward.1} parent=11 // pred_check_branch
        %733 = sbr.rel (%p731) target = $region64
      $region63: #{graph_rnn_decoder_forward.1} parent=11 // pred_region
        _
      $region64: #{graph_rnn_decoder_forward.1} parent=11 // pred_fallthru
        _
      // Predicated region
      $region65: #{graph_rnn_decoder_forward.1} parent=11 // pred_check
        %p734 = pneg %p350
      $region66: #{graph_rnn_decoder_forward.1} parent=11 // pred_check_branch
        %736 = sbr.rel (%p734) target = $region68
      $region67: #{graph_rnn_decoder_forward.1} parent=11 // pred_region
        _
      $region68: #{graph_rnn_decoder_forward.1} parent=11 // pred_fallthru
        _
      // Predicated region
      $region69: #{graph_rnn_decoder_forward.1} parent=11 // pred_check
        %p737 = pneg %p371
      $region70: #{graph_rnn_decoder_forward.1} parent=11 // pred_check_branch
        %739 = sbr.rel (%p737) target = $region72
      $region71: #{graph_rnn_decoder_forward.1} parent=11 // pred_region
        _
      $region72: #{graph_rnn_decoder_forward.1} parent=11 // pred_fallthru
        _
      // Predicated region
      $region73: #{graph_rnn_decoder_forward.1} parent=11 // pred_check
        %p740 = pneg %p392
      $region74: #{graph_rnn_decoder_forward.1} parent=11 // pred_check_branch
        %742 = sbr.rel (%p740) target = $region76
      $region75: #{graph_rnn_decoder_forward.1} parent=11 // pred_region
        _
      $region76: #{graph_rnn_decoder_forward.1} parent=11 // pred_fallthru
        _
      // Predicated region
      $region77: #{graph_rnn_decoder_forward.1} parent=11 // pred_check
        %p743 = pneg %p413
      $region78: #{graph_rnn_decoder_forward.1} parent=11 // pred_check_branch
        %745 = sbr.rel (%p743) target = $region80
      $region79: #{graph_rnn_decoder_forward.1} parent=11 // pred_region
        _
      $region80: #{graph_rnn_decoder_forward.1} parent=11 // pred_fallthru
        _
      // Predicated region
      $region81: #{graph_rnn_decoder_forward.1} parent=11 // pred_check
        %p746 = pneg %p434
      $region82: #{graph_rnn_decoder_forward.1} parent=11 // pred_check_branch
        %748 = sbr.rel (%p746) target = $region84
      $region83: #{graph_rnn_decoder_forward.1} parent=11 // pred_region
        _
      $region84: #{graph_rnn_decoder_forward.1} parent=11 // pred_fallthru
        _
      // Predicated region
      $region85: #{graph_rnn_decoder_forward.1} parent=11 // pred_check
        %p749 = pneg %p455
      $region86: #{graph_rnn_decoder_forward.1} parent=11 // pred_check_branch
        %751 = sbr.rel (%p749) target = $region88
      $region87: #{graph_rnn_decoder_forward.1} parent=11 // pred_region
        _
      $region88: #{graph_rnn_decoder_forward.1} parent=11 // pred_fallthru
        _
      // Predicated region
      $region89: #{graph_rnn_decoder_forward.1} parent=11 // pred_check
        %p752 = pneg %p476
      $region90: #{graph_rnn_decoder_forward.1} parent=11 // pred_check_branch
        %754 = sbr.rel (%p752) target = $region92
      $region91: #{graph_rnn_decoder_forward.1} parent=11 // pred_region
        _
      $region92: #{graph_rnn_decoder_forward.1} parent=11 // pred_fallthru
        _
      // Predicated region
      $region93: #{graph_rnn_decoder_forward.1} parent=11 // pred_check
        %p755 = pneg %p497
      $region94: #{graph_rnn_decoder_forward.1} parent=11 // pred_check_branch
        %757 = sbr.rel (%p755) target = $region96
      $region95: #{graph_rnn_decoder_forward.1} parent=11 // pred_region
        _
      $region96: #{graph_rnn_decoder_forward.1} parent=11 // pred_fallthru
        _
      // Predicated region
      $region97: #{graph_rnn_decoder_forward.1} parent=11 // pred_check
        %p758 = pneg %p518
      $region98: #{graph_rnn_decoder_forward.1} parent=11 // pred_check_branch
        %760 = sbr.rel (%p758) target = $region100
      $region99: #{graph_rnn_decoder_forward.1} parent=11 // pred_region
        _
      $region100: #{graph_rnn_decoder_forward.1} parent=11 // pred_fallthru
        _
      // Predicated region
      $region101: #{graph_rnn_decoder_forward.1} parent=11 // pred_check
        %p761 = pneg %p539
      $region102: #{graph_rnn_decoder_forward.1} parent=11 // pred_check_branch
        %763 = sbr.rel (%p761) target = $region104
      $region103: #{graph_rnn_decoder_forward.1} parent=11 // pred_region
        _
      $region104: #{graph_rnn_decoder_forward.1} parent=11 // pred_fallthru
        _
      // Predicated region
      $region105: #{graph_rnn_decoder_forward.1} parent=11 // pred_check
        %p764 = pneg %p560
      $region106: #{graph_rnn_decoder_forward.1} parent=11 // pred_check_branch
        %766 = sbr.rel (%p764) target = $region108
      $region107: #{graph_rnn_decoder_forward.1} parent=11 // pred_region
        _
      $region108: #{graph_rnn_decoder_forward.1} parent=11 // pred_fallthru
        _
      // Predicated region
      $region109: #{graph_rnn_decoder_forward.1} parent=11 // pred_check
        %p767 = pneg %p581
      $region110: #{graph_rnn_decoder_forward.1} parent=11 // pred_check_branch
        %769 = sbr.rel (%p767) target = $region112
      $region111: #{graph_rnn_decoder_forward.1} parent=11 // pred_region
        _
      $region112: #{graph_rnn_decoder_forward.1} parent=11 // pred_fallthru
        _
      // Predicated region
      $region113: #{graph_rnn_decoder_forward.1} parent=11 // pred_check
        %p770 = pneg %p602
      $region114: #{graph_rnn_decoder_forward.1} parent=11 // pred_check_branch
        %772 = sbr.rel (%p770) target = $region116
      $region115: #{graph_rnn_decoder_forward.1} parent=11 // pred_region
        _
      $region116: #{graph_rnn_decoder_forward.1} parent=11 // pred_fallthru
        _
      // Predicated region
      $region117: #{graph_rnn_decoder_forward.1} parent=11 // pred_check
        %p773 = pneg %p623
      $region118: #{graph_rnn_decoder_forward.1} parent=11 // pred_check_branch
        %775 = sbr.rel (%p773) target = $region120
      $region119: #{graph_rnn_decoder_forward.1} parent=11 // pred_region
        _
      $region120: #{graph_rnn_decoder_forward.1} parent=11 // pred_fallthru
        _
      // Predicated region
      $region121: #{graph_rnn_decoder_forward.1} parent=11 // pred_check
        %p776 = pneg %p644
      $region122: #{graph_rnn_decoder_forward.1} parent=11 // pred_check_branch
        %778 = sbr.rel (%p776) target = $region124
      $region123: #{graph_rnn_decoder_forward.1} parent=11 // pred_region
        _
      $region124: #{graph_rnn_decoder_forward.1} parent=11 // pred_fallthru
        _
    $region12: #{graph_rnn_decoder_forward.1} parent=5 // pred_fallthru
      _
    %p779 = scmp.lt.s32.totalorder %s34, 4
    // Predicated region
    $region125: #{graph_rnn_decoder_forward.1} parent=5 // pred_check
      %p780 = pneg %p779
    $region126: #{graph_rnn_decoder_forward.1} parent=5 // pred_check_branch
      %782 = sbr.rel (%p780) target = $region128
    $region127: #{graph_rnn_decoder_forward.1} parent=5 // pred_region
      _
    $region128: #{graph_rnn_decoder_forward.1} parent=5 // pred_fallthru
      _
    %p783 = scmp.le.s32.totalorder 1, %s34
    %p784 = scmp.lt.s32.totalorder %s34, 5
    %p785 = pnand %p783, %p784
    %p786 = pneg %p785
    // Predicated region
    $region129: #{graph_rnn_decoder_forward.1} parent=5 // pred_check
      _
    $region130: #{graph_rnn_decoder_forward.1} parent=5 // pred_check_branch
      %788 = sbr.rel (%p785) target = $region132
    $region131: #{graph_rnn_decoder_forward.1} parent=5 // pred_region
      %s789 = ssub.s32 %s34, 1
      %p790 = scmp.lt.s32.totalorder %s43, 0
      %s791 = scalar_select %p790, %s43, 0
      %s792 = smul.addr %s791, 2
      %s793 = smul.addr %s792, 8
      %s794 = scalar_lea.vmem %s0, %s793
      %p795 = pneg %p72
      %p796 = pneg %p69
      %p797 = scmp.lt.s32.totalorder %s43, 0
      %s798 = scalar_select %p797, %s43, 0
      %s799 = smul.addr %s798, 5
      %s800 = smul.addr %s799, 8
      %s801 = scalar_lea.vmem %s1, %s800
      %p802 = pneg %p98
      %p803 = pneg %p95
      %p804 = pneg %p119
      %p805 = pneg %p116
      %p806 = pneg %p140
      %p807 = pneg %p137
      %p808 = pneg %p161
      %p809 = pneg %p158
      %p810 = pneg %p182
      %p811 = pneg %p179
      %p812 = pneg %p203
      %p813 = pneg %p200
      %p814 = pneg %p224
      %p815 = pneg %p221
      %p816 = pneg %p245
      %p817 = pneg %p242
      %p818 = pneg %p266
      %p819 = pneg %p263
      %p820 = pneg %p287
      %p821 = pneg %p284
      %p822 = pneg %p308
      %p823 = pneg %p305
      %p824 = pneg %p329
      %p825 = pneg %p326
      %p826 = pneg %p350
      %p827 = pneg %p347
      %p828 = pneg %p371
      %p829 = pneg %p368
      %p830 = pneg %p392
      %p831 = pneg %p389
      %p832 = pneg %p413
      %p833 = pneg %p410
      %p834 = pneg %p434
      %p835 = pneg %p431
      %p836 = pneg %p455
      %p837 = pneg %p452
      %p838 = pneg %p476
      %p839 = pneg %p473
      %p840 = pneg %p497
      %p841 = pneg %p494
      %p842 = pneg %p518
      %p843 = pneg %p515
      %p844 = pneg %p539
      %p845 = pneg %p536
      %p846 = pneg %p560
      %p847 = pneg %p557
      %p848 = pneg %p581
      %p849 = pneg %p578
      %p850 = pneg %p602
      %p851 = pneg %p599
      %p852 = pneg %p623
      %p853 = pneg %p620
      %p854 = pneg %p644
      %p855 = pneg %p641
      %p856 = pneg %p670
      %p857 = pneg %p667
      %p858 = scmp.lt.s32.totalorder %s43, 0
      %s859 = scalar_select %p858, %s43, 0
      %s860 = smul.addr %s859, 8
      %s861 = smul.addr %s860, 8
      %s862 = scalar_lea.vmem %s28, %s861
      %p863 = scmp.lt.s32.totalorder %s43, 0
      %s864 = scalar_select %p863, %s43, 0
      %s865 = smul.addr %s864, 2
      %s866 = smul.addr %s865, 8
      %s867 = scalar_lea.vmem %s0, %s866
      %p868 = scmp.lt.s32.totalorder %s43, 0
      %s869 = scalar_select %p868, %s43, 0
      %s870 = smul.addr %s869, 5
      %s871 = smul.addr %s870, 8
      %s872 = scalar_lea.vmem %s1, %s871
      %p873 = scmp.lt.s32.totalorder %s43, 0
      %s874 = scalar_select %p873, %s43, 0
      %s875 = smul.addr %s874, 8
      %s876 = smul.addr %s875, 8
      %s877 = scalar_lea.vmem %s28, %s876
      %p879 = scmp.eq.s32.totalorder %s44, 0
      // Predicated region
      $region133: #{graph_rnn_decoder_forward.1} parent=131 // pred_check
        %p880 = pneg %p879
      $region134: #{graph_rnn_decoder_forward.1} parent=131 // pred_check_branch
        %882 = sbr.rel (%p880) target = $region136
      $region135: #{graph_rnn_decoder_forward.1} parent=131 // pred_region
        %vm883 = vcmask 261120
        %884 = vst.msk [vmem:[#allocation2] sm:$0xff] %vm883, 0.0
        %vm885 = vcmask 254976
        %886 = vst.msk [vmem:[#allocation2 + $0x8] sm:$0x3] %vm885, 0.0
        %v887 = vld [vmem:[%s867] sm:$0xff]
        %v888 = vld [vmem:[%s867 + $0x8] sm:$0x3]
        %vm889 = vcmask 31744
        %890 = vst.msk [vmem:[#allocation3] sm:$0xff] %vm889, %v887
        %vm891 = vcmask 25600
        %892 = vst.msk [vmem:[#allocation3 + $0x8] sm:$0x3] %vm891, %v888
      $region136: #{graph_rnn_decoder_forward.1} parent=131 // pred_fallthru
        _
      %v893 = vld [vmem:[#allocation3] sm:$0xff]
      %v894 = vld [vmem:[#allocation3 + $0x8] sm:$0x3]
      %v895 = vld [vmem:[#allocation2] sm:$0xff]
      %v896 = vld [vmem:[#allocation2 + $0x8] sm:$0x3]
      %v897 = vld [vmem:[%s872] sm:$0xff]
      %v898 = vld [vmem:[%s872 + $0x8] sm:$0xff]
      %v899 = vld [vmem:[%s872 + $0x10] sm:$0xff]
      %v900 = vld [vmem:[%s872 + $0x18] sm:$0xff]
      %v901 = vld [vmem:[%s872 + $0x20] sm:$0xff]
      %v902 = vld [vmem:[%s5] sm:$0xff]
      %v903 = vld [vmem:[%s5 + $0x8] sm:$0x3]
      %v904 = vld [vmem:[%s6] sm:$0x1]
      %s905 = scalar_lea.vmem %s6, 1
      %v906 = vld [vmem:[%s905] sm:$0x1]
      %s907 = scalar_lea.vmem %s6, 2
      %v908 = vld [vmem:[%s907] sm:$0x1]
      %s909 = scalar_lea.vmem %s6, 3
      %v910 = vld [vmem:[%s909] sm:$0x1]
      %v911 = vld [vmem:[%s2] sm:$0xf]
      %v912 = vld [vmem:[%s2 + $0x4] sm:$0xf]
      %v913 = vld [vmem:[%s2 + $0x8] sm:$0xf]
      %v914 = vld [vmem:[%s2 + $0xc] sm:$0xf]
      %v915 = vld [vmem:[%s2 + $0x10] sm:$0xf]
      %v916 = vpack.c.bf16 %v896, %v895
      %v922 = vunpack.c.l.b16 %v911
      %v923 = vunpack.c.l.b16 %v912
      %v924 = vunpack.c.l.b16 %v913
      %v925 = vunpack.c.l.b16 %v914
      %v926 = vunpack.c.l.b16 %v915
      %v927 = vpack.c.b16 %v923, %v922
      %v928 = vpack.c.b16 %v925, %v924
      %v929 = vpack.c.b16 %v926, %v926
      %vm930 = vcmask 80896
      %v932 = vsel %vm930, %v927, 0
      %v935 = vsel %vm930, %v928, 0
      %v938 = vsel %vm930, %v929, 0
      %vm940 = vcmask 1044480
      %v942 = vsel %vm940, %v916, 0
      %944 = vmatprep.subr.bf16.mxu0 0
      %945 = vmatpush1.bf16.msra.mxu0 %v942
      %946 = vmatprep.subr.bf16.mxu0 0
      %947 = vmatpush1.bf16.msra.mxu0 0
      %948 = vmatprep.subr.bf16.mxu0 0
      %949 = vmatpush1.bf16.msra.mxu0 0
      %950 = vmatprep.subr.bf16.mxu0 0
      %951 = vmatpush1.bf16.msra.mxu0 0
      %952 = vmatprep.subr.bf16.mxu0 0
      %953 = vmatpush1.bf16.msra.mxu0 0
      %954 = vmatprep.subr.bf16.mxu0 0
      %955 = vmatpush1.bf16.msra.mxu0 0
      %956 = vmatprep.subr.bf16.mxu0 0
      %957 = vmatpush1.bf16.msra.mxu0 0
      %958 = vmatprep.subr.bf16.mxu0 0
      %959 = vmatpush1.bf16.msra.mxu0 0
      %960 = vmatprep.subr.bf16.mxu0 0
      %961 = vmatpush1.bf16.msra.mxu0 0
      %962 = vmatprep.subr.bf16.mxu0 0
      %963 = vmatpush1.bf16.msra.mxu0 0
      %964 = vmatprep.subr.bf16.mxu0 0
      %965 = vmatpush1.bf16.msra.mxu0 0
      %966 = vmatprep.subr.bf16.mxu0 0
      %967 = vmatpush1.bf16.msra.mxu0 0
      %968 = vmatprep.subr.bf16.mxu0 0
      %969 = vmatpush1.bf16.msra.mxu0 0
      %970 = vmatprep.subr.bf16.mxu0 0
      %971 = vmatpush1.bf16.msra.mxu0 0
      %972 = vmatprep.subr.bf16.mxu0 0
      %973 = vmatpush1.bf16.msra.mxu0 0
      %974 = vmatprep.subr.bf16.mxu0 0
      %975 = vmatpush1.bf16.msra.mxu0 0
      %976 = vmatprep.mubr.bf16.mxu0 0
      %977 = vmatmul.mubr.bf16.gmra.mrb[0].mxu0 %v932
      %v978 = vpop.f32.mrb[0].mxu0
      %v979 = vadd.f32 0.0, %v978
      %v980 = vpop.f32.mrb[0].mxu0
      %v981 = vpop.f32.mrb[0].mxu0
      %v982 = vadd.f32 0.0, %v981
      %v983 = vpop.f32.mrb[0].mxu0
      %984 = vmatprep.mubr.bf16.mxu0 0
      %985 = vmatmul.mubr.bf16.gmra.mrb[0].mxu0 %v935
      %v986 = vpop.f32.mrb[0].mxu0
      %v987 = vadd.f32 0.0, %v986
      %v988 = vpop.f32.mrb[0].mxu0
      %v989 = vpop.f32.mrb[0].mxu0
      %v990 = vadd.f32 0.0, %v989
      %v991 = vpop.f32.mrb[0].mxu0
      %992 = vmatprep.mubr.bf16.mxu0 0
      %993 = vmatmul.mubr.bf16.gmra.mrb[0].mxu0 %v938
      %v994 = vpop.f32.mrb[0].mxu0
      %v995 = vadd.f32 0.0, %v994
      %v996 = vpop.f32.mrb[0].mxu0
      %v997 = vpop.f32.mrb[0].mxu0
      %v998 = vpop.f32.mrb[0].mxu0
      %999 = vdwg.mxu0
      %v1000 = vld [vmem:[%s3] sm:$0xf]
      %v1001 = vld [vmem:[%s3 + $0x4] sm:$0xf]
      %v1002 = vld [vmem:[%s3 + $0x8] sm:$0xf]
      %v1003 = vld [vmem:[%s3 + $0xc] sm:$0xf]
      %v1004 = vld [vmem:[%s3 + $0x10] sm:$0xf]
      %v1010 = vunpack.c.l.b16 %v1000
      %v1011 = vunpack.c.l.b16 %v1001
      %v1012 = vunpack.c.l.b16 %v1002
      %v1013 = vunpack.c.l.b16 %v1003
      %v1014 = vunpack.c.l.b16 %v1004
      %v1015 = vpack.c.b16 %v1011, %v1010
      %v1016 = vpack.c.b16 %v1013, %v1012
      %v1017 = vpack.c.b16 %v1014, %v1014
      %v1019 = vsel %vm930, %v1015, 0
      %v1022 = vsel %vm930, %v1016, 0
      %v1025 = vsel %vm930, %v1017, 0
      %1027 = vmatprep.subr.bf16.mxu0 0
      %1028 = vmatpush1.bf16.msra.mxu0 %v942
      %1029 = vmatprep.subr.bf16.mxu0 0
      %1030 = vmatpush1.bf16.msra.mxu0 0
      %1031 = vmatprep.subr.bf16.mxu0 0
      %1032 = vmatpush1.bf16.msra.mxu0 0
      %1033 = vmatprep.subr.bf16.mxu0 0
      %1034 = vmatpush1.bf16.msra.mxu0 0
      %1035 = vmatprep.subr.bf16.mxu0 0
      %1036 = vmatpush1.bf16.msra.mxu0 0
      %1037 = vmatprep.subr.bf16.mxu0 0
      %1038 = vmatpush1.bf16.msra.mxu0 0
      %1039 = vmatprep.subr.bf16.mxu0 0
      %1040 = vmatpush1.bf16.msra.mxu0 0
      %1041 = vmatprep.subr.bf16.mxu0 0
      %1042 = vmatpush1.bf16.msra.mxu0 0
      %1043 = vmatprep.subr.bf16.mxu0 0
      %1044 = vmatpush1.bf16.msra.mxu0 0
      %1045 = vmatprep.subr.bf16.mxu0 0
      %1046 = vmatpush1.bf16.msra.mxu0 0
      %1047 = vmatprep.subr.bf16.mxu0 0
      %1048 = vmatpush1.bf16.msra.mxu0 0
      %1049 = vmatprep.subr.bf16.mxu0 0
      %1050 = vmatpush1.bf16.msra.mxu0 0
      %1051 = vmatprep.subr.bf16.mxu0 0
      %1052 = vmatpush1.bf16.msra.mxu0 0
      %1053 = vmatprep.subr.bf16.mxu0 0
      %1054 = vmatpush1.bf16.msra.mxu0 0
      %1055 = vmatprep.subr.bf16.mxu0 0
      %1056 = vmatpush1.bf16.msra.mxu0 0
      %1057 = vmatprep.subr.bf16.mxu0 0
      %1058 = vmatpush1.bf16.msra.mxu0 0
      %1059 = vmatprep.mubr.bf16.mxu0 0
      %1060 = vmatmul.mubr.bf16.gmra.mrb[0].mxu0 %v1019
      %v1061 = vpop.f32.mrb[0].mxu0
      %v1062 = vadd.f32 0.0, %v1061
      %v1063 = vpop.f32.mrb[0].mxu0
      %v1064 = vpop.f32.mrb[0].mxu0
      %v1065 = vadd.f32 0.0, %v1064
      %v1066 = vpop.f32.mrb[0].mxu0
      %1067 = vmatprep.mubr.bf16.mxu0 0
      %1068 = vmatmul.mubr.bf16.gmra.mrb[0].mxu0 %v1022
      %v1069 = vpop.f32.mrb[0].mxu0
      %v1070 = vadd.f32 0.0, %v1069
      %v1071 = vpop.f32.mrb[0].mxu0
      %v1072 = vpop.f32.mrb[0].mxu0
      %v1073 = vadd.f32 0.0, %v1072
      %v1074 = vpop.f32.mrb[0].mxu0
      %1075 = vmatprep.mubr.bf16.mxu0 0
      %1076 = vmatmul.mubr.bf16.gmra.mrb[0].mxu0 %v1025
      %v1077 = vpop.f32.mrb[0].mxu0
      %v1078 = vadd.f32 0.0, %v1077
      %v1079 = vpop.f32.mrb[0].mxu0
      %v1080 = vpop.f32.mrb[0].mxu0
      %v1081 = vpop.f32.mrb[0].mxu0
      %1082 = vdwg.mxu0
      %1088 = vrot.lane.b32.xlu0 %v1062, 32
      %v1089 = vpop.permute.xlu0 %1088
      %1090 = vrot.lane.b32.xlu0 %v1065, 32
      %v1091 = vpop.permute.xlu0 %1090
      %1092 = vrot.lane.b32.xlu0 %v1070, 32
      %v1093 = vpop.permute.xlu0 %1092
      %1094 = vrot.lane.b32.xlu0 %v1073, 32
      %v1095 = vpop.permute.xlu0 %1094
      %1096 = vrot.lane.b32.xlu0 %v1078, 32
      %v1097 = vpop.permute.xlu0 %1096
      %vm1103 = vcmask 261120
      %v1104 = vsel %vm1103, %v979, %v1089
      %v1105 = vsel %vm1103, %v982, %v1091
      %v1106 = vsel %vm1103, %v987, %v1093
      %v1107 = vsel %vm1103, %v990, %v1095
      %v1108 = vsel %vm1103, %v995, %v1097
      %s1109 = scalar_lea.vmem %s7, 32
      %v1110 = vld [vmem:[%s1109] sm:$0xf]
      %v1111 = vld [vmem:[%s1109 + $0x4] sm:$0xf]
      %v1112 = vld [vmem:[%s1109 + $0x8] sm:$0xf]
      %v1113 = vld [vmem:[%s1109 + $0xc] sm:$0xf]
      %v1114 = vld [vmem:[%s1109 + $0x10] sm:$0xf]
      %v1115 = vld [vmem:[%s1109 + $0x14] sm:$0xf]
      %v1116 = vld [vmem:[%s1109 + $0x18] sm:$0xf]
      %v1117 = vld [vmem:[%s1109 + $0x1c] sm:$0xf]
      %v1118 = vpack.c.bf16 %v1105, %v1104
      %v1119 = vpack.c.bf16 %v1107, %v1106
      %v1120 = vpack.c.bf16 %v1108, %v1108
      %s1121 = scalar_lea.vmem %s9, 2
      %v1122 = vld [vmem:[%s1121] sm:$0x1]
      %v1124 = vlaneseq
      %v1125 = vshrl.u32 %v1124, 7
      %v1126 = vsub.s32 0, %v1125
      %v1127 = vrot.slane %v1122, %v1126
      %v1137 = vunpack.c.l.b16 %v1110
      %v1138 = vunpack.c.l.b16 %v1111
      %v1139 = vunpack.c.l.b16 %v1112
      %v1140 = vunpack.c.l.b16 %v1113
      %v1141 = vunpack.c.l.b16 %v1114
      %v1142 = vunpack.c.l.b16 %v1115
      %v1143 = vunpack.c.l.b16 %v1116
      %v1144 = vunpack.c.l.b16 %v1117
      %v1145 = vpack.c.b16 %v1138, %v1137
      %v1146 = vpack.c.b16 %v1140, %v1139
      %v1147 = vpack.c.b16 %v1142, %v1141
      %v1148 = vpack.c.b16 %v1144, %v1143
      %vm1153 = vcmask 523264
      %v1155 = vsel %vm1153, %v1118, 0
      %v1158 = vsel %vm1153, %v1119, 0
      %v1161 = vsel %vm1153, %v1120, 0
      %1163 = vmatprep.subr.bf16.mxu0 0
      %1164 = vmatpush1.bf16.msra.mxu0 %v1145
      %1165 = vmatprep.subr.bf16.mxu0 0
      %1166 = vmatpush1.bf16.msra.mxu0 %v1146
      %1167 = vmatprep.subr.bf16.mxu0 0
      %1168 = vmatpush1.bf16.msra.mxu0 %v1147
      %1169 = vmatprep.subr.bf16.mxu0 0
      %1170 = vmatpush1.bf16.msra.mxu0 %v1148
      %1171 = vmatprep.subr.bf16.mxu0 0
      %1172 = vmatpush1.bf16.msra.mxu0 0
      %1173 = vmatprep.subr.bf16.mxu0 0
      %1174 = vmatpush1.bf16.msra.mxu0 0
      %1175 = vmatprep.subr.bf16.mxu0 0
      %1176 = vmatpush1.bf16.msra.mxu0 0
      %1177 = vmatprep.subr.bf16.mxu0 0
      %1178 = vmatpush1.bf16.msra.mxu0 0
      %1179 = vmatprep.subr.bf16.mxu0 0
      %1180 = vmatpush1.bf16.msra.mxu0 0
      %1181 = vmatprep.subr.bf16.mxu0 0
      %1182 = vmatpush1.bf16.msra.mxu0 0
      %1183 = vmatprep.subr.bf16.mxu0 0
      %1184 = vmatpush1.bf16.msra.mxu0 0
      %1185 = vmatprep.subr.bf16.mxu0 0
      %1186 = vmatpush1.bf16.msra.mxu0 0
      %1187 = vmatprep.subr.bf16.mxu0 0
      %1188 = vmatpush1.bf16.msra.mxu0 0
      %1189 = vmatprep.subr.bf16.mxu0 0
      %1190 = vmatpush1.bf16.msra.mxu0 0
      %1191 = vmatprep.subr.bf16.mxu0 0
      %1192 = vmatpush1.bf16.msra.mxu0 0
      %1193 = vmatprep.subr.bf16.mxu0 0
      %1194 = vmatpush1.bf16.msra.mxu0 0
      %1195 = vmatprep.mubr.bf16.mxu0 0
      %1196 = vmatmul.mubr.bf16.gmra.mrb[0].mxu0 %v1155
      %v1197 = vpop.f32.mrb[0].mxu0
      %v1198 = vadd.f32 %v1127, %v1197
      %v1199 = vpop.f32.mrb[0].mxu0
      %v1200 = vpop.f32.mrb[0].mxu0
      %v1201 = vadd.f32 %v1127, %v1200
      %v1202 = vpop.f32.mrb[0].mxu0
      %1203 = vmatprep.mubr.bf16.mxu0 0
      %1204 = vmatmul.mubr.bf16.gmra.mrb[0].mxu0 %v1158
      %v1205 = vpop.f32.mrb[0].mxu0
      %v1206 = vadd.f32 %v1127, %v1205
      %v1207 = vpop.f32.mrb[0].mxu0
      %v1208 = vpop.f32.mrb[0].mxu0
      %v1209 = vadd.f32 %v1127, %v1208
      %v1210 = vpop.f32.mrb[0].mxu0
      %1211 = vmatprep.mubr.bf16.mxu0 0
      %1212 = vmatmul.mubr.bf16.gmra.mrb[0].mxu0 %v1161
      %v1213 = vpop.f32.mrb[0].mxu0
      %v1214 = vadd.f32 %v1127, %v1213
      %v1215 = vpop.f32.mrb[0].mxu0
      %v1216 = vpop.f32.mrb[0].mxu0
      %v1217 = vpop.f32.mrb[0].mxu0
      %1218 = vdwg.mxu0
      %v1219 = vtanh.pop %v1198
      %v1220 = vtanh.pop %v1201
      %v1221 = vtanh.pop %v1206
      %v1222 = vtanh.pop %v1209
      %v1223 = vtanh.pop %v1214
      %s1224 = scalar_lea.vmem %s8, 16
      %v1225 = vld [vmem:[%s1224] sm:$0xf]
      %v1226 = vld [vmem:[%s1224 + $0x4] sm:$0xf]
      %v1227 = vld [vmem:[%s1224 + $0x8] sm:$0xf]
      %v1228 = vld [vmem:[%s1224 + $0xc] sm:$0xf]
      %v1229 = vpack.c.bf16 %v1220, %v1219
      %v1230 = vpack.c.bf16 %v1222, %v1221
      %v1231 = vpack.c.bf16 %v1223, %v1223
      %s1232 = scalar_lea.vmem %s9, 3
      %v1233 = vld [vmem:[%s1232] sm:$0x1]
      %v1235 = vlaneseq
      %v1236 = vshrl.u32 %v1235, 7
      %v1237 = vsub.s32 0, %v1236
      %v1238 = vrot.slane %v1233, %v1237
      %v1244 = vunpack.c.l.b16 %v1225
      %v1245 = vunpack.c.l.b16 %v1226
      %v1246 = vunpack.c.l.b16 %v1227
      %v1247 = vunpack.c.l.b16 %v1228
      %v1248 = vpack.c.b16 %v1245, %v1244
      %v1249 = vpack.c.b16 %v1247, %v1246
      %v1253 = vsel %vm1103, %v1229, 0
      %v1256 = vsel %vm1103, %v1230, 0
      %v1259 = vsel %vm1103, %v1231, 0
      %1261 = vmatprep.subr.bf16.mxu0 0
      %1262 = vmatpush1.bf16.msra.mxu0 %v1248
      %1263 = vmatprep.subr.bf16.mxu0 0
      %1264 = vmatpush1.bf16.msra.mxu0 %v1249
      %1265 = vmatprep.subr.bf16.mxu0 0
      %1266 = vmatpush1.bf16.msra.mxu0 0
      %1267 = vmatprep.subr.bf16.mxu0 0
      %1268 = vmatpush1.bf16.msra.mxu0 0
      %1269 = vmatprep.subr.bf16.mxu0 0
      %1270 = vmatpush1.bf16.msra.mxu0 0
      %1271 = vmatprep.subr.bf16.mxu0 0
      %1272 = vmatpush1.bf16.msra.mxu0 0
      %1273 = vmatprep.subr.bf16.mxu0 0
      %1274 = vmatpush1.bf16.msra.mxu0 0
      %1275 = vmatprep.subr.bf16.mxu0 0
      %1276 = vmatpush1.bf16.msra.mxu0 0
      %1277 = vmatprep.subr.bf16.mxu0 0
      %1278 = vmatpush1.bf16.msra.mxu0 0
      %1279 = vmatprep.subr.bf16.mxu0 0
      %1280 = vmatpush1.bf16.msra.mxu0 0
      %1281 = vmatprep.subr.bf16.mxu0 0
      %1282 = vmatpush1.bf16.msra.mxu0 0
      %1283 = vmatprep.subr.bf16.mxu0 0
      %1284 = vmatpush1.bf16.msra.mxu0 0
      %1285 = vmatprep.subr.bf16.mxu0 0
      %1286 = vmatpush1.bf16.msra.mxu0 0
      %1287 = vmatprep.subr.bf16.mxu0 0
      %1288 = vmatpush1.bf16.msra.mxu0 0
      %1289 = vmatprep.subr.bf16.mxu0 0
      %1290 = vmatpush1.bf16.msra.mxu0 0
      %1291 = vmatprep.subr.bf16.mxu0 0
      %1292 = vmatpush1.bf16.msra.mxu0 0
      %1293 = vmatprep.mubr.bf16.mxu0 0
      %1294 = vmatmul.mubr.bf16.gmra.mrb[0].mxu0 %v1253
      %v1295 = vpop.f32.mrb[0].mxu0
      %v1296 = vadd.f32 %v1238, %v1295
      %v1297 = vpop.f32.mrb[0].mxu0
      %v1298 = vpop.f32.mrb[0].mxu0
      %v1299 = vadd.f32 %v1238, %v1298
      %v1300 = vpop.f32.mrb[0].mxu0
      %1301 = vmatprep.mubr.bf16.mxu0 0
      %1302 = vmatmul.mubr.bf16.gmra.mrb[0].mxu0 %v1256
      %v1303 = vpop.f32.mrb[0].mxu0
      %v1304 = vadd.f32 %v1238, %v1303
      %v1305 = vpop.f32.mrb[0].mxu0
      %v1306 = vpop.f32.mrb[0].mxu0
      %v1307 = vadd.f32 %v1238, %v1306
      %v1308 = vpop.f32.mrb[0].mxu0
      %1309 = vmatprep.mubr.bf16.mxu0 0
      %1310 = vmatmul.mubr.bf16.gmra.mrb[0].mxu0 %v1259
      %v1311 = vpop.f32.mrb[0].mxu0
      %v1312 = vadd.f32 %v1238, %v1311
      %v1313 = vpop.f32.mrb[0].mxu0
      %v1314 = vpop.f32.mrb[0].mxu0
      %v1315 = vpop.f32.mrb[0].mxu0
      %1316 = vdwg.mxu0
      %v1317 = vtanh.pop %v1296
      %v1318 = vtanh.pop %v1299
      %v1319 = vtanh.pop %v1304
      %v1320 = vtanh.pop %v1307
      %v1321 = vtanh.pop %v1312
      %1323 = vset.pattern.permute.xlu0 1
      %1324 = vperm.xlu0 %1323, %v897
      %v1325 = vpop.permute.xlu0 %1324
      %1328 = vset.pattern.permute.xlu0 1
      %1329 = vperm.xlu0 %1328, %v898
      %v1330 = vpop.permute.xlu0 %1329
      %1333 = vset.pattern.permute.xlu0 1
      %1334 = vperm.xlu0 %1333, %v899
      %v1335 = vpop.permute.xlu0 %1334
      %1338 = vset.pattern.permute.xlu0 1
      %1339 = vperm.xlu0 %1338, %v900
      %v1340 = vpop.permute.xlu0 %1339
      %1343 = vset.pattern.permute.xlu0 1
      %1344 = vperm.xlu0 %1343, %v901
      %v1345 = vpop.permute.xlu0 %1344
      %v1347 = vmul.f32 %v1317, %v1325
      %v1348 = vmul.f32 %v1318, %v1330
      %v1349 = vmul.f32 %v1319, %v1335
      %v1350 = vmul.f32 %v1320, %v1340
      %v1351 = vmul.f32 %v1321, %v1345
      %v1352 = vadd.f32 %v1347, 0.0
      %v1353 = vadd.f32 %v1348, 0.0
      %v1354 = vadd.f32 %v1349, 0.0
      %v1355 = vadd.f32 %v1350, 0.0
      %v1356 = vadd.f32 %v1351, 0.0
      %v1357 = vld [vmem:[%s4] sm:$0xf]
      %v1358 = vld [vmem:[%s4 + $0x4] sm:$0x1]
      %v1359 = vpack.c.bf16 %v1353, %v1352
      %v1360 = vpack.c.bf16 %v1355, %v1354
      %v1361 = vpack.c.bf16 %v1356, %v1356
      %v1364 = vunpack.c.l.b16 %v1357
      %v1365 = vunpack.c.l.b16 %v1358
      %v1366 = vpack.c.b16 %v1365, %v1364
      %vm1367 = vcmask 326656
      %v1369 = vsel %vm1367, %v1366, 0
      %vm1371 = vcmask 1043456
      %v1373 = vsel %vm1371, %v1361, 0
      %1375 = vmatprep.subr.bf16.mxu0 0
      %1376 = vmatpush1.bf16.msra.mxu0 %v1359
      %1377 = vmatprep.subr.bf16.mxu0 0
      %1378 = vmatpush1.bf16.msra.mxu0 %v1360
      %1379 = vmatprep.subr.bf16.mxu0 0
      %1380 = vmatpush1.bf16.msra.mxu0 %v1373
      %1381 = vmatprep.subr.bf16.mxu0 0
      %1382 = vmatpush1.bf16.msra.mxu0 0
      %1383 = vmatprep.subr.bf16.mxu0 0
      %1384 = vmatpush1.bf16.msra.mxu0 0
      %1385 = vmatprep.subr.bf16.mxu0 0
      %1386 = vmatpush1.bf16.msra.mxu0 0
      %1387 = vmatprep.subr.bf16.mxu0 0
      %1388 = vmatpush1.bf16.msra.mxu0 0
      %1389 = vmatprep.subr.bf16.mxu0 0
      %1390 = vmatpush1.bf16.msra.mxu0 0
      %1391 = vmatprep.subr.bf16.mxu0 0
      %1392 = vmatpush1.bf16.msra.mxu0 0
      %1393 = vmatprep.subr.bf16.mxu0 0
      %1394 = vmatpush1.bf16.msra.mxu0 0
      %1395 = vmatprep.subr.bf16.mxu0 0
      %1396 = vmatpush1.bf16.msra.mxu0 0
      %1397 = vmatprep.subr.bf16.mxu0 0
      %1398 = vmatpush1.bf16.msra.mxu0 0
      %1399 = vmatprep.subr.bf16.mxu0 0
      %1400 = vmatpush1.bf16.msra.mxu0 0
      %1401 = vmatprep.subr.bf16.mxu0 0
      %1402 = vmatpush1.bf16.msra.mxu0 0
      %1403 = vmatprep.subr.bf16.mxu0 0
      %1404 = vmatpush1.bf16.msra.mxu0 0
      %1405 = vmatprep.subr.bf16.mxu0 0
      %1406 = vmatpush1.bf16.msra.mxu0 0
      %1407 = vmatprep.mubr.bf16.mxu0 0
      %1408 = vmatmul.mubr.bf16.gmra.mrb[0].mxu0 %v1369
      %v1409 = vpop.f32.mrb[0].mxu0
      %v1410 = vadd.f32 0.0, %v1409
      %v1411 = vpop.f32.mrb[0].mxu0
      %v1412 = vpop.f32.mrb[0].mxu0
      %v1413 = vadd.f32 0.0, %v1412
      %v1414 = vpop.f32.mrb[0].mxu0
      %1415 = vdwg.mxu0
      %v1416 = vmul.f32 %v1410, 0.25
      %v1417 = vmul.f32 %v1413, 0.25
      %v1418 = vld [vmem:[%s10] sm:$0x3]
      %v1419 = vpack.c.bf16 %v894, %v893
      %v1420 = vld [vmem:[%s11] sm:$0x1]
      %v1422 = vlaneseq
      %v1423 = vshrl.u32 %v1422, 7
      %v1424 = vsub.s32 0, %v1423
      %v1425 = vrot.slane %v1420, %v1424
      %vm1427 = vcmask 31744
      %v1429 = vsel %vm1427, %v1419, 0
      %vm1431 = vcmask 1041408
      %v1433 = vsel %vm1431, %v1418, 0
      %1435 = vmatprep.subr.bf16.mxu0 0
      %1436 = vmatpush1.bf16.msra.mxu0 %v1433
      %1437 = vmatprep.subr.bf16.mxu0 0
      %1438 = vmatpush1.bf16.msra.mxu0 0
      %1439 = vmatprep.subr.bf16.mxu0 0
      %1440 = vmatpush1.bf16.msra.mxu0 0
      %1441 = vmatprep.subr.bf16.mxu0 0
      %1442 = vmatpush1.bf16.msra.mxu0 0
      %1443 = vmatprep.subr.bf16.mxu0 0
      %1444 = vmatpush1.bf16.msra.mxu0 0
      %1445 = vmatprep.subr.bf16.mxu0 0
      %1446 = vmatpush1.bf16.msra.mxu0 0
      %1447 = vmatprep.subr.bf16.mxu0 0
      %1448 = vmatpush1.bf16.msra.mxu0 0
      %1449 = vmatprep.subr.bf16.mxu0 0
      %1450 = vmatpush1.bf16.msra.mxu0 0
      %1451 = vmatprep.subr.bf16.mxu0 0
      %1452 = vmatpush1.bf16.msra.mxu0 0
      %1453 = vmatprep.subr.bf16.mxu0 0
      %1454 = vmatpush1.bf16.msra.mxu0 0
      %1455 = vmatprep.subr.bf16.mxu0 0
      %1456 = vmatpush1.bf16.msra.mxu0 0
      %1457 = vmatprep.subr.bf16.mxu0 0
      %1458 = vmatpush1.bf16.msra.mxu0 0
      %1459 = vmatprep.subr.bf16.mxu0 0
      %1460 = vmatpush1.bf16.msra.mxu0 0
      %1461 = vmatprep.subr.bf16.mxu0 0
      %1462 = vmatpush1.bf16.msra.mxu0 0
      %1463 = vmatprep.subr.bf16.mxu0 0
      %1464 = vmatpush1.bf16.msra.mxu0 0
      %1465 = vmatprep.subr.bf16.mxu0 0
      %1466 = vmatpush1.bf16.msra.mxu0 0
      %1467 = vmatprep.mubr.bf16.mxu0 0
      %1468 = vmatmul.mubr.bf16.gmra.mrb[0].mxu0 %v1429
      %v1469 = vpop.f32.mrb[0].mxu0
      %v1470 = vadd.f32 %v1425, %v1469
      %v1471 = vpop.f32.mrb[0].mxu0
      %v1472 = vpop.f32.mrb[0].mxu0
      %v1473 = vadd.f32 %v1425, %v1472
      %v1474 = vpop.f32.mrb[0].mxu0
      %1475 = vdwg.mxu0
      %v1476 = vld [vmem:[%s12] sm:$0xf]
      %v1477 = vld [vmem:[%s12 + $0x4] sm:$0xf]
      %v1478 = vld [vmem:[%s12 + $0x8] sm:$0xf]
      %v1479 = vld [vmem:[%s12 + $0xc] sm:$0xf]
      %v1480 = vld [vmem:[%s13] sm:$0x1]
      %v1481 = vld [vmem:[%s14] sm:$0xf]
      %v1482 = vld [vmem:[%s14 + $0x4] sm:$0xf]
      %v1483 = vld [vmem:[%s14 + $0x8] sm:$0xf]
      %v1484 = vld [vmem:[%s14 + $0xc] sm:$0xf]
      %v1485 = vld [vmem:[%s15] sm:$0x1]
      %v1486 = vpack.c.bf16 %v1473, %v1470
      %v1488 = vlaneseq
      %v1489 = vshrl.u32 %v1488, 7
      %v1490 = vsub.s32 0, %v1489
      %v1491 = vrot.slane %v1480, %v1490
      %v1497 = vunpack.c.l.b16 %v1476
      %v1498 = vunpack.c.l.b16 %v1477
      %v1499 = vunpack.c.l.b16 %v1478
      %v1500 = vunpack.c.l.b16 %v1479
      %v1501 = vpack.c.b16 %v1498, %v1497
      %v1502 = vpack.c.b16 %v1500, %v1499
      %v1506 = vsel %vm1103, %v1486, 0
      %1508 = vmatprep.subr.bf16.mxu0 0
      %1509 = vmatpush1.bf16.msra.mxu0 %v1501
      %1510 = vmatprep.subr.bf16.mxu0 0
      %1511 = vmatpush1.bf16.msra.mxu0 %v1502
      %1512 = vmatprep.subr.bf16.mxu0 0
      %1513 = vmatpush1.bf16.msra.mxu0 0
      %1514 = vmatprep.subr.bf16.mxu0 0
      %1515 = vmatpush1.bf16.msra.mxu0 0
      %1516 = vmatprep.subr.bf16.mxu0 0
      %1517 = vmatpush1.bf16.msra.mxu0 0
      %1518 = vmatprep.subr.bf16.mxu0 0
      %1519 = vmatpush1.bf16.msra.mxu0 0
      %1520 = vmatprep.subr.bf16.mxu0 0
      %1521 = vmatpush1.bf16.msra.mxu0 0
      %1522 = vmatprep.subr.bf16.mxu0 0
      %1523 = vmatpush1.bf16.msra.mxu0 0
      %1524 = vmatprep.subr.bf16.mxu0 0
      %1525 = vmatpush1.bf16.msra.mxu0 0
      %1526 = vmatprep.subr.bf16.mxu0 0
      %1527 = vmatpush1.bf16.msra.mxu0 0
      %1528 = vmatprep.subr.bf16.mxu0 0
      %1529 = vmatpush1.bf16.msra.mxu0 0
      %1530 = vmatprep.subr.bf16.mxu0 0
      %1531 = vmatpush1.bf16.msra.mxu0 0
      %1532 = vmatprep.subr.bf16.mxu0 0
      %1533 = vmatpush1.bf16.msra.mxu0 0
      %1534 = vmatprep.subr.bf16.mxu0 0
      %1535 = vmatpush1.bf16.msra.mxu0 0
      %1536 = vmatprep.subr.bf16.mxu0 0
      %1537 = vmatpush1.bf16.msra.mxu0 0
      %1538 = vmatprep.subr.bf16.mxu0 0
      %1539 = vmatpush1.bf16.msra.mxu0 0
      %1540 = vmatprep.mubr.bf16.mxu0 0
      %1541 = vmatmul.mubr.bf16.gmra.mrb[0].mxu0 %v1506
      %v1542 = vpop.f32.mrb[0].mxu0
      %v1543 = vadd.f32 %v1491, %v1542
      %v1544 = vpop.f32.mrb[0].mxu0
      %v1545 = vpop.f32.mrb[0].mxu0
      %v1546 = vadd.f32 %v1491, %v1545
      %v1547 = vpop.f32.mrb[0].mxu0
      %1548 = vdwg.mxu0
      %v1549 = vmul.f32 %v1543, 0.35355338
      %v1550 = vmul.f32 %v1546, 0.35355338
      %v1552 = vlaneseq
      %v1553 = vshrl.u32 %v1552, 7
      %v1554 = vsub.s32 0, %v1553
      %v1555 = vrot.slane %v904, %v1554
      %v1557 = vmul.f32 %v1549, %v1555
      %v1558 = vmul.f32 %v1550, %v1555
      %v1559 = vpack.c.bf16 %v1558, %v1557
      %v1560 = vpack.c.bf16 %v1546, %v1543
      %1562 = vrot.lane.b32.xlu0 %v1560, 96
      %v1563 = vpop.permute.xlu0 %1562
      %v1565 = vsel %vm1103, %v1559, 0
      %v1568 = vsel %vm1103, %v1563, 0
      %1570 = vmatprep.subr.bf16.mxu0 0
      %1571 = vmatpush1.bf16.xpose.msra.mxu0 %v1568
      %1572 = vmatprep.subr.bf16.mxu0 0
      %1573 = vmatpush1.bf16.xpose.msra.mxu0 0
      %1574 = vmatprep.subr.bf16.mxu0 0
      %1575 = vmatpush1.bf16.xpose.msra.mxu0 0
      %1576 = vmatprep.subr.bf16.mxu0 0
      %1577 = vmatpush1.bf16.xpose.msra.mxu0 0
      %1578 = vmatprep.subr.bf16.mxu0 0
      %1579 = vmatpush1.bf16.xpose.msra.mxu0 0
      %1580 = vmatprep.subr.bf16.mxu0 0
      %1581 = vmatpush1.bf16.xpose.msra.mxu0 0
      %1582 = vmatprep.subr.bf16.mxu0 0
      %1583 = vmatpush1.bf16.xpose.msra.mxu0 0
      %1584 = vmatprep.subr.bf16.mxu0 0
      %1585 = vmatpush1.bf16.xpose.msra.mxu0 0
      %1586 = vmatprep.subr.bf16.mxu0 0
      %1587 = vmatpush1.bf16.xpose.msra.mxu0 0
      %1588 = vmatprep.subr.bf16.mxu0 0
      %1589 = vmatpush1.bf16.xpose.msra.mxu0 0
      %1590 = vmatprep.subr.bf16.mxu0 0
      %1591 = vmatpush1.bf16.xpose.msra.mxu0 0
      %1592 = vmatprep.subr.bf16.mxu0 0
      %1593 = vmatpush1.bf16.xpose.msra.mxu0 0
      %1594 = vmatprep.subr.bf16.mxu0 0
      %1595 = vmatpush1.bf16.xpose.msra.mxu0 0
      %1596 = vmatprep.subr.bf16.mxu0 0
      %1597 = vmatpush1.bf16.xpose.msra.mxu0 0
      %1598 = vmatprep.subr.bf16.mxu0 0
      %1599 = vmatpush1.bf16.xpose.msra.mxu0 0
      %1600 = vmatprep.subr.bf16.mxu0 0
      %1601 = vmatpush1.bf16.xpose.msra.mxu0 0
      %1602 = vmatprep.mubr.bf16.mxu0 0
      %1603 = vmatmul.mubr.bf16.gmra.mrb[0].mxu0 %v1565
      %v1604 = vpop.f32.mrb[0].mxu0
      %v1605 = vadd.f32 %v902, %v1604
      %v1606 = vpop.f32.mrb[0].mxu0
      %v1607 = vpop.f32.mrb[0].mxu0
      %v1608 = vadd.f32 %v903, %v1607
      %v1609 = vpop.f32.mrb[0].mxu0
      %1610 = vdwg.mxu0
      %v1611 = vsel %vm930, %v1605, -inf
      %1612 = vmax.xlane.f32.xlu0 %v1611
      %v1613 = vpop.xlane.xlu0 %1612
      %vm1614 = vcmask 74752
      %v1615 = vsel %vm1614, %v1608, -inf
      %1616 = vmax.xlane.f32.xlu0 %v1615
      %v1617 = vpop.xlane.xlu0 %1616
      %v1618 = vsub.f32 %v1605, %v1613
      %v1619 = vsub.f32 %v1608, %v1617
      %v1620 = vmul.f32 %v1618, 1.442695
      %v1621 = vpow.pop %v1620
      %v1622 = vmul.f32 %v1619, 1.442695
      %v1623 = vpow.pop %v1622
      %v1624 = vsel %vm930, %v1621, 0.0
      %1625 = vadd.xlane.f32.xlu0 %v1624
      %v1626 = vpop.xlane.xlu0 %1625
      %v1627 = vsel %vm1614, %v1623, 0.0
      %1628 = vadd.xlane.f32.xlu0 %v1627
      %v1629 = vpop.xlane.xlu0 %1628
      %v1630 = vrcp.pop %v1626
      %v1631 = vmul.f32 %v1621, %v1630
      %v1632 = vrcp.pop %v1629
      %v1633 = vmul.f32 %v1623, %v1632
      %1634 = vrot.lane.b32.xlu0 %v1555, 64
      %v1635 = vpop.permute.xlu0 %1634
      %v1637 = vmul.f32 %v1543, %v1635
      %v1638 = vmul.f32 %v1546, %v1635
      %v1639 = vpack.c.bf16 %v1633, %v1631
      %v1640 = vpack.c.bf16 %v1638, %v1637
      %v1642 = vlaneseq
      %v1643 = vshrl.u32 %v1642, 7
      %v1644 = vsub.s32 0, %v1643
      %v1645 = vrot.slane %v906, %v1644
      %v1647 = vmul.f32 %v1549, %v1645
      %v1648 = vmul.f32 %v1550, %v1645
      %v1649 = vpack.c.bf16 %v1648, %v1647
      %v1651 = vsel %vm1103, %v1649, 0
      %1653 = vmatprep.subr.bf16.mxu0 0
      %1654 = vmatpush1.bf16.xpose.msra.mxu0 %v1568
      %1655 = vmatprep.subr.bf16.mxu0 0
      %1656 = vmatpush1.bf16.xpose.msra.mxu0 0
      %1657 = vmatprep.subr.bf16.mxu0 0
      %1658 = vmatpush1.bf16.xpose.msra.mxu0 0
      %1659 = vmatprep.subr.bf16.mxu0 0
      %1660 = vmatpush1.bf16.xpose.msra.mxu0 0
      %1661 = vmatprep.subr.bf16.mxu0 0
      %1662 = vmatpush1.bf16.xpose.msra.mxu0 0
      %1663 = vmatprep.subr.bf16.mxu0 0
      %1664 = vmatpush1.bf16.xpose.msra.mxu0 0
      %1665 = vmatprep.subr.bf16.mxu0 0
      %1666 = vmatpush1.bf16.xpose.msra.mxu0 0
      %1667 = vmatprep.subr.bf16.mxu0 0
      %1668 = vmatpush1.bf16.xpose.msra.mxu0 0
      %1669 = vmatprep.subr.bf16.mxu0 0
      %1670 = vmatpush1.bf16.xpose.msra.mxu0 0
      %1671 = vmatprep.subr.bf16.mxu0 0
      %1672 = vmatpush1.bf16.xpose.msra.mxu0 0
      %1673 = vmatprep.subr.bf16.mxu0 0
      %1674 = vmatpush1.bf16.xpose.msra.mxu0 0
      %1675 = vmatprep.subr.bf16.mxu0 0
      %1676 = vmatpush1.bf16.xpose.msra.mxu0 0
      %1677 = vmatprep.subr.bf16.mxu0 0
      %1678 = vmatpush1.bf16.xpose.msra.mxu0 0
      %1679 = vmatprep.subr.bf16.mxu0 0
      %1680 = vmatpush1.bf16.xpose.msra.mxu0 0
      %1681 = vmatprep.subr.bf16.mxu0 0
      %1682 = vmatpush1.bf16.xpose.msra.mxu0 0
      %1683 = vmatprep.subr.bf16.mxu0 0
      %1684 = vmatpush1.bf16.xpose.msra.mxu0 0
      %1685 = vmatprep.mubr.bf16.mxu0 0
      %1686 = vmatmul.mubr.bf16.gmra.mrb[0].mxu0 %v1651
      %v1687 = vpop.f32.mrb[0].mxu0
      %v1688 = vadd.f32 %v902, %v1687
      %v1689 = vpop.f32.mrb[0].mxu0
      %v1690 = vpop.f32.mrb[0].mxu0
      %v1691 = vadd.f32 %v903, %v1690
      %v1692 = vpop.f32.mrb[0].mxu0
      %1693 = vdwg.mxu0
      %v1694 = vsel %vm930, %v1688, -inf
      %1695 = vmax.xlane.f32.xlu0 %v1694
      %v1696 = vpop.xlane.xlu0 %1695
      %v1697 = vsel %vm1614, %v1691, -inf
      %1698 = vmax.xlane.f32.xlu0 %v1697
      %v1699 = vpop.xlane.xlu0 %1698
      %v1700 = vsub.f32 %v1688, %v1696
      %v1701 = vsub.f32 %v1691, %v1699
      %v1702 = vmul.f32 %v1700, 1.442695
      %v1703 = vpow.pop %v1702
      %v1704 = vmul.f32 %v1701, 1.442695
      %v1705 = vpow.pop %v1704
      %v1706 = vsel %vm930, %v1703, 0.0
      %1707 = vadd.xlane.f32.xlu0 %v1706
      %v1708 = vpop.xlane.xlu0 %1707
      %v1709 = vsel %vm1614, %v1705, 0.0
      %1710 = vadd.xlane.f32.xlu0 %v1709
      %v1711 = vpop.xlane.xlu0 %1710
      %v1712 = vrcp.pop %v1708
      %v1713 = vmul.f32 %v1703, %v1712
      %v1714 = vrcp.pop %v1711
      %v1715 = vmul.f32 %v1705, %v1714
      %1716 = vrot.lane.b32.xlu0 %v1645, 64
      %v1717 = vpop.permute.xlu0 %1716
      %v1719 = vmul.f32 %v1543, %v1717
      %v1720 = vmul.f32 %v1546, %v1717
      %v1721 = vpack.c.bf16 %v1715, %v1713
      %v1722 = vpack.c.bf16 %v1720, %v1719
      %1724 = vrot.lane.b32.xlu0 %v1722, 64
      %v1725 = vpop.permute.xlu0 %1724
      %v1727 = vsel %vm930, %v1721, 0
      %v1730 = vsel %vm940, %v1725, 0
      %1732 = vmatprep.subr.bf16.mxu0 0
      %1733 = vmatpush1.bf16.msra.mxu0 %v1730
      %1734 = vmatprep.subr.bf16.mxu0 0
      %1735 = vmatpush1.bf16.msra.mxu0 0
      %1736 = vmatprep.subr.bf16.mxu0 0
      %1737 = vmatpush1.bf16.msra.mxu0 0
      %1738 = vmatprep.subr.bf16.mxu0 0
      %1739 = vmatpush1.bf16.msra.mxu0 0
      %1740 = vmatprep.subr.bf16.mxu0 0
      %1741 = vmatpush1.bf16.msra.mxu0 0
      %1742 = vmatprep.subr.bf16.mxu0 0
      %1743 = vmatpush1.bf16.msra.mxu0 0
      %1744 = vmatprep.subr.bf16.mxu0 0
      %1745 = vmatpush1.bf16.msra.mxu0 0
      %1746 = vmatprep.subr.bf16.mxu0 0
      %1747 = vmatpush1.bf16.msra.mxu0 0
      %1748 = vmatprep.subr.bf16.mxu0 0
      %1749 = vmatpush1.bf16.msra.mxu0 0
      %1750 = vmatprep.subr.bf16.mxu0 0
      %1751 = vmatpush1.bf16.msra.mxu0 0
      %1752 = vmatprep.subr.bf16.mxu0 0
      %1753 = vmatpush1.bf16.msra.mxu0 0
      %1754 = vmatprep.subr.bf16.mxu0 0
      %1755 = vmatpush1.bf16.msra.mxu0 0
      %1756 = vmatprep.subr.bf16.mxu0 0
      %1757 = vmatpush1.bf16.msra.mxu0 0
      %1758 = vmatprep.subr.bf16.mxu0 0
      %1759 = vmatpush1.bf16.msra.mxu0 0
      %1760 = vmatprep.subr.bf16.mxu0 0
      %1761 = vmatpush1.bf16.msra.mxu0 0
      %1762 = vmatprep.subr.bf16.mxu0 0
      %1763 = vmatpush1.bf16.msra.mxu0 0
      %1764 = vmatprep.mubr.bf16.mxu0 0
      %1765 = vmatmul.mubr.bf16.gmra.mrb[0].mxu0 %v1727
      %v1766 = vpop.f32.mrb[0].mxu0
      %v1767 = vadd.f32 0.0, %v1766
      %v1768 = vpop.f32.mrb[0].mxu0
      %v1769 = vpop.f32.mrb[0].mxu0
      %v1770 = vadd.f32 0.0, %v1769
      %v1771 = vpop.f32.mrb[0].mxu0
      %1772 = vdwg.mxu0
      %1774 = vrot.lane.b32.xlu0 %v1640, 64
      %v1775 = vpop.permute.xlu0 %1774
      %v1777 = vsel %vm930, %v1639, 0
      %v1780 = vsel %vm940, %v1775, 0
      %1782 = vmatprep.subr.bf16.mxu0 0
      %1783 = vmatpush1.bf16.msra.mxu0 %v1780
      %1784 = vmatprep.subr.bf16.mxu0 0
      %1785 = vmatpush1.bf16.msra.mxu0 0
      %1786 = vmatprep.subr.bf16.mxu0 0
      %1787 = vmatpush1.bf16.msra.mxu0 0
      %1788 = vmatprep.subr.bf16.mxu0 0
      %1789 = vmatpush1.bf16.msra.mxu0 0
      %1790 = vmatprep.subr.bf16.mxu0 0
      %1791 = vmatpush1.bf16.msra.mxu0 0
      %1792 = vmatprep.subr.bf16.mxu0 0
      %1793 = vmatpush1.bf16.msra.mxu0 0
      %1794 = vmatprep.subr.bf16.mxu0 0
      %1795 = vmatpush1.bf16.msra.mxu0 0
      %1796 = vmatprep.subr.bf16.mxu0 0
      %1797 = vmatpush1.bf16.msra.mxu0 0
      %1798 = vmatprep.subr.bf16.mxu0 0
      %1799 = vmatpush1.bf16.msra.mxu0 0
      %1800 = vmatprep.subr.bf16.mxu0 0
      %1801 = vmatpush1.bf16.msra.mxu0 0
      %1802 = vmatprep.subr.bf16.mxu0 0
      %1803 = vmatpush1.bf16.msra.mxu0 0
      %1804 = vmatprep.subr.bf16.mxu0 0
      %1805 = vmatpush1.bf16.msra.mxu0 0
      %1806 = vmatprep.subr.bf16.mxu0 0
      %1807 = vmatpush1.bf16.msra.mxu0 0
      %1808 = vmatprep.subr.bf16.mxu0 0
      %1809 = vmatpush1.bf16.msra.mxu0 0
      %1810 = vmatprep.subr.bf16.mxu0 0
      %1811 = vmatpush1.bf16.msra.mxu0 0
      %1812 = vmatprep.subr.bf16.mxu0 0
      %1813 = vmatpush1.bf16.msra.mxu0 0
      %1814 = vmatprep.mubr.bf16.mxu0 0
      %1815 = vmatmul.mubr.bf16.gmra.mrb[0].mxu0 %v1777
      %v1816 = vpop.f32.mrb[0].mxu0
      %v1817 = vadd.f32 %v1767, %v1816
      %v1818 = vpop.f32.mrb[0].mxu0
      %v1819 = vpop.f32.mrb[0].mxu0
      %v1820 = vadd.f32 %v1770, %v1819
      %v1821 = vpop.f32.mrb[0].mxu0
      %1822 = vdwg.mxu0
      %v1824 = vlaneseq
      %v1825 = vshrl.u32 %v1824, 7
      %v1826 = vsub.s32 0, %v1825
      %v1827 = vrot.slane %v908, %v1826
      %v1829 = vmul.f32 %v1549, %v1827
      %v1830 = vmul.f32 %v1550, %v1827
      %v1831 = vpack.c.bf16 %v1830, %v1829
      %v1833 = vsel %vm1103, %v1831, 0
      %1835 = vmatprep.subr.bf16.mxu0 0
      %1836 = vmatpush1.bf16.xpose.msra.mxu0 %v1568
      %1837 = vmatprep.subr.bf16.mxu0 0
      %1838 = vmatpush1.bf16.xpose.msra.mxu0 0
      %1839 = vmatprep.subr.bf16.mxu0 0
      %1840 = vmatpush1.bf16.xpose.msra.mxu0 0
      %1841 = vmatprep.subr.bf16.mxu0 0
      %1842 = vmatpush1.bf16.xpose.msra.mxu0 0
      %1843 = vmatprep.subr.bf16.mxu0 0
      %1844 = vmatpush1.bf16.xpose.msra.mxu0 0
      %1845 = vmatprep.subr.bf16.mxu0 0
      %1846 = vmatpush1.bf16.xpose.msra.mxu0 0
      %1847 = vmatprep.subr.bf16.mxu0 0
      %1848 = vmatpush1.bf16.xpose.msra.mxu0 0
      %1849 = vmatprep.subr.bf16.mxu0 0
      %1850 = vmatpush1.bf16.xpose.msra.mxu0 0
      %1851 = vmatprep.subr.bf16.mxu0 0
      %1852 = vmatpush1.bf16.xpose.msra.mxu0 0
      %1853 = vmatprep.subr.bf16.mxu0 0
      %1854 = vmatpush1.bf16.xpose.msra.mxu0 0
      %1855 = vmatprep.subr.bf16.mxu0 0
      %1856 = vmatpush1.bf16.xpose.msra.mxu0 0
      %1857 = vmatprep.subr.bf16.mxu0 0
      %1858 = vmatpush1.bf16.xpose.msra.mxu0 0
      %1859 = vmatprep.subr.bf16.mxu0 0
      %1860 = vmatpush1.bf16.xpose.msra.mxu0 0
      %1861 = vmatprep.subr.bf16.mxu0 0
      %1862 = vmatpush1.bf16.xpose.msra.mxu0 0
      %1863 = vmatprep.subr.bf16.mxu0 0
      %1864 = vmatpush1.bf16.xpose.msra.mxu0 0
      %1865 = vmatprep.subr.bf16.mxu0 0
      %1866 = vmatpush1.bf16.xpose.msra.mxu0 0
      %1867 = vmatprep.mubr.bf16.mxu0 0
      %1868 = vmatmul.mubr.bf16.gmra.mrb[0].mxu0 %v1833
      %v1869 = vpop.f32.mrb[0].mxu0
      %v1870 = vadd.f32 %v902, %v1869
      %v1871 = vpop.f32.mrb[0].mxu0
      %v1872 = vpop.f32.mrb[0].mxu0
      %v1873 = vadd.f32 %v903, %v1872
      %v1874 = vpop.f32.mrb[0].mxu0
      %1875 = vdwg.mxu0
      %v1876 = vsel %vm930, %v1870, -inf
      %1877 = vmax.xlane.f32.xlu0 %v1876
      %v1878 = vpop.xlane.xlu0 %1877
      %v1879 = vsel %vm1614, %v1873, -inf
      %1880 = vmax.xlane.f32.xlu0 %v1879
      %v1881 = vpop.xlane.xlu0 %1880
      %v1882 = vsub.f32 %v1870, %v1878
      %v1883 = vsub.f32 %v1873, %v1881
      %v1884 = vmul.f32 %v1882, 1.442695
      %v1885 = vpow.pop %v1884
      %v1886 = vmul.f32 %v1883, 1.442695
      %v1887 = vpow.pop %v1886
      %v1888 = vsel %vm930, %v1885, 0.0
      %1889 = vadd.xlane.f32.xlu0 %v1888
      %v1890 = vpop.xlane.xlu0 %1889
      %v1891 = vsel %vm1614, %v1887, 0.0
      %1892 = vadd.xlane.f32.xlu0 %v1891
      %v1893 = vpop.xlane.xlu0 %1892
      %v1894 = vrcp.pop %v1890
      %v1895 = vmul.f32 %v1885, %v1894
      %v1896 = vrcp.pop %v1893
      %v1897 = vmul.f32 %v1887, %v1896
      %1898 = vrot.lane.b32.xlu0 %v1827, 64
      %v1899 = vpop.permute.xlu0 %1898
      %v1901 = vmul.f32 %v1543, %v1899
      %v1902 = vmul.f32 %v1546, %v1899
      %v1903 = vpack.c.bf16 %v1897, %v1895
      %v1904 = vpack.c.bf16 %v1902, %v1901
      %1906 = vrot.lane.b32.xlu0 %v1904, 64
      %v1907 = vpop.permute.xlu0 %1906
      %v1909 = vsel %vm930, %v1903, 0
      %v1912 = vsel %vm940, %v1907, 0
      %1914 = vmatprep.subr.bf16.mxu0 0
      %1915 = vmatpush1.bf16.msra.mxu0 %v1912
      %1916 = vmatprep.subr.bf16.mxu0 0
      %1917 = vmatpush1.bf16.msra.mxu0 0
      %1918 = vmatprep.subr.bf16.mxu0 0
      %1919 = vmatpush1.bf16.msra.mxu0 0
      %1920 = vmatprep.subr.bf16.mxu0 0
      %1921 = vmatpush1.bf16.msra.mxu0 0
      %1922 = vmatprep.subr.bf16.mxu0 0
      %1923 = vmatpush1.bf16.msra.mxu0 0
      %1924 = vmatprep.subr.bf16.mxu0 0
      %1925 = vmatpush1.bf16.msra.mxu0 0
      %1926 = vmatprep.subr.bf16.mxu0 0
      %1927 = vmatpush1.bf16.msra.mxu0 0
      %1928 = vmatprep.subr.bf16.mxu0 0
      %1929 = vmatpush1.bf16.msra.mxu0 0
      %1930 = vmatprep.subr.bf16.mxu0 0
      %1931 = vmatpush1.bf16.msra.mxu0 0
      %1932 = vmatprep.subr.bf16.mxu0 0
      %1933 = vmatpush1.bf16.msra.mxu0 0
      %1934 = vmatprep.subr.bf16.mxu0 0
      %1935 = vmatpush1.bf16.msra.mxu0 0
      %1936 = vmatprep.subr.bf16.mxu0 0
      %1937 = vmatpush1.bf16.msra.mxu0 0
      %1938 = vmatprep.subr.bf16.mxu0 0
      %1939 = vmatpush1.bf16.msra.mxu0 0
      %1940 = vmatprep.subr.bf16.mxu0 0
      %1941 = vmatpush1.bf16.msra.mxu0 0
      %1942 = vmatprep.subr.bf16.mxu0 0
      %1943 = vmatpush1.bf16.msra.mxu0 0
      %1944 = vmatprep.subr.bf16.mxu0 0
      %1945 = vmatpush1.bf16.msra.mxu0 0
      %1946 = vmatprep.mubr.bf16.mxu0 0
      %1947 = vmatmul.mubr.bf16.gmra.mrb[0].mxu0 %v1909
      %v1948 = vpop.f32.mrb[0].mxu0
      %v1949 = vadd.f32 0.0, %v1948
      %v1950 = vpop.f32.mrb[0].mxu0
      %v1951 = vpop.f32.mrb[0].mxu0
      %v1952 = vadd.f32 0.0, %v1951
      %v1953 = vpop.f32.mrb[0].mxu0
      %1954 = vdwg.mxu0
      %v1955 = vadd.f32 %v1817, %v1949
      %v1956 = vadd.f32 %v1820, %v1952
      %v1958 = vlaneseq
      %v1959 = vshrl.u32 %v1958, 7
      %v1960 = vsub.s32 0, %v1959
      %v1961 = vrot.slane %v910, %v1960
      %v1963 = vmul.f32 %v1549, %v1961
      %v1964 = vmul.f32 %v1550, %v1961
      %v1965 = vpack.c.bf16 %v1964, %v1963
      %v1967 = vsel %vm1103, %v1965, 0
      %1969 = vmatprep.subr.bf16.mxu0 0
      %1970 = vmatpush1.bf16.xpose.msra.mxu0 %v1568
      %1971 = vmatprep.subr.bf16.mxu0 0
      %1972 = vmatpush1.bf16.xpose.msra.mxu0 0
      %1973 = vmatprep.subr.bf16.mxu0 0
      %1974 = vmatpush1.bf16.xpose.msra.mxu0 0
      %1975 = vmatprep.subr.bf16.mxu0 0
      %1976 = vmatpush1.bf16.xpose.msra.mxu0 0
      %1977 = vmatprep.subr.bf16.mxu0 0
      %1978 = vmatpush1.bf16.xpose.msra.mxu0 0
      %1979 = vmatprep.subr.bf16.mxu0 0
      %1980 = vmatpush1.bf16.xpose.msra.mxu0 0
      %1981 = vmatprep.subr.bf16.mxu0 0
      %1982 = vmatpush1.bf16.xpose.msra.mxu0 0
      %1983 = vmatprep.subr.bf16.mxu0 0
      %1984 = vmatpush1.bf16.xpose.msra.mxu0 0
      %1985 = vmatprep.subr.bf16.mxu0 0
      %1986 = vmatpush1.bf16.xpose.msra.mxu0 0
      %1987 = vmatprep.subr.bf16.mxu0 0
      %1988 = vmatpush1.bf16.xpose.msra.mxu0 0
      %1989 = vmatprep.subr.bf16.mxu0 0
      %1990 = vmatpush1.bf16.xpose.msra.mxu0 0
      %1991 = vmatprep.subr.bf16.mxu0 0
      %1992 = vmatpush1.bf16.xpose.msra.mxu0 0
      %1993 = vmatprep.subr.bf16.mxu0 0
      %1994 = vmatpush1.bf16.xpose.msra.mxu0 0
      %1995 = vmatprep.subr.bf16.mxu0 0
      %1996 = vmatpush1.bf16.xpose.msra.mxu0 0
      %1997 = vmatprep.subr.bf16.mxu0 0
      %1998 = vmatpush1.bf16.xpose.msra.mxu0 0
      %1999 = vmatprep.subr.bf16.mxu0 0
      %2000 = vmatpush1.bf16.xpose.msra.mxu0 0
      %2001 = vmatprep.mubr.bf16.mxu0 0
      %2002 = vmatmul.mubr.bf16.gmra.mrb[0].mxu0 %v1967
      %v2003 = vpop.f32.mrb[0].mxu0
      %v2004 = vadd.f32 %v902, %v2003
      %v2005 = vpop.f32.mrb[0].mxu0
      %v2006 = vpop.f32.mrb[0].mxu0
      %v2007 = vadd.f32 %v903, %v2006
      %v2008 = vpop.f32.mrb[0].mxu0
      %2009 = vdwg.mxu0
      %v2010 = vsel %vm930, %v2004, -inf
      %2011 = vmax.xlane.f32.xlu0 %v2010
      %v2012 = vpop.xlane.xlu0 %2011
      %v2013 = vsel %vm1614, %v2007, -inf
      %2014 = vmax.xlane.f32.xlu0 %v2013
      %v2015 = vpop.xlane.xlu0 %2014
      %v2016 = vsub.f32 %v2004, %v2012
      %v2017 = vsub.f32 %v2007, %v2015
      %v2018 = vmul.f32 %v2016, 1.442695
      %v2019 = vpow.pop %v2018
      %v2020 = vmul.f32 %v2017, 1.442695
      %v2021 = vpow.pop %v2020
      %v2022 = vsel %vm930, %v2019, 0.0
      %2023 = vadd.xlane.f32.xlu0 %v2022
      %v2024 = vpop.xlane.xlu0 %2023
      %v2025 = vsel %vm1614, %v2021, 0.0
      %2026 = vadd.xlane.f32.xlu0 %v2025
      %v2027 = vpop.xlane.xlu0 %2026
      %v2028 = vrcp.pop %v2024
      %v2029 = vmul.f32 %v2019, %v2028
      %v2030 = vrcp.pop %v2027
      %v2031 = vmul.f32 %v2021, %v2030
      %2032 = vrot.lane.b32.xlu0 %v1961, 64
      %v2033 = vpop.permute.xlu0 %2032
      %v2035 = vmul.f32 %v1543, %v2033
      %v2036 = vmul.f32 %v1546, %v2033
      %v2037 = vpack.c.bf16 %v2031, %v2029
      %v2038 = vpack.c.bf16 %v2036, %v2035
      %2040 = vrot.lane.b32.xlu0 %v2038, 64
      %v2041 = vpop.permute.xlu0 %2040
      %v2043 = vsel %vm930, %v2037, 0
      %v2046 = vsel %vm940, %v2041, 0
      %2048 = vmatprep.subr.bf16.mxu0 0
      %2049 = vmatpush1.bf16.msra.mxu0 %v2046
      %2050 = vmatprep.subr.bf16.mxu0 0
      %2051 = vmatpush1.bf16.msra.mxu0 0
      %2052 = vmatprep.subr.bf16.mxu0 0
      %2053 = vmatpush1.bf16.msra.mxu0 0
      %2054 = vmatprep.subr.bf16.mxu0 0
      %2055 = vmatpush1.bf16.msra.mxu0 0
      %2056 = vmatprep.subr.bf16.mxu0 0
      %2057 = vmatpush1.bf16.msra.mxu0 0
      %2058 = vmatprep.subr.bf16.mxu0 0
      %2059 = vmatpush1.bf16.msra.mxu0 0
      %2060 = vmatprep.subr.bf16.mxu0 0
      %2061 = vmatpush1.bf16.msra.mxu0 0
      %2062 = vmatprep.subr.bf16.mxu0 0
      %2063 = vmatpush1.bf16.msra.mxu0 0
      %2064 = vmatprep.subr.bf16.mxu0 0
      %2065 = vmatpush1.bf16.msra.mxu0 0
      %2066 = vmatprep.subr.bf16.mxu0 0
      %2067 = vmatpush1.bf16.msra.mxu0 0
      %2068 = vmatprep.subr.bf16.mxu0 0
      %2069 = vmatpush1.bf16.msra.mxu0 0
      %2070 = vmatprep.subr.bf16.mxu0 0
      %2071 = vmatpush1.bf16.msra.mxu0 0
      %2072 = vmatprep.subr.bf16.mxu0 0
      %2073 = vmatpush1.bf16.msra.mxu0 0
      %2074 = vmatprep.subr.bf16.mxu0 0
      %2075 = vmatpush1.bf16.msra.mxu0 0
      %2076 = vmatprep.subr.bf16.mxu0 0
      %2077 = vmatpush1.bf16.msra.mxu0 0
      %2078 = vmatprep.subr.bf16.mxu0 0
      %2079 = vmatpush1.bf16.msra.mxu0 0
      %2080 = vmatprep.mubr.bf16.mxu0 0
      %2081 = vmatmul.mubr.bf16.gmra.mrb[0].mxu0 %v2043
      %v2082 = vpop.f32.mrb[0].mxu0
      %v2083 = vadd.f32 0.0, %v2082
      %v2084 = vpop.f32.mrb[0].mxu0
      %v2085 = vpop.f32.mrb[0].mxu0
      %v2086 = vadd.f32 0.0, %v2085
      %v2087 = vpop.f32.mrb[0].mxu0
      %2088 = vdwg.mxu0
      %v2089 = vadd.f32 %v1955, %v2083
      %v2090 = vadd.f32 %v1956, %v2086
      %v2091 = vpack.c.bf16 %v2090, %v2089
      %v2093 = vlaneseq
      %v2094 = vshrl.u32 %v2093, 7
      %v2095 = vsub.s32 0, %v2094
      %v2096 = vrot.slane %v1485, %v2095
      %v2102 = vunpack.c.l.b16 %v1481
      %v2103 = vunpack.c.l.b16 %v1482
      %v2104 = vunpack.c.l.b16 %v1483
      %v2105 = vunpack.c.l.b16 %v1484
      %v2106 = vpack.c.b16 %v2103, %v2102
      %v2107 = vpack.c.b16 %v2105, %v2104
      %v2111 = vsel %vm1103, %v2091, 0
      %2113 = vmatprep.subr.bf16.mxu0 0
      %2114 = vmatpush1.bf16.msra.mxu0 %v2106
      %2115 = vmatprep.subr.bf16.mxu0 0
      %2116 = vmatpush1.bf16.msra.mxu0 %v2107
      %2117 = vmatprep.subr.bf16.mxu0 0
      %2118 = vmatpush1.bf16.msra.mxu0 0
      %2119 = vmatprep.subr.bf16.mxu0 0
      %2120 = vmatpush1.bf16.msra.mxu0 0
      %2121 = vmatprep.subr.bf16.mxu0 0
      %2122 = vmatpush1.bf16.msra.mxu0 0
      %2123 = vmatprep.subr.bf16.mxu0 0
      %2124 = vmatpush1.bf16.msra.mxu0 0
      %2125 = vmatprep.subr.bf16.mxu0 0
      %2126 = vmatpush1.bf16.msra.mxu0 0
      %2127 = vmatprep.subr.bf16.mxu0 0
      %2128 = vmatpush1.bf16.msra.mxu0 0
      %2129 = vmatprep.subr.bf16.mxu0 0
      %2130 = vmatpush1.bf16.msra.mxu0 0
      %2131 = vmatprep.subr.bf16.mxu0 0
      %2132 = vmatpush1.bf16.msra.mxu0 0
      %2133 = vmatprep.subr.bf16.mxu0 0
      %2134 = vmatpush1.bf16.msra.mxu0 0
      %2135 = vmatprep.subr.bf16.mxu0 0
      %2136 = vmatpush1.bf16.msra.mxu0 0
      %2137 = vmatprep.subr.bf16.mxu0 0
      %2138 = vmatpush1.bf16.msra.mxu0 0
      %2139 = vmatprep.subr.bf16.mxu0 0
      %2140 = vmatpush1.bf16.msra.mxu0 0
      %2141 = vmatprep.subr.bf16.mxu0 0
      %2142 = vmatpush1.bf16.msra.mxu0 0
      %2143 = vmatprep.subr.bf16.mxu0 0
      %2144 = vmatpush1.bf16.msra.mxu0 0
      %2145 = vmatprep.mubr.bf16.mxu0 0
      %2146 = vmatmul.mubr.bf16.gmra.mrb[0].mxu0 %v2111
      %v2147 = vpop.f32.mrb[0].mxu0
      %v2148 = vadd.f32 %v2096, %v2147
      %v2149 = vpop.f32.mrb[0].mxu0
      %v2150 = vpop.f32.mrb[0].mxu0
      %v2151 = vadd.f32 %v2096, %v2150
      %v2152 = vpop.f32.mrb[0].mxu0
      %2153 = vdwg.mxu0
      %v2154 = vadd.f32 %v1470, %v2148
      %v2155 = vadd.f32 %v1473, %v2151
      %v2156 = vld [vmem:[%s22] sm:$0x1]
      %s2157 = scalar_lea.vmem %s22, 1
      %v2158 = vld [vmem:[%s2157] sm:$0x1]
      %v2159 = vsel %vm1103, %v2154, 0.0
      %2160 = vadd.xlane.f32.xlu0 %v2159
      %v2161 = vpop.xlane.xlu0 %2160
      %vm2162 = vcmask 254976
      %v2163 = vsel %vm2162, %v2155, 0.0
      %2164 = vadd.xlane.f32.xlu0 %v2163
      %v2165 = vpop.xlane.xlu0 %2164
      %v2166 = vrcp.pop 32.0
      %v2167 = vmul.f32 %v2161, %v2166
      %v2168 = vmul.f32 %v2165, %v2166
      %v2169 = vsub.f32 %v2154, %v2167
      %v2170 = vsub.f32 %v2155, %v2168
      %v2171 = vmul.f32 %v2169, %v2169
      %v2172 = vmul.f32 %v2170, %v2170
      %v2173 = vsel %vm1103, %v2171, 0.0
      %2174 = vadd.xlane.f32.xlu0 %v2173
      %v2175 = vpop.xlane.xlu0 %2174
      %v2176 = vsel %vm2162, %v2172, 0.0
      %2177 = vadd.xlane.f32.xlu0 %v2176
      %v2178 = vpop.xlane.xlu0 %2177
      %v2179 = vmul.f32 %v2175, %v2166
      %v2180 = vmul.f32 %v2178, %v2166
      %v2181 = vadd.f32 %v2179, 1e-05
      %v2182 = vadd.f32 %v2180, 1e-05
      %v2183 = vrsqrt.pop %v2181
      %v2184 = vrsqrt.pop %v2182
      %v2185 = vmul.f32 %v2169, %v2183
      %v2186 = vmul.f32 %v2170, %v2184
      %v2188 = vlaneseq
      %v2189 = vshrl.u32 %v2188, 7
      %v2190 = vsub.s32 0, %v2189
      %v2191 = vrot.slane %v2156, %v2190
      %v2193 = vmul.f32 %v2185, %v2191
      %v2194 = vmul.f32 %v2186, %v2191
      %v2196 = vlaneseq
      %v2197 = vshrl.u32 %v2196, 7
      %v2198 = vsub.s32 0, %v2197
      %v2199 = vrot.slane %v2158, %v2198
      %v2201 = vadd.f32 %v2193, %v2199
      %v2202 = vadd.f32 %v2194, %v2199
      %v2203 = vld [vmem:[%s18] sm:$0xf]
      %v2204 = vld [vmem:[%s18 + $0x4] sm:$0xf]
      %v2205 = vld [vmem:[%s18 + $0x8] sm:$0xf]
      %v2206 = vld [vmem:[%s18 + $0xc] sm:$0xf]
      %v2207 = vpack.c.bf16 %v2202, %v2201
      %v2208 = vld [vmem:[%s19] sm:$0x1]
      %v2210 = vlaneseq
      %v2211 = vshrl.u32 %v2210, 7
      %v2212 = vsub.s32 0, %v2211
      %v2213 = vrot.slane %v2208, %v2212
      %v2219 = vunpack.c.l.b16 %v2203
      %v2220 = vunpack.c.l.b16 %v2204
      %v2221 = vunpack.c.l.b16 %v2205
      %v2222 = vunpack.c.l.b16 %v2206
      %v2223 = vpack.c.b16 %v2220, %v2219
      %v2224 = vpack.c.b16 %v2222, %v2221
      %v2228 = vsel %vm1103, %v2207, 0
      %2230 = vmatprep.subr.bf16.mxu0 0
      %2231 = vmatpush1.bf16.msra.mxu0 %v2223
      %2232 = vmatprep.subr.bf16.mxu0 0
      %2233 = vmatpush1.bf16.msra.mxu0 %v2224
      %2234 = vmatprep.subr.bf16.mxu0 0
      %2235 = vmatpush1.bf16.msra.mxu0 0
      %2236 = vmatprep.subr.bf16.mxu0 0
      %2237 = vmatpush1.bf16.msra.mxu0 0
      %2238 = vmatprep.subr.bf16.mxu0 0
      %2239 = vmatpush1.bf16.msra.mxu0 0
      %2240 = vmatprep.subr.bf16.mxu0 0
      %2241 = vmatpush1.bf16.msra.mxu0 0
      %2242 = vmatprep.subr.bf16.mxu0 0
      %2243 = vmatpush1.bf16.msra.mxu0 0
      %2244 = vmatprep.subr.bf16.mxu0 0
      %2245 = vmatpush1.bf16.msra.mxu0 0
      %2246 = vmatprep.subr.bf16.mxu0 0
      %2247 = vmatpush1.bf16.msra.mxu0 0
      %2248 = vmatprep.subr.bf16.mxu0 0
      %2249 = vmatpush1.bf16.msra.mxu0 0
      %2250 = vmatprep.subr.bf16.mxu0 0
      %2251 = vmatpush1.bf16.msra.mxu0 0
      %2252 = vmatprep.subr.bf16.mxu0 0
      %2253 = vmatpush1.bf16.msra.mxu0 0
      %2254 = vmatprep.subr.bf16.mxu0 0
      %2255 = vmatpush1.bf16.msra.mxu0 0
      %2256 = vmatprep.subr.bf16.mxu0 0
      %2257 = vmatpush1.bf16.msra.mxu0 0
      %2258 = vmatprep.subr.bf16.mxu0 0
      %2259 = vmatpush1.bf16.msra.mxu0 0
      %2260 = vmatprep.subr.bf16.mxu0 0
      %2261 = vmatpush1.bf16.msra.mxu0 0
      %2262 = vmatprep.mubr.bf16.mxu0 0
      %2263 = vmatmul.mubr.bf16.gmra.mrb[0].mxu0 %v2228
      %v2264 = vpop.f32.mrb[0].mxu0
      %v2265 = vadd.f32 %v2213, %v2264
      %v2266 = vpop.f32.mrb[0].mxu0
      %v2267 = vpop.f32.mrb[0].mxu0
      %v2268 = vadd.f32 %v2213, %v2267
      %v2269 = vpop.f32.mrb[0].mxu0
      %2270 = vdwg.mxu0
      %v2271 = vmax.f32 %v2265, 0.0
      %v2272 = vmax.f32 %v2268, 0.0
      %v2273 = vld [vmem:[%s20] sm:$0xf]
      %v2274 = vld [vmem:[%s20 + $0x4] sm:$0xf]
      %v2275 = vld [vmem:[%s20 + $0x8] sm:$0xf]
      %v2276 = vld [vmem:[%s20 + $0xc] sm:$0xf]
      %v2277 = vld [vmem:[%s20 + $0x10] sm:$0xf]
      %v2278 = vld [vmem:[%s20 + $0x14] sm:$0xf]
      %v2279 = vld [vmem:[%s20 + $0x18] sm:$0xf]
      %v2280 = vld [vmem:[%s20 + $0x1c] sm:$0xf]
      %v2281 = vpack.c.bf16 %v2272, %v2271
      %v2282 = vld [vmem:[%s21] sm:$0x1]
      %v2284 = vlaneseq
      %v2285 = vshrl.u32 %v2284, 7
      %v2286 = vsub.s32 0, %v2285
      %v2287 = vrot.slane %v2282, %v2286
      %v2297 = vunpack.c.l.b16 %v2273
      %v2298 = vunpack.c.l.b16 %v2274
      %v2299 = vunpack.c.l.b16 %v2275
      %v2300 = vunpack.c.l.b16 %v2276
      %v2301 = vunpack.c.l.b16 %v2277
      %v2302 = vunpack.c.l.b16 %v2278
      %v2303 = vunpack.c.l.b16 %v2279
      %v2304 = vunpack.c.l.b16 %v2280
      %v2305 = vpack.c.b16 %v2298, %v2297
      %v2306 = vpack.c.b16 %v2300, %v2299
      %v2307 = vpack.c.b16 %v2302, %v2301
      %v2308 = vpack.c.b16 %v2304, %v2303
      %v2314 = vsel %vm1153, %v2281, 0
      %2316 = vmatprep.subr.bf16.mxu0 0
      %2317 = vmatpush1.bf16.msra.mxu0 %v2305
      %2318 = vmatprep.subr.bf16.mxu0 0
      %2319 = vmatpush1.bf16.msra.mxu0 %v2306
      %2320 = vmatprep.subr.bf16.mxu0 0
      %2321 = vmatpush1.bf16.msra.mxu0 %v2307
      %2322 = vmatprep.subr.bf16.mxu0 0
      %2323 = vmatpush1.bf16.msra.mxu0 %v2308
      %2324 = vmatprep.subr.bf16.mxu0 0
      %2325 = vmatpush1.bf16.msra.mxu0 0
      %2326 = vmatprep.subr.bf16.mxu0 0
      %2327 = vmatpush1.bf16.msra.mxu0 0
      %2328 = vmatprep.subr.bf16.mxu0 0
      %2329 = vmatpush1.bf16.msra.mxu0 0
      %2330 = vmatprep.subr.bf16.mxu0 0
      %2331 = vmatpush1.bf16.msra.mxu0 0
      %2332 = vmatprep.subr.bf16.mxu0 0
      %2333 = vmatpush1.bf16.msra.mxu0 0
      %2334 = vmatprep.subr.bf16.mxu0 0
      %2335 = vmatpush1.bf16.msra.mxu0 0
      %2336 = vmatprep.subr.bf16.mxu0 0
      %2337 = vmatpush1.bf16.msra.mxu0 0
      %2338 = vmatprep.subr.bf16.mxu0 0
      %2339 = vmatpush1.bf16.msra.mxu0 0
      %2340 = vmatprep.subr.bf16.mxu0 0
      %2341 = vmatpush1.bf16.msra.mxu0 0
      %2342 = vmatprep.subr.bf16.mxu0 0
      %2343 = vmatpush1.bf16.msra.mxu0 0
      %2344 = vmatprep.subr.bf16.mxu0 0
      %2345 = vmatpush1.bf16.msra.mxu0 0
      %2346 = vmatprep.subr.bf16.mxu0 0
      %2347 = vmatpush1.bf16.msra.mxu0 0
      %2348 = vmatprep.mubr.bf16.mxu0 0
      %2349 = vmatmul.mubr.bf16.gmra.mrb[0].mxu0 %v2314
      %v2350 = vpop.f32.mrb[0].mxu0
      %v2351 = vadd.f32 %v2287, %v2350
      %v2352 = vpop.f32.mrb[0].mxu0
      %v2353 = vpop.f32.mrb[0].mxu0
      %v2354 = vadd.f32 %v2287, %v2353
      %v2355 = vpop.f32.mrb[0].mxu0
      %2356 = vdwg.mxu0
      %v2357 = vadd.f32 %v2201, %v2351
      %v2358 = vadd.f32 %v2202, %v2354
      %s2359 = scalar_lea.vmem %s22, 2
      %v2360 = vld [vmem:[%s2359] sm:$0x1]
      %s2361 = scalar_lea.vmem %s22, 3
      %v2362 = vld [vmem:[%s2361] sm:$0x1]
      %v2363 = vsel %vm1103, %v2357, 0.0
      %2364 = vadd.xlane.f32.xlu0 %v2363
      %v2365 = vpop.xlane.xlu0 %2364
      %v2366 = vsel %vm2162, %v2358, 0.0
      %2367 = vadd.xlane.f32.xlu0 %v2366
      %v2368 = vpop.xlane.xlu0 %2367
      %v2369 = vmul.f32 %v2365, %v2166
      %v2370 = vmul.f32 %v2368, %v2166
      %v2371 = vsub.f32 %v2357, %v2369
      %v2372 = vsub.f32 %v2358, %v2370
      %v2373 = vmul.f32 %v2371, %v2371
      %v2374 = vmul.f32 %v2372, %v2372
      %v2375 = vsel %vm1103, %v2373, 0.0
      %2376 = vadd.xlane.f32.xlu0 %v2375
      %v2377 = vpop.xlane.xlu0 %2376
      %v2378 = vsel %vm2162, %v2374, 0.0
      %2379 = vadd.xlane.f32.xlu0 %v2378
      %v2380 = vpop.xlane.xlu0 %2379
      %v2381 = vmul.f32 %v2377, %v2166
      %v2382 = vmul.f32 %v2380, %v2166
      %v2383 = vadd.f32 %v2381, 1e-05
      %v2384 = vadd.f32 %v2382, 1e-05
      %v2385 = vrsqrt.pop %v2383
      %v2386 = vrsqrt.pop %v2384
      %v2387 = vmul.f32 %v2371, %v2385
      %v2388 = vmul.f32 %v2372, %v2386
      %v2390 = vlaneseq
      %v2391 = vshrl.u32 %v2390, 7
      %v2392 = vsub.s32 0, %v2391
      %v2393 = vrot.slane %v2360, %v2392
      %v2395 = vmul.f32 %v2387, %v2393
      %v2396 = vmul.f32 %v2388, %v2393
      %v2398 = vlaneseq
      %v2399 = vshrl.u32 %v2398, 7
      %v2400 = vsub.s32 0, %v2399
      %v2401 = vrot.slane %v2362, %v2400
      %v2403 = vadd.f32 %v2395, %v2401
      %v2404 = vadd.f32 %v2396, %v2401
      %s2405 = scalar_lea.vmem %s12, 16
      %v2406 = vld [vmem:[%s2405] sm:$0xf]
      %v2407 = vld [vmem:[%s2405 + $0x4] sm:$0xf]
      %v2408 = vld [vmem:[%s2405 + $0x8] sm:$0xf]
      %v2409 = vld [vmem:[%s2405 + $0xc] sm:$0xf]
      %s2410 = scalar_lea.vmem %s13, 1
      %v2411 = vld [vmem:[%s2410] sm:$0x1]
      %s2412 = scalar_lea.vmem %s14, 16
      %v2413 = vld [vmem:[%s2412] sm:$0xf]
      %v2414 = vld [vmem:[%s2412 + $0x4] sm:$0xf]
      %v2415 = vld [vmem:[%s2412 + $0x8] sm:$0xf]
      %v2416 = vld [vmem:[%s2412 + $0xc] sm:$0xf]
      %s2417 = scalar_lea.vmem %s15, 1
      %v2418 = vld [vmem:[%s2417] sm:$0x1]
      %v2419 = vpack.c.bf16 %v2404, %v2403
      %v2421 = vlaneseq
      %v2422 = vshrl.u32 %v2421, 7
      %v2423 = vsub.s32 0, %v2422
      %v2424 = vrot.slane %v2411, %v2423
      %v2430 = vunpack.c.l.b16 %v2406
      %v2431 = vunpack.c.l.b16 %v2407
      %v2432 = vunpack.c.l.b16 %v2408
      %v2433 = vunpack.c.l.b16 %v2409
      %v2434 = vpack.c.b16 %v2431, %v2430
      %v2435 = vpack.c.b16 %v2433, %v2432
      %v2439 = vsel %vm1103, %v2419, 0
      %2441 = vmatprep.subr.bf16.mxu0 0
      %2442 = vmatpush1.bf16.msra.mxu0 %v2434
      %2443 = vmatprep.subr.bf16.mxu0 0
      %2444 = vmatpush1.bf16.msra.mxu0 %v2435
      %2445 = vmatprep.subr.bf16.mxu0 0
      %2446 = vmatpush1.bf16.msra.mxu0 0
      %2447 = vmatprep.subr.bf16.mxu0 0
      %2448 = vmatpush1.bf16.msra.mxu0 0
      %2449 = vmatprep.subr.bf16.mxu0 0
      %2450 = vmatpush1.bf16.msra.mxu0 0
      %2451 = vmatprep.subr.bf16.mxu0 0
      %2452 = vmatpush1.bf16.msra.mxu0 0
      %2453 = vmatprep.subr.bf16.mxu0 0
      %2454 = vmatpush1.bf16.msra.mxu0 0
      %2455 = vmatprep.subr.bf16.mxu0 0
      %2456 = vmatpush1.bf16.msra.mxu0 0
      %2457 = vmatprep.subr.bf16.mxu0 0
      %2458 = vmatpush1.bf16.msra.mxu0 0
      %2459 = vmatprep.subr.bf16.mxu0 0
      %2460 = vmatpush1.bf16.msra.mxu0 0
      %2461 = vmatprep.subr.bf16.mxu0 0
      %2462 = vmatpush1.bf16.msra.mxu0 0
      %2463 = vmatprep.subr.bf16.mxu0 0
      %2464 = vmatpush1.bf16.msra.mxu0 0
      %2465 = vmatprep.subr.bf16.mxu0 0
      %2466 = vmatpush1.bf16.msra.mxu0 0
      %2467 = vmatprep.subr.bf16.mxu0 0
      %2468 = vmatpush1.bf16.msra.mxu0 0
      %2469 = vmatprep.subr.bf16.mxu0 0
      %2470 = vmatpush1.bf16.msra.mxu0 0
      %2471 = vmatprep.subr.bf16.mxu0 0
      %2472 = vmatpush1.bf16.msra.mxu0 0
      %2473 = vmatprep.mubr.bf16.mxu0 0
      %2474 = vmatmul.mubr.bf16.gmra.mrb[0].mxu0 %v2439
      %v2475 = vpop.f32.mrb[0].mxu0
      %v2476 = vadd.f32 %v2424, %v2475
      %v2477 = vpop.f32.mrb[0].mxu0
      %v2478 = vpop.f32.mrb[0].mxu0
      %v2479 = vadd.f32 %v2424, %v2478
      %v2480 = vpop.f32.mrb[0].mxu0
      %2481 = vdwg.mxu0
      %v2482 = vmul.f32 %v2476, 0.35355338
      %v2483 = vmul.f32 %v2479, 0.35355338
      %v2484 = vmul.f32 %v2482, %v1555
      %v2485 = vmul.f32 %v2483, %v1555
      %v2486 = vpack.c.bf16 %v2485, %v2484
      %v2487 = vpack.c.bf16 %v2479, %v2476
      %2489 = vrot.lane.b32.xlu0 %v2487, 96
      %v2490 = vpop.permute.xlu0 %2489
      %v2492 = vsel %vm1103, %v2486, 0
      %v2495 = vsel %vm1103, %v2490, 0
      %2497 = vmatprep.subr.bf16.mxu0 0
      %2498 = vmatpush1.bf16.xpose.msra.mxu0 %v2495
      %2499 = vmatprep.subr.bf16.mxu0 0
      %2500 = vmatpush1.bf16.xpose.msra.mxu0 0
      %2501 = vmatprep.subr.bf16.mxu0 0
      %2502 = vmatpush1.bf16.xpose.msra.mxu0 0
      %2503 = vmatprep.subr.bf16.mxu0 0
      %2504 = vmatpush1.bf16.xpose.msra.mxu0 0
      %2505 = vmatprep.subr.bf16.mxu0 0
      %2506 = vmatpush1.bf16.xpose.msra.mxu0 0
      %2507 = vmatprep.subr.bf16.mxu0 0
      %2508 = vmatpush1.bf16.xpose.msra.mxu0 0
      %2509 = vmatprep.subr.bf16.mxu0 0
      %2510 = vmatpush1.bf16.xpose.msra.mxu0 0
      %2511 = vmatprep.subr.bf16.mxu0 0
      %2512 = vmatpush1.bf16.xpose.msra.mxu0 0
      %2513 = vmatprep.subr.bf16.mxu0 0
      %2514 = vmatpush1.bf16.xpose.msra.mxu0 0
      %2515 = vmatprep.subr.bf16.mxu0 0
      %2516 = vmatpush1.bf16.xpose.msra.mxu0 0
      %2517 = vmatprep.subr.bf16.mxu0 0
      %2518 = vmatpush1.bf16.xpose.msra.mxu0 0
      %2519 = vmatprep.subr.bf16.mxu0 0
      %2520 = vmatpush1.bf16.xpose.msra.mxu0 0
      %2521 = vmatprep.subr.bf16.mxu0 0
      %2522 = vmatpush1.bf16.xpose.msra.mxu0 0
      %2523 = vmatprep.subr.bf16.mxu0 0
      %2524 = vmatpush1.bf16.xpose.msra.mxu0 0
      %2525 = vmatprep.subr.bf16.mxu0 0
      %2526 = vmatpush1.bf16.xpose.msra.mxu0 0
      %2527 = vmatprep.subr.bf16.mxu0 0
      %2528 = vmatpush1.bf16.xpose.msra.mxu0 0
      %2529 = vmatprep.mubr.bf16.mxu0 0
      %2530 = vmatmul.mubr.bf16.gmra.mrb[0].mxu0 %v2492
      %v2531 = vpop.f32.mrb[0].mxu0
      %v2532 = vadd.f32 %v902, %v2531
      %v2533 = vpop.f32.mrb[0].mxu0
      %v2534 = vpop.f32.mrb[0].mxu0
      %v2535 = vadd.f32 %v903, %v2534
      %v2536 = vpop.f32.mrb[0].mxu0
      %2537 = vdwg.mxu0
      %v2538 = vsel %vm930, %v2532, -inf
      %2539 = vmax.xlane.f32.xlu0 %v2538
      %v2540 = vpop.xlane.xlu0 %2539
      %v2541 = vsel %vm1614, %v2535, -inf
      %2542 = vmax.xlane.f32.xlu0 %v2541
      %v2543 = vpop.xlane.xlu0 %2542
      %v2544 = vsub.f32 %v2532, %v2540
      %v2545 = vsub.f32 %v2535, %v2543
      %v2546 = vmul.f32 %v2544, 1.442695
      %v2547 = vpow.pop %v2546
      %v2548 = vmul.f32 %v2545, 1.442695
      %v2549 = vpow.pop %v2548
      %v2550 = vsel %vm930, %v2547, 0.0
      %2551 = vadd.xlane.f32.xlu0 %v2550
      %v2552 = vpop.xlane.xlu0 %2551
      %v2553 = vsel %vm1614, %v2549, 0.0
      %2554 = vadd.xlane.f32.xlu0 %v2553
      %v2555 = vpop.xlane.xlu0 %2554
      %v2556 = vrcp.pop %v2552
      %v2557 = vmul.f32 %v2547, %v2556
      %v2558 = vrcp.pop %v2555
      %v2559 = vmul.f32 %v2549, %v2558
      %v2560 = vmul.f32 %v2476, %v1635
      %v2561 = vmul.f32 %v2479, %v1635
      %v2562 = vpack.c.bf16 %v2559, %v2557
      %v2563 = vpack.c.bf16 %v2561, %v2560
      %v2564 = vmul.f32 %v2482, %v1645
      %v2565 = vmul.f32 %v2483, %v1645
      %v2566 = vpack.c.bf16 %v2565, %v2564
      %v2568 = vsel %vm1103, %v2566, 0
      %2570 = vmatprep.subr.bf16.mxu0 0
      %2571 = vmatpush1.bf16.xpose.msra.mxu0 %v2495
      %2572 = vmatprep.subr.bf16.mxu0 0
      %2573 = vmatpush1.bf16.xpose.msra.mxu0 0
      %2574 = vmatprep.subr.bf16.mxu0 0
      %2575 = vmatpush1.bf16.xpose.msra.mxu0 0
      %2576 = vmatprep.subr.bf16.mxu0 0
      %2577 = vmatpush1.bf16.xpose.msra.mxu0 0
      %2578 = vmatprep.subr.bf16.mxu0 0
      %2579 = vmatpush1.bf16.xpose.msra.mxu0 0
      %2580 = vmatprep.subr.bf16.mxu0 0
      %2581 = vmatpush1.bf16.xpose.msra.mxu0 0
      %2582 = vmatprep.subr.bf16.mxu0 0
      %2583 = vmatpush1.bf16.xpose.msra.mxu0 0
      %2584 = vmatprep.subr.bf16.mxu0 0
      %2585 = vmatpush1.bf16.xpose.msra.mxu0 0
      %2586 = vmatprep.subr.bf16.mxu0 0
      %2587 = vmatpush1.bf16.xpose.msra.mxu0 0
      %2588 = vmatprep.subr.bf16.mxu0 0
      %2589 = vmatpush1.bf16.xpose.msra.mxu0 0
      %2590 = vmatprep.subr.bf16.mxu0 0
      %2591 = vmatpush1.bf16.xpose.msra.mxu0 0
      %2592 = vmatprep.subr.bf16.mxu0 0
      %2593 = vmatpush1.bf16.xpose.msra.mxu0 0
      %2594 = vmatprep.subr.bf16.mxu0 0
      %2595 = vmatpush1.bf16.xpose.msra.mxu0 0
      %2596 = vmatprep.subr.bf16.mxu0 0
      %2597 = vmatpush1.bf16.xpose.msra.mxu0 0
      %2598 = vmatprep.subr.bf16.mxu0 0
      %2599 = vmatpush1.bf16.xpose.msra.mxu0 0
      %2600 = vmatprep.subr.bf16.mxu0 0
      %2601 = vmatpush1.bf16.xpose.msra.mxu0 0
      %2602 = vmatprep.mubr.bf16.mxu0 0
      %2603 = vmatmul.mubr.bf16.gmra.mrb[0].mxu0 %v2568
      %v2604 = vpop.f32.mrb[0].mxu0
      %v2605 = vadd.f32 %v902, %v2604
      %v2606 = vpop.f32.mrb[0].mxu0
      %v2607 = vpop.f32.mrb[0].mxu0
      %v2608 = vadd.f32 %v903, %v2607
      %v2609 = vpop.f32.mrb[0].mxu0
      %2610 = vdwg.mxu0
      %v2611 = vsel %vm930, %v2605, -inf
      %2612 = vmax.xlane.f32.xlu0 %v2611
      %v2613 = vpop.xlane.xlu0 %2612
      %v2614 = vsel %vm1614, %v2608, -inf
      %2615 = vmax.xlane.f32.xlu0 %v2614
      %v2616 = vpop.xlane.xlu0 %2615
      %v2617 = vsub.f32 %v2605, %v2613
      %v2618 = vsub.f32 %v2608, %v2616
      %v2619 = vmul.f32 %v2617, 1.442695
      %v2620 = vpow.pop %v2619
      %v2621 = vmul.f32 %v2618, 1.442695
      %v2622 = vpow.pop %v2621
      %v2623 = vsel %vm930, %v2620, 0.0
      %2624 = vadd.xlane.f32.xlu0 %v2623
      %v2625 = vpop.xlane.xlu0 %2624
      %v2626 = vsel %vm1614, %v2622, 0.0
      %2627 = vadd.xlane.f32.xlu0 %v2626
      %v2628 = vpop.xlane.xlu0 %2627
      %v2629 = vrcp.pop %v2625
      %v2630 = vmul.f32 %v2620, %v2629
      %v2631 = vrcp.pop %v2628
      %v2632 = vmul.f32 %v2622, %v2631
      %v2633 = vmul.f32 %v2476, %v1717
      %v2634 = vmul.f32 %v2479, %v1717
      %v2635 = vpack.c.bf16 %v2632, %v2630
      %v2636 = vpack.c.bf16 %v2634, %v2633
      %2638 = vrot.lane.b32.xlu0 %v2636, 64
      %v2639 = vpop.permute.xlu0 %2638
      %v2641 = vsel %vm930, %v2635, 0
      %v2644 = vsel %vm940, %v2639, 0
      %2646 = vmatprep.subr.bf16.mxu0 0
      %2647 = vmatpush1.bf16.msra.mxu0 %v2644
      %2648 = vmatprep.subr.bf16.mxu0 0
      %2649 = vmatpush1.bf16.msra.mxu0 0
      %2650 = vmatprep.subr.bf16.mxu0 0
      %2651 = vmatpush1.bf16.msra.mxu0 0
      %2652 = vmatprep.subr.bf16.mxu0 0
      %2653 = vmatpush1.bf16.msra.mxu0 0
      %2654 = vmatprep.subr.bf16.mxu0 0
      %2655 = vmatpush1.bf16.msra.mxu0 0
      %2656 = vmatprep.subr.bf16.mxu0 0
      %2657 = vmatpush1.bf16.msra.mxu0 0
      %2658 = vmatprep.subr.bf16.mxu0 0
      %2659 = vmatpush1.bf16.msra.mxu0 0
      %2660 = vmatprep.subr.bf16.mxu0 0
      %2661 = vmatpush1.bf16.msra.mxu0 0
      %2662 = vmatprep.subr.bf16.mxu0 0
      %2663 = vmatpush1.bf16.msra.mxu0 0
      %2664 = vmatprep.subr.bf16.mxu0 0
      %2665 = vmatpush1.bf16.msra.mxu0 0
      %2666 = vmatprep.subr.bf16.mxu0 0
      %2667 = vmatpush1.bf16.msra.mxu0 0
      %2668 = vmatprep.subr.bf16.mxu0 0
      %2669 = vmatpush1.bf16.msra.mxu0 0
      %2670 = vmatprep.subr.bf16.mxu0 0
      %2671 = vmatpush1.bf16.msra.mxu0 0
      %2672 = vmatprep.subr.bf16.mxu0 0
      %2673 = vmatpush1.bf16.msra.mxu0 0
      %2674 = vmatprep.subr.bf16.mxu0 0
      %2675 = vmatpush1.bf16.msra.mxu0 0
      %2676 = vmatprep.subr.bf16.mxu0 0
      %2677 = vmatpush1.bf16.msra.mxu0 0
      %2678 = vmatprep.mubr.bf16.mxu0 0
      %2679 = vmatmul.mubr.bf16.gmra.mrb[0].mxu0 %v2641
      %v2680 = vpop.f32.mrb[0].mxu0
      %v2681 = vadd.f32 0.0, %v2680
      %v2682 = vpop.f32.mrb[0].mxu0
      %v2683 = vpop.f32.mrb[0].mxu0
      %v2684 = vadd.f32 0.0, %v2683
      %v2685 = vpop.f32.mrb[0].mxu0
      %2686 = vdwg.mxu0
      %2688 = vrot.lane.b32.xlu0 %v2563, 64
      %v2689 = vpop.permute.xlu0 %2688
      %v2691 = vsel %vm930, %v2562, 0
      %v2694 = vsel %vm940, %v2689, 0
      %2696 = vmatprep.subr.bf16.mxu0 0
      %2697 = vmatpush1.bf16.msra.mxu0 %v2694
      %2698 = vmatprep.subr.bf16.mxu0 0
      %2699 = vmatpush1.bf16.msra.mxu0 0
      %2700 = vmatprep.subr.bf16.mxu0 0
      %2701 = vmatpush1.bf16.msra.mxu0 0
      %2702 = vmatprep.subr.bf16.mxu0 0
      %2703 = vmatpush1.bf16.msra.mxu0 0
      %2704 = vmatprep.subr.bf16.mxu0 0
      %2705 = vmatpush1.bf16.msra.mxu0 0
      %2706 = vmatprep.subr.bf16.mxu0 0
      %2707 = vmatpush1.bf16.msra.mxu0 0
      %2708 = vmatprep.subr.bf16.mxu0 0
      %2709 = vmatpush1.bf16.msra.mxu0 0
      %2710 = vmatprep.subr.bf16.mxu0 0
      %2711 = vmatpush1.bf16.msra.mxu0 0
      %2712 = vmatprep.subr.bf16.mxu0 0
      %2713 = vmatpush1.bf16.msra.mxu0 0
      %2714 = vmatprep.subr.bf16.mxu0 0
      %2715 = vmatpush1.bf16.msra.mxu0 0
      %2716 = vmatprep.subr.bf16.mxu0 0
      %2717 = vmatpush1.bf16.msra.mxu0 0
      %2718 = vmatprep.subr.bf16.mxu0 0
      %2719 = vmatpush1.bf16.msra.mxu0 0
      %2720 = vmatprep.subr.bf16.mxu0 0
      %2721 = vmatpush1.bf16.msra.mxu0 0
      %2722 = vmatprep.subr.bf16.mxu0 0
      %2723 = vmatpush1.bf16.msra.mxu0 0
      %2724 = vmatprep.subr.bf16.mxu0 0
      %2725 = vmatpush1.bf16.msra.mxu0 0
      %2726 = vmatprep.subr.bf16.mxu0 0
      %2727 = vmatpush1.bf16.msra.mxu0 0
      %2728 = vmatprep.mubr.bf16.mxu0 0
      %2729 = vmatmul.mubr.bf16.gmra.mrb[0].mxu0 %v2691
      %v2730 = vpop.f32.mrb[0].mxu0
      %v2731 = vadd.f32 %v2681, %v2730
      %v2732 = vpop.f32.mrb[0].mxu0
      %v2733 = vpop.f32.mrb[0].mxu0
      %v2734 = vadd.f32 %v2684, %v2733
      %v2735 = vpop.f32.mrb[0].mxu0
      %2736 = vdwg.mxu0
      %v2737 = vmul.f32 %v2482, %v1827
      %v2738 = vmul.f32 %v2483, %v1827
      %v2739 = vpack.c.bf16 %v2738, %v2737
      %v2741 = vsel %vm1103, %v2739, 0
      %2743 = vmatprep.subr.bf16.mxu0 0
      %2744 = vmatpush1.bf16.xpose.msra.mxu0 %v2495
      %2745 = vmatprep.subr.bf16.mxu0 0
      %2746 = vmatpush1.bf16.xpose.msra.mxu0 0
      %2747 = vmatprep.subr.bf16.mxu0 0
      %2748 = vmatpush1.bf16.xpose.msra.mxu0 0
      %2749 = vmatprep.subr.bf16.mxu0 0
      %2750 = vmatpush1.bf16.xpose.msra.mxu0 0
      %2751 = vmatprep.subr.bf16.mxu0 0
      %2752 = vmatpush1.bf16.xpose.msra.mxu0 0
      %2753 = vmatprep.subr.bf16.mxu0 0
      %2754 = vmatpush1.bf16.xpose.msra.mxu0 0
      %2755 = vmatprep.subr.bf16.mxu0 0
      %2756 = vmatpush1.bf16.xpose.msra.mxu0 0
      %2757 = vmatprep.subr.bf16.mxu0 0
      %2758 = vmatpush1.bf16.xpose.msra.mxu0 0
      %2759 = vmatprep.subr.bf16.mxu0 0
      %2760 = vmatpush1.bf16.xpose.msra.mxu0 0
      %2761 = vmatprep.subr.bf16.mxu0 0
      %2762 = vmatpush1.bf16.xpose.msra.mxu0 0
      %2763 = vmatprep.subr.bf16.mxu0 0
      %2764 = vmatpush1.bf16.xpose.msra.mxu0 0
      %2765 = vmatprep.subr.bf16.mxu0 0
      %2766 = vmatpush1.bf16.xpose.msra.mxu0 0
      %2767 = vmatprep.subr.bf16.mxu0 0
      %2768 = vmatpush1.bf16.xpose.msra.mxu0 0
      %2769 = vmatprep.subr.bf16.mxu0 0
      %2770 = vmatpush1.bf16.xpose.msra.mxu0 0
      %2771 = vmatprep.subr.bf16.mxu0 0
      %2772 = vmatpush1.bf16.xpose.msra.mxu0 0
      %2773 = vmatprep.subr.bf16.mxu0 0
      %2774 = vmatpush1.bf16.xpose.msra.mxu0 0
      %2775 = vmatprep.mubr.bf16.mxu0 0
      %2776 = vmatmul.mubr.bf16.gmra.mrb[0].mxu0 %v2741
      %v2777 = vpop.f32.mrb[0].mxu0
      %v2778 = vadd.f32 %v902, %v2777
      %v2779 = vpop.f32.mrb[0].mxu0
      %v2780 = vpop.f32.mrb[0].mxu0
      %v2781 = vadd.f32 %v903, %v2780
      %v2782 = vpop.f32.mrb[0].mxu0
      %2783 = vdwg.mxu0
      %v2784 = vsel %vm930, %v2778, -inf
      %2785 = vmax.xlane.f32.xlu0 %v2784
      %v2786 = vpop.xlane.xlu0 %2785
      %v2787 = vsel %vm1614, %v2781, -inf
      %2788 = vmax.xlane.f32.xlu0 %v2787
      %v2789 = vpop.xlane.xlu0 %2788
      %v2790 = vsub.f32 %v2778, %v2786
      %v2791 = vsub.f32 %v2781, %v2789
      %v2792 = vmul.f32 %v2790, 1.442695
      %v2793 = vpow.pop %v2792
      %v2794 = vmul.f32 %v2791, 1.442695
      %v2795 = vpow.pop %v2794
      %v2796 = vsel %vm930, %v2793, 0.0
      %2797 = vadd.xlane.f32.xlu0 %v2796
      %v2798 = vpop.xlane.xlu0 %2797
      %v2799 = vsel %vm1614, %v2795, 0.0
      %2800 = vadd.xlane.f32.xlu0 %v2799
      %v2801 = vpop.xlane.xlu0 %2800
      %v2802 = vrcp.pop %v2798
      %v2803 = vmul.f32 %v2793, %v2802
      %v2804 = vrcp.pop %v2801
      %v2805 = vmul.f32 %v2795, %v2804
      %v2806 = vmul.f32 %v2476, %v1899
      %v2807 = vmul.f32 %v2479, %v1899
      %v2808 = vpack.c.bf16 %v2805, %v2803
      %v2809 = vpack.c.bf16 %v2807, %v2806
      %2811 = vrot.lane.b32.xlu0 %v2809, 64
      %v2812 = vpop.permute.xlu0 %2811
      %v2814 = vsel %vm930, %v2808, 0
      %v2817 = vsel %vm940, %v2812, 0
      %2819 = vmatprep.subr.bf16.mxu0 0
      %2820 = vmatpush1.bf16.msra.mxu0 %v2817
      %2821 = vmatprep.subr.bf16.mxu0 0
      %2822 = vmatpush1.bf16.msra.mxu0 0
      %2823 = vmatprep.subr.bf16.mxu0 0
      %2824 = vmatpush1.bf16.msra.mxu0 0
      %2825 = vmatprep.subr.bf16.mxu0 0
      %2826 = vmatpush1.bf16.msra.mxu0 0
      %2827 = vmatprep.subr.bf16.mxu0 0
      %2828 = vmatpush1.bf16.msra.mxu0 0
      %2829 = vmatprep.subr.bf16.mxu0 0
      %2830 = vmatpush1.bf16.msra.mxu0 0
      %2831 = vmatprep.subr.bf16.mxu0 0
      %2832 = vmatpush1.bf16.msra.mxu0 0
      %2833 = vmatprep.subr.bf16.mxu0 0
      %2834 = vmatpush1.bf16.msra.mxu0 0
      %2835 = vmatprep.subr.bf16.mxu0 0
      %2836 = vmatpush1.bf16.msra.mxu0 0
      %2837 = vmatprep.subr.bf16.mxu0 0
      %2838 = vmatpush1.bf16.msra.mxu0 0
      %2839 = vmatprep.subr.bf16.mxu0 0
      %2840 = vmatpush1.bf16.msra.mxu0 0
      %2841 = vmatprep.subr.bf16.mxu0 0
      %2842 = vmatpush1.bf16.msra.mxu0 0
      %2843 = vmatprep.subr.bf16.mxu0 0
      %2844 = vmatpush1.bf16.msra.mxu0 0
      %2845 = vmatprep.subr.bf16.mxu0 0
      %2846 = vmatpush1.bf16.msra.mxu0 0
      %2847 = vmatprep.subr.bf16.mxu0 0
      %2848 = vmatpush1.bf16.msra.mxu0 0
      %2849 = vmatprep.subr.bf16.mxu0 0
      %2850 = vmatpush1.bf16.msra.mxu0 0
      %2851 = vmatprep.mubr.bf16.mxu0 0
      %2852 = vmatmul.mubr.bf16.gmra.mrb[0].mxu0 %v2814
      %v2853 = vpop.f32.mrb[0].mxu0
      %v2854 = vadd.f32 0.0, %v2853
      %v2855 = vpop.f32.mrb[0].mxu0
      %v2856 = vpop.f32.mrb[0].mxu0
      %v2857 = vadd.f32 0.0, %v2856
      %v2858 = vpop.f32.mrb[0].mxu0
      %2859 = vdwg.mxu0
      %v2860 = vadd.f32 %v2731, %v2854
      %v2861 = vadd.f32 %v2734, %v2857
      %v2862 = vmul.f32 %v2482, %v1961
      %v2863 = vmul.f32 %v2483, %v1961
      %v2864 = vpack.c.bf16 %v2863, %v2862
      %v2866 = vsel %vm1103, %v2864, 0
      %2868 = vmatprep.subr.bf16.mxu0 0
      %2869 = vmatpush1.bf16.xpose.msra.mxu0 %v2495
      %2870 = vmatprep.subr.bf16.mxu0 0
      %2871 = vmatpush1.bf16.xpose.msra.mxu0 0
      %2872 = vmatprep.subr.bf16.mxu0 0
      %2873 = vmatpush1.bf16.xpose.msra.mxu0 0
      %2874 = vmatprep.subr.bf16.mxu0 0
      %2875 = vmatpush1.bf16.xpose.msra.mxu0 0
      %2876 = vmatprep.subr.bf16.mxu0 0
      %2877 = vmatpush1.bf16.xpose.msra.mxu0 0
      %2878 = vmatprep.subr.bf16.mxu0 0
      %2879 = vmatpush1.bf16.xpose.msra.mxu0 0
      %2880 = vmatprep.subr.bf16.mxu0 0
      %2881 = vmatpush1.bf16.xpose.msra.mxu0 0
      %2882 = vmatprep.subr.bf16.mxu0 0
      %2883 = vmatpush1.bf16.xpose.msra.mxu0 0
      %2884 = vmatprep.subr.bf16.mxu0 0
      %2885 = vmatpush1.bf16.xpose.msra.mxu0 0
      %2886 = vmatprep.subr.bf16.mxu0 0
      %2887 = vmatpush1.bf16.xpose.msra.mxu0 0
      %2888 = vmatprep.subr.bf16.mxu0 0
      %2889 = vmatpush1.bf16.xpose.msra.mxu0 0
      %2890 = vmatprep.subr.bf16.mxu0 0
      %2891 = vmatpush1.bf16.xpose.msra.mxu0 0
      %2892 = vmatprep.subr.bf16.mxu0 0
      %2893 = vmatpush1.bf16.xpose.msra.mxu0 0
      %2894 = vmatprep.subr.bf16.mxu0 0
      %2895 = vmatpush1.bf16.xpose.msra.mxu0 0
      %2896 = vmatprep.subr.bf16.mxu0 0
      %2897 = vmatpush1.bf16.xpose.msra.mxu0 0
      %2898 = vmatprep.subr.bf16.mxu0 0
      %2899 = vmatpush1.bf16.xpose.msra.mxu0 0
      %2900 = vmatprep.mubr.bf16.mxu0 0
      %2901 = vmatmul.mubr.bf16.gmra.mrb[0].mxu0 %v2866
      %v2902 = vpop.f32.mrb[0].mxu0
      %v2903 = vadd.f32 %v902, %v2902
      %v2904 = vpop.f32.mrb[0].mxu0
      %v2905 = vpop.f32.mrb[0].mxu0
      %v2906 = vadd.f32 %v903, %v2905
      %v2907 = vpop.f32.mrb[0].mxu0
      %2908 = vdwg.mxu0
      %v2909 = vsel %vm930, %v2903, -inf
      %2910 = vmax.xlane.f32.xlu0 %v2909
      %v2911 = vpop.xlane.xlu0 %2910
      %v2912 = vsel %vm1614, %v2906, -inf
      %2913 = vmax.xlane.f32.xlu0 %v2912
      %v2914 = vpop.xlane.xlu0 %2913
      %v2915 = vsub.f32 %v2903, %v2911
      %v2916 = vsub.f32 %v2906, %v2914
      %v2917 = vmul.f32 %v2915, 1.442695
      %v2918 = vpow.pop %v2917
      %v2919 = vmul.f32 %v2916, 1.442695
      %v2920 = vpow.pop %v2919
      %v2921 = vsel %vm930, %v2918, 0.0
      %2922 = vadd.xlane.f32.xlu0 %v2921
      %v2923 = vpop.xlane.xlu0 %2922
      %v2924 = vsel %vm1614, %v2920, 0.0
      %2925 = vadd.xlane.f32.xlu0 %v2924
      %v2926 = vpop.xlane.xlu0 %2925
      %v2927 = vrcp.pop %v2923
      %v2928 = vmul.f32 %v2918, %v2927
      %v2929 = vrcp.pop %v2926
      %v2930 = vmul.f32 %v2920, %v2929
      %v2931 = vmul.f32 %v2476, %v2033
      %v2932 = vmul.f32 %v2479, %v2033
      %v2933 = vpack.c.bf16 %v2930, %v2928
      %v2934 = vpack.c.bf16 %v2932, %v2931
      %2936 = vrot.lane.b32.xlu0 %v2934, 64
      %v2937 = vpop.permute.xlu0 %2936
      %v2939 = vsel %vm930, %v2933, 0
      %v2942 = vsel %vm940, %v2937, 0
      %2944 = vmatprep.subr.bf16.mxu0 0
      %2945 = vmatpush1.bf16.msra.mxu0 %v2942
      %2946 = vmatprep.subr.bf16.mxu0 0
      %2947 = vmatpush1.bf16.msra.mxu0 0
      %2948 = vmatprep.subr.bf16.mxu0 0
      %2949 = vmatpush1.bf16.msra.mxu0 0
      %2950 = vmatprep.subr.bf16.mxu0 0
      %2951 = vmatpush1.bf16.msra.mxu0 0
      %2952 = vmatprep.subr.bf16.mxu0 0
      %2953 = vmatpush1.bf16.msra.mxu0 0
      %2954 = vmatprep.subr.bf16.mxu0 0
      %2955 = vmatpush1.bf16.msra.mxu0 0
      %2956 = vmatprep.subr.bf16.mxu0 0
      %2957 = vmatpush1.bf16.msra.mxu0 0
      %2958 = vmatprep.subr.bf16.mxu0 0
      %2959 = vmatpush1.bf16.msra.mxu0 0
      %2960 = vmatprep.subr.bf16.mxu0 0
      %2961 = vmatpush1.bf16.msra.mxu0 0
      %2962 = vmatprep.subr.bf16.mxu0 0
      %2963 = vmatpush1.bf16.msra.mxu0 0
      %2964 = vmatprep.subr.bf16.mxu0 0
      %2965 = vmatpush1.bf16.msra.mxu0 0
      %2966 = vmatprep.subr.bf16.mxu0 0
      %2967 = vmatpush1.bf16.msra.mxu0 0
      %2968 = vmatprep.subr.bf16.mxu0 0
      %2969 = vmatpush1.bf16.msra.mxu0 0
      %2970 = vmatprep.subr.bf16.mxu0 0
      %2971 = vmatpush1.bf16.msra.mxu0 0
      %2972 = vmatprep.subr.bf16.mxu0 0
      %2973 = vmatpush1.bf16.msra.mxu0 0
      %2974 = vmatprep.subr.bf16.mxu0 0
      %2975 = vmatpush1.bf16.msra.mxu0 0
      %2976 = vmatprep.mubr.bf16.mxu0 0
      %2977 = vmatmul.mubr.bf16.gmra.mrb[0].mxu0 %v2939
      %v2978 = vpop.f32.mrb[0].mxu0
      %v2979 = vadd.f32 0.0, %v2978
      %v2980 = vpop.f32.mrb[0].mxu0
      %v2981 = vpop.f32.mrb[0].mxu0
      %v2982 = vadd.f32 0.0, %v2981
      %v2983 = vpop.f32.mrb[0].mxu0
      %2984 = vdwg.mxu0
      %v2985 = vadd.f32 %v2860, %v2979
      %v2986 = vadd.f32 %v2861, %v2982
      %v2987 = vpack.c.bf16 %v2986, %v2985
      %v2989 = vlaneseq
      %v2990 = vshrl.u32 %v2989, 7
      %v2991 = vsub.s32 0, %v2990
      %v2992 = vrot.slane %v2418, %v2991
      %v2998 = vunpack.c.l.b16 %v2413
      %v2999 = vunpack.c.l.b16 %v2414
      %v3000 = vunpack.c.l.b16 %v2415
      %v3001 = vunpack.c.l.b16 %v2416
      %v3002 = vpack.c.b16 %v2999, %v2998
      %v3003 = vpack.c.b16 %v3001, %v3000
      %v3007 = vsel %vm1103, %v2987, 0
      %3009 = vmatprep.subr.bf16.mxu0 0
      %3010 = vmatpush1.bf16.msra.mxu0 %v3002
      %3011 = vmatprep.subr.bf16.mxu0 0
      %3012 = vmatpush1.bf16.msra.mxu0 %v3003
      %3013 = vmatprep.subr.bf16.mxu0 0
      %3014 = vmatpush1.bf16.msra.mxu0 0
      %3015 = vmatprep.subr.bf16.mxu0 0
      %3016 = vmatpush1.bf16.msra.mxu0 0
      %3017 = vmatprep.subr.bf16.mxu0 0
      %3018 = vmatpush1.bf16.msra.mxu0 0
      %3019 = vmatprep.subr.bf16.mxu0 0
      %3020 = vmatpush1.bf16.msra.mxu0 0
      %3021 = vmatprep.subr.bf16.mxu0 0
      %3022 = vmatpush1.bf16.msra.mxu0 0
      %3023 = vmatprep.subr.bf16.mxu0 0
      %3024 = vmatpush1.bf16.msra.mxu0 0
      %3025 = vmatprep.subr.bf16.mxu0 0
      %3026 = vmatpush1.bf16.msra.mxu0 0
      %3027 = vmatprep.subr.bf16.mxu0 0
      %3028 = vmatpush1.bf16.msra.mxu0 0
      %3029 = vmatprep.subr.bf16.mxu0 0
      %3030 = vmatpush1.bf16.msra.mxu0 0
      %3031 = vmatprep.subr.bf16.mxu0 0
      %3032 = vmatpush1.bf16.msra.mxu0 0
      %3033 = vmatprep.subr.bf16.mxu0 0
      %3034 = vmatpush1.bf16.msra.mxu0 0
      %3035 = vmatprep.subr.bf16.mxu0 0
      %3036 = vmatpush1.bf16.msra.mxu0 0
      %3037 = vmatprep.subr.bf16.mxu0 0
      %3038 = vmatpush1.bf16.msra.mxu0 0
      %3039 = vmatprep.subr.bf16.mxu0 0
      %3040 = vmatpush1.bf16.msra.mxu0 0
      %3041 = vmatprep.mubr.bf16.mxu0 0
      %3042 = vmatmul.mubr.bf16.gmra.mrb[0].mxu0 %v3007
      %v3043 = vpop.f32.mrb[0].mxu0
      %v3044 = vadd.f32 %v2992, %v3043
      %v3045 = vpop.f32.mrb[0].mxu0
      %v3046 = vpop.f32.mrb[0].mxu0
      %v3047 = vadd.f32 %v2992, %v3046
      %v3048 = vpop.f32.mrb[0].mxu0
      %3049 = vdwg.mxu0
      %v3050 = vadd.f32 %v2403, %v3044
      %v3051 = vadd.f32 %v2404, %v3047
      %s3052 = scalar_lea.vmem %s22, 10
      %v3053 = vld [vmem:[%s3052] sm:$0x1]
      %s3054 = scalar_lea.vmem %s22, 11
      %v3055 = vld [vmem:[%s3054] sm:$0x1]
      %v3056 = vsel %vm1103, %v3050, 0.0
      %3057 = vadd.xlane.f32.xlu0 %v3056
      %v3058 = vpop.xlane.xlu0 %3057
      %v3059 = vsel %vm2162, %v3051, 0.0
      %3060 = vadd.xlane.f32.xlu0 %v3059
      %v3061 = vpop.xlane.xlu0 %3060
      %v3062 = vmul.f32 %v3058, %v2166
      %v3063 = vmul.f32 %v3061, %v2166
      %v3064 = vsub.f32 %v3050, %v3062
      %v3065 = vsub.f32 %v3051, %v3063
      %v3066 = vmul.f32 %v3064, %v3064
      %v3067 = vmul.f32 %v3065, %v3065
      %v3068 = vsel %vm1103, %v3066, 0.0
      %3069 = vadd.xlane.f32.xlu0 %v3068
      %v3070 = vpop.xlane.xlu0 %3069
      %v3071 = vsel %vm2162, %v3067, 0.0
      %3072 = vadd.xlane.f32.xlu0 %v3071
      %v3073 = vpop.xlane.xlu0 %3072
      %v3074 = vmul.f32 %v3070, %v2166
      %v3075 = vmul.f32 %v3073, %v2166
      %v3076 = vadd.f32 %v3074, 1e-05
      %v3077 = vadd.f32 %v3075, 1e-05
      %v3078 = vrsqrt.pop %v3076
      %v3079 = vrsqrt.pop %v3077
      %v3080 = vmul.f32 %v3064, %v3078
      %v3081 = vmul.f32 %v3065, %v3079
      %v3083 = vlaneseq
      %v3084 = vshrl.u32 %v3083, 7
      %v3085 = vsub.s32 0, %v3084
      %v3086 = vrot.slane %v3053, %v3085
      %v3088 = vmul.f32 %v3080, %v3086
      %v3089 = vmul.f32 %v3081, %v3086
      %v3091 = vlaneseq
      %v3092 = vshrl.u32 %v3091, 7
      %v3093 = vsub.s32 0, %v3092
      %v3094 = vrot.slane %v3055, %v3093
      %v3096 = vadd.f32 %v3088, %v3094
      %v3097 = vadd.f32 %v3089, %v3094
      %s3098 = scalar_lea.vmem %s18, 16
      %v3099 = vld [vmem:[%s3098] sm:$0xf]
      %v3100 = vld [vmem:[%s3098 + $0x4] sm:$0xf]
      %v3101 = vld [vmem:[%s3098 + $0x8] sm:$0xf]
      %v3102 = vld [vmem:[%s3098 + $0xc] sm:$0xf]
      %v3103 = vpack.c.bf16 %v3097, %v3096
      %s3104 = scalar_lea.vmem %s19, 1
      %v3105 = vld [vmem:[%s3104] sm:$0x1]
      %v3107 = vlaneseq
      %v3108 = vshrl.u32 %v3107, 7
      %v3109 = vsub.s32 0, %v3108
      %v3110 = vrot.slane %v3105, %v3109
      %v3116 = vunpack.c.l.b16 %v3099
      %v3117 = vunpack.c.l.b16 %v3100
      %v3118 = vunpack.c.l.b16 %v3101
      %v3119 = vunpack.c.l.b16 %v3102
      %v3120 = vpack.c.b16 %v3117, %v3116
      %v3121 = vpack.c.b16 %v3119, %v3118
      %v3125 = vsel %vm1103, %v3103, 0
      %3127 = vmatprep.subr.bf16.mxu0 0
      %3128 = vmatpush1.bf16.msra.mxu0 %v3120
      %3129 = vmatprep.subr.bf16.mxu0 0
      %3130 = vmatpush1.bf16.msra.mxu0 %v3121
      %3131 = vmatprep.subr.bf16.mxu0 0
      %3132 = vmatpush1.bf16.msra.mxu0 0
      %3133 = vmatprep.subr.bf16.mxu0 0
      %3134 = vmatpush1.bf16.msra.mxu0 0
      %3135 = vmatprep.subr.bf16.mxu0 0
      %3136 = vmatpush1.bf16.msra.mxu0 0
      %3137 = vmatprep.subr.bf16.mxu0 0
      %3138 = vmatpush1.bf16.msra.mxu0 0
      %3139 = vmatprep.subr.bf16.mxu0 0
      %3140 = vmatpush1.bf16.msra.mxu0 0
      %3141 = vmatprep.subr.bf16.mxu0 0
      %3142 = vmatpush1.bf16.msra.mxu0 0
      %3143 = vmatprep.subr.bf16.mxu0 0
      %3144 = vmatpush1.bf16.msra.mxu0 0
      %3145 = vmatprep.subr.bf16.mxu0 0
      %3146 = vmatpush1.bf16.msra.mxu0 0
      %3147 = vmatprep.subr.bf16.mxu0 0
      %3148 = vmatpush1.bf16.msra.mxu0 0
      %3149 = vmatprep.subr.bf16.mxu0 0
      %3150 = vmatpush1.bf16.msra.mxu0 0
      %3151 = vmatprep.subr.bf16.mxu0 0
      %3152 = vmatpush1.bf16.msra.mxu0 0
      %3153 = vmatprep.subr.bf16.mxu0 0
      %3154 = vmatpush1.bf16.msra.mxu0 0
      %3155 = vmatprep.subr.bf16.mxu0 0
      %3156 = vmatpush1.bf16.msra.mxu0 0
      %3157 = vmatprep.subr.bf16.mxu0 0
      %3158 = vmatpush1.bf16.msra.mxu0 0
      %3159 = vmatprep.mubr.bf16.mxu0 0
      %3160 = vmatmul.mubr.bf16.gmra.mrb[0].mxu0 %v3125
      %v3161 = vpop.f32.mrb[0].mxu0
      %v3162 = vadd.f32 %v3110, %v3161
      %v3163 = vpop.f32.mrb[0].mxu0
      %v3164 = vpop.f32.mrb[0].mxu0
      %v3165 = vadd.f32 %v3110, %v3164
      %v3166 = vpop.f32.mrb[0].mxu0
      %3167 = vdwg.mxu0
      %v3168 = vmax.f32 %v3162, 0.0
      %v3169 = vmax.f32 %v3165, 0.0
      %s3170 = scalar_lea.vmem %s20, 32
      %v3171 = vld [vmem:[%s3170] sm:$0xf]
      %v3172 = vld [vmem:[%s3170 + $0x4] sm:$0xf]
      %v3173 = vld [vmem:[%s3170 + $0x8] sm:$0xf]
      %v3174 = vld [vmem:[%s3170 + $0xc] sm:$0xf]
      %v3175 = vld [vmem:[%s3170 + $0x10] sm:$0xf]
      %v3176 = vld [vmem:[%s3170 + $0x14] sm:$0xf]
      %v3177 = vld [vmem:[%s3170 + $0x18] sm:$0xf]
      %v3178 = vld [vmem:[%s3170 + $0x1c] sm:$0xf]
      %v3179 = vpack.c.bf16 %v3169, %v3168
      %s3180 = scalar_lea.vmem %s21, 1
      %v3181 = vld [vmem:[%s3180] sm:$0x1]
      %v3183 = vlaneseq
      %v3184 = vshrl.u32 %v3183, 7
      %v3185 = vsub.s32 0, %v3184
      %v3186 = vrot.slane %v3181, %v3185
      %v3196 = vunpack.c.l.b16 %v3171
      %v3197 = vunpack.c.l.b16 %v3172
      %v3198 = vunpack.c.l.b16 %v3173
      %v3199 = vunpack.c.l.b16 %v3174
      %v3200 = vunpack.c.l.b16 %v3175
      %v3201 = vunpack.c.l.b16 %v3176
      %v3202 = vunpack.c.l.b16 %v3177
      %v3203 = vunpack.c.l.b16 %v3178
      %v3204 = vpack.c.b16 %v3197, %v3196
      %v3205 = vpack.c.b16 %v3199, %v3198
      %v3206 = vpack.c.b16 %v3201, %v3200
      %v3207 = vpack.c.b16 %v3203, %v3202
      %v3213 = vsel %vm1153, %v3179, 0
      %3215 = vmatprep.subr.bf16.mxu0 0
      %3216 = vmatpush1.bf16.msra.mxu0 %v3204
      %3217 = vmatprep.subr.bf16.mxu0 0
      %3218 = vmatpush1.bf16.msra.mxu0 %v3205
      %3219 = vmatprep.subr.bf16.mxu0 0
      %3220 = vmatpush1.bf16.msra.mxu0 %v3206
      %3221 = vmatprep.subr.bf16.mxu0 0
      %3222 = vmatpush1.bf16.msra.mxu0 %v3207
      %3223 = vmatprep.subr.bf16.mxu0 0
      %3224 = vmatpush1.bf16.msra.mxu0 0
      %3225 = vmatprep.subr.bf16.mxu0 0
      %3226 = vmatpush1.bf16.msra.mxu0 0
      %3227 = vmatprep.subr.bf16.mxu0 0
      %3228 = vmatpush1.bf16.msra.mxu0 0
      %3229 = vmatprep.subr.bf16.mxu0 0
      %3230 = vmatpush1.bf16.msra.mxu0 0
      %3231 = vmatprep.subr.bf16.mxu0 0
      %3232 = vmatpush1.bf16.msra.mxu0 0
      %3233 = vmatprep.subr.bf16.mxu0 0
      %3234 = vmatpush1.bf16.msra.mxu0 0
      %3235 = vmatprep.subr.bf16.mxu0 0
      %3236 = vmatpush1.bf16.msra.mxu0 0
      %3237 = vmatprep.subr.bf16.mxu0 0
      %3238 = vmatpush1.bf16.msra.mxu0 0
      %3239 = vmatprep.subr.bf16.mxu0 0
      %3240 = vmatpush1.bf16.msra.mxu0 0
      %3241 = vmatprep.subr.bf16.mxu0 0
      %3242 = vmatpush1.bf16.msra.mxu0 0
      %3243 = vmatprep.subr.bf16.mxu0 0
      %3244 = vmatpush1.bf16.msra.mxu0 0
      %3245 = vmatprep.subr.bf16.mxu0 0
      %3246 = vmatpush1.bf16.msra.mxu0 0
      %3247 = vmatprep.mubr.bf16.mxu0 0
      %3248 = vmatmul.mubr.bf16.gmra.mrb[0].mxu0 %v3213
      %v3249 = vpop.f32.mrb[0].mxu0
      %v3250 = vadd.f32 %v3186, %v3249
      %v3251 = vpop.f32.mrb[0].mxu0
      %v3252 = vpop.f32.mrb[0].mxu0
      %v3253 = vadd.f32 %v3186, %v3252
      %v3254 = vpop.f32.mrb[0].mxu0
      %3255 = vdwg.mxu0
      %v3256 = vadd.f32 %v3096, %v3250
      %v3257 = vadd.f32 %v3097, %v3253
      %s3258 = scalar_lea.vmem %s22, 12
      %v3259 = vld [vmem:[%s3258] sm:$0x1]
      %s3260 = scalar_lea.vmem %s22, 13
      %v3261 = vld [vmem:[%s3260] sm:$0x1]
      %v3262 = vsel %vm1103, %v3256, 0.0
      %3263 = vadd.xlane.f32.xlu0 %v3262
      %v3264 = vpop.xlane.xlu0 %3263
      %v3265 = vsel %vm2162, %v3257, 0.0
      %3266 = vadd.xlane.f32.xlu0 %v3265
      %v3267 = vpop.xlane.xlu0 %3266
      %v3268 = vmul.f32 %v3264, %v2166
      %v3269 = vmul.f32 %v3267, %v2166
      %v3270 = vsub.f32 %v3256, %v3268
      %v3271 = vsub.f32 %v3257, %v3269
      %v3272 = vmul.f32 %v3270, %v3270
      %v3273 = vmul.f32 %v3271, %v3271
      %v3274 = vsel %vm1103, %v3272, 0.0
      %3275 = vadd.xlane.f32.xlu0 %v3274
      %v3276 = vpop.xlane.xlu0 %3275
      %v3277 = vsel %vm2162, %v3273, 0.0
      %3278 = vadd.xlane.f32.xlu0 %v3277
      %v3279 = vpop.xlane.xlu0 %3278
      %v3280 = vmul.f32 %v3276, %v2166
      %v3281 = vmul.f32 %v3279, %v2166
      %v3282 = vadd.f32 %v3280, 1e-05
      %v3283 = vadd.f32 %v3281, 1e-05
      %v3284 = vrsqrt.pop %v3282
      %v3285 = vrsqrt.pop %v3283
      %v3286 = vmul.f32 %v3270, %v3284
      %v3287 = vmul.f32 %v3271, %v3285
      %v3289 = vlaneseq
      %v3290 = vshrl.u32 %v3289, 7
      %v3291 = vsub.s32 0, %v3290
      %v3292 = vrot.slane %v3259, %v3291
      %v3294 = vmul.f32 %v3286, %v3292
      %v3295 = vmul.f32 %v3287, %v3292
      %v3297 = vlaneseq
      %v3298 = vshrl.u32 %v3297, 7
      %v3299 = vsub.s32 0, %v3298
      %v3300 = vrot.slane %v3261, %v3299
      %v3302 = vadd.f32 %v3294, %v3300
      %v3303 = vadd.f32 %v3295, %v3300
      %v3304 = vld [vmem:[%s23] sm:$0x1]
      %s3305 = scalar_lea.vmem %s23, 1
      %v3306 = vld [vmem:[%s3305] sm:$0x1]
      %v3307 = vsel %vm1103, %v3302, 0.0
      %3308 = vadd.xlane.f32.xlu0 %v3307
      %v3309 = vpop.xlane.xlu0 %3308
      %v3310 = vsel %vm2162, %v3303, 0.0
      %3311 = vadd.xlane.f32.xlu0 %v3310
      %v3312 = vpop.xlane.xlu0 %3311
      %v3313 = vmul.f32 %v3309, %v2166
      %v3314 = vmul.f32 %v3312, %v2166
      %v3315 = vsub.f32 %v3302, %v3313
      %v3316 = vsub.f32 %v3303, %v3314
      %v3317 = vmul.f32 %v3315, %v3315
      %v3318 = vmul.f32 %v3316, %v3316
      %v3319 = vsel %vm1103, %v3317, 0.0
      %3320 = vadd.xlane.f32.xlu0 %v3319
      %v3321 = vpop.xlane.xlu0 %3320
      %v3322 = vsel %vm2162, %v3318, 0.0
      %3323 = vadd.xlane.f32.xlu0 %v3322
      %v3324 = vpop.xlane.xlu0 %3323
      %v3325 = vmul.f32 %v3321, %v2166
      %v3326 = vmul.f32 %v3324, %v2166
      %v3327 = vadd.f32 %v3325, 1e-05
      %v3328 = vadd.f32 %v3326, 1e-05
      %v3329 = vrsqrt.pop %v3327
      %v3330 = vrsqrt.pop %v3328
      %v3331 = vmul.f32 %v3315, %v3329
      %v3332 = vmul.f32 %v3316, %v3330
      %v3334 = vlaneseq
      %v3335 = vshrl.u32 %v3334, 7
      %v3336 = vsub.s32 0, %v3335
      %v3337 = vrot.slane %v3304, %v3336
      %v3339 = vmul.f32 %v3331, %v3337
      %v3340 = vmul.f32 %v3332, %v3337
      %v3342 = vlaneseq
      %v3343 = vshrl.u32 %v3342, 7
      %v3344 = vsub.s32 0, %v3343
      %v3345 = vrot.slane %v3306, %v3344
      %v3347 = vadd.f32 %v3339, %v3345
      %v3348 = vadd.f32 %v3340, %v3345
      %s3349 = scalar_lea.vmem %s12, 32
      %v3350 = vld [vmem:[%s3349] sm:$0xf]
      %v3351 = vld [vmem:[%s3349 + $0x4] sm:$0xf]
      %v3352 = vld [vmem:[%s3349 + $0x8] sm:$0xf]
      %v3353 = vld [vmem:[%s3349 + $0xc] sm:$0xf]
      %s3354 = scalar_lea.vmem %s13, 2
      %v3355 = vld [vmem:[%s3354] sm:$0x1]
      %s3356 = scalar_lea.vmem %s14, 32
      %v3357 = vld [vmem:[%s3356] sm:$0xf]
      %v3358 = vld [vmem:[%s3356 + $0x4] sm:$0xf]
      %v3359 = vld [vmem:[%s3356 + $0x8] sm:$0xf]
      %v3360 = vld [vmem:[%s3356 + $0xc] sm:$0xf]
      %s3361 = scalar_lea.vmem %s15, 2
      %v3362 = vld [vmem:[%s3361] sm:$0x1]
      %v3363 = vpack.c.bf16 %v1417, %v1416
      %v3365 = vlaneseq
      %v3366 = vshrl.u32 %v3365, 7
      %v3367 = vsub.s32 0, %v3366
      %v3368 = vrot.slane %v3355, %v3367
      %v3374 = vunpack.c.l.b16 %v3350
      %v3375 = vunpack.c.l.b16 %v3351
      %v3376 = vunpack.c.l.b16 %v3352
      %v3377 = vunpack.c.l.b16 %v3353
      %v3378 = vpack.c.b16 %v3375, %v3374
      %v3379 = vpack.c.b16 %v3377, %v3376
      %v3383 = vsel %vm1103, %v3363, 0
      %3385 = vmatprep.subr.bf16.mxu0 0
      %3386 = vmatpush1.bf16.msra.mxu0 %v3378
      %3387 = vmatprep.subr.bf16.mxu0 0
      %3388 = vmatpush1.bf16.msra.mxu0 %v3379
      %3389 = vmatprep.subr.bf16.mxu0 0
      %3390 = vmatpush1.bf16.msra.mxu0 0
      %3391 = vmatprep.subr.bf16.mxu0 0
      %3392 = vmatpush1.bf16.msra.mxu0 0
      %3393 = vmatprep.subr.bf16.mxu0 0
      %3394 = vmatpush1.bf16.msra.mxu0 0
      %3395 = vmatprep.subr.bf16.mxu0 0
      %3396 = vmatpush1.bf16.msra.mxu0 0
      %3397 = vmatprep.subr.bf16.mxu0 0
      %3398 = vmatpush1.bf16.msra.mxu0 0
      %3399 = vmatprep.subr.bf16.mxu0 0
      %3400 = vmatpush1.bf16.msra.mxu0 0
      %3401 = vmatprep.subr.bf16.mxu0 0
      %3402 = vmatpush1.bf16.msra.mxu0 0
      %3403 = vmatprep.subr.bf16.mxu0 0
      %3404 = vmatpush1.bf16.msra.mxu0 0
      %3405 = vmatprep.subr.bf16.mxu0 0
      %3406 = vmatpush1.bf16.msra.mxu0 0
      %3407 = vmatprep.subr.bf16.mxu0 0
      %3408 = vmatpush1.bf16.msra.mxu0 0
      %3409 = vmatprep.subr.bf16.mxu0 0
      %3410 = vmatpush1.bf16.msra.mxu0 0
      %3411 = vmatprep.subr.bf16.mxu0 0
      %3412 = vmatpush1.bf16.msra.mxu0 0
      %3413 = vmatprep.subr.bf16.mxu0 0
      %3414 = vmatpush1.bf16.msra.mxu0 0
      %3415 = vmatprep.subr.bf16.mxu0 0
      %3416 = vmatpush1.bf16.msra.mxu0 0
      %3417 = vmatprep.mubr.bf16.mxu0 0
      %3418 = vmatmul.mubr.bf16.gmra.mrb[0].mxu0 %v3383
      %v3419 = vpop.f32.mrb[0].mxu0
      %v3420 = vadd.f32 %v3368, %v3419
      %v3421 = vpop.f32.mrb[0].mxu0
      %v3422 = vpop.f32.mrb[0].mxu0
      %v3423 = vadd.f32 %v3368, %v3422
      %v3424 = vpop.f32.mrb[0].mxu0
      %3425 = vdwg.mxu0
      %v3426 = vmul.f32 %v3420, 0.35355338
      %v3427 = vmul.f32 %v3423, 0.35355338
      %v3428 = vmul.f32 %v3426, %v1555
      %v3429 = vmul.f32 %v3427, %v1555
      %v3430 = vpack.c.bf16 %v3429, %v3428
      %v3431 = vpack.c.bf16 %v3423, %v3420
      %3433 = vrot.lane.b32.xlu0 %v3431, 96
      %v3434 = vpop.permute.xlu0 %3433
      %v3436 = vsel %vm1103, %v3430, 0
      %v3439 = vsel %vm1103, %v3434, 0
      %3441 = vmatprep.subr.bf16.mxu0 0
      %3442 = vmatpush1.bf16.xpose.msra.mxu0 %v3439
      %3443 = vmatprep.subr.bf16.mxu0 0
      %3444 = vmatpush1.bf16.xpose.msra.mxu0 0
      %3445 = vmatprep.subr.bf16.mxu0 0
      %3446 = vmatpush1.bf16.xpose.msra.mxu0 0
      %3447 = vmatprep.subr.bf16.mxu0 0
      %3448 = vmatpush1.bf16.xpose.msra.mxu0 0
      %3449 = vmatprep.subr.bf16.mxu0 0
      %3450 = vmatpush1.bf16.xpose.msra.mxu0 0
      %3451 = vmatprep.subr.bf16.mxu0 0
      %3452 = vmatpush1.bf16.xpose.msra.mxu0 0
      %3453 = vmatprep.subr.bf16.mxu0 0
      %3454 = vmatpush1.bf16.xpose.msra.mxu0 0
      %3455 = vmatprep.subr.bf16.mxu0 0
      %3456 = vmatpush1.bf16.xpose.msra.mxu0 0
      %3457 = vmatprep.subr.bf16.mxu0 0
      %3458 = vmatpush1.bf16.xpose.msra.mxu0 0
      %3459 = vmatprep.subr.bf16.mxu0 0
      %3460 = vmatpush1.bf16.xpose.msra.mxu0 0
      %3461 = vmatprep.subr.bf16.mxu0 0
      %3462 = vmatpush1.bf16.xpose.msra.mxu0 0
      %3463 = vmatprep.subr.bf16.mxu0 0
      %3464 = vmatpush1.bf16.xpose.msra.mxu0 0
      %3465 = vmatprep.subr.bf16.mxu0 0
      %3466 = vmatpush1.bf16.xpose.msra.mxu0 0
      %3467 = vmatprep.subr.bf16.mxu0 0
      %3468 = vmatpush1.bf16.xpose.msra.mxu0 0
      %3469 = vmatprep.subr.bf16.mxu0 0
      %3470 = vmatpush1.bf16.xpose.msra.mxu0 0
      %3471 = vmatprep.subr.bf16.mxu0 0
      %3472 = vmatpush1.bf16.xpose.msra.mxu0 0
      %3473 = vmatprep.mubr.bf16.mxu0 0
      %3474 = vmatmul.mubr.bf16.gmra.mrb[0].mxu0 %v3436
      %v3475 = vpop.f32.mrb[0].mxu0
      %v3476 = vadd.f32 %v902, %v3475
      %v3477 = vpop.f32.mrb[0].mxu0
      %v3478 = vpop.f32.mrb[0].mxu0
      %v3479 = vadd.f32 %v903, %v3478
      %v3480 = vpop.f32.mrb[0].mxu0
      %3481 = vdwg.mxu0
      %v3482 = vsel %vm930, %v3476, -inf
      %3483 = vmax.xlane.f32.xlu0 %v3482
      %v3484 = vpop.xlane.xlu0 %3483
      %v3485 = vsel %vm1614, %v3479, -inf
      %3486 = vmax.xlane.f32.xlu0 %v3485
      %v3487 = vpop.xlane.xlu0 %3486
      %v3488 = vsub.f32 %v3476, %v3484
      %v3489 = vsub.f32 %v3479, %v3487
      %v3490 = vmul.f32 %v3488, 1.442695
      %v3491 = vpow.pop %v3490
      %v3492 = vmul.f32 %v3489, 1.442695
      %v3493 = vpow.pop %v3492
      %v3494 = vsel %vm930, %v3491, 0.0
      %3495 = vadd.xlane.f32.xlu0 %v3494
      %v3496 = vpop.xlane.xlu0 %3495
      %v3497 = vsel %vm1614, %v3493, 0.0
      %3498 = vadd.xlane.f32.xlu0 %v3497
      %v3499 = vpop.xlane.xlu0 %3498
      %v3500 = vrcp.pop %v3496
      %v3501 = vmul.f32 %v3491, %v3500
      %v3502 = vrcp.pop %v3499
      %v3503 = vmul.f32 %v3493, %v3502
      %v3504 = vmul.f32 %v3420, %v1635
      %v3505 = vmul.f32 %v3423, %v1635
      %v3506 = vpack.c.bf16 %v3503, %v3501
      %v3507 = vpack.c.bf16 %v3505, %v3504
      %v3508 = vmul.f32 %v3426, %v1645
      %v3509 = vmul.f32 %v3427, %v1645
      %v3510 = vpack.c.bf16 %v3509, %v3508
      %v3512 = vsel %vm1103, %v3510, 0
      %3514 = vmatprep.subr.bf16.mxu0 0
      %3515 = vmatpush1.bf16.xpose.msra.mxu0 %v3439
      %3516 = vmatprep.subr.bf16.mxu0 0
      %3517 = vmatpush1.bf16.xpose.msra.mxu0 0
      %3518 = vmatprep.subr.bf16.mxu0 0
      %3519 = vmatpush1.bf16.xpose.msra.mxu0 0
      %3520 = vmatprep.subr.bf16.mxu0 0
      %3521 = vmatpush1.bf16.xpose.msra.mxu0 0
      %3522 = vmatprep.subr.bf16.mxu0 0
      %3523 = vmatpush1.bf16.xpose.msra.mxu0 0
      %3524 = vmatprep.subr.bf16.mxu0 0
      %3525 = vmatpush1.bf16.xpose.msra.mxu0 0
      %3526 = vmatprep.subr.bf16.mxu0 0
      %3527 = vmatpush1.bf16.xpose.msra.mxu0 0
      %3528 = vmatprep.subr.bf16.mxu0 0
      %3529 = vmatpush1.bf16.xpose.msra.mxu0 0
      %3530 = vmatprep.subr.bf16.mxu0 0
      %3531 = vmatpush1.bf16.xpose.msra.mxu0 0
      %3532 = vmatprep.subr.bf16.mxu0 0
      %3533 = vmatpush1.bf16.xpose.msra.mxu0 0
      %3534 = vmatprep.subr.bf16.mxu0 0
      %3535 = vmatpush1.bf16.xpose.msra.mxu0 0
      %3536 = vmatprep.subr.bf16.mxu0 0
      %3537 = vmatpush1.bf16.xpose.msra.mxu0 0
      %3538 = vmatprep.subr.bf16.mxu0 0
      %3539 = vmatpush1.bf16.xpose.msra.mxu0 0
      %3540 = vmatprep.subr.bf16.mxu0 0
      %3541 = vmatpush1.bf16.xpose.msra.mxu0 0
      %3542 = vmatprep.subr.bf16.mxu0 0
      %3543 = vmatpush1.bf16.xpose.msra.mxu0 0
      %3544 = vmatprep.subr.bf16.mxu0 0
      %3545 = vmatpush1.bf16.xpose.msra.mxu0 0
      %3546 = vmatprep.mubr.bf16.mxu0 0
      %3547 = vmatmul.mubr.bf16.gmra.mrb[0].mxu0 %v3512
      %v3548 = vpop.f32.mrb[0].mxu0
      %v3549 = vadd.f32 %v902, %v3548
      %v3550 = vpop.f32.mrb[0].mxu0
      %v3551 = vpop.f32.mrb[0].mxu0
      %v3552 = vadd.f32 %v903, %v3551
      %v3553 = vpop.f32.mrb[0].mxu0
      %3554 = vdwg.mxu0
      %v3555 = vsel %vm930, %v3549, -inf
      %3556 = vmax.xlane.f32.xlu0 %v3555
      %v3557 = vpop.xlane.xlu0 %3556
      %v3558 = vsel %vm1614, %v3552, -inf
      %3559 = vmax.xlane.f32.xlu0 %v3558
      %v3560 = vpop.xlane.xlu0 %3559
      %v3561 = vsub.f32 %v3549, %v3557
      %v3562 = vsub.f32 %v3552, %v3560
      %v3563 = vmul.f32 %v3561, 1.442695
      %v3564 = vpow.pop %v3563
      %v3565 = vmul.f32 %v3562, 1.442695
      %v3566 = vpow.pop %v3565
      %v3567 = vsel %vm930, %v3564, 0.0
      %3568 = vadd.xlane.f32.xlu0 %v3567
      %v3569 = vpop.xlane.xlu0 %3568
      %v3570 = vsel %vm1614, %v3566, 0.0
      %3571 = vadd.xlane.f32.xlu0 %v3570
      %v3572 = vpop.xlane.xlu0 %3571
      %v3573 = vrcp.pop %v3569
      %v3574 = vmul.f32 %v3564, %v3573
      %v3575 = vrcp.pop %v3572
      %v3576 = vmul.f32 %v3566, %v3575
      %v3577 = vmul.f32 %v3420, %v1717
      %v3578 = vmul.f32 %v3423, %v1717
      %v3579 = vpack.c.bf16 %v3576, %v3574
      %v3580 = vpack.c.bf16 %v3578, %v3577
      %3582 = vrot.lane.b32.xlu0 %v3580, 64
      %v3583 = vpop.permute.xlu0 %3582
      %v3585 = vsel %vm930, %v3579, 0
      %v3588 = vsel %vm940, %v3583, 0
      %3590 = vmatprep.subr.bf16.mxu0 0
      %3591 = vmatpush1.bf16.msra.mxu0 %v3588
      %3592 = vmatprep.subr.bf16.mxu0 0
      %3593 = vmatpush1.bf16.msra.mxu0 0
      %3594 = vmatprep.subr.bf16.mxu0 0
      %3595 = vmatpush1.bf16.msra.mxu0 0
      %3596 = vmatprep.subr.bf16.mxu0 0
      %3597 = vmatpush1.bf16.msra.mxu0 0
      %3598 = vmatprep.subr.bf16.mxu0 0
      %3599 = vmatpush1.bf16.msra.mxu0 0
      %3600 = vmatprep.subr.bf16.mxu0 0
      %3601 = vmatpush1.bf16.msra.mxu0 0
      %3602 = vmatprep.subr.bf16.mxu0 0
      %3603 = vmatpush1.bf16.msra.mxu0 0
      %3604 = vmatprep.subr.bf16.mxu0 0
      %3605 = vmatpush1.bf16.msra.mxu0 0
      %3606 = vmatprep.subr.bf16.mxu0 0
      %3607 = vmatpush1.bf16.msra.mxu0 0
      %3608 = vmatprep.subr.bf16.mxu0 0
      %3609 = vmatpush1.bf16.msra.mxu0 0
      %3610 = vmatprep.subr.bf16.mxu0 0
      %3611 = vmatpush1.bf16.msra.mxu0 0
      %3612 = vmatprep.subr.bf16.mxu0 0
      %3613 = vmatpush1.bf16.msra.mxu0 0
      %3614 = vmatprep.subr.bf16.mxu0 0
      %3615 = vmatpush1.bf16.msra.mxu0 0
      %3616 = vmatprep.subr.bf16.mxu0 0
      %3617 = vmatpush1.bf16.msra.mxu0 0
      %3618 = vmatprep.subr.bf16.mxu0 0
      %3619 = vmatpush1.bf16.msra.mxu0 0
      %3620 = vmatprep.subr.bf16.mxu0 0
      %3621 = vmatpush1.bf16.msra.mxu0 0
      %3622 = vmatprep.mubr.bf16.mxu0 0
      %3623 = vmatmul.mubr.bf16.gmra.mrb[0].mxu0 %v3585
      %v3624 = vpop.f32.mrb[0].mxu0
      %v3625 = vadd.f32 0.0, %v3624
      %v3626 = vpop.f32.mrb[0].mxu0
      %v3627 = vpop.f32.mrb[0].mxu0
      %v3628 = vadd.f32 0.0, %v3627
      %v3629 = vpop.f32.mrb[0].mxu0
      %3630 = vdwg.mxu0
      %3632 = vrot.lane.b32.xlu0 %v3507, 64
      %v3633 = vpop.permute.xlu0 %3632
      %v3635 = vsel %vm930, %v3506, 0
      %v3638 = vsel %vm940, %v3633, 0
      %3640 = vmatprep.subr.bf16.mxu0 0
      %3641 = vmatpush1.bf16.msra.mxu0 %v3638
      %3642 = vmatprep.subr.bf16.mxu0 0
      %3643 = vmatpush1.bf16.msra.mxu0 0
      %3644 = vmatprep.subr.bf16.mxu0 0
      %3645 = vmatpush1.bf16.msra.mxu0 0
      %3646 = vmatprep.subr.bf16.mxu0 0
      %3647 = vmatpush1.bf16.msra.mxu0 0
      %3648 = vmatprep.subr.bf16.mxu0 0
      %3649 = vmatpush1.bf16.msra.mxu0 0
      %3650 = vmatprep.subr.bf16.mxu0 0
      %3651 = vmatpush1.bf16.msra.mxu0 0
      %3652 = vmatprep.subr.bf16.mxu0 0
      %3653 = vmatpush1.bf16.msra.mxu0 0
      %3654 = vmatprep.subr.bf16.mxu0 0
      %3655 = vmatpush1.bf16.msra.mxu0 0
      %3656 = vmatprep.subr.bf16.mxu0 0
      %3657 = vmatpush1.bf16.msra.mxu0 0
      %3658 = vmatprep.subr.bf16.mxu0 0
      %3659 = vmatpush1.bf16.msra.mxu0 0
      %3660 = vmatprep.subr.bf16.mxu0 0
      %3661 = vmatpush1.bf16.msra.mxu0 0
      %3662 = vmatprep.subr.bf16.mxu0 0
      %3663 = vmatpush1.bf16.msra.mxu0 0
      %3664 = vmatprep.subr.bf16.mxu0 0
      %3665 = vmatpush1.bf16.msra.mxu0 0
      %3666 = vmatprep.subr.bf16.mxu0 0
      %3667 = vmatpush1.bf16.msra.mxu0 0
      %3668 = vmatprep.subr.bf16.mxu0 0
      %3669 = vmatpush1.bf16.msra.mxu0 0
      %3670 = vmatprep.subr.bf16.mxu0 0
      %3671 = vmatpush1.bf16.msra.mxu0 0
      %3672 = vmatprep.mubr.bf16.mxu0 0
      %3673 = vmatmul.mubr.bf16.gmra.mrb[0].mxu0 %v3635
      %v3674 = vpop.f32.mrb[0].mxu0
      %v3675 = vadd.f32 %v3625, %v3674
      %v3676 = vpop.f32.mrb[0].mxu0
      %v3677 = vpop.f32.mrb[0].mxu0
      %v3678 = vadd.f32 %v3628, %v3677
      %v3679 = vpop.f32.mrb[0].mxu0
      %3680 = vdwg.mxu0
      %v3681 = vmul.f32 %v3426, %v1827
      %v3682 = vmul.f32 %v3427, %v1827
      %v3683 = vpack.c.bf16 %v3682, %v3681
      %v3685 = vsel %vm1103, %v3683, 0
      %3687 = vmatprep.subr.bf16.mxu0 0
      %3688 = vmatpush1.bf16.xpose.msra.mxu0 %v3439
      %3689 = vmatprep.subr.bf16.mxu0 0
      %3690 = vmatpush1.bf16.xpose.msra.mxu0 0
      %3691 = vmatprep.subr.bf16.mxu0 0
      %3692 = vmatpush1.bf16.xpose.msra.mxu0 0
      %3693 = vmatprep.subr.bf16.mxu0 0
      %3694 = vmatpush1.bf16.xpose.msra.mxu0 0
      %3695 = vmatprep.subr.bf16.mxu0 0
      %3696 = vmatpush1.bf16.xpose.msra.mxu0 0
      %3697 = vmatprep.subr.bf16.mxu0 0
      %3698 = vmatpush1.bf16.xpose.msra.mxu0 0
      %3699 = vmatprep.subr.bf16.mxu0 0
      %3700 = vmatpush1.bf16.xpose.msra.mxu0 0
      %3701 = vmatprep.subr.bf16.mxu0 0
      %3702 = vmatpush1.bf16.xpose.msra.mxu0 0
      %3703 = vmatprep.subr.bf16.mxu0 0
      %3704 = vmatpush1.bf16.xpose.msra.mxu0 0
      %3705 = vmatprep.subr.bf16.mxu0 0
      %3706 = vmatpush1.bf16.xpose.msra.mxu0 0
      %3707 = vmatprep.subr.bf16.mxu0 0
      %3708 = vmatpush1.bf16.xpose.msra.mxu0 0
      %3709 = vmatprep.subr.bf16.mxu0 0
      %3710 = vmatpush1.bf16.xpose.msra.mxu0 0
      %3711 = vmatprep.subr.bf16.mxu0 0
      %3712 = vmatpush1.bf16.xpose.msra.mxu0 0
      %3713 = vmatprep.subr.bf16.mxu0 0
      %3714 = vmatpush1.bf16.xpose.msra.mxu0 0
      %3715 = vmatprep.subr.bf16.mxu0 0
      %3716 = vmatpush1.bf16.xpose.msra.mxu0 0
      %3717 = vmatprep.subr.bf16.mxu0 0
      %3718 = vmatpush1.bf16.xpose.msra.mxu0 0
      %3719 = vmatprep.mubr.bf16.mxu0 0
      %3720 = vmatmul.mubr.bf16.gmra.mrb[0].mxu0 %v3685
      %v3721 = vpop.f32.mrb[0].mxu0
      %v3722 = vadd.f32 %v902, %v3721
      %v3723 = vpop.f32.mrb[0].mxu0
      %v3724 = vpop.f32.mrb[0].mxu0
      %v3725 = vadd.f32 %v903, %v3724
      %v3726 = vpop.f32.mrb[0].mxu0
      %3727 = vdwg.mxu0
      %v3728 = vsel %vm930, %v3722, -inf
      %3729 = vmax.xlane.f32.xlu0 %v3728
      %v3730 = vpop.xlane.xlu0 %3729
      %v3731 = vsel %vm1614, %v3725, -inf
      %3732 = vmax.xlane.f32.xlu0 %v3731
      %v3733 = vpop.xlane.xlu0 %3732
      %v3734 = vsub.f32 %v3722, %v3730
      %v3735 = vsub.f32 %v3725, %v3733
      %v3736 = vmul.f32 %v3734, 1.442695
      %v3737 = vpow.pop %v3736
      %v3738 = vmul.f32 %v3735, 1.442695
      %v3739 = vpow.pop %v3738
      %v3740 = vsel %vm930, %v3737, 0.0
      %3741 = vadd.xlane.f32.xlu0 %v3740
      %v3742 = vpop.xlane.xlu0 %3741
      %v3743 = vsel %vm1614, %v3739, 0.0
      %3744 = vadd.xlane.f32.xlu0 %v3743
      %v3745 = vpop.xlane.xlu0 %3744
      %v3746 = vrcp.pop %v3742
      %v3747 = vmul.f32 %v3737, %v3746
      %v3748 = vrcp.pop %v3745
      %v3749 = vmul.f32 %v3739, %v3748
      %v3750 = vmul.f32 %v3420, %v1899
      %v3751 = vmul.f32 %v3423, %v1899
      %v3752 = vpack.c.bf16 %v3749, %v3747
      %v3753 = vpack.c.bf16 %v3751, %v3750
      %3755 = vrot.lane.b32.xlu0 %v3753, 64
      %v3756 = vpop.permute.xlu0 %3755
      %v3758 = vsel %vm930, %v3752, 0
      %v3761 = vsel %vm940, %v3756, 0
      %3763 = vmatprep.subr.bf16.mxu0 0
      %3764 = vmatpush1.bf16.msra.mxu0 %v3761
      %3765 = vmatprep.subr.bf16.mxu0 0
      %3766 = vmatpush1.bf16.msra.mxu0 0
      %3767 = vmatprep.subr.bf16.mxu0 0
      %3768 = vmatpush1.bf16.msra.mxu0 0
      %3769 = vmatprep.subr.bf16.mxu0 0
      %3770 = vmatpush1.bf16.msra.mxu0 0
      %3771 = vmatprep.subr.bf16.mxu0 0
      %3772 = vmatpush1.bf16.msra.mxu0 0
      %3773 = vmatprep.subr.bf16.mxu0 0
      %3774 = vmatpush1.bf16.msra.mxu0 0
      %3775 = vmatprep.subr.bf16.mxu0 0
      %3776 = vmatpush1.bf16.msra.mxu0 0
      %3777 = vmatprep.subr.bf16.mxu0 0
      %3778 = vmatpush1.bf16.msra.mxu0 0
      %3779 = vmatprep.subr.bf16.mxu0 0
      %3780 = vmatpush1.bf16.msra.mxu0 0
      %3781 = vmatprep.subr.bf16.mxu0 0
      %3782 = vmatpush1.bf16.msra.mxu0 0
      %3783 = vmatprep.subr.bf16.mxu0 0
      %3784 = vmatpush1.bf16.msra.mxu0 0
      %3785 = vmatprep.subr.bf16.mxu0 0
      %3786 = vmatpush1.bf16.msra.mxu0 0
      %3787 = vmatprep.subr.bf16.mxu0 0
      %3788 = vmatpush1.bf16.msra.mxu0 0
      %3789 = vmatprep.subr.bf16.mxu0 0
      %3790 = vmatpush1.bf16.msra.mxu0 0
      %3791 = vmatprep.subr.bf16.mxu0 0
      %3792 = vmatpush1.bf16.msra.mxu0 0
      %3793 = vmatprep.subr.bf16.mxu0 0
      %3794 = vmatpush1.bf16.msra.mxu0 0
      %3795 = vmatprep.mubr.bf16.mxu0 0
      %3796 = vmatmul.mubr.bf16.gmra.mrb[0].mxu0 %v3758
      %v3797 = vpop.f32.mrb[0].mxu0
      %v3798 = vadd.f32 0.0, %v3797
      %v3799 = vpop.f32.mrb[0].mxu0
      %v3800 = vpop.f32.mrb[0].mxu0
      %v3801 = vadd.f32 0.0, %v3800
      %v3802 = vpop.f32.mrb[0].mxu0
      %3803 = vdwg.mxu0
      %v3804 = vadd.f32 %v3675, %v3798
      %v3805 = vadd.f32 %v3678, %v3801
      %v3806 = vmul.f32 %v3426, %v1961
      %v3807 = vmul.f32 %v3427, %v1961
      %v3808 = vpack.c.bf16 %v3807, %v3806
      %v3810 = vsel %vm1103, %v3808, 0
      %3812 = vmatprep.subr.bf16.mxu0 0
      %3813 = vmatpush1.bf16.xpose.msra.mxu0 %v3439
      %3814 = vmatprep.subr.bf16.mxu0 0
      %3815 = vmatpush1.bf16.xpose.msra.mxu0 0
      %3816 = vmatprep.subr.bf16.mxu0 0
      %3817 = vmatpush1.bf16.xpose.msra.mxu0 0
      %3818 = vmatprep.subr.bf16.mxu0 0
      %3819 = vmatpush1.bf16.xpose.msra.mxu0 0
      %3820 = vmatprep.subr.bf16.mxu0 0
      %3821 = vmatpush1.bf16.xpose.msra.mxu0 0
      %3822 = vmatprep.subr.bf16.mxu0 0
      %3823 = vmatpush1.bf16.xpose.msra.mxu0 0
      %3824 = vmatprep.subr.bf16.mxu0 0
      %3825 = vmatpush1.bf16.xpose.msra.mxu0 0
      %3826 = vmatprep.subr.bf16.mxu0 0
      %3827 = vmatpush1.bf16.xpose.msra.mxu0 0
      %3828 = vmatprep.subr.bf16.mxu0 0
      %3829 = vmatpush1.bf16.xpose.msra.mxu0 0
      %3830 = vmatprep.subr.bf16.mxu0 0
      %3831 = vmatpush1.bf16.xpose.msra.mxu0 0
      %3832 = vmatprep.subr.bf16.mxu0 0
      %3833 = vmatpush1.bf16.xpose.msra.mxu0 0
      %3834 = vmatprep.subr.bf16.mxu0 0
      %3835 = vmatpush1.bf16.xpose.msra.mxu0 0
      %3836 = vmatprep.subr.bf16.mxu0 0
      %3837 = vmatpush1.bf16.xpose.msra.mxu0 0
      %3838 = vmatprep.subr.bf16.mxu0 0
      %3839 = vmatpush1.bf16.xpose.msra.mxu0 0
      %3840 = vmatprep.subr.bf16.mxu0 0
      %3841 = vmatpush1.bf16.xpose.msra.mxu0 0
      %3842 = vmatprep.subr.bf16.mxu0 0
      %3843 = vmatpush1.bf16.xpose.msra.mxu0 0
      %3844 = vmatprep.mubr.bf16.mxu0 0
      %3845 = vmatmul.mubr.bf16.gmra.mrb[0].mxu0 %v3810
      %v3846 = vpop.f32.mrb[0].mxu0
      %v3847 = vadd.f32 %v902, %v3846
      %v3848 = vpop.f32.mrb[0].mxu0
      %v3849 = vpop.f32.mrb[0].mxu0
      %v3850 = vadd.f32 %v903, %v3849
      %v3851 = vpop.f32.mrb[0].mxu0
      %3852 = vdwg.mxu0
      %v3853 = vsel %vm930, %v3847, -inf
      %3854 = vmax.xlane.f32.xlu0 %v3853
      %v3855 = vpop.xlane.xlu0 %3854
      %v3856 = vsel %vm1614, %v3850, -inf
      %3857 = vmax.xlane.f32.xlu0 %v3856
      %v3858 = vpop.xlane.xlu0 %3857
      %v3859 = vsub.f32 %v3847, %v3855
      %v3860 = vsub.f32 %v3850, %v3858
      %v3861 = vmul.f32 %v3859, 1.442695
      %v3862 = vpow.pop %v3861
      %v3863 = vmul.f32 %v3860, 1.442695
      %v3864 = vpow.pop %v3863
      %v3865 = vsel %vm930, %v3862, 0.0
      %3866 = vadd.xlane.f32.xlu0 %v3865
      %v3867 = vpop.xlane.xlu0 %3866
      %v3868 = vsel %vm1614, %v3864, 0.0
      %3869 = vadd.xlane.f32.xlu0 %v3868
      %v3870 = vpop.xlane.xlu0 %3869
      %v3871 = vrcp.pop %v3867
      %v3872 = vmul.f32 %v3862, %v3871
      %v3873 = vrcp.pop %v3870
      %v3874 = vmul.f32 %v3864, %v3873
      %v3875 = vmul.f32 %v3420, %v2033
      %v3876 = vmul.f32 %v3423, %v2033
      %v3877 = vpack.c.bf16 %v3874, %v3872
      %v3878 = vpack.c.bf16 %v3876, %v3875
      %3880 = vrot.lane.b32.xlu0 %v3878, 64
      %v3881 = vpop.permute.xlu0 %3880
      %v3883 = vsel %vm930, %v3877, 0
      %v3886 = vsel %vm940, %v3881, 0
      %3888 = vmatprep.subr.bf16.mxu0 0
      %3889 = vmatpush1.bf16.msra.mxu0 %v3886
      %3890 = vmatprep.subr.bf16.mxu0 0
      %3891 = vmatpush1.bf16.msra.mxu0 0
      %3892 = vmatprep.subr.bf16.mxu0 0
      %3893 = vmatpush1.bf16.msra.mxu0 0
      %3894 = vmatprep.subr.bf16.mxu0 0
      %3895 = vmatpush1.bf16.msra.mxu0 0
      %3896 = vmatprep.subr.bf16.mxu0 0
      %3897 = vmatpush1.bf16.msra.mxu0 0
      %3898 = vmatprep.subr.bf16.mxu0 0
      %3899 = vmatpush1.bf16.msra.mxu0 0
      %3900 = vmatprep.subr.bf16.mxu0 0
      %3901 = vmatpush1.bf16.msra.mxu0 0
      %3902 = vmatprep.subr.bf16.mxu0 0
      %3903 = vmatpush1.bf16.msra.mxu0 0
      %3904 = vmatprep.subr.bf16.mxu0 0
      %3905 = vmatpush1.bf16.msra.mxu0 0
      %3906 = vmatprep.subr.bf16.mxu0 0
      %3907 = vmatpush1.bf16.msra.mxu0 0
      %3908 = vmatprep.subr.bf16.mxu0 0
      %3909 = vmatpush1.bf16.msra.mxu0 0
      %3910 = vmatprep.subr.bf16.mxu0 0
      %3911 = vmatpush1.bf16.msra.mxu0 0
      %3912 = vmatprep.subr.bf16.mxu0 0
      %3913 = vmatpush1.bf16.msra.mxu0 0
      %3914 = vmatprep.subr.bf16.mxu0 0
      %3915 = vmatpush1.bf16.msra.mxu0 0
      %3916 = vmatprep.subr.bf16.mxu0 0
      %3917 = vmatpush1.bf16.msra.mxu0 0
      %3918 = vmatprep.subr.bf16.mxu0 0
      %3919 = vmatpush1.bf16.msra.mxu0 0
      %3920 = vmatprep.mubr.bf16.mxu0 0
      %3921 = vmatmul.mubr.bf16.gmra.mrb[0].mxu0 %v3883
      %v3922 = vpop.f32.mrb[0].mxu0
      %v3923 = vadd.f32 0.0, %v3922
      %v3924 = vpop.f32.mrb[0].mxu0
      %v3925 = vpop.f32.mrb[0].mxu0
      %v3926 = vadd.f32 0.0, %v3925
      %v3927 = vpop.f32.mrb[0].mxu0
      %3928 = vdwg.mxu0
      %v3929 = vadd.f32 %v3804, %v3923
      %v3930 = vadd.f32 %v3805, %v3926
      %v3931 = vpack.c.bf16 %v3930, %v3929
      %v3933 = vlaneseq
      %v3934 = vshrl.u32 %v3933, 7
      %v3935 = vsub.s32 0, %v3934
      %v3936 = vrot.slane %v3362, %v3935
      %v3942 = vunpack.c.l.b16 %v3357
      %v3943 = vunpack.c.l.b16 %v3358
      %v3944 = vunpack.c.l.b16 %v3359
      %v3945 = vunpack.c.l.b16 %v3360
      %v3946 = vpack.c.b16 %v3943, %v3942
      %v3947 = vpack.c.b16 %v3945, %v3944
      %v3951 = vsel %vm1103, %v3931, 0
      %3953 = vmatprep.subr.bf16.mxu0 0
      %3954 = vmatpush1.bf16.msra.mxu0 %v3946
      %3955 = vmatprep.subr.bf16.mxu0 0
      %3956 = vmatpush1.bf16.msra.mxu0 %v3947
      %3957 = vmatprep.subr.bf16.mxu0 0
      %3958 = vmatpush1.bf16.msra.mxu0 0
      %3959 = vmatprep.subr.bf16.mxu0 0
      %3960 = vmatpush1.bf16.msra.mxu0 0
      %3961 = vmatprep.subr.bf16.mxu0 0
      %3962 = vmatpush1.bf16.msra.mxu0 0
      %3963 = vmatprep.subr.bf16.mxu0 0
      %3964 = vmatpush1.bf16.msra.mxu0 0
      %3965 = vmatprep.subr.bf16.mxu0 0
      %3966 = vmatpush1.bf16.msra.mxu0 0
      %3967 = vmatprep.subr.bf16.mxu0 0
      %3968 = vmatpush1.bf16.msra.mxu0 0
      %3969 = vmatprep.subr.bf16.mxu0 0
      %3970 = vmatpush1.bf16.msra.mxu0 0
      %3971 = vmatprep.subr.bf16.mxu0 0
      %3972 = vmatpush1.bf16.msra.mxu0 0
      %3973 = vmatprep.subr.bf16.mxu0 0
      %3974 = vmatpush1.bf16.msra.mxu0 0
      %3975 = vmatprep.subr.bf16.mxu0 0
      %3976 = vmatpush1.bf16.msra.mxu0 0
      %3977 = vmatprep.subr.bf16.mxu0 0
      %3978 = vmatpush1.bf16.msra.mxu0 0
      %3979 = vmatprep.subr.bf16.mxu0 0
      %3980 = vmatpush1.bf16.msra.mxu0 0
      %3981 = vmatprep.subr.bf16.mxu0 0
      %3982 = vmatpush1.bf16.msra.mxu0 0
      %3983 = vmatprep.subr.bf16.mxu0 0
      %3984 = vmatpush1.bf16.msra.mxu0 0
      %3985 = vmatprep.mubr.bf16.mxu0 0
      %3986 = vmatmul.mubr.bf16.gmra.mrb[0].mxu0 %v3951
      %v3987 = vpop.f32.mrb[0].mxu0
      %v3988 = vadd.f32 %v3936, %v3987
      %v3989 = vpop.f32.mrb[0].mxu0
      %v3990 = vpop.f32.mrb[0].mxu0
      %v3991 = vadd.f32 %v3936, %v3990
      %v3992 = vpop.f32.mrb[0].mxu0
      %3993 = vdwg.mxu0
      %v3994 = vadd.f32 %v1416, %v3988
      %v3995 = vadd.f32 %v1417, %v3991
      %s3996 = scalar_lea.vmem %s22, 4
      %v3997 = vld [vmem:[%s3996] sm:$0x1]
      %s3998 = scalar_lea.vmem %s22, 5
      %v3999 = vld [vmem:[%s3998] sm:$0x1]
      %v4000 = vsel %vm1103, %v3994, 0.0
      %4001 = vadd.xlane.f32.xlu0 %v4000
      %v4002 = vpop.xlane.xlu0 %4001
      %v4003 = vsel %vm2162, %v3995, 0.0
      %4004 = vadd.xlane.f32.xlu0 %v4003
      %v4005 = vpop.xlane.xlu0 %4004
      %v4006 = vmul.f32 %v4002, %v2166
      %v4007 = vmul.f32 %v4005, %v2166
      %v4008 = vsub.f32 %v3994, %v4006
      %v4009 = vsub.f32 %v3995, %v4007
      %v4010 = vmul.f32 %v4008, %v4008
      %v4011 = vmul.f32 %v4009, %v4009
      %v4012 = vsel %vm1103, %v4010, 0.0
      %4013 = vadd.xlane.f32.xlu0 %v4012
      %v4014 = vpop.xlane.xlu0 %4013
      %v4015 = vsel %vm2162, %v4011, 0.0
      %4016 = vadd.xlane.f32.xlu0 %v4015
      %v4017 = vpop.xlane.xlu0 %4016
      %v4018 = vmul.f32 %v4014, %v2166
      %v4019 = vmul.f32 %v4017, %v2166
      %v4020 = vadd.f32 %v4018, 1e-05
      %v4021 = vadd.f32 %v4019, 1e-05
      %v4022 = vrsqrt.pop %v4020
      %v4023 = vrsqrt.pop %v4021
      %v4024 = vmul.f32 %v4008, %v4022
      %v4025 = vmul.f32 %v4009, %v4023
      %v4027 = vlaneseq
      %v4028 = vshrl.u32 %v4027, 7
      %v4029 = vsub.s32 0, %v4028
      %v4030 = vrot.slane %v3997, %v4029
      %v4032 = vmul.f32 %v4024, %v4030
      %v4033 = vmul.f32 %v4025, %v4030
      %v4035 = vlaneseq
      %v4036 = vshrl.u32 %v4035, 7
      %v4037 = vsub.s32 0, %v4036
      %v4038 = vrot.slane %v3999, %v4037
      %v4040 = vadd.f32 %v4032, %v4038
      %v4041 = vadd.f32 %v4033, %v4038
      %s4042 = scalar_lea.vmem %s14, 96
      %v4043 = vld [vmem:[%s4042] sm:$0xf]
      %v4044 = vld [vmem:[%s4042 + $0x4] sm:$0xf]
      %v4045 = vld [vmem:[%s4042 + $0x8] sm:$0xf]
      %v4046 = vld [vmem:[%s4042 + $0xc] sm:$0xf]
      %v4047 = vpack.c.bf16 %v4041, %v4040
      %s4048 = scalar_lea.vmem %s15, 6
      %v4049 = vld [vmem:[%s4048] sm:$0x1]
      %v4051 = vlaneseq
      %v4052 = vshrl.u32 %v4051, 7
      %v4053 = vsub.s32 0, %v4052
      %v4054 = vrot.slane %v4049, %v4053
      %v4060 = vunpack.c.l.b16 %v4043
      %v4061 = vunpack.c.l.b16 %v4044
      %v4062 = vunpack.c.l.b16 %v4045
      %v4063 = vunpack.c.l.b16 %v4046
      %v4064 = vpack.c.b16 %v4061, %v4060
      %v4065 = vpack.c.b16 %v4063, %v4062
      %v4069 = vsel %vm1103, %v4047, 0
      %4071 = vmatprep.subr.bf16.mxu0 0
      %4072 = vmatpush1.bf16.msra.mxu0 %v4064
      %4073 = vmatprep.subr.bf16.mxu0 0
      %4074 = vmatpush1.bf16.msra.mxu0 %v4065
      %4075 = vmatprep.subr.bf16.mxu0 0
      %4076 = vmatpush1.bf16.msra.mxu0 0
      %4077 = vmatprep.subr.bf16.mxu0 0
      %4078 = vmatpush1.bf16.msra.mxu0 0
      %4079 = vmatprep.subr.bf16.mxu0 0
      %4080 = vmatpush1.bf16.msra.mxu0 0
      %4081 = vmatprep.subr.bf16.mxu0 0
      %4082 = vmatpush1.bf16.msra.mxu0 0
      %4083 = vmatprep.subr.bf16.mxu0 0
      %4084 = vmatpush1.bf16.msra.mxu0 0
      %4085 = vmatprep.subr.bf16.mxu0 0
      %4086 = vmatpush1.bf16.msra.mxu0 0
      %4087 = vmatprep.subr.bf16.mxu0 0
      %4088 = vmatpush1.bf16.msra.mxu0 0
      %4089 = vmatprep.subr.bf16.mxu0 0
      %4090 = vmatpush1.bf16.msra.mxu0 0
      %4091 = vmatprep.subr.bf16.mxu0 0
      %4092 = vmatpush1.bf16.msra.mxu0 0
      %4093 = vmatprep.subr.bf16.mxu0 0
      %4094 = vmatpush1.bf16.msra.mxu0 0
      %4095 = vmatprep.subr.bf16.mxu0 0
      %4096 = vmatpush1.bf16.msra.mxu0 0
      %4097 = vmatprep.subr.bf16.mxu0 0
      %4098 = vmatpush1.bf16.msra.mxu0 0
      %4099 = vmatprep.subr.bf16.mxu0 0
      %4100 = vmatpush1.bf16.msra.mxu0 0
      %4101 = vmatprep.subr.bf16.mxu0 0
      %4102 = vmatpush1.bf16.msra.mxu0 0
      %4103 = vmatprep.mubr.bf16.mxu0 0
      %4104 = vmatmul.mubr.bf16.gmra.mrb[0].mxu0 %v4069
      %v4105 = vpop.f32.mrb[0].mxu0
      %v4106 = vadd.f32 %v4054, %v4105
      %v4107 = vpop.f32.mrb[0].mxu0
      %v4108 = vpop.f32.mrb[0].mxu0
      %v4109 = vadd.f32 %v4054, %v4108
      %v4110 = vpop.f32.mrb[0].mxu0
      %4111 = vdwg.mxu0
      %v4112 = vld [vmem:[%s16] sm:$0xf]
      %v4113 = vld [vmem:[%s16 + $0x4] sm:$0xf]
      %v4114 = vld [vmem:[%s16 + $0x8] sm:$0xf]
      %v4115 = vld [vmem:[%s16 + $0xc] sm:$0xf]
      %v4116 = vpack.c.bf16 %v3348, %v3347
      %v4117 = vld [vmem:[%s17] sm:$0x1]
      %v4119 = vlaneseq
      %v4120 = vshrl.u32 %v4119, 7
      %v4121 = vsub.s32 0, %v4120
      %v4122 = vrot.slane %v4117, %v4121
      %v4128 = vunpack.c.l.b16 %v4112
      %v4129 = vunpack.c.l.b16 %v4113
      %v4130 = vunpack.c.l.b16 %v4114
      %v4131 = vunpack.c.l.b16 %v4115
      %v4132 = vpack.c.b16 %v4129, %v4128
      %v4133 = vpack.c.b16 %v4131, %v4130
      %v4137 = vsel %vm1103, %v4116, 0
      %4139 = vmatprep.subr.bf16.mxu0 0
      %4140 = vmatpush1.bf16.msra.mxu0 %v4132
      %4141 = vmatprep.subr.bf16.mxu0 0
      %4142 = vmatpush1.bf16.msra.mxu0 %v4133
      %4143 = vmatprep.subr.bf16.mxu0 0
      %4144 = vmatpush1.bf16.msra.mxu0 0
      %4145 = vmatprep.subr.bf16.mxu0 0
      %4146 = vmatpush1.bf16.msra.mxu0 0
      %4147 = vmatprep.subr.bf16.mxu0 0
      %4148 = vmatpush1.bf16.msra.mxu0 0
      %4149 = vmatprep.subr.bf16.mxu0 0
      %4150 = vmatpush1.bf16.msra.mxu0 0
      %4151 = vmatprep.subr.bf16.mxu0 0
      %4152 = vmatpush1.bf16.msra.mxu0 0
      %4153 = vmatprep.subr.bf16.mxu0 0
      %4154 = vmatpush1.bf16.msra.mxu0 0
      %4155 = vmatprep.subr.bf16.mxu0 0
      %4156 = vmatpush1.bf16.msra.mxu0 0
      %4157 = vmatprep.subr.bf16.mxu0 0
      %4158 = vmatpush1.bf16.msra.mxu0 0
      %4159 = vmatprep.subr.bf16.mxu0 0
      %4160 = vmatpush1.bf16.msra.mxu0 0
      %4161 = vmatprep.subr.bf16.mxu0 0
      %4162 = vmatpush1.bf16.msra.mxu0 0
      %4163 = vmatprep.subr.bf16.mxu0 0
      %4164 = vmatpush1.bf16.msra.mxu0 0
      %4165 = vmatprep.subr.bf16.mxu0 0
      %4166 = vmatpush1.bf16.msra.mxu0 0
      %4167 = vmatprep.subr.bf16.mxu0 0
      %4168 = vmatpush1.bf16.msra.mxu0 0
      %4169 = vmatprep.subr.bf16.mxu0 0
      %4170 = vmatpush1.bf16.msra.mxu0 0
      %4171 = vmatprep.mubr.bf16.mxu0 0
      %4172 = vmatmul.mubr.bf16.gmra.mrb[0].mxu0 %v4137
      %v4173 = vpop.f32.mrb[0].mxu0
      %v4174 = vadd.f32 %v4122, %v4173
      %v4175 = vpop.f32.mrb[0].mxu0
      %v4176 = vpop.f32.mrb[0].mxu0
      %v4177 = vadd.f32 %v4122, %v4176
      %v4178 = vpop.f32.mrb[0].mxu0
      %4179 = vdwg.mxu0
      %s4180 = scalar_lea.vmem %s14, 64
      %v4181 = vld [vmem:[%s4180] sm:$0xf]
      %v4182 = vld [vmem:[%s4180 + $0x4] sm:$0xf]
      %v4183 = vld [vmem:[%s4180 + $0x8] sm:$0xf]
      %v4184 = vld [vmem:[%s4180 + $0xc] sm:$0xf]
      %s4185 = scalar_lea.vmem %s15, 4
      %v4186 = vld [vmem:[%s4185] sm:$0x1]
      %v4187 = vmul.f32 %v4106, 0.35355338
      %v4188 = vmul.f32 %v4109, 0.35355338
      %v4189 = vmul.f32 %v4187, %v1555
      %v4190 = vmul.f32 %v4188, %v1555
      %v4191 = vpack.c.bf16 %v4190, %v4189
      %v4192 = vpack.c.bf16 %v4177, %v4174
      %v4194 = vsel %vm1103, %v4191, 0
      %v4197 = vsel %vm1103, %v4192, 0
      %4199 = vmatprep.subr.bf16.mxu0 0
      %4200 = vmatpush1.bf16.xpose.msra.mxu0 %v4197
      %4201 = vmatprep.subr.bf16.mxu0 0
      %4202 = vmatpush1.bf16.xpose.msra.mxu0 0
      %4203 = vmatprep.subr.bf16.mxu0 0
      %4204 = vmatpush1.bf16.xpose.msra.mxu0 0
      %4205 = vmatprep.subr.bf16.mxu0 0
      %4206 = vmatpush1.bf16.xpose.msra.mxu0 0
      %4207 = vmatprep.subr.bf16.mxu0 0
      %4208 = vmatpush1.bf16.xpose.msra.mxu0 0
      %4209 = vmatprep.subr.bf16.mxu0 0
      %4210 = vmatpush1.bf16.xpose.msra.mxu0 0
      %4211 = vmatprep.subr.bf16.mxu0 0
      %4212 = vmatpush1.bf16.xpose.msra.mxu0 0
      %4213 = vmatprep.subr.bf16.mxu0 0
      %4214 = vmatpush1.bf16.xpose.msra.mxu0 0
      %4215 = vmatprep.subr.bf16.mxu0 0
      %4216 = vmatpush1.bf16.xpose.msra.mxu0 0
      %4217 = vmatprep.subr.bf16.mxu0 0
      %4218 = vmatpush1.bf16.xpose.msra.mxu0 0
      %4219 = vmatprep.subr.bf16.mxu0 0
      %4220 = vmatpush1.bf16.xpose.msra.mxu0 0
      %4221 = vmatprep.subr.bf16.mxu0 0
      %4222 = vmatpush1.bf16.xpose.msra.mxu0 0
      %4223 = vmatprep.subr.bf16.mxu0 0
      %4224 = vmatpush1.bf16.xpose.msra.mxu0 0
      %4225 = vmatprep.subr.bf16.mxu0 0
      %4226 = vmatpush1.bf16.xpose.msra.mxu0 0
      %4227 = vmatprep.subr.bf16.mxu0 0
      %4228 = vmatpush1.bf16.xpose.msra.mxu0 0
      %4229 = vmatprep.subr.bf16.mxu0 0
      %4230 = vmatpush1.bf16.xpose.msra.mxu0 0
      %4231 = vmatprep.mubr.bf16.mxu0 0
      %4232 = vmatmul.mubr.bf16.gmra.mrb[0].mxu0 %v4194
      %v4233 = vpop.f32.mrb[0].mxu0
      %v4234 = vadd.f32 %v902, %v4233
      %v4235 = vpop.f32.mrb[0].mxu0
      %v4236 = vpop.f32.mrb[0].mxu0
      %v4237 = vadd.f32 %v903, %v4236
      %v4238 = vpop.f32.mrb[0].mxu0
      %4239 = vdwg.mxu0
      %v4240 = vsel %vm930, %v4234, -inf
      %4241 = vmax.xlane.f32.xlu0 %v4240
      %v4242 = vpop.xlane.xlu0 %4241
      %v4243 = vsel %vm1614, %v4237, -inf
      %4244 = vmax.xlane.f32.xlu0 %v4243
      %v4245 = vpop.xlane.xlu0 %4244
      %v4246 = vsub.f32 %v4234, %v4242
      %v4247 = vsub.f32 %v4237, %v4245
      %v4248 = vmul.f32 %v4246, 1.442695
      %v4249 = vpow.pop %v4248
      %v4250 = vmul.f32 %v4247, 1.442695
      %v4251 = vpow.pop %v4250
      %v4252 = vsel %vm930, %v4249, 0.0
      %4253 = vadd.xlane.f32.xlu0 %v4252
      %v4254 = vpop.xlane.xlu0 %4253
      %v4255 = vsel %vm1614, %v4251, 0.0
      %4256 = vadd.xlane.f32.xlu0 %v4255
      %v4257 = vpop.xlane.xlu0 %4256
      %v4258 = vrcp.pop %v4254
      %v4259 = vmul.f32 %v4249, %v4258
      %v4260 = vrcp.pop %v4257
      %v4261 = vmul.f32 %v4251, %v4260
      %4262 = vrot.lane.b32.xlu0 %v1555, 32
      %v4263 = vpop.permute.xlu0 %4262
      %v4265 = vmul.f32 %v4174, %v4263
      %v4266 = vmul.f32 %v4177, %v4263
      %v4267 = vpack.c.bf16 %v4261, %v4259
      %v4268 = vpack.c.bf16 %v4266, %v4265
      %v4269 = vmul.f32 %v4187, %v1645
      %v4270 = vmul.f32 %v4188, %v1645
      %v4271 = vpack.c.bf16 %v4270, %v4269
      %v4273 = vsel %vm1103, %v4271, 0
      %4275 = vmatprep.subr.bf16.mxu0 0
      %4276 = vmatpush1.bf16.xpose.msra.mxu0 %v4197
      %4277 = vmatprep.subr.bf16.mxu0 0
      %4278 = vmatpush1.bf16.xpose.msra.mxu0 0
      %4279 = vmatprep.subr.bf16.mxu0 0
      %4280 = vmatpush1.bf16.xpose.msra.mxu0 0
      %4281 = vmatprep.subr.bf16.mxu0 0
      %4282 = vmatpush1.bf16.xpose.msra.mxu0 0
      %4283 = vmatprep.subr.bf16.mxu0 0
      %4284 = vmatpush1.bf16.xpose.msra.mxu0 0
      %4285 = vmatprep.subr.bf16.mxu0 0
      %4286 = vmatpush1.bf16.xpose.msra.mxu0 0
      %4287 = vmatprep.subr.bf16.mxu0 0
      %4288 = vmatpush1.bf16.xpose.msra.mxu0 0
      %4289 = vmatprep.subr.bf16.mxu0 0
      %4290 = vmatpush1.bf16.xpose.msra.mxu0 0
      %4291 = vmatprep.subr.bf16.mxu0 0
      %4292 = vmatpush1.bf16.xpose.msra.mxu0 0
      %4293 = vmatprep.subr.bf16.mxu0 0
      %4294 = vmatpush1.bf16.xpose.msra.mxu0 0
      %4295 = vmatprep.subr.bf16.mxu0 0
      %4296 = vmatpush1.bf16.xpose.msra.mxu0 0
      %4297 = vmatprep.subr.bf16.mxu0 0
      %4298 = vmatpush1.bf16.xpose.msra.mxu0 0
      %4299 = vmatprep.subr.bf16.mxu0 0
      %4300 = vmatpush1.bf16.xpose.msra.mxu0 0
      %4301 = vmatprep.subr.bf16.mxu0 0
      %4302 = vmatpush1.bf16.xpose.msra.mxu0 0
      %4303 = vmatprep.subr.bf16.mxu0 0
      %4304 = vmatpush1.bf16.xpose.msra.mxu0 0
      %4305 = vmatprep.subr.bf16.mxu0 0
      %4306 = vmatpush1.bf16.xpose.msra.mxu0 0
      %4307 = vmatprep.mubr.bf16.mxu0 0
      %4308 = vmatmul.mubr.bf16.gmra.mrb[0].mxu0 %v4273
      %v4309 = vpop.f32.mrb[0].mxu0
      %v4310 = vadd.f32 %v902, %v4309
      %v4311 = vpop.f32.mrb[0].mxu0
      %v4312 = vpop.f32.mrb[0].mxu0
      %v4313 = vadd.f32 %v903, %v4312
      %v4314 = vpop.f32.mrb[0].mxu0
      %4315 = vdwg.mxu0
      %v4316 = vsel %vm930, %v4310, -inf
      %4317 = vmax.xlane.f32.xlu0 %v4316
      %v4318 = vpop.xlane.xlu0 %4317
      %v4319 = vsel %vm1614, %v4313, -inf
      %4320 = vmax.xlane.f32.xlu0 %v4319
      %v4321 = vpop.xlane.xlu0 %4320
      %v4322 = vsub.f32 %v4310, %v4318
      %v4323 = vsub.f32 %v4313, %v4321
      %v4324 = vmul.f32 %v4322, 1.442695
      %v4325 = vpow.pop %v4324
      %v4326 = vmul.f32 %v4323, 1.442695
      %v4327 = vpow.pop %v4326
      %v4328 = vsel %vm930, %v4325, 0.0
      %4329 = vadd.xlane.f32.xlu0 %v4328
      %v4330 = vpop.xlane.xlu0 %4329
      %v4331 = vsel %vm1614, %v4327, 0.0
      %4332 = vadd.xlane.f32.xlu0 %v4331
      %v4333 = vpop.xlane.xlu0 %4332
      %v4334 = vrcp.pop %v4330
      %v4335 = vmul.f32 %v4325, %v4334
      %v4336 = vrcp.pop %v4333
      %v4337 = vmul.f32 %v4327, %v4336
      %4338 = vrot.lane.b32.xlu0 %v1645, 32
      %v4339 = vpop.permute.xlu0 %4338
      %v4341 = vmul.f32 %v4174, %v4339
      %v4342 = vmul.f32 %v4177, %v4339
      %v4343 = vpack.c.bf16 %v4337, %v4335
      %v4344 = vpack.c.bf16 %v4342, %v4341
      %4346 = vrot.lane.b32.xlu0 %v4344, 96
      %v4347 = vpop.permute.xlu0 %4346
      %v4349 = vsel %vm930, %v4343, 0
      %v4352 = vsel %vm940, %v4347, 0
      %4354 = vmatprep.subr.bf16.mxu0 0
      %4355 = vmatpush1.bf16.msra.mxu0 %v4352
      %4356 = vmatprep.subr.bf16.mxu0 0
      %4357 = vmatpush1.bf16.msra.mxu0 0
      %4358 = vmatprep.subr.bf16.mxu0 0
      %4359 = vmatpush1.bf16.msra.mxu0 0
      %4360 = vmatprep.subr.bf16.mxu0 0
      %4361 = vmatpush1.bf16.msra.mxu0 0
      %4362 = vmatprep.subr.bf16.mxu0 0
      %4363 = vmatpush1.bf16.msra.mxu0 0
      %4364 = vmatprep.subr.bf16.mxu0 0
      %4365 = vmatpush1.bf16.msra.mxu0 0
      %4366 = vmatprep.subr.bf16.mxu0 0
      %4367 = vmatpush1.bf16.msra.mxu0 0
      %4368 = vmatprep.subr.bf16.mxu0 0
      %4369 = vmatpush1.bf16.msra.mxu0 0
      %4370 = vmatprep.subr.bf16.mxu0 0
      %4371 = vmatpush1.bf16.msra.mxu0 0
      %4372 = vmatprep.subr.bf16.mxu0 0
      %4373 = vmatpush1.bf16.msra.mxu0 0
      %4374 = vmatprep.subr.bf16.mxu0 0
      %4375 = vmatpush1.bf16.msra.mxu0 0
      %4376 = vmatprep.subr.bf16.mxu0 0
      %4377 = vmatpush1.bf16.msra.mxu0 0
      %4378 = vmatprep.subr.bf16.mxu0 0
      %4379 = vmatpush1.bf16.msra.mxu0 0
      %4380 = vmatprep.subr.bf16.mxu0 0
      %4381 = vmatpush1.bf16.msra.mxu0 0
      %4382 = vmatprep.subr.bf16.mxu0 0
      %4383 = vmatpush1.bf16.msra.mxu0 0
      %4384 = vmatprep.subr.bf16.mxu0 0
      %4385 = vmatpush1.bf16.msra.mxu0 0
      %4386 = vmatprep.mubr.bf16.mxu0 0
      %4387 = vmatmul.mubr.bf16.gmra.mrb[0].mxu0 %v4349
      %v4388 = vpop.f32.mrb[0].mxu0
      %v4389 = vadd.f32 0.0, %v4388
      %v4390 = vpop.f32.mrb[0].mxu0
      %v4391 = vpop.f32.mrb[0].mxu0
      %v4392 = vadd.f32 0.0, %v4391
      %v4393 = vpop.f32.mrb[0].mxu0
      %4394 = vdwg.mxu0
      %4396 = vrot.lane.b32.xlu0 %v4268, 96
      %v4397 = vpop.permute.xlu0 %4396
      %v4399 = vsel %vm930, %v4267, 0
      %v4402 = vsel %vm940, %v4397, 0
      %4404 = vmatprep.subr.bf16.mxu0 0
      %4405 = vmatpush1.bf16.msra.mxu0 %v4402
      %4406 = vmatprep.subr.bf16.mxu0 0
      %4407 = vmatpush1.bf16.msra.mxu0 0
      %4408 = vmatprep.subr.bf16.mxu0 0
      %4409 = vmatpush1.bf16.msra.mxu0 0
      %4410 = vmatprep.subr.bf16.mxu0 0
      %4411 = vmatpush1.bf16.msra.mxu0 0
      %4412 = vmatprep.subr.bf16.mxu0 0
      %4413 = vmatpush1.bf16.msra.mxu0 0
      %4414 = vmatprep.subr.bf16.mxu0 0
      %4415 = vmatpush1.bf16.msra.mxu0 0
      %4416 = vmatprep.subr.bf16.mxu0 0
      %4417 = vmatpush1.bf16.msra.mxu0 0
      %4418 = vmatprep.subr.bf16.mxu0 0
      %4419 = vmatpush1.bf16.msra.mxu0 0
      %4420 = vmatprep.subr.bf16.mxu0 0
      %4421 = vmatpush1.bf16.msra.mxu0 0
      %4422 = vmatprep.subr.bf16.mxu0 0
      %4423 = vmatpush1.bf16.msra.mxu0 0
      %4424 = vmatprep.subr.bf16.mxu0 0
      %4425 = vmatpush1.bf16.msra.mxu0 0
      %4426 = vmatprep.subr.bf16.mxu0 0
      %4427 = vmatpush1.bf16.msra.mxu0 0
      %4428 = vmatprep.subr.bf16.mxu0 0
      %4429 = vmatpush1.bf16.msra.mxu0 0
      %4430 = vmatprep.subr.bf16.mxu0 0
      %4431 = vmatpush1.bf16.msra.mxu0 0
      %4432 = vmatprep.subr.bf16.mxu0 0
      %4433 = vmatpush1.bf16.msra.mxu0 0
      %4434 = vmatprep.subr.bf16.mxu0 0
      %4435 = vmatpush1.bf16.msra.mxu0 0
      %4436 = vmatprep.mubr.bf16.mxu0 0
      %4437 = vmatmul.mubr.bf16.gmra.mrb[0].mxu0 %v4399
      %v4438 = vpop.f32.mrb[0].mxu0
      %v4439 = vadd.f32 %v4389, %v4438
      %v4440 = vpop.f32.mrb[0].mxu0
      %v4441 = vpop.f32.mrb[0].mxu0
      %v4442 = vadd.f32 %v4392, %v4441
      %v4443 = vpop.f32.mrb[0].mxu0
      %4444 = vdwg.mxu0
      %v4445 = vmul.f32 %v4187, %v1827
      %v4446 = vmul.f32 %v4188, %v1827
      %v4447 = vpack.c.bf16 %v4446, %v4445
      %v4449 = vsel %vm1103, %v4447, 0
      %4451 = vmatprep.subr.bf16.mxu0 0
      %4452 = vmatpush1.bf16.xpose.msra.mxu0 %v4197
      %4453 = vmatprep.subr.bf16.mxu0 0
      %4454 = vmatpush1.bf16.xpose.msra.mxu0 0
      %4455 = vmatprep.subr.bf16.mxu0 0
      %4456 = vmatpush1.bf16.xpose.msra.mxu0 0
      %4457 = vmatprep.subr.bf16.mxu0 0
      %4458 = vmatpush1.bf16.xpose.msra.mxu0 0
      %4459 = vmatprep.subr.bf16.mxu0 0
      %4460 = vmatpush1.bf16.xpose.msra.mxu0 0
      %4461 = vmatprep.subr.bf16.mxu0 0
      %4462 = vmatpush1.bf16.xpose.msra.mxu0 0
      %4463 = vmatprep.subr.bf16.mxu0 0
      %4464 = vmatpush1.bf16.xpose.msra.mxu0 0
      %4465 = vmatprep.subr.bf16.mxu0 0
      %4466 = vmatpush1.bf16.xpose.msra.mxu0 0
      %4467 = vmatprep.subr.bf16.mxu0 0
      %4468 = vmatpush1.bf16.xpose.msra.mxu0 0
      %4469 = vmatprep.subr.bf16.mxu0 0
      %4470 = vmatpush1.bf16.xpose.msra.mxu0 0
      %4471 = vmatprep.subr.bf16.mxu0 0
      %4472 = vmatpush1.bf16.xpose.msra.mxu0 0
      %4473 = vmatprep.subr.bf16.mxu0 0
      %4474 = vmatpush1.bf16.xpose.msra.mxu0 0
      %4475 = vmatprep.subr.bf16.mxu0 0
      %4476 = vmatpush1.bf16.xpose.msra.mxu0 0
      %4477 = vmatprep.subr.bf16.mxu0 0
      %4478 = vmatpush1.bf16.xpose.msra.mxu0 0
      %4479 = vmatprep.subr.bf16.mxu0 0
      %4480 = vmatpush1.bf16.xpose.msra.mxu0 0
      %4481 = vmatprep.subr.bf16.mxu0 0
      %4482 = vmatpush1.bf16.xpose.msra.mxu0 0
      %4483 = vmatprep.mubr.bf16.mxu0 0
      %4484 = vmatmul.mubr.bf16.gmra.mrb[0].mxu0 %v4449
      %v4485 = vpop.f32.mrb[0].mxu0
      %v4486 = vadd.f32 %v902, %v4485
      %v4487 = vpop.f32.mrb[0].mxu0
      %v4488 = vpop.f32.mrb[0].mxu0
      %v4489 = vadd.f32 %v903, %v4488
      %v4490 = vpop.f32.mrb[0].mxu0
      %4491 = vdwg.mxu0
      %v4492 = vsel %vm930, %v4486, -inf
      %4493 = vmax.xlane.f32.xlu0 %v4492
      %v4494 = vpop.xlane.xlu0 %4493
      %v4495 = vsel %vm1614, %v4489, -inf
      %4496 = vmax.xlane.f32.xlu0 %v4495
      %v4497 = vpop.xlane.xlu0 %4496
      %v4498 = vsub.f32 %v4486, %v4494
      %v4499 = vsub.f32 %v4489, %v4497
      %v4500 = vmul.f32 %v4498, 1.442695
      %v4501 = vpow.pop %v4500
      %v4502 = vmul.f32 %v4499, 1.442695
      %v4503 = vpow.pop %v4502
      %v4504 = vsel %vm930, %v4501, 0.0
      %4505 = vadd.xlane.f32.xlu0 %v4504
      %v4506 = vpop.xlane.xlu0 %4505
      %v4507 = vsel %vm1614, %v4503, 0.0
      %4508 = vadd.xlane.f32.xlu0 %v4507
      %v4509 = vpop.xlane.xlu0 %4508
      %v4510 = vrcp.pop %v4506
      %v4511 = vmul.f32 %v4501, %v4510
      %v4512 = vrcp.pop %v4509
      %v4513 = vmul.f32 %v4503, %v4512
      %4514 = vrot.lane.b32.xlu0 %v1827, 32
      %v4515 = vpop.permute.xlu0 %4514
      %v4517 = vmul.f32 %v4174, %v4515
      %v4518 = vmul.f32 %v4177, %v4515
      %v4519 = vpack.c.bf16 %v4513, %v4511
      %v4520 = vpack.c.bf16 %v4518, %v4517
      %4522 = vrot.lane.b32.xlu0 %v4520, 96
      %v4523 = vpop.permute.xlu0 %4522
      %v4525 = vsel %vm930, %v4519, 0
      %v4528 = vsel %vm940, %v4523, 0
      %4530 = vmatprep.subr.bf16.mxu0 0
      %4531 = vmatpush1.bf16.msra.mxu0 %v4528
      %4532 = vmatprep.subr.bf16.mxu0 0
      %4533 = vmatpush1.bf16.msra.mxu0 0
      %4534 = vmatprep.subr.bf16.mxu0 0
      %4535 = vmatpush1.bf16.msra.mxu0 0
      %4536 = vmatprep.subr.bf16.mxu0 0
      %4537 = vmatpush1.bf16.msra.mxu0 0
      %4538 = vmatprep.subr.bf16.mxu0 0
      %4539 = vmatpush1.bf16.msra.mxu0 0
      %4540 = vmatprep.subr.bf16.mxu0 0
      %4541 = vmatpush1.bf16.msra.mxu0 0
      %4542 = vmatprep.subr.bf16.mxu0 0
      %4543 = vmatpush1.bf16.msra.mxu0 0
      %4544 = vmatprep.subr.bf16.mxu0 0
      %4545 = vmatpush1.bf16.msra.mxu0 0
      %4546 = vmatprep.subr.bf16.mxu0 0
      %4547 = vmatpush1.bf16.msra.mxu0 0
      %4548 = vmatprep.subr.bf16.mxu0 0
      %4549 = vmatpush1.bf16.msra.mxu0 0
      %4550 = vmatprep.subr.bf16.mxu0 0
      %4551 = vmatpush1.bf16.msra.mxu0 0
      %4552 = vmatprep.subr.bf16.mxu0 0
      %4553 = vmatpush1.bf16.msra.mxu0 0
      %4554 = vmatprep.subr.bf16.mxu0 0
      %4555 = vmatpush1.bf16.msra.mxu0 0
      %4556 = vmatprep.subr.bf16.mxu0 0
      %4557 = vmatpush1.bf16.msra.mxu0 0
      %4558 = vmatprep.subr.bf16.mxu0 0
      %4559 = vmatpush1.bf16.msra.mxu0 0
      %4560 = vmatprep.subr.bf16.mxu0 0
      %4561 = vmatpush1.bf16.msra.mxu0 0
      %4562 = vmatprep.mubr.bf16.mxu0 0
      %4563 = vmatmul.mubr.bf16.gmra.mrb[0].mxu0 %v4525
      %v4564 = vpop.f32.mrb[0].mxu0
      %v4565 = vadd.f32 0.0, %v4564
      %v4566 = vpop.f32.mrb[0].mxu0
      %v4567 = vpop.f32.mrb[0].mxu0
      %v4568 = vadd.f32 0.0, %v4567
      %v4569 = vpop.f32.mrb[0].mxu0
      %4570 = vdwg.mxu0
      %v4571 = vadd.f32 %v4439, %v4565
      %v4572 = vadd.f32 %v4442, %v4568
      %v4573 = vmul.f32 %v4187, %v1961
      %v4574 = vmul.f32 %v4188, %v1961
      %v4575 = vpack.c.bf16 %v4574, %v4573
      %v4577 = vsel %vm1103, %v4575, 0
      %4579 = vmatprep.subr.bf16.mxu0 0
      %4580 = vmatpush1.bf16.xpose.msra.mxu0 %v4197
      %4581 = vmatprep.subr.bf16.mxu0 0
      %4582 = vmatpush1.bf16.xpose.msra.mxu0 0
      %4583 = vmatprep.subr.bf16.mxu0 0
      %4584 = vmatpush1.bf16.xpose.msra.mxu0 0
      %4585 = vmatprep.subr.bf16.mxu0 0
      %4586 = vmatpush1.bf16.xpose.msra.mxu0 0
      %4587 = vmatprep.subr.bf16.mxu0 0
      %4588 = vmatpush1.bf16.xpose.msra.mxu0 0
      %4589 = vmatprep.subr.bf16.mxu0 0
      %4590 = vmatpush1.bf16.xpose.msra.mxu0 0
      %4591 = vmatprep.subr.bf16.mxu0 0
      %4592 = vmatpush1.bf16.xpose.msra.mxu0 0
      %4593 = vmatprep.subr.bf16.mxu0 0
      %4594 = vmatpush1.bf16.xpose.msra.mxu0 0
      %4595 = vmatprep.subr.bf16.mxu0 0
      %4596 = vmatpush1.bf16.xpose.msra.mxu0 0
      %4597 = vmatprep.subr.bf16.mxu0 0
      %4598 = vmatpush1.bf16.xpose.msra.mxu0 0
      %4599 = vmatprep.subr.bf16.mxu0 0
      %4600 = vmatpush1.bf16.xpose.msra.mxu0 0
      %4601 = vmatprep.subr.bf16.mxu0 0
      %4602 = vmatpush1.bf16.xpose.msra.mxu0 0
      %4603 = vmatprep.subr.bf16.mxu0 0
      %4604 = vmatpush1.bf16.xpose.msra.mxu0 0
      %4605 = vmatprep.subr.bf16.mxu0 0
      %4606 = vmatpush1.bf16.xpose.msra.mxu0 0
      %4607 = vmatprep.subr.bf16.mxu0 0
      %4608 = vmatpush1.bf16.xpose.msra.mxu0 0
      %4609 = vmatprep.subr.bf16.mxu0 0
      %4610 = vmatpush1.bf16.xpose.msra.mxu0 0
      %4611 = vmatprep.mubr.bf16.mxu0 0
      %4612 = vmatmul.mubr.bf16.gmra.mrb[0].mxu0 %v4577
      %v4613 = vpop.f32.mrb[0].mxu0
      %v4614 = vadd.f32 %v902, %v4613
      %v4615 = vpop.f32.mrb[0].mxu0
      %v4616 = vpop.f32.mrb[0].mxu0
      %v4617 = vadd.f32 %v903, %v4616
      %v4618 = vpop.f32.mrb[0].mxu0
      %4619 = vdwg.mxu0
      %v4620 = vsel %vm930, %v4614, -inf
      %4621 = vmax.xlane.f32.xlu0 %v4620
      %v4622 = vpop.xlane.xlu0 %4621
      %v4623 = vsel %vm1614, %v4617, -inf
      %4624 = vmax.xlane.f32.xlu0 %v4623
      %v4625 = vpop.xlane.xlu0 %4624
      %v4626 = vsub.f32 %v4614, %v4622
      %v4627 = vsub.f32 %v4617, %v4625
      %v4628 = vmul.f32 %v4626, 1.442695
      %v4629 = vpow.pop %v4628
      %v4630 = vmul.f32 %v4627, 1.442695
      %v4631 = vpow.pop %v4630
      %v4632 = vsel %vm930, %v4629, 0.0
      %4633 = vadd.xlane.f32.xlu0 %v4632
      %v4634 = vpop.xlane.xlu0 %4633
      %v4635 = vsel %vm1614, %v4631, 0.0
      %4636 = vadd.xlane.f32.xlu0 %v4635
      %v4637 = vpop.xlane.xlu0 %4636
      %v4638 = vrcp.pop %v4634
      %v4639 = vmul.f32 %v4629, %v4638
      %v4640 = vrcp.pop %v4637
      %v4641 = vmul.f32 %v4631, %v4640
      %4642 = vrot.lane.b32.xlu0 %v1961, 32
      %v4643 = vpop.permute.xlu0 %4642
      %v4645 = vmul.f32 %v4174, %v4643
      %v4646 = vmul.f32 %v4177, %v4643
      %v4647 = vpack.c.bf16 %v4641, %v4639
      %v4648 = vpack.c.bf16 %v4646, %v4645
      %4650 = vrot.lane.b32.xlu0 %v4648, 96
      %v4651 = vpop.permute.xlu0 %4650
      %v4653 = vsel %vm930, %v4647, 0
      %v4656 = vsel %vm940, %v4651, 0
      %4658 = vmatprep.subr.bf16.mxu0 0
      %4659 = vmatpush1.bf16.msra.mxu0 %v4656
      %4660 = vmatprep.subr.bf16.mxu0 0
      %4661 = vmatpush1.bf16.msra.mxu0 0
      %4662 = vmatprep.subr.bf16.mxu0 0
      %4663 = vmatpush1.bf16.msra.mxu0 0
      %4664 = vmatprep.subr.bf16.mxu0 0
      %4665 = vmatpush1.bf16.msra.mxu0 0
      %4666 = vmatprep.subr.bf16.mxu0 0
      %4667 = vmatpush1.bf16.msra.mxu0 0
      %4668 = vmatprep.subr.bf16.mxu0 0
      %4669 = vmatpush1.bf16.msra.mxu0 0
      %4670 = vmatprep.subr.bf16.mxu0 0
      %4671 = vmatpush1.bf16.msra.mxu0 0
      %4672 = vmatprep.subr.bf16.mxu0 0
      %4673 = vmatpush1.bf16.msra.mxu0 0
      %4674 = vmatprep.subr.bf16.mxu0 0
      %4675 = vmatpush1.bf16.msra.mxu0 0
      %4676 = vmatprep.subr.bf16.mxu0 0
      %4677 = vmatpush1.bf16.msra.mxu0 0
      %4678 = vmatprep.subr.bf16.mxu0 0
      %4679 = vmatpush1.bf16.msra.mxu0 0
      %4680 = vmatprep.subr.bf16.mxu0 0
      %4681 = vmatpush1.bf16.msra.mxu0 0
      %4682 = vmatprep.subr.bf16.mxu0 0
      %4683 = vmatpush1.bf16.msra.mxu0 0
      %4684 = vmatprep.subr.bf16.mxu0 0
      %4685 = vmatpush1.bf16.msra.mxu0 0
      %4686 = vmatprep.subr.bf16.mxu0 0
      %4687 = vmatpush1.bf16.msra.mxu0 0
      %4688 = vmatprep.subr.bf16.mxu0 0
      %4689 = vmatpush1.bf16.msra.mxu0 0
      %4690 = vmatprep.mubr.bf16.mxu0 0
      %4691 = vmatmul.mubr.bf16.gmra.mrb[0].mxu0 %v4653
      %v4692 = vpop.f32.mrb[0].mxu0
      %v4693 = vadd.f32 0.0, %v4692
      %v4694 = vpop.f32.mrb[0].mxu0
      %v4695 = vpop.f32.mrb[0].mxu0
      %v4696 = vadd.f32 0.0, %v4695
      %v4697 = vpop.f32.mrb[0].mxu0
      %4698 = vdwg.mxu0
      %v4699 = vadd.f32 %v4571, %v4693
      %v4700 = vadd.f32 %v4572, %v4696
      %v4701 = vpack.c.bf16 %v4700, %v4699
      %v4703 = vlaneseq
      %v4704 = vshrl.u32 %v4703, 7
      %v4705 = vsub.s32 0, %v4704
      %v4706 = vrot.slane %v4186, %v4705
      %v4712 = vunpack.c.l.b16 %v4181
      %v4713 = vunpack.c.l.b16 %v4182
      %v4714 = vunpack.c.l.b16 %v4183
      %v4715 = vunpack.c.l.b16 %v4184
      %v4716 = vpack.c.b16 %v4713, %v4712
      %v4717 = vpack.c.b16 %v4715, %v4714
      %v4721 = vsel %vm1103, %v4701, 0
      %4723 = vmatprep.subr.bf16.mxu0 0
      %4724 = vmatpush1.bf16.msra.mxu0 %v4716
      %4725 = vmatprep.subr.bf16.mxu0 0
      %4726 = vmatpush1.bf16.msra.mxu0 %v4717
      %4727 = vmatprep.subr.bf16.mxu0 0
      %4728 = vmatpush1.bf16.msra.mxu0 0
      %4729 = vmatprep.subr.bf16.mxu0 0
      %4730 = vmatpush1.bf16.msra.mxu0 0
      %4731 = vmatprep.subr.bf16.mxu0 0
      %4732 = vmatpush1.bf16.msra.mxu0 0
      %4733 = vmatprep.subr.bf16.mxu0 0
      %4734 = vmatpush1.bf16.msra.mxu0 0
      %4735 = vmatprep.subr.bf16.mxu0 0
      %4736 = vmatpush1.bf16.msra.mxu0 0
      %4737 = vmatprep.subr.bf16.mxu0 0
      %4738 = vmatpush1.bf16.msra.mxu0 0
      %4739 = vmatprep.subr.bf16.mxu0 0
      %4740 = vmatpush1.bf16.msra.mxu0 0
      %4741 = vmatprep.subr.bf16.mxu0 0
      %4742 = vmatpush1.bf16.msra.mxu0 0
      %4743 = vmatprep.subr.bf16.mxu0 0
      %4744 = vmatpush1.bf16.msra.mxu0 0
      %4745 = vmatprep.subr.bf16.mxu0 0
      %4746 = vmatpush1.bf16.msra.mxu0 0
      %4747 = vmatprep.subr.bf16.mxu0 0
      %4748 = vmatpush1.bf16.msra.mxu0 0
      %4749 = vmatprep.subr.bf16.mxu0 0
      %4750 = vmatpush1.bf16.msra.mxu0 0
      %4751 = vmatprep.subr.bf16.mxu0 0
      %4752 = vmatpush1.bf16.msra.mxu0 0
      %4753 = vmatprep.subr.bf16.mxu0 0
      %4754 = vmatpush1.bf16.msra.mxu0 0
      %4755 = vmatprep.mubr.bf16.mxu0 0
      %4756 = vmatmul.mubr.bf16.gmra.mrb[0].mxu0 %v4721
      %v4757 = vpop.f32.mrb[0].mxu0
      %v4758 = vadd.f32 %v4706, %v4757
      %v4759 = vpop.f32.mrb[0].mxu0
      %v4760 = vpop.f32.mrb[0].mxu0
      %v4761 = vadd.f32 %v4706, %v4760
      %v4762 = vpop.f32.mrb[0].mxu0
      %4763 = vdwg.mxu0
      %v4764 = vadd.f32 %v4040, %v4758
      %v4765 = vadd.f32 %v4041, %v4761
      %s4766 = scalar_lea.vmem %s22, 6
      %v4767 = vld [vmem:[%s4766] sm:$0x1]
      %s4768 = scalar_lea.vmem %s22, 7
      %v4769 = vld [vmem:[%s4768] sm:$0x1]
      %v4770 = vsel %vm1103, %v4764, 0.0
      %4771 = vadd.xlane.f32.xlu0 %v4770
      %v4772 = vpop.xlane.xlu0 %4771
      %v4773 = vsel %vm2162, %v4765, 0.0
      %4774 = vadd.xlane.f32.xlu0 %v4773
      %v4775 = vpop.xlane.xlu0 %4774
      %v4776 = vmul.f32 %v4772, %v2166
      %v4777 = vmul.f32 %v4775, %v2166
      %v4778 = vsub.f32 %v4764, %v4776
      %v4779 = vsub.f32 %v4765, %v4777
      %v4780 = vmul.f32 %v4778, %v4778
      %v4781 = vmul.f32 %v4779, %v4779
      %v4782 = vsel %vm1103, %v4780, 0.0
      %4783 = vadd.xlane.f32.xlu0 %v4782
      %v4784 = vpop.xlane.xlu0 %4783
      %v4785 = vsel %vm2162, %v4781, 0.0
      %4786 = vadd.xlane.f32.xlu0 %v4785
      %v4787 = vpop.xlane.xlu0 %4786
      %v4788 = vmul.f32 %v4784, %v2166
      %v4789 = vmul.f32 %v4787, %v2166
      %v4790 = vadd.f32 %v4788, 1e-05
      %v4791 = vadd.f32 %v4789, 1e-05
      %v4792 = vrsqrt.pop %v4790
      %v4793 = vrsqrt.pop %v4791
      %v4794 = vmul.f32 %v4778, %v4792
      %v4795 = vmul.f32 %v4779, %v4793
      %v4797 = vlaneseq
      %v4798 = vshrl.u32 %v4797, 7
      %v4799 = vsub.s32 0, %v4798
      %v4800 = vrot.slane %v4767, %v4799
      %v4802 = vmul.f32 %v4794, %v4800
      %v4803 = vmul.f32 %v4795, %v4800
      %v4805 = vlaneseq
      %v4806 = vshrl.u32 %v4805, 7
      %v4807 = vsub.s32 0, %v4806
      %v4808 = vrot.slane %v4769, %v4807
      %v4810 = vadd.f32 %v4802, %v4808
      %v4811 = vadd.f32 %v4803, %v4808
      %s4812 = scalar_lea.vmem %s18, 32
      %v4813 = vld [vmem:[%s4812] sm:$0xf]
      %v4814 = vld [vmem:[%s4812 + $0x4] sm:$0xf]
      %v4815 = vld [vmem:[%s4812 + $0x8] sm:$0xf]
      %v4816 = vld [vmem:[%s4812 + $0xc] sm:$0xf]
      %v4817 = vpack.c.bf16 %v4811, %v4810
      %s4818 = scalar_lea.vmem %s19, 2
      %v4819 = vld [vmem:[%s4818] sm:$0x1]
      %v4821 = vlaneseq
      %v4822 = vshrl.u32 %v4821, 7
      %v4823 = vsub.s32 0, %v4822
      %v4824 = vrot.slane %v4819, %v4823
      %v4830 = vunpack.c.l.b16 %v4813
      %v4831 = vunpack.c.l.b16 %v4814
      %v4832 = vunpack.c.l.b16 %v4815
      %v4833 = vunpack.c.l.b16 %v4816
      %v4834 = vpack.c.b16 %v4831, %v4830
      %v4835 = vpack.c.b16 %v4833, %v4832
      %v4839 = vsel %vm1103, %v4817, 0
      %4841 = vmatprep.subr.bf16.mxu0 0
      %4842 = vmatpush1.bf16.msra.mxu0 %v4834
      %4843 = vmatprep.subr.bf16.mxu0 0
      %4844 = vmatpush1.bf16.msra.mxu0 %v4835
      %4845 = vmatprep.subr.bf16.mxu0 0
      %4846 = vmatpush1.bf16.msra.mxu0 0
      %4847 = vmatprep.subr.bf16.mxu0 0
      %4848 = vmatpush1.bf16.msra.mxu0 0
      %4849 = vmatprep.subr.bf16.mxu0 0
      %4850 = vmatpush1.bf16.msra.mxu0 0
      %4851 = vmatprep.subr.bf16.mxu0 0
      %4852 = vmatpush1.bf16.msra.mxu0 0
      %4853 = vmatprep.subr.bf16.mxu0 0
      %4854 = vmatpush1.bf16.msra.mxu0 0
      %4855 = vmatprep.subr.bf16.mxu0 0
      %4856 = vmatpush1.bf16.msra.mxu0 0
      %4857 = vmatprep.subr.bf16.mxu0 0
      %4858 = vmatpush1.bf16.msra.mxu0 0
      %4859 = vmatprep.subr.bf16.mxu0 0
      %4860 = vmatpush1.bf16.msra.mxu0 0
      %4861 = vmatprep.subr.bf16.mxu0 0
      %4862 = vmatpush1.bf16.msra.mxu0 0
      %4863 = vmatprep.subr.bf16.mxu0 0
      %4864 = vmatpush1.bf16.msra.mxu0 0
      %4865 = vmatprep.subr.bf16.mxu0 0
      %4866 = vmatpush1.bf16.msra.mxu0 0
      %4867 = vmatprep.subr.bf16.mxu0 0
      %4868 = vmatpush1.bf16.msra.mxu0 0
      %4869 = vmatprep.subr.bf16.mxu0 0
      %4870 = vmatpush1.bf16.msra.mxu0 0
      %4871 = vmatprep.subr.bf16.mxu0 0
      %4872 = vmatpush1.bf16.msra.mxu0 0
      %4873 = vmatprep.mubr.bf16.mxu0 0
      %4874 = vmatmul.mubr.bf16.gmra.mrb[0].mxu0 %v4839
      %v4875 = vpop.f32.mrb[0].mxu0
      %v4876 = vadd.f32 %v4824, %v4875
      %v4877 = vpop.f32.mrb[0].mxu0
      %v4878 = vpop.f32.mrb[0].mxu0
      %v4879 = vadd.f32 %v4824, %v4878
      %v4880 = vpop.f32.mrb[0].mxu0
      %4881 = vdwg.mxu0
      %v4882 = vmax.f32 %v4876, 0.0
      %v4883 = vmax.f32 %v4879, 0.0
      %s4884 = scalar_lea.vmem %s20, 64
      %v4885 = vld [vmem:[%s4884] sm:$0xf]
      %v4886 = vld [vmem:[%s4884 + $0x4] sm:$0xf]
      %v4887 = vld [vmem:[%s4884 + $0x8] sm:$0xf]
      %v4888 = vld [vmem:[%s4884 + $0xc] sm:$0xf]
      %v4889 = vld [vmem:[%s4884 + $0x10] sm:$0xf]
      %v4890 = vld [vmem:[%s4884 + $0x14] sm:$0xf]
      %v4891 = vld [vmem:[%s4884 + $0x18] sm:$0xf]
      %v4892 = vld [vmem:[%s4884 + $0x1c] sm:$0xf]
      %v4893 = vpack.c.bf16 %v4883, %v4882
      %s4894 = scalar_lea.vmem %s21, 2
      %v4895 = vld [vmem:[%s4894] sm:$0x1]
      %v4897 = vlaneseq
      %v4898 = vshrl.u32 %v4897, 7
      %v4899 = vsub.s32 0, %v4898
      %v4900 = vrot.slane %v4895, %v4899
      %v4910 = vunpack.c.l.b16 %v4885
      %v4911 = vunpack.c.l.b16 %v4886
      %v4912 = vunpack.c.l.b16 %v4887
      %v4913 = vunpack.c.l.b16 %v4888
      %v4914 = vunpack.c.l.b16 %v4889
      %v4915 = vunpack.c.l.b16 %v4890
      %v4916 = vunpack.c.l.b16 %v4891
      %v4917 = vunpack.c.l.b16 %v4892
      %v4918 = vpack.c.b16 %v4911, %v4910
      %v4919 = vpack.c.b16 %v4913, %v4912
      %v4920 = vpack.c.b16 %v4915, %v4914
      %v4921 = vpack.c.b16 %v4917, %v4916
      %v4927 = vsel %vm1153, %v4893, 0
      %4929 = vmatprep.subr.bf16.mxu0 0
      %4930 = vmatpush1.bf16.msra.mxu0 %v4918
      %4931 = vmatprep.subr.bf16.mxu0 0
      %4932 = vmatpush1.bf16.msra.mxu0 %v4919
      %4933 = vmatprep.subr.bf16.mxu0 0
      %4934 = vmatpush1.bf16.msra.mxu0 %v4920
      %4935 = vmatprep.subr.bf16.mxu0 0
      %4936 = vmatpush1.bf16.msra.mxu0 %v4921
      %4937 = vmatprep.subr.bf16.mxu0 0
      %4938 = vmatpush1.bf16.msra.mxu0 0
      %4939 = vmatprep.subr.bf16.mxu0 0
      %4940 = vmatpush1.bf16.msra.mxu0 0
      %4941 = vmatprep.subr.bf16.mxu0 0
      %4942 = vmatpush1.bf16.msra.mxu0 0
      %4943 = vmatprep.subr.bf16.mxu0 0
      %4944 = vmatpush1.bf16.msra.mxu0 0
      %4945 = vmatprep.subr.bf16.mxu0 0
      %4946 = vmatpush1.bf16.msra.mxu0 0
      %4947 = vmatprep.subr.bf16.mxu0 0
      %4948 = vmatpush1.bf16.msra.mxu0 0
      %4949 = vmatprep.subr.bf16.mxu0 0
      %4950 = vmatpush1.bf16.msra.mxu0 0
      %4951 = vmatprep.subr.bf16.mxu0 0
      %4952 = vmatpush1.bf16.msra.mxu0 0
      %4953 = vmatprep.subr.bf16.mxu0 0
      %4954 = vmatpush1.bf16.msra.mxu0 0
      %4955 = vmatprep.subr.bf16.mxu0 0
      %4956 = vmatpush1.bf16.msra.mxu0 0
      %4957 = vmatprep.subr.bf16.mxu0 0
      %4958 = vmatpush1.bf16.msra.mxu0 0
      %4959 = vmatprep.subr.bf16.mxu0 0
      %4960 = vmatpush1.bf16.msra.mxu0 0
      %4961 = vmatprep.mubr.bf16.mxu0 0
      %4962 = vmatmul.mubr.bf16.gmra.mrb[0].mxu0 %v4927
      %v4963 = vpop.f32.mrb[0].mxu0
      %v4964 = vadd.f32 %v4900, %v4963
      %v4965 = vpop.f32.mrb[0].mxu0
      %v4966 = vpop.f32.mrb[0].mxu0
      %v4967 = vadd.f32 %v4900, %v4966
      %v4968 = vpop.f32.mrb[0].mxu0
      %4969 = vdwg.mxu0
      %v4970 = vadd.f32 %v4810, %v4964
      %v4971 = vadd.f32 %v4811, %v4967
      %s4972 = scalar_lea.vmem %s22, 8
      %v4973 = vld [vmem:[%s4972] sm:$0x1]
      %s4974 = scalar_lea.vmem %s22, 9
      %v4975 = vld [vmem:[%s4974] sm:$0x1]
      %v4976 = vsel %vm1103, %v4970, 0.0
      %4977 = vadd.xlane.f32.xlu0 %v4976
      %v4978 = vpop.xlane.xlu0 %4977
      %v4979 = vsel %vm2162, %v4971, 0.0
      %4980 = vadd.xlane.f32.xlu0 %v4979
      %v4981 = vpop.xlane.xlu0 %4980
      %v4982 = vmul.f32 %v4978, %v2166
      %v4983 = vmul.f32 %v4981, %v2166
      %v4984 = vsub.f32 %v4970, %v4982
      %v4985 = vsub.f32 %v4971, %v4983
      %v4986 = vmul.f32 %v4984, %v4984
      %v4987 = vmul.f32 %v4985, %v4985
      %v4988 = vsel %vm1103, %v4986, 0.0
      %4989 = vadd.xlane.f32.xlu0 %v4988
      %v4990 = vpop.xlane.xlu0 %4989
      %v4991 = vsel %vm2162, %v4987, 0.0
      %4992 = vadd.xlane.f32.xlu0 %v4991
      %v4993 = vpop.xlane.xlu0 %4992
      %v4994 = vmul.f32 %v4990, %v2166
      %v4995 = vmul.f32 %v4993, %v2166
      %v4996 = vadd.f32 %v4994, 1e-05
      %v4997 = vadd.f32 %v4995, 1e-05
      %v4998 = vrsqrt.pop %v4996
      %v4999 = vrsqrt.pop %v4997
      %v5000 = vmul.f32 %v4984, %v4998
      %v5001 = vmul.f32 %v4985, %v4999
      %v5003 = vlaneseq
      %v5004 = vshrl.u32 %v5003, 7
      %v5005 = vsub.s32 0, %v5004
      %v5006 = vrot.slane %v4973, %v5005
      %v5008 = vmul.f32 %v5000, %v5006
      %v5009 = vmul.f32 %v5001, %v5006
      %v5011 = vlaneseq
      %v5012 = vshrl.u32 %v5011, 7
      %v5013 = vsub.s32 0, %v5012
      %v5014 = vrot.slane %v4975, %v5013
      %v5016 = vadd.f32 %v5008, %v5014
      %v5017 = vadd.f32 %v5009, %v5014
      %s5018 = scalar_lea.vmem %s12, 48
      %v5019 = vld [vmem:[%s5018] sm:$0xf]
      %v5020 = vld [vmem:[%s5018 + $0x4] sm:$0xf]
      %v5021 = vld [vmem:[%s5018 + $0x8] sm:$0xf]
      %v5022 = vld [vmem:[%s5018 + $0xc] sm:$0xf]
      %s5023 = scalar_lea.vmem %s13, 3
      %v5024 = vld [vmem:[%s5023] sm:$0x1]
      %s5025 = scalar_lea.vmem %s14, 48
      %v5026 = vld [vmem:[%s5025] sm:$0xf]
      %v5027 = vld [vmem:[%s5025 + $0x4] sm:$0xf]
      %v5028 = vld [vmem:[%s5025 + $0x8] sm:$0xf]
      %v5029 = vld [vmem:[%s5025 + $0xc] sm:$0xf]
      %s5030 = scalar_lea.vmem %s15, 3
      %v5031 = vld [vmem:[%s5030] sm:$0x1]
      %v5032 = vpack.c.bf16 %v5017, %v5016
      %v5034 = vlaneseq
      %v5035 = vshrl.u32 %v5034, 7
      %v5036 = vsub.s32 0, %v5035
      %v5037 = vrot.slane %v5024, %v5036
      %v5043 = vunpack.c.l.b16 %v5019
      %v5044 = vunpack.c.l.b16 %v5020
      %v5045 = vunpack.c.l.b16 %v5021
      %v5046 = vunpack.c.l.b16 %v5022
      %v5047 = vpack.c.b16 %v5044, %v5043
      %v5048 = vpack.c.b16 %v5046, %v5045
      %v5052 = vsel %vm1103, %v5032, 0
      %5054 = vmatprep.subr.bf16.mxu0 0
      %5055 = vmatpush1.bf16.msra.mxu0 %v5047
      %5056 = vmatprep.subr.bf16.mxu0 0
      %5057 = vmatpush1.bf16.msra.mxu0 %v5048
      %5058 = vmatprep.subr.bf16.mxu0 0
      %5059 = vmatpush1.bf16.msra.mxu0 0
      %5060 = vmatprep.subr.bf16.mxu0 0
      %5061 = vmatpush1.bf16.msra.mxu0 0
      %5062 = vmatprep.subr.bf16.mxu0 0
      %5063 = vmatpush1.bf16.msra.mxu0 0
      %5064 = vmatprep.subr.bf16.mxu0 0
      %5065 = vmatpush1.bf16.msra.mxu0 0
      %5066 = vmatprep.subr.bf16.mxu0 0
      %5067 = vmatpush1.bf16.msra.mxu0 0
      %5068 = vmatprep.subr.bf16.mxu0 0
      %5069 = vmatpush1.bf16.msra.mxu0 0
      %5070 = vmatprep.subr.bf16.mxu0 0
      %5071 = vmatpush1.bf16.msra.mxu0 0
      %5072 = vmatprep.subr.bf16.mxu0 0
      %5073 = vmatpush1.bf16.msra.mxu0 0
      %5074 = vmatprep.subr.bf16.mxu0 0
      %5075 = vmatpush1.bf16.msra.mxu0 0
      %5076 = vmatprep.subr.bf16.mxu0 0
      %5077 = vmatpush1.bf16.msra.mxu0 0
      %5078 = vmatprep.subr.bf16.mxu0 0
      %5079 = vmatpush1.bf16.msra.mxu0 0
      %5080 = vmatprep.subr.bf16.mxu0 0
      %5081 = vmatpush1.bf16.msra.mxu0 0
      %5082 = vmatprep.subr.bf16.mxu0 0
      %5083 = vmatpush1.bf16.msra.mxu0 0
      %5084 = vmatprep.subr.bf16.mxu0 0
      %5085 = vmatpush1.bf16.msra.mxu0 0
      %5086 = vmatprep.mubr.bf16.mxu0 0
      %5087 = vmatmul.mubr.bf16.gmra.mrb[0].mxu0 %v5052
      %v5088 = vpop.f32.mrb[0].mxu0
      %v5089 = vadd.f32 %v5037, %v5088
      %v5090 = vpop.f32.mrb[0].mxu0
      %v5091 = vpop.f32.mrb[0].mxu0
      %v5092 = vadd.f32 %v5037, %v5091
      %v5093 = vpop.f32.mrb[0].mxu0
      %5094 = vdwg.mxu0
      %v5095 = vmul.f32 %v5089, 0.35355338
      %v5096 = vmul.f32 %v5092, 0.35355338
      %v5097 = vmul.f32 %v5095, %v1555
      %v5098 = vmul.f32 %v5096, %v1555
      %v5099 = vpack.c.bf16 %v5098, %v5097
      %v5100 = vpack.c.bf16 %v5092, %v5089
      %5102 = vrot.lane.b32.xlu0 %v5100, 96
      %v5103 = vpop.permute.xlu0 %5102
      %v5105 = vsel %vm1103, %v5099, 0
      %v5108 = vsel %vm1103, %v5103, 0
      %5110 = vmatprep.subr.bf16.mxu0 0
      %5111 = vmatpush1.bf16.xpose.msra.mxu0 %v5108
      %5112 = vmatprep.subr.bf16.mxu0 0
      %5113 = vmatpush1.bf16.xpose.msra.mxu0 0
      %5114 = vmatprep.subr.bf16.mxu0 0
      %5115 = vmatpush1.bf16.xpose.msra.mxu0 0
      %5116 = vmatprep.subr.bf16.mxu0 0
      %5117 = vmatpush1.bf16.xpose.msra.mxu0 0
      %5118 = vmatprep.subr.bf16.mxu0 0
      %5119 = vmatpush1.bf16.xpose.msra.mxu0 0
      %5120 = vmatprep.subr.bf16.mxu0 0
      %5121 = vmatpush1.bf16.xpose.msra.mxu0 0
      %5122 = vmatprep.subr.bf16.mxu0 0
      %5123 = vmatpush1.bf16.xpose.msra.mxu0 0
      %5124 = vmatprep.subr.bf16.mxu0 0
      %5125 = vmatpush1.bf16.xpose.msra.mxu0 0
      %5126 = vmatprep.subr.bf16.mxu0 0
      %5127 = vmatpush1.bf16.xpose.msra.mxu0 0
      %5128 = vmatprep.subr.bf16.mxu0 0
      %5129 = vmatpush1.bf16.xpose.msra.mxu0 0
      %5130 = vmatprep.subr.bf16.mxu0 0
      %5131 = vmatpush1.bf16.xpose.msra.mxu0 0
      %5132 = vmatprep.subr.bf16.mxu0 0
      %5133 = vmatpush1.bf16.xpose.msra.mxu0 0
      %5134 = vmatprep.subr.bf16.mxu0 0
      %5135 = vmatpush1.bf16.xpose.msra.mxu0 0
      %5136 = vmatprep.subr.bf16.mxu0 0
      %5137 = vmatpush1.bf16.xpose.msra.mxu0 0
      %5138 = vmatprep.subr.bf16.mxu0 0
      %5139 = vmatpush1.bf16.xpose.msra.mxu0 0
      %5140 = vmatprep.subr.bf16.mxu0 0
      %5141 = vmatpush1.bf16.xpose.msra.mxu0 0
      %5142 = vmatprep.mubr.bf16.mxu0 0
      %5143 = vmatmul.mubr.bf16.gmra.mrb[0].mxu0 %v5105
      %v5144 = vpop.f32.mrb[0].mxu0
      %v5145 = vadd.f32 %v902, %v5144
      %v5146 = vpop.f32.mrb[0].mxu0
      %v5147 = vpop.f32.mrb[0].mxu0
      %v5148 = vadd.f32 %v903, %v5147
      %v5149 = vpop.f32.mrb[0].mxu0
      %5150 = vdwg.mxu0
      %v5151 = vsel %vm930, %v5145, -inf
      %5152 = vmax.xlane.f32.xlu0 %v5151
      %v5153 = vpop.xlane.xlu0 %5152
      %v5154 = vsel %vm1614, %v5148, -inf
      %5155 = vmax.xlane.f32.xlu0 %v5154
      %v5156 = vpop.xlane.xlu0 %5155
      %v5157 = vsub.f32 %v5145, %v5153
      %v5158 = vsub.f32 %v5148, %v5156
      %v5159 = vmul.f32 %v5157, 1.442695
      %v5160 = vpow.pop %v5159
      %v5161 = vmul.f32 %v5158, 1.442695
      %v5162 = vpow.pop %v5161
      %v5163 = vsel %vm930, %v5160, 0.0
      %5164 = vadd.xlane.f32.xlu0 %v5163
      %v5165 = vpop.xlane.xlu0 %5164
      %v5166 = vsel %vm1614, %v5162, 0.0
      %5167 = vadd.xlane.f32.xlu0 %v5166
      %v5168 = vpop.xlane.xlu0 %5167
      %v5169 = vrcp.pop %v5165
      %v5170 = vmul.f32 %v5160, %v5169
      %v5171 = vrcp.pop %v5168
      %v5172 = vmul.f32 %v5162, %v5171
      %v5173 = vmul.f32 %v5089, %v1635
      %v5174 = vmul.f32 %v5092, %v1635
      %v5175 = vpack.c.bf16 %v5172, %v5170
      %v5176 = vpack.c.bf16 %v5174, %v5173
      %v5177 = vmul.f32 %v5095, %v1645
      %v5178 = vmul.f32 %v5096, %v1645
      %v5179 = vpack.c.bf16 %v5178, %v5177
      %v5181 = vsel %vm1103, %v5179, 0
      %5183 = vmatprep.subr.bf16.mxu0 0
      %5184 = vmatpush1.bf16.xpose.msra.mxu0 %v5108
      %5185 = vmatprep.subr.bf16.mxu0 0
      %5186 = vmatpush1.bf16.xpose.msra.mxu0 0
      %5187 = vmatprep.subr.bf16.mxu0 0
      %5188 = vmatpush1.bf16.xpose.msra.mxu0 0
      %5189 = vmatprep.subr.bf16.mxu0 0
      %5190 = vmatpush1.bf16.xpose.msra.mxu0 0
      %5191 = vmatprep.subr.bf16.mxu0 0
      %5192 = vmatpush1.bf16.xpose.msra.mxu0 0
      %5193 = vmatprep.subr.bf16.mxu0 0
      %5194 = vmatpush1.bf16.xpose.msra.mxu0 0
      %5195 = vmatprep.subr.bf16.mxu0 0
      %5196 = vmatpush1.bf16.xpose.msra.mxu0 0
      %5197 = vmatprep.subr.bf16.mxu0 0
      %5198 = vmatpush1.bf16.xpose.msra.mxu0 0
      %5199 = vmatprep.subr.bf16.mxu0 0
      %5200 = vmatpush1.bf16.xpose.msra.mxu0 0
      %5201 = vmatprep.subr.bf16.mxu0 0
      %5202 = vmatpush1.bf16.xpose.msra.mxu0 0
      %5203 = vmatprep.subr.bf16.mxu0 0
      %5204 = vmatpush1.bf16.xpose.msra.mxu0 0
      %5205 = vmatprep.subr.bf16.mxu0 0
      %5206 = vmatpush1.bf16.xpose.msra.mxu0 0
      %5207 = vmatprep.subr.bf16.mxu0 0
      %5208 = vmatpush1.bf16.xpose.msra.mxu0 0
      %5209 = vmatprep.subr.bf16.mxu0 0
      %5210 = vmatpush1.bf16.xpose.msra.mxu0 0
      %5211 = vmatprep.subr.bf16.mxu0 0
      %5212 = vmatpush1.bf16.xpose.msra.mxu0 0
      %5213 = vmatprep.subr.bf16.mxu0 0
      %5214 = vmatpush1.bf16.xpose.msra.mxu0 0
      %5215 = vmatprep.mubr.bf16.mxu0 0
      %5216 = vmatmul.mubr.bf16.gmra.mrb[0].mxu0 %v5181
      %v5217 = vpop.f32.mrb[0].mxu0
      %v5218 = vadd.f32 %v902, %v5217
      %v5219 = vpop.f32.mrb[0].mxu0
      %v5220 = vpop.f32.mrb[0].mxu0
      %v5221 = vadd.f32 %v903, %v5220
      %v5222 = vpop.f32.mrb[0].mxu0
      %5223 = vdwg.mxu0
      %v5224 = vsel %vm930, %v5218, -inf
      %5225 = vmax.xlane.f32.xlu0 %v5224
      %v5226 = vpop.xlane.xlu0 %5225
      %v5227 = vsel %vm1614, %v5221, -inf
      %5228 = vmax.xlane.f32.xlu0 %v5227
      %v5229 = vpop.xlane.xlu0 %5228
      %v5230 = vsub.f32 %v5218, %v5226
      %v5231 = vsub.f32 %v5221, %v5229
      %v5232 = vmul.f32 %v5230, 1.442695
      %v5233 = vpow.pop %v5232
      %v5234 = vmul.f32 %v5231, 1.442695
      %v5235 = vpow.pop %v5234
      %v5236 = vsel %vm930, %v5233, 0.0
      %5237 = vadd.xlane.f32.xlu0 %v5236
      %v5238 = vpop.xlane.xlu0 %5237
      %v5239 = vsel %vm1614, %v5235, 0.0
      %5240 = vadd.xlane.f32.xlu0 %v5239
      %v5241 = vpop.xlane.xlu0 %5240
      %v5242 = vrcp.pop %v5238
      %v5243 = vmul.f32 %v5233, %v5242
      %v5244 = vrcp.pop %v5241
      %v5245 = vmul.f32 %v5235, %v5244
      %v5246 = vmul.f32 %v5089, %v1717
      %v5247 = vmul.f32 %v5092, %v1717
      %v5248 = vpack.c.bf16 %v5245, %v5243
      %v5249 = vpack.c.bf16 %v5247, %v5246
      %5251 = vrot.lane.b32.xlu0 %v5249, 64
      %v5252 = vpop.permute.xlu0 %5251
      %v5254 = vsel %vm930, %v5248, 0
      %v5257 = vsel %vm940, %v5252, 0
      %5259 = vmatprep.subr.bf16.mxu0 0
      %5260 = vmatpush1.bf16.msra.mxu0 %v5257
      %5261 = vmatprep.subr.bf16.mxu0 0
      %5262 = vmatpush1.bf16.msra.mxu0 0
      %5263 = vmatprep.subr.bf16.mxu0 0
      %5264 = vmatpush1.bf16.msra.mxu0 0
      %5265 = vmatprep.subr.bf16.mxu0 0
      %5266 = vmatpush1.bf16.msra.mxu0 0
      %5267 = vmatprep.subr.bf16.mxu0 0
      %5268 = vmatpush1.bf16.msra.mxu0 0
      %5269 = vmatprep.subr.bf16.mxu0 0
      %5270 = vmatpush1.bf16.msra.mxu0 0
      %5271 = vmatprep.subr.bf16.mxu0 0
      %5272 = vmatpush1.bf16.msra.mxu0 0
      %5273 = vmatprep.subr.bf16.mxu0 0
      %5274 = vmatpush1.bf16.msra.mxu0 0
      %5275 = vmatprep.subr.bf16.mxu0 0
      %5276 = vmatpush1.bf16.msra.mxu0 0
      %5277 = vmatprep.subr.bf16.mxu0 0
      %5278 = vmatpush1.bf16.msra.mxu0 0
      %5279 = vmatprep.subr.bf16.mxu0 0
      %5280 = vmatpush1.bf16.msra.mxu0 0
      %5281 = vmatprep.subr.bf16.mxu0 0
      %5282 = vmatpush1.bf16.msra.mxu0 0
      %5283 = vmatprep.subr.bf16.mxu0 0
      %5284 = vmatpush1.bf16.msra.mxu0 0
      %5285 = vmatprep.subr.bf16.mxu0 0
      %5286 = vmatpush1.bf16.msra.mxu0 0
      %5287 = vmatprep.subr.bf16.mxu0 0
      %5288 = vmatpush1.bf16.msra.mxu0 0
      %5289 = vmatprep.subr.bf16.mxu0 0
      %5290 = vmatpush1.bf16.msra.mxu0 0
      %5291 = vmatprep.mubr.bf16.mxu0 0
      %5292 = vmatmul.mubr.bf16.gmra.mrb[0].mxu0 %v5254
      %v5293 = vpop.f32.mrb[0].mxu0
      %v5294 = vadd.f32 0.0, %v5293
      %v5295 = vpop.f32.mrb[0].mxu0
      %v5296 = vpop.f32.mrb[0].mxu0
      %v5297 = vadd.f32 0.0, %v5296
      %v5298 = vpop.f32.mrb[0].mxu0
      %5299 = vdwg.mxu0
      %5301 = vrot.lane.b32.xlu0 %v5176, 64
      %v5302 = vpop.permute.xlu0 %5301
      %v5304 = vsel %vm930, %v5175, 0
      %v5307 = vsel %vm940, %v5302, 0
      %5309 = vmatprep.subr.bf16.mxu0 0
      %5310 = vmatpush1.bf16.msra.mxu0 %v5307
      %5311 = vmatprep.subr.bf16.mxu0 0
      %5312 = vmatpush1.bf16.msra.mxu0 0
      %5313 = vmatprep.subr.bf16.mxu0 0
      %5314 = vmatpush1.bf16.msra.mxu0 0
      %5315 = vmatprep.subr.bf16.mxu0 0
      %5316 = vmatpush1.bf16.msra.mxu0 0
      %5317 = vmatprep.subr.bf16.mxu0 0
      %5318 = vmatpush1.bf16.msra.mxu0 0
      %5319 = vmatprep.subr.bf16.mxu0 0
      %5320 = vmatpush1.bf16.msra.mxu0 0
      %5321 = vmatprep.subr.bf16.mxu0 0
      %5322 = vmatpush1.bf16.msra.mxu0 0
      %5323 = vmatprep.subr.bf16.mxu0 0
      %5324 = vmatpush1.bf16.msra.mxu0 0
      %5325 = vmatprep.subr.bf16.mxu0 0
      %5326 = vmatpush1.bf16.msra.mxu0 0
      %5327 = vmatprep.subr.bf16.mxu0 0
      %5328 = vmatpush1.bf16.msra.mxu0 0
      %5329 = vmatprep.subr.bf16.mxu0 0
      %5330 = vmatpush1.bf16.msra.mxu0 0
      %5331 = vmatprep.subr.bf16.mxu0 0
      %5332 = vmatpush1.bf16.msra.mxu0 0
      %5333 = vmatprep.subr.bf16.mxu0 0
      %5334 = vmatpush1.bf16.msra.mxu0 0
      %5335 = vmatprep.subr.bf16.mxu0 0
      %5336 = vmatpush1.bf16.msra.mxu0 0
      %5337 = vmatprep.subr.bf16.mxu0 0
      %5338 = vmatpush1.bf16.msra.mxu0 0
      %5339 = vmatprep.subr.bf16.mxu0 0
      %5340 = vmatpush1.bf16.msra.mxu0 0
      %5341 = vmatprep.mubr.bf16.mxu0 0
      %5342 = vmatmul.mubr.bf16.gmra.mrb[0].mxu0 %v5304
      %v5343 = vpop.f32.mrb[0].mxu0
      %v5344 = vadd.f32 %v5294, %v5343
      %v5345 = vpop.f32.mrb[0].mxu0
      %v5346 = vpop.f32.mrb[0].mxu0
      %v5347 = vadd.f32 %v5297, %v5346
      %v5348 = vpop.f32.mrb[0].mxu0
      %5349 = vdwg.mxu0
      %v5350 = vmul.f32 %v5095, %v1827
      %v5351 = vmul.f32 %v5096, %v1827
      %v5352 = vpack.c.bf16 %v5351, %v5350
      %v5354 = vsel %vm1103, %v5352, 0
      %5356 = vmatprep.subr.bf16.mxu0 0
      %5357 = vmatpush1.bf16.xpose.msra.mxu0 %v5108
      %5358 = vmatprep.subr.bf16.mxu0 0
      %5359 = vmatpush1.bf16.xpose.msra.mxu0 0
      %5360 = vmatprep.subr.bf16.mxu0 0
      %5361 = vmatpush1.bf16.xpose.msra.mxu0 0
      %5362 = vmatprep.subr.bf16.mxu0 0
      %5363 = vmatpush1.bf16.xpose.msra.mxu0 0
      %5364 = vmatprep.subr.bf16.mxu0 0
      %5365 = vmatpush1.bf16.xpose.msra.mxu0 0
      %5366 = vmatprep.subr.bf16.mxu0 0
      %5367 = vmatpush1.bf16.xpose.msra.mxu0 0
      %5368 = vmatprep.subr.bf16.mxu0 0
      %5369 = vmatpush1.bf16.xpose.msra.mxu0 0
      %5370 = vmatprep.subr.bf16.mxu0 0
      %5371 = vmatpush1.bf16.xpose.msra.mxu0 0
      %5372 = vmatprep.subr.bf16.mxu0 0
      %5373 = vmatpush1.bf16.xpose.msra.mxu0 0
      %5374 = vmatprep.subr.bf16.mxu0 0
      %5375 = vmatpush1.bf16.xpose.msra.mxu0 0
      %5376 = vmatprep.subr.bf16.mxu0 0
      %5377 = vmatpush1.bf16.xpose.msra.mxu0 0
      %5378 = vmatprep.subr.bf16.mxu0 0
      %5379 = vmatpush1.bf16.xpose.msra.mxu0 0
      %5380 = vmatprep.subr.bf16.mxu0 0
      %5381 = vmatpush1.bf16.xpose.msra.mxu0 0
      %5382 = vmatprep.subr.bf16.mxu0 0
      %5383 = vmatpush1.bf16.xpose.msra.mxu0 0
      %5384 = vmatprep.subr.bf16.mxu0 0
      %5385 = vmatpush1.bf16.xpose.msra.mxu0 0
      %5386 = vmatprep.subr.bf16.mxu0 0
      %5387 = vmatpush1.bf16.xpose.msra.mxu0 0
      %5388 = vmatprep.mubr.bf16.mxu0 0
      %5389 = vmatmul.mubr.bf16.gmra.mrb[0].mxu0 %v5354
      %v5390 = vpop.f32.mrb[0].mxu0
      %v5391 = vadd.f32 %v902, %v5390
      %v5392 = vpop.f32.mrb[0].mxu0
      %v5393 = vpop.f32.mrb[0].mxu0
      %v5394 = vadd.f32 %v903, %v5393
      %v5395 = vpop.f32.mrb[0].mxu0
      %5396 = vdwg.mxu0
      %v5397 = vsel %vm930, %v5391, -inf
      %5398 = vmax.xlane.f32.xlu0 %v5397
      %v5399 = vpop.xlane.xlu0 %5398
      %v5400 = vsel %vm1614, %v5394, -inf
      %5401 = vmax.xlane.f32.xlu0 %v5400
      %v5402 = vpop.xlane.xlu0 %5401
      %v5403 = vsub.f32 %v5391, %v5399
      %v5404 = vsub.f32 %v5394, %v5402
      %v5405 = vmul.f32 %v5403, 1.442695
      %v5406 = vpow.pop %v5405
      %v5407 = vmul.f32 %v5404, 1.442695
      %v5408 = vpow.pop %v5407
      %v5409 = vsel %vm930, %v5406, 0.0
      %5410 = vadd.xlane.f32.xlu0 %v5409
      %v5411 = vpop.xlane.xlu0 %5410
      %v5412 = vsel %vm1614, %v5408, 0.0
      %5413 = vadd.xlane.f32.xlu0 %v5412
      %v5414 = vpop.xlane.xlu0 %5413
      %v5415 = vrcp.pop %v5411
      %v5416 = vmul.f32 %v5406, %v5415
      %v5417 = vrcp.pop %v5414
      %v5418 = vmul.f32 %v5408, %v5417
      %v5419 = vmul.f32 %v5089, %v1899
      %v5420 = vmul.f32 %v5092, %v1899
      %v5421 = vpack.c.bf16 %v5418, %v5416
      %v5422 = vpack.c.bf16 %v5420, %v5419
      %5424 = vrot.lane.b32.xlu0 %v5422, 64
      %v5425 = vpop.permute.xlu0 %5424
      %v5427 = vsel %vm930, %v5421, 0
      %v5430 = vsel %vm940, %v5425, 0
      %5432 = vmatprep.subr.bf16.mxu0 0
      %5433 = vmatpush1.bf16.msra.mxu0 %v5430
      %5434 = vmatprep.subr.bf16.mxu0 0
      %5435 = vmatpush1.bf16.msra.mxu0 0
      %5436 = vmatprep.subr.bf16.mxu0 0
      %5437 = vmatpush1.bf16.msra.mxu0 0
      %5438 = vmatprep.subr.bf16.mxu0 0
      %5439 = vmatpush1.bf16.msra.mxu0 0
      %5440 = vmatprep.subr.bf16.mxu0 0
      %5441 = vmatpush1.bf16.msra.mxu0 0
      %5442 = vmatprep.subr.bf16.mxu0 0
      %5443 = vmatpush1.bf16.msra.mxu0 0
      %5444 = vmatprep.subr.bf16.mxu0 0
      %5445 = vmatpush1.bf16.msra.mxu0 0
      %5446 = vmatprep.subr.bf16.mxu0 0
      %5447 = vmatpush1.bf16.msra.mxu0 0
      %5448 = vmatprep.subr.bf16.mxu0 0
      %5449 = vmatpush1.bf16.msra.mxu0 0
      %5450 = vmatprep.subr.bf16.mxu0 0
      %5451 = vmatpush1.bf16.msra.mxu0 0
      %5452 = vmatprep.subr.bf16.mxu0 0
      %5453 = vmatpush1.bf16.msra.mxu0 0
      %5454 = vmatprep.subr.bf16.mxu0 0
      %5455 = vmatpush1.bf16.msra.mxu0 0
      %5456 = vmatprep.subr.bf16.mxu0 0
      %5457 = vmatpush1.bf16.msra.mxu0 0
      %5458 = vmatprep.subr.bf16.mxu0 0
      %5459 = vmatpush1.bf16.msra.mxu0 0
      %5460 = vmatprep.subr.bf16.mxu0 0
      %5461 = vmatpush1.bf16.msra.mxu0 0
      %5462 = vmatprep.subr.bf16.mxu0 0
      %5463 = vmatpush1.bf16.msra.mxu0 0
      %5464 = vmatprep.mubr.bf16.mxu0 0
      %5465 = vmatmul.mubr.bf16.gmra.mrb[0].mxu0 %v5427
      %v5466 = vpop.f32.mrb[0].mxu0
      %v5467 = vadd.f32 0.0, %v5466
      %v5468 = vpop.f32.mrb[0].mxu0
      %v5469 = vpop.f32.mrb[0].mxu0
      %v5470 = vadd.f32 0.0, %v5469
      %v5471 = vpop.f32.mrb[0].mxu0
      %5472 = vdwg.mxu0
      %v5473 = vadd.f32 %v5344, %v5467
      %v5474 = vadd.f32 %v5347, %v5470
      %v5475 = vmul.f32 %v5095, %v1961
      %v5476 = vmul.f32 %v5096, %v1961
      %v5477 = vpack.c.bf16 %v5476, %v5475
      %v5479 = vsel %vm1103, %v5477, 0
      %5481 = vmatprep.subr.bf16.mxu0 0
      %5482 = vmatpush1.bf16.xpose.msra.mxu0 %v5108
      %5483 = vmatprep.subr.bf16.mxu0 0
      %5484 = vmatpush1.bf16.xpose.msra.mxu0 0
      %5485 = vmatprep.subr.bf16.mxu0 0
      %5486 = vmatpush1.bf16.xpose.msra.mxu0 0
      %5487 = vmatprep.subr.bf16.mxu0 0
      %5488 = vmatpush1.bf16.xpose.msra.mxu0 0
      %5489 = vmatprep.subr.bf16.mxu0 0
      %5490 = vmatpush1.bf16.xpose.msra.mxu0 0
      %5491 = vmatprep.subr.bf16.mxu0 0
      %5492 = vmatpush1.bf16.xpose.msra.mxu0 0
      %5493 = vmatprep.subr.bf16.mxu0 0
      %5494 = vmatpush1.bf16.xpose.msra.mxu0 0
      %5495 = vmatprep.subr.bf16.mxu0 0
      %5496 = vmatpush1.bf16.xpose.msra.mxu0 0
      %5497 = vmatprep.subr.bf16.mxu0 0
      %5498 = vmatpush1.bf16.xpose.msra.mxu0 0
      %5499 = vmatprep.subr.bf16.mxu0 0
      %5500 = vmatpush1.bf16.xpose.msra.mxu0 0
      %5501 = vmatprep.subr.bf16.mxu0 0
      %5502 = vmatpush1.bf16.xpose.msra.mxu0 0
      %5503 = vmatprep.subr.bf16.mxu0 0
      %5504 = vmatpush1.bf16.xpose.msra.mxu0 0
      %5505 = vmatprep.subr.bf16.mxu0 0
      %5506 = vmatpush1.bf16.xpose.msra.mxu0 0
      %5507 = vmatprep.subr.bf16.mxu0 0
      %5508 = vmatpush1.bf16.xpose.msra.mxu0 0
      %5509 = vmatprep.subr.bf16.mxu0 0
      %5510 = vmatpush1.bf16.xpose.msra.mxu0 0
      %5511 = vmatprep.subr.bf16.mxu0 0
      %5512 = vmatpush1.bf16.xpose.msra.mxu0 0
      %5513 = vmatprep.mubr.bf16.mxu0 0
      %5514 = vmatmul.mubr.bf16.gmra.mrb[0].mxu0 %v5479
      %v5515 = vpop.f32.mrb[0].mxu0
      %v5516 = vadd.f32 %v902, %v5515
      %v5517 = vpop.f32.mrb[0].mxu0
      %v5518 = vpop.f32.mrb[0].mxu0
      %v5519 = vadd.f32 %v903, %v5518
      %v5520 = vpop.f32.mrb[0].mxu0
      %5521 = vdwg.mxu0
      %v5522 = vsel %vm930, %v5516, -inf
      %5523 = vmax.xlane.f32.xlu0 %v5522
      %v5524 = vpop.xlane.xlu0 %5523
      %v5525 = vsel %vm1614, %v5519, -inf
      %5526 = vmax.xlane.f32.xlu0 %v5525
      %v5527 = vpop.xlane.xlu0 %5526
      %v5528 = vsub.f32 %v5516, %v5524
      %v5529 = vsub.f32 %v5519, %v5527
      %v5530 = vmul.f32 %v5528, 1.442695
      %v5531 = vpow.pop %v5530
      %v5532 = vmul.f32 %v5529, 1.442695
      %v5533 = vpow.pop %v5532
      %v5534 = vsel %vm930, %v5531, 0.0
      %5535 = vadd.xlane.f32.xlu0 %v5534
      %v5536 = vpop.xlane.xlu0 %5535
      %v5537 = vsel %vm1614, %v5533, 0.0
      %5538 = vadd.xlane.f32.xlu0 %v5537
      %v5539 = vpop.xlane.xlu0 %5538
      %v5540 = vrcp.pop %v5536
      %v5541 = vmul.f32 %v5531, %v5540
      %v5542 = vrcp.pop %v5539
      %v5543 = vmul.f32 %v5533, %v5542
      %v5544 = vmul.f32 %v5089, %v2033
      %v5545 = vmul.f32 %v5092, %v2033
      %v5546 = vpack.c.bf16 %v5543, %v5541
      %v5547 = vpack.c.bf16 %v5545, %v5544
      %5549 = vrot.lane.b32.xlu0 %v5547, 64
      %v5550 = vpop.permute.xlu0 %5549
      %v5552 = vsel %vm930, %v5546, 0
      %v5555 = vsel %vm940, %v5550, 0
      %5557 = vmatprep.subr.bf16.mxu0 0
      %5558 = vmatpush1.bf16.msra.mxu0 %v5555
      %5559 = vmatprep.subr.bf16.mxu0 0
      %5560 = vmatpush1.bf16.msra.mxu0 0
      %5561 = vmatprep.subr.bf16.mxu0 0
      %5562 = vmatpush1.bf16.msra.mxu0 0
      %5563 = vmatprep.subr.bf16.mxu0 0
      %5564 = vmatpush1.bf16.msra.mxu0 0
      %5565 = vmatprep.subr.bf16.mxu0 0
      %5566 = vmatpush1.bf16.msra.mxu0 0
      %5567 = vmatprep.subr.bf16.mxu0 0
      %5568 = vmatpush1.bf16.msra.mxu0 0
      %5569 = vmatprep.subr.bf16.mxu0 0
      %5570 = vmatpush1.bf16.msra.mxu0 0
      %5571 = vmatprep.subr.bf16.mxu0 0
      %5572 = vmatpush1.bf16.msra.mxu0 0
      %5573 = vmatprep.subr.bf16.mxu0 0
      %5574 = vmatpush1.bf16.msra.mxu0 0
      %5575 = vmatprep.subr.bf16.mxu0 0
      %5576 = vmatpush1.bf16.msra.mxu0 0
      %5577 = vmatprep.subr.bf16.mxu0 0
      %5578 = vmatpush1.bf16.msra.mxu0 0
      %5579 = vmatprep.subr.bf16.mxu0 0
      %5580 = vmatpush1.bf16.msra.mxu0 0
      %5581 = vmatprep.subr.bf16.mxu0 0
      %5582 = vmatpush1.bf16.msra.mxu0 0
      %5583 = vmatprep.subr.bf16.mxu0 0
      %5584 = vmatpush1.bf16.msra.mxu0 0
      %5585 = vmatprep.subr.bf16.mxu0 0
      %5586 = vmatpush1.bf16.msra.mxu0 0
      %5587 = vmatprep.subr.bf16.mxu0 0
      %5588 = vmatpush1.bf16.msra.mxu0 0
      %5589 = vmatprep.mubr.bf16.mxu0 0
      %5590 = vmatmul.mubr.bf16.gmra.mrb[0].mxu0 %v5552
      %v5591 = vpop.f32.mrb[0].mxu0
      %v5592 = vadd.f32 0.0, %v5591
      %v5593 = vpop.f32.mrb[0].mxu0
      %v5594 = vpop.f32.mrb[0].mxu0
      %v5595 = vadd.f32 0.0, %v5594
      %v5596 = vpop.f32.mrb[0].mxu0
      %5597 = vdwg.mxu0
      %v5598 = vadd.f32 %v5473, %v5592
      %v5599 = vadd.f32 %v5474, %v5595
      %v5600 = vpack.c.bf16 %v5599, %v5598
      %v5602 = vlaneseq
      %v5603 = vshrl.u32 %v5602, 7
      %v5604 = vsub.s32 0, %v5603
      %v5605 = vrot.slane %v5031, %v5604
      %v5611 = vunpack.c.l.b16 %v5026
      %v5612 = vunpack.c.l.b16 %v5027
      %v5613 = vunpack.c.l.b16 %v5028
      %v5614 = vunpack.c.l.b16 %v5029
      %v5615 = vpack.c.b16 %v5612, %v5611
      %v5616 = vpack.c.b16 %v5614, %v5613
      %v5620 = vsel %vm1103, %v5600, 0
      %5622 = vmatprep.subr.bf16.mxu0 0
      %5623 = vmatpush1.bf16.msra.mxu0 %v5615
      %5624 = vmatprep.subr.bf16.mxu0 0
      %5625 = vmatpush1.bf16.msra.mxu0 %v5616
      %5626 = vmatprep.subr.bf16.mxu0 0
      %5627 = vmatpush1.bf16.msra.mxu0 0
      %5628 = vmatprep.subr.bf16.mxu0 0
      %5629 = vmatpush1.bf16.msra.mxu0 0
      %5630 = vmatprep.subr.bf16.mxu0 0
      %5631 = vmatpush1.bf16.msra.mxu0 0
      %5632 = vmatprep.subr.bf16.mxu0 0
      %5633 = vmatpush1.bf16.msra.mxu0 0
      %5634 = vmatprep.subr.bf16.mxu0 0
      %5635 = vmatpush1.bf16.msra.mxu0 0
      %5636 = vmatprep.subr.bf16.mxu0 0
      %5637 = vmatpush1.bf16.msra.mxu0 0
      %5638 = vmatprep.subr.bf16.mxu0 0
      %5639 = vmatpush1.bf16.msra.mxu0 0
      %5640 = vmatprep.subr.bf16.mxu0 0
      %5641 = vmatpush1.bf16.msra.mxu0 0
      %5642 = vmatprep.subr.bf16.mxu0 0
      %5643 = vmatpush1.bf16.msra.mxu0 0
      %5644 = vmatprep.subr.bf16.mxu0 0
      %5645 = vmatpush1.bf16.msra.mxu0 0
      %5646 = vmatprep.subr.bf16.mxu0 0
      %5647 = vmatpush1.bf16.msra.mxu0 0
      %5648 = vmatprep.subr.bf16.mxu0 0
      %5649 = vmatpush1.bf16.msra.mxu0 0
      %5650 = vmatprep.subr.bf16.mxu0 0
      %5651 = vmatpush1.bf16.msra.mxu0 0
      %5652 = vmatprep.subr.bf16.mxu0 0
      %5653 = vmatpush1.bf16.msra.mxu0 0
      %5654 = vmatprep.mubr.bf16.mxu0 0
      %5655 = vmatmul.mubr.bf16.gmra.mrb[0].mxu0 %v5620
      %v5656 = vpop.f32.mrb[0].mxu0
      %v5657 = vadd.f32 %v5605, %v5656
      %v5658 = vpop.f32.mrb[0].mxu0
      %v5659 = vpop.f32.mrb[0].mxu0
      %v5660 = vadd.f32 %v5605, %v5659
      %v5661 = vpop.f32.mrb[0].mxu0
      %5662 = vdwg.mxu0
      %v5663 = vadd.f32 %v5016, %v5657
      %v5664 = vadd.f32 %v5017, %v5660
      %s5665 = scalar_lea.vmem %s22, 14
      %v5666 = vld [vmem:[%s5665] sm:$0x1]
      %s5667 = scalar_lea.vmem %s22, 15
      %v5668 = vld [vmem:[%s5667] sm:$0x1]
      %v5669 = vsel %vm1103, %v5663, 0.0
      %5670 = vadd.xlane.f32.xlu0 %v5669
      %v5671 = vpop.xlane.xlu0 %5670
      %v5672 = vsel %vm2162, %v5664, 0.0
      %5673 = vadd.xlane.f32.xlu0 %v5672
      %v5674 = vpop.xlane.xlu0 %5673
      %v5675 = vmul.f32 %v5671, %v2166
      %v5676 = vmul.f32 %v5674, %v2166
      %v5677 = vsub.f32 %v5663, %v5675
      %v5678 = vsub.f32 %v5664, %v5676
      %v5679 = vmul.f32 %v5677, %v5677
      %v5680 = vmul.f32 %v5678, %v5678
      %v5681 = vsel %vm1103, %v5679, 0.0
      %5682 = vadd.xlane.f32.xlu0 %v5681
      %v5683 = vpop.xlane.xlu0 %5682
      %v5684 = vsel %vm2162, %v5680, 0.0
      %5685 = vadd.xlane.f32.xlu0 %v5684
      %v5686 = vpop.xlane.xlu0 %5685
      %v5687 = vmul.f32 %v5683, %v2166
      %v5688 = vmul.f32 %v5686, %v2166
      %v5689 = vadd.f32 %v5687, 1e-05
      %v5690 = vadd.f32 %v5688, 1e-05
      %v5691 = vrsqrt.pop %v5689
      %v5692 = vrsqrt.pop %v5690
      %v5693 = vmul.f32 %v5677, %v5691
      %v5694 = vmul.f32 %v5678, %v5692
      %v5696 = vlaneseq
      %v5697 = vshrl.u32 %v5696, 7
      %v5698 = vsub.s32 0, %v5697
      %v5699 = vrot.slane %v5666, %v5698
      %v5701 = vmul.f32 %v5693, %v5699
      %v5702 = vmul.f32 %v5694, %v5699
      %v5704 = vlaneseq
      %v5705 = vshrl.u32 %v5704, 7
      %v5706 = vsub.s32 0, %v5705
      %v5707 = vrot.slane %v5668, %v5706
      %v5709 = vadd.f32 %v5701, %v5707
      %v5710 = vadd.f32 %v5702, %v5707
      %s5711 = scalar_lea.vmem %s14, 112
      %v5712 = vld [vmem:[%s5711] sm:$0xf]
      %v5713 = vld [vmem:[%s5711 + $0x4] sm:$0xf]
      %v5714 = vld [vmem:[%s5711 + $0x8] sm:$0xf]
      %v5715 = vld [vmem:[%s5711 + $0xc] sm:$0xf]
      %v5716 = vpack.c.bf16 %v5710, %v5709
      %s5717 = scalar_lea.vmem %s15, 7
      %v5718 = vld [vmem:[%s5717] sm:$0x1]
      %v5720 = vlaneseq
      %v5721 = vshrl.u32 %v5720, 7
      %v5722 = vsub.s32 0, %v5721
      %v5723 = vrot.slane %v5718, %v5722
      %v5729 = vunpack.c.l.b16 %v5712
      %v5730 = vunpack.c.l.b16 %v5713
      %v5731 = vunpack.c.l.b16 %v5714
      %v5732 = vunpack.c.l.b16 %v5715
      %v5733 = vpack.c.b16 %v5730, %v5729
      %v5734 = vpack.c.b16 %v5732, %v5731
      %v5738 = vsel %vm1103, %v5716, 0
      %5740 = vmatprep.subr.bf16.mxu0 0
      %5741 = vmatpush1.bf16.msra.mxu0 %v5733
      %5742 = vmatprep.subr.bf16.mxu0 0
      %5743 = vmatpush1.bf16.msra.mxu0 %v5734
      %5744 = vmatprep.subr.bf16.mxu0 0
      %5745 = vmatpush1.bf16.msra.mxu0 0
      %5746 = vmatprep.subr.bf16.mxu0 0
      %5747 = vmatpush1.bf16.msra.mxu0 0
      %5748 = vmatprep.subr.bf16.mxu0 0
      %5749 = vmatpush1.bf16.msra.mxu0 0
      %5750 = vmatprep.subr.bf16.mxu0 0
      %5751 = vmatpush1.bf16.msra.mxu0 0
      %5752 = vmatprep.subr.bf16.mxu0 0
      %5753 = vmatpush1.bf16.msra.mxu0 0
      %5754 = vmatprep.subr.bf16.mxu0 0
      %5755 = vmatpush1.bf16.msra.mxu0 0
      %5756 = vmatprep.subr.bf16.mxu0 0
      %5757 = vmatpush1.bf16.msra.mxu0 0
      %5758 = vmatprep.subr.bf16.mxu0 0
      %5759 = vmatpush1.bf16.msra.mxu0 0
      %5760 = vmatprep.subr.bf16.mxu0 0
      %5761 = vmatpush1.bf16.msra.mxu0 0
      %5762 = vmatprep.subr.bf16.mxu0 0
      %5763 = vmatpush1.bf16.msra.mxu0 0
      %5764 = vmatprep.subr.bf16.mxu0 0
      %5765 = vmatpush1.bf16.msra.mxu0 0
      %5766 = vmatprep.subr.bf16.mxu0 0
      %5767 = vmatpush1.bf16.msra.mxu0 0
      %5768 = vmatprep.subr.bf16.mxu0 0
      %5769 = vmatpush1.bf16.msra.mxu0 0
      %5770 = vmatprep.subr.bf16.mxu0 0
      %5771 = vmatpush1.bf16.msra.mxu0 0
      %5772 = vmatprep.mubr.bf16.mxu0 0
      %5773 = vmatmul.mubr.bf16.gmra.mrb[0].mxu0 %v5738
      %v5774 = vpop.f32.mrb[0].mxu0
      %v5775 = vadd.f32 %v5723, %v5774
      %v5776 = vpop.f32.mrb[0].mxu0
      %v5777 = vpop.f32.mrb[0].mxu0
      %v5778 = vadd.f32 %v5723, %v5777
      %v5779 = vpop.f32.mrb[0].mxu0
      %5780 = vdwg.mxu0
      %s5781 = scalar_lea.vmem %s16, 16
      %v5782 = vld [vmem:[%s5781] sm:$0xf]
      %v5783 = vld [vmem:[%s5781 + $0x4] sm:$0xf]
      %v5784 = vld [vmem:[%s5781 + $0x8] sm:$0xf]
      %v5785 = vld [vmem:[%s5781 + $0xc] sm:$0xf]
      %s5786 = scalar_lea.vmem %s17, 1
      %v5787 = vld [vmem:[%s5786] sm:$0x1]
      %v5789 = vlaneseq
      %v5790 = vshrl.u32 %v5789, 7
      %v5791 = vsub.s32 0, %v5790
      %v5792 = vrot.slane %v5787, %v5791
      %v5798 = vunpack.c.l.b16 %v5782
      %v5799 = vunpack.c.l.b16 %v5783
      %v5800 = vunpack.c.l.b16 %v5784
      %v5801 = vunpack.c.l.b16 %v5785
      %v5802 = vpack.c.b16 %v5799, %v5798
      %v5803 = vpack.c.b16 %v5801, %v5800
      %5806 = vmatprep.subr.bf16.mxu0 0
      %5807 = vmatpush1.bf16.msra.mxu0 %v5802
      %5808 = vmatprep.subr.bf16.mxu0 0
      %5809 = vmatpush1.bf16.msra.mxu0 %v5803
      %5810 = vmatprep.subr.bf16.mxu0 0
      %5811 = vmatpush1.bf16.msra.mxu0 0
      %5812 = vmatprep.subr.bf16.mxu0 0
      %5813 = vmatpush1.bf16.msra.mxu0 0
      %5814 = vmatprep.subr.bf16.mxu0 0
      %5815 = vmatpush1.bf16.msra.mxu0 0
      %5816 = vmatprep.subr.bf16.mxu0 0
      %5817 = vmatpush1.bf16.msra.mxu0 0
      %5818 = vmatprep.subr.bf16.mxu0 0
      %5819 = vmatpush1.bf16.msra.mxu0 0
      %5820 = vmatprep.subr.bf16.mxu0 0
      %5821 = vmatpush1.bf16.msra.mxu0 0
      %5822 = vmatprep.subr.bf16.mxu0 0
      %5823 = vmatpush1.bf16.msra.mxu0 0
      %5824 = vmatprep.subr.bf16.mxu0 0
      %5825 = vmatpush1.bf16.msra.mxu0 0
      %5826 = vmatprep.subr.bf16.mxu0 0
      %5827 = vmatpush1.bf16.msra.mxu0 0
      %5828 = vmatprep.subr.bf16.mxu0 0
      %5829 = vmatpush1.bf16.msra.mxu0 0
      %5830 = vmatprep.subr.bf16.mxu0 0
      %5831 = vmatpush1.bf16.msra.mxu0 0
      %5832 = vmatprep.subr.bf16.mxu0 0
      %5833 = vmatpush1.bf16.msra.mxu0 0
      %5834 = vmatprep.subr.bf16.mxu0 0
      %5835 = vmatpush1.bf16.msra.mxu0 0
      %5836 = vmatprep.subr.bf16.mxu0 0
      %5837 = vmatpush1.bf16.msra.mxu0 0
      %5838 = vmatprep.mubr.bf16.mxu0 0
      %5839 = vmatmul.mubr.bf16.gmra.mrb[0].mxu0 %v4137
      %v5840 = vpop.f32.mrb[0].mxu0
      %v5841 = vadd.f32 %v5792, %v5840
      %v5842 = vpop.f32.mrb[0].mxu0
      %v5843 = vpop.f32.mrb[0].mxu0
      %v5844 = vadd.f32 %v5792, %v5843
      %v5845 = vpop.f32.mrb[0].mxu0
      %5846 = vdwg.mxu0
      %s5847 = scalar_lea.vmem %s14, 80
      %v5848 = vld [vmem:[%s5847] sm:$0xf]
      %v5849 = vld [vmem:[%s5847 + $0x4] sm:$0xf]
      %v5850 = vld [vmem:[%s5847 + $0x8] sm:$0xf]
      %v5851 = vld [vmem:[%s5847 + $0xc] sm:$0xf]
      %s5852 = scalar_lea.vmem %s15, 5
      %v5853 = vld [vmem:[%s5852] sm:$0x1]
      %v5854 = vmul.f32 %v5775, 0.35355338
      %v5855 = vmul.f32 %v5778, 0.35355338
      %v5856 = vmul.f32 %v5854, %v1555
      %v5857 = vmul.f32 %v5855, %v1555
      %v5858 = vpack.c.bf16 %v5857, %v5856
      %v5859 = vpack.c.bf16 %v5844, %v5841
      %v5861 = vsel %vm1103, %v5858, 0
      %v5864 = vsel %vm1103, %v5859, 0
      %5866 = vmatprep.subr.bf16.mxu0 0
      %5867 = vmatpush1.bf16.xpose.msra.mxu0 %v5864
      %5868 = vmatprep.subr.bf16.mxu0 0
      %5869 = vmatpush1.bf16.xpose.msra.mxu0 0
      %5870 = vmatprep.subr.bf16.mxu0 0
      %5871 = vmatpush1.bf16.xpose.msra.mxu0 0
      %5872 = vmatprep.subr.bf16.mxu0 0
      %5873 = vmatpush1.bf16.xpose.msra.mxu0 0
      %5874 = vmatprep.subr.bf16.mxu0 0
      %5875 = vmatpush1.bf16.xpose.msra.mxu0 0
      %5876 = vmatprep.subr.bf16.mxu0 0
      %5877 = vmatpush1.bf16.xpose.msra.mxu0 0
      %5878 = vmatprep.subr.bf16.mxu0 0
      %5879 = vmatpush1.bf16.xpose.msra.mxu0 0
      %5880 = vmatprep.subr.bf16.mxu0 0
      %5881 = vmatpush1.bf16.xpose.msra.mxu0 0
      %5882 = vmatprep.subr.bf16.mxu0 0
      %5883 = vmatpush1.bf16.xpose.msra.mxu0 0
      %5884 = vmatprep.subr.bf16.mxu0 0
      %5885 = vmatpush1.bf16.xpose.msra.mxu0 0
      %5886 = vmatprep.subr.bf16.mxu0 0
      %5887 = vmatpush1.bf16.xpose.msra.mxu0 0
      %5888 = vmatprep.subr.bf16.mxu0 0
      %5889 = vmatpush1.bf16.xpose.msra.mxu0 0
      %5890 = vmatprep.subr.bf16.mxu0 0
      %5891 = vmatpush1.bf16.xpose.msra.mxu0 0
      %5892 = vmatprep.subr.bf16.mxu0 0
      %5893 = vmatpush1.bf16.xpose.msra.mxu0 0
      %5894 = vmatprep.subr.bf16.mxu0 0
      %5895 = vmatpush1.bf16.xpose.msra.mxu0 0
      %5896 = vmatprep.subr.bf16.mxu0 0
      %5897 = vmatpush1.bf16.xpose.msra.mxu0 0
      %5898 = vmatprep.mubr.bf16.mxu0 0
      %5899 = vmatmul.mubr.bf16.gmra.mrb[0].mxu0 %v5861
      %v5900 = vpop.f32.mrb[0].mxu0
      %v5901 = vadd.f32 %v902, %v5900
      %v5902 = vpop.f32.mrb[0].mxu0
      %v5903 = vpop.f32.mrb[0].mxu0
      %v5904 = vadd.f32 %v903, %v5903
      %v5905 = vpop.f32.mrb[0].mxu0
      %5906 = vdwg.mxu0
      %v5907 = vsel %vm930, %v5901, -inf
      %5908 = vmax.xlane.f32.xlu0 %v5907
      %v5909 = vpop.xlane.xlu0 %5908
      %v5910 = vsel %vm1614, %v5904, -inf
      %5911 = vmax.xlane.f32.xlu0 %v5910
      %v5912 = vpop.xlane.xlu0 %5911
      %v5913 = vsub.f32 %v5901, %v5909
      %v5914 = vsub.f32 %v5904, %v5912
      %v5915 = vmul.f32 %v5913, 1.442695
      %v5916 = vpow.pop %v5915
      %v5917 = vmul.f32 %v5914, 1.442695
      %v5918 = vpow.pop %v5917
      %v5919 = vsel %vm930, %v5916, 0.0
      %5920 = vadd.xlane.f32.xlu0 %v5919
      %v5921 = vpop.xlane.xlu0 %5920
      %v5922 = vsel %vm1614, %v5918, 0.0
      %5923 = vadd.xlane.f32.xlu0 %v5922
      %v5924 = vpop.xlane.xlu0 %5923
      %v5925 = vrcp.pop %v5921
      %v5926 = vmul.f32 %v5916, %v5925
      %v5927 = vrcp.pop %v5924
      %v5928 = vmul.f32 %v5918, %v5927
      %v5929 = vmul.f32 %v5841, %v4263
      %v5930 = vmul.f32 %v5844, %v4263
      %v5931 = vpack.c.bf16 %v5928, %v5926
      %v5932 = vpack.c.bf16 %v5930, %v5929
      %v5933 = vmul.f32 %v5854, %v1645
      %v5934 = vmul.f32 %v5855, %v1645
      %v5935 = vpack.c.bf16 %v5934, %v5933
      %v5937 = vsel %vm1103, %v5935, 0
      %5939 = vmatprep.subr.bf16.mxu0 0
      %5940 = vmatpush1.bf16.xpose.msra.mxu0 %v5864
      %5941 = vmatprep.subr.bf16.mxu0 0
      %5942 = vmatpush1.bf16.xpose.msra.mxu0 0
      %5943 = vmatprep.subr.bf16.mxu0 0
      %5944 = vmatpush1.bf16.xpose.msra.mxu0 0
      %5945 = vmatprep.subr.bf16.mxu0 0
      %5946 = vmatpush1.bf16.xpose.msra.mxu0 0
      %5947 = vmatprep.subr.bf16.mxu0 0
      %5948 = vmatpush1.bf16.xpose.msra.mxu0 0
      %5949 = vmatprep.subr.bf16.mxu0 0
      %5950 = vmatpush1.bf16.xpose.msra.mxu0 0
      %5951 = vmatprep.subr.bf16.mxu0 0
      %5952 = vmatpush1.bf16.xpose.msra.mxu0 0
      %5953 = vmatprep.subr.bf16.mxu0 0
      %5954 = vmatpush1.bf16.xpose.msra.mxu0 0
      %5955 = vmatprep.subr.bf16.mxu0 0
      %5956 = vmatpush1.bf16.xpose.msra.mxu0 0
      %5957 = vmatprep.subr.bf16.mxu0 0
      %5958 = vmatpush1.bf16.xpose.msra.mxu0 0
      %5959 = vmatprep.subr.bf16.mxu0 0
      %5960 = vmatpush1.bf16.xpose.msra.mxu0 0
      %5961 = vmatprep.subr.bf16.mxu0 0
      %5962 = vmatpush1.bf16.xpose.msra.mxu0 0
      %5963 = vmatprep.subr.bf16.mxu0 0
      %5964 = vmatpush1.bf16.xpose.msra.mxu0 0
      %5965 = vmatprep.subr.bf16.mxu0 0
      %5966 = vmatpush1.bf16.xpose.msra.mxu0 0
      %5967 = vmatprep.subr.bf16.mxu0 0
      %5968 = vmatpush1.bf16.xpose.msra.mxu0 0
      %5969 = vmatprep.subr.bf16.mxu0 0
      %5970 = vmatpush1.bf16.xpose.msra.mxu0 0
      %5971 = vmatprep.mubr.bf16.mxu0 0
      %5972 = vmatmul.mubr.bf16.gmra.mrb[0].mxu0 %v5937
      %v5973 = vpop.f32.mrb[0].mxu0
      %v5974 = vadd.f32 %v902, %v5973
      %v5975 = vpop.f32.mrb[0].mxu0
      %v5976 = vpop.f32.mrb[0].mxu0
      %v5977 = vadd.f32 %v903, %v5976
      %v5978 = vpop.f32.mrb[0].mxu0
      %5979 = vdwg.mxu0
      %v5980 = vsel %vm930, %v5974, -inf
      %5981 = vmax.xlane.f32.xlu0 %v5980
      %v5982 = vpop.xlane.xlu0 %5981
      %v5983 = vsel %vm1614, %v5977, -inf
      %5984 = vmax.xlane.f32.xlu0 %v5983
      %v5985 = vpop.xlane.xlu0 %5984
      %v5986 = vsub.f32 %v5974, %v5982
      %v5987 = vsub.f32 %v5977, %v5985
      %v5988 = vmul.f32 %v5986, 1.442695
      %v5989 = vpow.pop %v5988
      %v5990 = vmul.f32 %v5987, 1.442695
      %v5991 = vpow.pop %v5990
      %v5992 = vsel %vm930, %v5989, 0.0
      %5993 = vadd.xlane.f32.xlu0 %v5992
      %v5994 = vpop.xlane.xlu0 %5993
      %v5995 = vsel %vm1614, %v5991, 0.0
      %5996 = vadd.xlane.f32.xlu0 %v5995
      %v5997 = vpop.xlane.xlu0 %5996
      %v5998 = vrcp.pop %v5994
      %v5999 = vmul.f32 %v5989, %v5998
      %v6000 = vrcp.pop %v5997
      %v6001 = vmul.f32 %v5991, %v6000
      %v6002 = vmul.f32 %v5841, %v4339
      %v6003 = vmul.f32 %v5844, %v4339
      %v6004 = vpack.c.bf16 %v6001, %v5999
      %v6005 = vpack.c.bf16 %v6003, %v6002
      %6007 = vrot.lane.b32.xlu0 %v6005, 96
      %v6008 = vpop.permute.xlu0 %6007
      %v6010 = vsel %vm930, %v6004, 0
      %v6013 = vsel %vm940, %v6008, 0
      %6015 = vmatprep.subr.bf16.mxu0 0
      %6016 = vmatpush1.bf16.msra.mxu0 %v6013
      %6017 = vmatprep.subr.bf16.mxu0 0
      %6018 = vmatpush1.bf16.msra.mxu0 0
      %6019 = vmatprep.subr.bf16.mxu0 0
      %6020 = vmatpush1.bf16.msra.mxu0 0
      %6021 = vmatprep.subr.bf16.mxu0 0
      %6022 = vmatpush1.bf16.msra.mxu0 0
      %6023 = vmatprep.subr.bf16.mxu0 0
      %6024 = vmatpush1.bf16.msra.mxu0 0
      %6025 = vmatprep.subr.bf16.mxu0 0
      %6026 = vmatpush1.bf16.msra.mxu0 0
      %6027 = vmatprep.subr.bf16.mxu0 0
      %6028 = vmatpush1.bf16.msra.mxu0 0
      %6029 = vmatprep.subr.bf16.mxu0 0
      %6030 = vmatpush1.bf16.msra.mxu0 0
      %6031 = vmatprep.subr.bf16.mxu0 0
      %6032 = vmatpush1.bf16.msra.mxu0 0
      %6033 = vmatprep.subr.bf16.mxu0 0
      %6034 = vmatpush1.bf16.msra.mxu0 0
      %6035 = vmatprep.subr.bf16.mxu0 0
      %6036 = vmatpush1.bf16.msra.mxu0 0
      %6037 = vmatprep.subr.bf16.mxu0 0
      %6038 = vmatpush1.bf16.msra.mxu0 0
      %6039 = vmatprep.subr.bf16.mxu0 0
      %6040 = vmatpush1.bf16.msra.mxu0 0
      %6041 = vmatprep.subr.bf16.mxu0 0
      %6042 = vmatpush1.bf16.msra.mxu0 0
      %6043 = vmatprep.subr.bf16.mxu0 0
      %6044 = vmatpush1.bf16.msra.mxu0 0
      %6045 = vmatprep.subr.bf16.mxu0 0
      %6046 = vmatpush1.bf16.msra.mxu0 0
      %6047 = vmatprep.mubr.bf16.mxu0 0
      %6048 = vmatmul.mubr.bf16.gmra.mrb[0].mxu0 %v6010
      %v6049 = vpop.f32.mrb[0].mxu0
      %v6050 = vadd.f32 0.0, %v6049
      %v6051 = vpop.f32.mrb[0].mxu0
      %v6052 = vpop.f32.mrb[0].mxu0
      %v6053 = vadd.f32 0.0, %v6052
      %v6054 = vpop.f32.mrb[0].mxu0
      %6055 = vdwg.mxu0
      %6057 = vrot.lane.b32.xlu0 %v5932, 96
      %v6058 = vpop.permute.xlu0 %6057
      %v6060 = vsel %vm930, %v5931, 0
      %v6063 = vsel %vm940, %v6058, 0
      %6065 = vmatprep.subr.bf16.mxu0 0
      %6066 = vmatpush1.bf16.msra.mxu0 %v6063
      %6067 = vmatprep.subr.bf16.mxu0 0
      %6068 = vmatpush1.bf16.msra.mxu0 0
      %6069 = vmatprep.subr.bf16.mxu0 0
      %6070 = vmatpush1.bf16.msra.mxu0 0
      %6071 = vmatprep.subr.bf16.mxu0 0
      %6072 = vmatpush1.bf16.msra.mxu0 0
      %6073 = vmatprep.subr.bf16.mxu0 0
      %6074 = vmatpush1.bf16.msra.mxu0 0
      %6075 = vmatprep.subr.bf16.mxu0 0
      %6076 = vmatpush1.bf16.msra.mxu0 0
      %6077 = vmatprep.subr.bf16.mxu0 0
      %6078 = vmatpush1.bf16.msra.mxu0 0
      %6079 = vmatprep.subr.bf16.mxu0 0
      %6080 = vmatpush1.bf16.msra.mxu0 0
      %6081 = vmatprep.subr.bf16.mxu0 0
      %6082 = vmatpush1.bf16.msra.mxu0 0
      %6083 = vmatprep.subr.bf16.mxu0 0
      %6084 = vmatpush1.bf16.msra.mxu0 0
      %6085 = vmatprep.subr.bf16.mxu0 0
      %6086 = vmatpush1.bf16.msra.mxu0 0
      %6087 = vmatprep.subr.bf16.mxu0 0
      %6088 = vmatpush1.bf16.msra.mxu0 0
      %6089 = vmatprep.subr.bf16.mxu0 0
      %6090 = vmatpush1.bf16.msra.mxu0 0
      %6091 = vmatprep.subr.bf16.mxu0 0
      %6092 = vmatpush1.bf16.msra.mxu0 0
      %6093 = vmatprep.subr.bf16.mxu0 0
      %6094 = vmatpush1.bf16.msra.mxu0 0
      %6095 = vmatprep.subr.bf16.mxu0 0
      %6096 = vmatpush1.bf16.msra.mxu0 0
      %6097 = vmatprep.mubr.bf16.mxu0 0
      %6098 = vmatmul.mubr.bf16.gmra.mrb[0].mxu0 %v6060
      %v6099 = vpop.f32.mrb[0].mxu0
      %v6100 = vadd.f32 %v6050, %v6099
      %v6101 = vpop.f32.mrb[0].mxu0
      %v6102 = vpop.f32.mrb[0].mxu0
      %v6103 = vadd.f32 %v6053, %v6102
      %v6104 = vpop.f32.mrb[0].mxu0
      %6105 = vdwg.mxu0
      %v6106 = vmul.f32 %v5854, %v1827
      %v6107 = vmul.f32 %v5855, %v1827
      %v6108 = vpack.c.bf16 %v6107, %v6106
      %v6110 = vsel %vm1103, %v6108, 0
      %6112 = vmatprep.subr.bf16.mxu0 0
      %6113 = vmatpush1.bf16.xpose.msra.mxu0 %v5864
      %6114 = vmatprep.subr.bf16.mxu0 0
      %6115 = vmatpush1.bf16.xpose.msra.mxu0 0
      %6116 = vmatprep.subr.bf16.mxu0 0
      %6117 = vmatpush1.bf16.xpose.msra.mxu0 0
      %6118 = vmatprep.subr.bf16.mxu0 0
      %6119 = vmatpush1.bf16.xpose.msra.mxu0 0
      %6120 = vmatprep.subr.bf16.mxu0 0
      %6121 = vmatpush1.bf16.xpose.msra.mxu0 0
      %6122 = vmatprep.subr.bf16.mxu0 0
      %6123 = vmatpush1.bf16.xpose.msra.mxu0 0
      %6124 = vmatprep.subr.bf16.mxu0 0
      %6125 = vmatpush1.bf16.xpose.msra.mxu0 0
      %6126 = vmatprep.subr.bf16.mxu0 0
      %6127 = vmatpush1.bf16.xpose.msra.mxu0 0
      %6128 = vmatprep.subr.bf16.mxu0 0
      %6129 = vmatpush1.bf16.xpose.msra.mxu0 0
      %6130 = vmatprep.subr.bf16.mxu0 0
      %6131 = vmatpush1.bf16.xpose.msra.mxu0 0
      %6132 = vmatprep.subr.bf16.mxu0 0
      %6133 = vmatpush1.bf16.xpose.msra.mxu0 0
      %6134 = vmatprep.subr.bf16.mxu0 0
      %6135 = vmatpush1.bf16.xpose.msra.mxu0 0
      %6136 = vmatprep.subr.bf16.mxu0 0
      %6137 = vmatpush1.bf16.xpose.msra.mxu0 0
      %6138 = vmatprep.subr.bf16.mxu0 0
      %6139 = vmatpush1.bf16.xpose.msra.mxu0 0
      %6140 = vmatprep.subr.bf16.mxu0 0
      %6141 = vmatpush1.bf16.xpose.msra.mxu0 0
      %6142 = vmatprep.subr.bf16.mxu0 0
      %6143 = vmatpush1.bf16.xpose.msra.mxu0 0
      %6144 = vmatprep.mubr.bf16.mxu0 0
      %6145 = vmatmul.mubr.bf16.gmra.mrb[0].mxu0 %v6110
      %v6146 = vpop.f32.mrb[0].mxu0
      %v6147 = vadd.f32 %v902, %v6146
      %v6148 = vpop.f32.mrb[0].mxu0
      %v6149 = vpop.f32.mrb[0].mxu0
      %v6150 = vadd.f32 %v903, %v6149
      %v6151 = vpop.f32.mrb[0].mxu0
      %6152 = vdwg.mxu0
      %v6153 = vsel %vm930, %v6147, -inf
      %6154 = vmax.xlane.f32.xlu0 %v6153
      %v6155 = vpop.xlane.xlu0 %6154
      %v6156 = vsel %vm1614, %v6150, -inf
      %6157 = vmax.xlane.f32.xlu0 %v6156
      %v6158 = vpop.xlane.xlu0 %6157
      %v6159 = vsub.f32 %v6147, %v6155
      %v6160 = vsub.f32 %v6150, %v6158
      %v6161 = vmul.f32 %v6159, 1.442695
      %v6162 = vpow.pop %v6161
      %v6163 = vmul.f32 %v6160, 1.442695
      %v6164 = vpow.pop %v6163
      %v6165 = vsel %vm930, %v6162, 0.0
      %6166 = vadd.xlane.f32.xlu0 %v6165
      %v6167 = vpop.xlane.xlu0 %6166
      %v6168 = vsel %vm1614, %v6164, 0.0
      %6169 = vadd.xlane.f32.xlu0 %v6168
      %v6170 = vpop.xlane.xlu0 %6169
      %v6171 = vrcp.pop %v6167
      %v6172 = vmul.f32 %v6162, %v6171
      %v6173 = vrcp.pop %v6170
      %v6174 = vmul.f32 %v6164, %v6173
      %v6175 = vmul.f32 %v5841, %v4515
      %v6176 = vmul.f32 %v5844, %v4515
      %v6177 = vpack.c.bf16 %v6174, %v6172
      %v6178 = vpack.c.bf16 %v6176, %v6175
      %6180 = vrot.lane.b32.xlu0 %v6178, 96
      %v6181 = vpop.permute.xlu0 %6180
      %v6183 = vsel %vm930, %v6177, 0
      %v6186 = vsel %vm940, %v6181, 0
      %6188 = vmatprep.subr.bf16.mxu0 0
      %6189 = vmatpush1.bf16.msra.mxu0 %v6186
      %6190 = vmatprep.subr.bf16.mxu0 0
      %6191 = vmatpush1.bf16.msra.mxu0 0
      %6192 = vmatprep.subr.bf16.mxu0 0
      %6193 = vmatpush1.bf16.msra.mxu0 0
      %6194 = vmatprep.subr.bf16.mxu0 0
      %6195 = vmatpush1.bf16.msra.mxu0 0
      %6196 = vmatprep.subr.bf16.mxu0 0
      %6197 = vmatpush1.bf16.msra.mxu0 0
      %6198 = vmatprep.subr.bf16.mxu0 0
      %6199 = vmatpush1.bf16.msra.mxu0 0
      %6200 = vmatprep.subr.bf16.mxu0 0
      %6201 = vmatpush1.bf16.msra.mxu0 0
      %6202 = vmatprep.subr.bf16.mxu0 0
      %6203 = vmatpush1.bf16.msra.mxu0 0
      %6204 = vmatprep.subr.bf16.mxu0 0
      %6205 = vmatpush1.bf16.msra.mxu0 0
      %6206 = vmatprep.subr.bf16.mxu0 0
      %6207 = vmatpush1.bf16.msra.mxu0 0
      %6208 = vmatprep.subr.bf16.mxu0 0
      %6209 = vmatpush1.bf16.msra.mxu0 0
      %6210 = vmatprep.subr.bf16.mxu0 0
      %6211 = vmatpush1.bf16.msra.mxu0 0
      %6212 = vmatprep.subr.bf16.mxu0 0
      %6213 = vmatpush1.bf16.msra.mxu0 0
      %6214 = vmatprep.subr.bf16.mxu0 0
      %6215 = vmatpush1.bf16.msra.mxu0 0
      %6216 = vmatprep.subr.bf16.mxu0 0
      %6217 = vmatpush1.bf16.msra.mxu0 0
      %6218 = vmatprep.subr.bf16.mxu0 0
      %6219 = vmatpush1.bf16.msra.mxu0 0
      %6220 = vmatprep.mubr.bf16.mxu0 0
      %6221 = vmatmul.mubr.bf16.gmra.mrb[0].mxu0 %v6183
      %v6222 = vpop.f32.mrb[0].mxu0
      %v6223 = vadd.f32 0.0, %v6222
      %v6224 = vpop.f32.mrb[0].mxu0
      %v6225 = vpop.f32.mrb[0].mxu0
      %v6226 = vadd.f32 0.0, %v6225
      %v6227 = vpop.f32.mrb[0].mxu0
      %6228 = vdwg.mxu0
      %v6229 = vadd.f32 %v6100, %v6223
      %v6230 = vadd.f32 %v6103, %v6226
      %v6231 = vmul.f32 %v5854, %v1961
      %v6232 = vmul.f32 %v5855, %v1961
      %v6233 = vpack.c.bf16 %v6232, %v6231
      %v6235 = vsel %vm1103, %v6233, 0
      %6237 = vmatprep.subr.bf16.mxu0 0
      %6238 = vmatpush1.bf16.xpose.msra.mxu0 %v5864
      %6239 = vmatprep.subr.bf16.mxu0 0
      %6240 = vmatpush1.bf16.xpose.msra.mxu0 0
      %6241 = vmatprep.subr.bf16.mxu0 0
      %6242 = vmatpush1.bf16.xpose.msra.mxu0 0
      %6243 = vmatprep.subr.bf16.mxu0 0
      %6244 = vmatpush1.bf16.xpose.msra.mxu0 0
      %6245 = vmatprep.subr.bf16.mxu0 0
      %6246 = vmatpush1.bf16.xpose.msra.mxu0 0
      %6247 = vmatprep.subr.bf16.mxu0 0
      %6248 = vmatpush1.bf16.xpose.msra.mxu0 0
      %6249 = vmatprep.subr.bf16.mxu0 0
      %6250 = vmatpush1.bf16.xpose.msra.mxu0 0
      %6251 = vmatprep.subr.bf16.mxu0 0
      %6252 = vmatpush1.bf16.xpose.msra.mxu0 0
      %6253 = vmatprep.subr.bf16.mxu0 0
      %6254 = vmatpush1.bf16.xpose.msra.mxu0 0
      %6255 = vmatprep.subr.bf16.mxu0 0
      %6256 = vmatpush1.bf16.xpose.msra.mxu0 0
      %6257 = vmatprep.subr.bf16.mxu0 0
      %6258 = vmatpush1.bf16.xpose.msra.mxu0 0
      %6259 = vmatprep.subr.bf16.mxu0 0
      %6260 = vmatpush1.bf16.xpose.msra.mxu0 0
      %6261 = vmatprep.subr.bf16.mxu0 0
      %6262 = vmatpush1.bf16.xpose.msra.mxu0 0
      %6263 = vmatprep.subr.bf16.mxu0 0
      %6264 = vmatpush1.bf16.xpose.msra.mxu0 0
      %6265 = vmatprep.subr.bf16.mxu0 0
      %6266 = vmatpush1.bf16.xpose.msra.mxu0 0
      %6267 = vmatprep.subr.bf16.mxu0 0
      %6268 = vmatpush1.bf16.xpose.msra.mxu0 0
      %6269 = vmatprep.mubr.bf16.mxu0 0
      %6270 = vmatmul.mubr.bf16.gmra.mrb[0].mxu0 %v6235
      %v6271 = vpop.f32.mrb[0].mxu0
      %v6272 = vadd.f32 %v902, %v6271
      %v6273 = vpop.f32.mrb[0].mxu0
      %v6274 = vpop.f32.mrb[0].mxu0
      %v6275 = vadd.f32 %v903, %v6274
      %v6276 = vpop.f32.mrb[0].mxu0
      %6277 = vdwg.mxu0
      %v6278 = vsel %vm930, %v6272, -inf
      %6279 = vmax.xlane.f32.xlu0 %v6278
      %v6280 = vpop.xlane.xlu0 %6279
      %v6281 = vsel %vm1614, %v6275, -inf
      %6282 = vmax.xlane.f32.xlu0 %v6281
      %v6283 = vpop.xlane.xlu0 %6282
      %v6284 = vsub.f32 %v6272, %v6280
      %v6285 = vsub.f32 %v6275, %v6283
      %v6286 = vmul.f32 %v6284, 1.442695
      %v6287 = vpow.pop %v6286
      %v6288 = vmul.f32 %v6285, 1.442695
      %v6289 = vpow.pop %v6288
      %v6290 = vsel %vm930, %v6287, 0.0
      %6291 = vadd.xlane.f32.xlu0 %v6290
      %v6292 = vpop.xlane.xlu0 %6291
      %v6293 = vsel %vm1614, %v6289, 0.0
      %6294 = vadd.xlane.f32.xlu0 %v6293
      %v6295 = vpop.xlane.xlu0 %6294
      %v6296 = vrcp.pop %v6292
      %v6297 = vmul.f32 %v6287, %v6296
      %v6298 = vrcp.pop %v6295
      %v6299 = vmul.f32 %v6289, %v6298
      %v6300 = vmul.f32 %v5841, %v4643
      %v6301 = vmul.f32 %v5844, %v4643
      %v6302 = vpack.c.bf16 %v6299, %v6297
      %v6303 = vpack.c.bf16 %v6301, %v6300
      %6305 = vrot.lane.b32.xlu0 %v6303, 96
      %v6306 = vpop.permute.xlu0 %6305
      %v6308 = vsel %vm930, %v6302, 0
      %v6311 = vsel %vm940, %v6306, 0
      %6313 = vmatprep.subr.bf16.mxu0 0
      %6314 = vmatpush1.bf16.msra.mxu0 %v6311
      %6315 = vmatprep.subr.bf16.mxu0 0
      %6316 = vmatpush1.bf16.msra.mxu0 0
      %6317 = vmatprep.subr.bf16.mxu0 0
      %6318 = vmatpush1.bf16.msra.mxu0 0
      %6319 = vmatprep.subr.bf16.mxu0 0
      %6320 = vmatpush1.bf16.msra.mxu0 0
      %6321 = vmatprep.subr.bf16.mxu0 0
      %6322 = vmatpush1.bf16.msra.mxu0 0
      %6323 = vmatprep.subr.bf16.mxu0 0
      %6324 = vmatpush1.bf16.msra.mxu0 0
      %6325 = vmatprep.subr.bf16.mxu0 0
      %6326 = vmatpush1.bf16.msra.mxu0 0
      %6327 = vmatprep.subr.bf16.mxu0 0
      %6328 = vmatpush1.bf16.msra.mxu0 0
      %6329 = vmatprep.subr.bf16.mxu0 0
      %6330 = vmatpush1.bf16.msra.mxu0 0
      %6331 = vmatprep.subr.bf16.mxu0 0
      %6332 = vmatpush1.bf16.msra.mxu0 0
      %6333 = vmatprep.subr.bf16.mxu0 0
      %6334 = vmatpush1.bf16.msra.mxu0 0
      %6335 = vmatprep.subr.bf16.mxu0 0
      %6336 = vmatpush1.bf16.msra.mxu0 0
      %6337 = vmatprep.subr.bf16.mxu0 0
      %6338 = vmatpush1.bf16.msra.mxu0 0
      %6339 = vmatprep.subr.bf16.mxu0 0
      %6340 = vmatpush1.bf16.msra.mxu0 0
      %6341 = vmatprep.subr.bf16.mxu0 0
      %6342 = vmatpush1.bf16.msra.mxu0 0
      %6343 = vmatprep.subr.bf16.mxu0 0
      %6344 = vmatpush1.bf16.msra.mxu0 0
      %6345 = vmatprep.mubr.bf16.mxu0 0
      %6346 = vmatmul.mubr.bf16.gmra.mrb[0].mxu0 %v6308
      %v6347 = vpop.f32.mrb[0].mxu0
      %v6348 = vadd.f32 0.0, %v6347
      %v6349 = vpop.f32.mrb[0].mxu0
      %v6350 = vpop.f32.mrb[0].mxu0
      %v6351 = vadd.f32 0.0, %v6350
      %v6352 = vpop.f32.mrb[0].mxu0
      %6353 = vdwg.mxu0
      %v6354 = vadd.f32 %v6229, %v6348
      %v6355 = vadd.f32 %v6230, %v6351
      %v6356 = vpack.c.bf16 %v6355, %v6354
      %v6358 = vlaneseq
      %v6359 = vshrl.u32 %v6358, 7
      %v6360 = vsub.s32 0, %v6359
      %v6361 = vrot.slane %v5853, %v6360
      %v6367 = vunpack.c.l.b16 %v5848
      %v6368 = vunpack.c.l.b16 %v5849
      %v6369 = vunpack.c.l.b16 %v5850
      %v6370 = vunpack.c.l.b16 %v5851
      %v6371 = vpack.c.b16 %v6368, %v6367
      %v6372 = vpack.c.b16 %v6370, %v6369
      %v6376 = vsel %vm1103, %v6356, 0
      %6378 = vmatprep.subr.bf16.mxu0 0
      %6379 = vmatpush1.bf16.msra.mxu0 %v6371
      %6380 = vmatprep.subr.bf16.mxu0 0
      %6381 = vmatpush1.bf16.msra.mxu0 %v6372
      %6382 = vmatprep.subr.bf16.mxu0 0
      %6383 = vmatpush1.bf16.msra.mxu0 0
      %6384 = vmatprep.subr.bf16.mxu0 0
      %6385 = vmatpush1.bf16.msra.mxu0 0
      %6386 = vmatprep.subr.bf16.mxu0 0
      %6387 = vmatpush1.bf16.msra.mxu0 0
      %6388 = vmatprep.subr.bf16.mxu0 0
      %6389 = vmatpush1.bf16.msra.mxu0 0
      %6390 = vmatprep.subr.bf16.mxu0 0
      %6391 = vmatpush1.bf16.msra.mxu0 0
      %6392 = vmatprep.subr.bf16.mxu0 0
      %6393 = vmatpush1.bf16.msra.mxu0 0
      %6394 = vmatprep.subr.bf16.mxu0 0
      %6395 = vmatpush1.bf16.msra.mxu0 0
      %6396 = vmatprep.subr.bf16.mxu0 0
      %6397 = vmatpush1.bf16.msra.mxu0 0
      %6398 = vmatprep.subr.bf16.mxu0 0
      %6399 = vmatpush1.bf16.msra.mxu0 0
      %6400 = vmatprep.subr.bf16.mxu0 0
      %6401 = vmatpush1.bf16.msra.mxu0 0
      %6402 = vmatprep.subr.bf16.mxu0 0
      %6403 = vmatpush1.bf16.msra.mxu0 0
      %6404 = vmatprep.subr.bf16.mxu0 0
      %6405 = vmatpush1.bf16.msra.mxu0 0
      %6406 = vmatprep.subr.bf16.mxu0 0
      %6407 = vmatpush1.bf16.msra.mxu0 0
      %6408 = vmatprep.subr.bf16.mxu0 0
      %6409 = vmatpush1.bf16.msra.mxu0 0
      %6410 = vmatprep.mubr.bf16.mxu0 0
      %6411 = vmatmul.mubr.bf16.gmra.mrb[0].mxu0 %v6376
      %v6412 = vpop.f32.mrb[0].mxu0
      %v6413 = vadd.f32 %v6361, %v6412
      %v6414 = vpop.f32.mrb[0].mxu0
      %v6415 = vpop.f32.mrb[0].mxu0
      %v6416 = vadd.f32 %v6361, %v6415
      %v6417 = vpop.f32.mrb[0].mxu0
      %6418 = vdwg.mxu0
      %v6419 = vadd.f32 %v5709, %v6413
      %v6420 = vadd.f32 %v5710, %v6416
      %s6421 = scalar_lea.vmem %s22, 16
      %v6422 = vld [vmem:[%s6421] sm:$0x1]
      %s6423 = scalar_lea.vmem %s22, 17
      %v6424 = vld [vmem:[%s6423] sm:$0x1]
      %v6425 = vsel %vm1103, %v6419, 0.0
      %6426 = vadd.xlane.f32.xlu0 %v6425
      %v6427 = vpop.xlane.xlu0 %6426
      %v6428 = vsel %vm2162, %v6420, 0.0
      %6429 = vadd.xlane.f32.xlu0 %v6428
      %v6430 = vpop.xlane.xlu0 %6429
      %v6431 = vmul.f32 %v6427, %v2166
      %v6432 = vmul.f32 %v6430, %v2166
      %v6433 = vsub.f32 %v6419, %v6431
      %v6434 = vsub.f32 %v6420, %v6432
      %v6435 = vmul.f32 %v6433, %v6433
      %v6436 = vmul.f32 %v6434, %v6434
      %v6437 = vsel %vm1103, %v6435, 0.0
      %6438 = vadd.xlane.f32.xlu0 %v6437
      %v6439 = vpop.xlane.xlu0 %6438
      %v6440 = vsel %vm2162, %v6436, 0.0
      %6441 = vadd.xlane.f32.xlu0 %v6440
      %v6442 = vpop.xlane.xlu0 %6441
      %v6443 = vmul.f32 %v6439, %v2166
      %v6444 = vmul.f32 %v6442, %v2166
      %v6445 = vadd.f32 %v6443, 1e-05
      %v6446 = vadd.f32 %v6444, 1e-05
      %v6447 = vrsqrt.pop %v6445
      %v6448 = vrsqrt.pop %v6446
      %v6449 = vmul.f32 %v6433, %v6447
      %v6450 = vmul.f32 %v6434, %v6448
      %v6452 = vlaneseq
      %v6453 = vshrl.u32 %v6452, 7
      %v6454 = vsub.s32 0, %v6453
      %v6455 = vrot.slane %v6422, %v6454
      %v6457 = vmul.f32 %v6449, %v6455
      %v6458 = vmul.f32 %v6450, %v6455
      %v6460 = vlaneseq
      %v6461 = vshrl.u32 %v6460, 7
      %v6462 = vsub.s32 0, %v6461
      %v6463 = vrot.slane %v6424, %v6462
      %v6465 = vadd.f32 %v6457, %v6463
      %v6466 = vadd.f32 %v6458, %v6463
      %s6467 = scalar_lea.vmem %s18, 48
      %v6468 = vld [vmem:[%s6467] sm:$0xf]
      %v6469 = vld [vmem:[%s6467 + $0x4] sm:$0xf]
      %v6470 = vld [vmem:[%s6467 + $0x8] sm:$0xf]
      %v6471 = vld [vmem:[%s6467 + $0xc] sm:$0xf]
      %v6472 = vpack.c.bf16 %v6466, %v6465
      %s6473 = scalar_lea.vmem %s19, 3
      %v6474 = vld [vmem:[%s6473] sm:$0x1]
      %v6476 = vlaneseq
      %v6477 = vshrl.u32 %v6476, 7
      %v6478 = vsub.s32 0, %v6477
      %v6479 = vrot.slane %v6474, %v6478
      %v6485 = vunpack.c.l.b16 %v6468
      %v6486 = vunpack.c.l.b16 %v6469
      %v6487 = vunpack.c.l.b16 %v6470
      %v6488 = vunpack.c.l.b16 %v6471
      %v6489 = vpack.c.b16 %v6486, %v6485
      %v6490 = vpack.c.b16 %v6488, %v6487
      %v6494 = vsel %vm1103, %v6472, 0
      %6496 = vmatprep.subr.bf16.mxu0 0
      %6497 = vmatpush1.bf16.msra.mxu0 %v6489
      %6498 = vmatprep.subr.bf16.mxu0 0
      %6499 = vmatpush1.bf16.msra.mxu0 %v6490
      %6500 = vmatprep.subr.bf16.mxu0 0
      %6501 = vmatpush1.bf16.msra.mxu0 0
      %6502 = vmatprep.subr.bf16.mxu0 0
      %6503 = vmatpush1.bf16.msra.mxu0 0
      %6504 = vmatprep.subr.bf16.mxu0 0
      %6505 = vmatpush1.bf16.msra.mxu0 0
      %6506 = vmatprep.subr.bf16.mxu0 0
      %6507 = vmatpush1.bf16.msra.mxu0 0
      %6508 = vmatprep.subr.bf16.mxu0 0
      %6509 = vmatpush1.bf16.msra.mxu0 0
      %6510 = vmatprep.subr.bf16.mxu0 0
      %6511 = vmatpush1.bf16.msra.mxu0 0
      %6512 = vmatprep.subr.bf16.mxu0 0
      %6513 = vmatpush1.bf16.msra.mxu0 0
      %6514 = vmatprep.subr.bf16.mxu0 0
      %6515 = vmatpush1.bf16.msra.mxu0 0
      %6516 = vmatprep.subr.bf16.mxu0 0
      %6517 = vmatpush1.bf16.msra.mxu0 0
      %6518 = vmatprep.subr.bf16.mxu0 0
      %6519 = vmatpush1.bf16.msra.mxu0 0
      %6520 = vmatprep.subr.bf16.mxu0 0
      %6521 = vmatpush1.bf16.msra.mxu0 0
      %6522 = vmatprep.subr.bf16.mxu0 0
      %6523 = vmatpush1.bf16.msra.mxu0 0
      %6524 = vmatprep.subr.bf16.mxu0 0
      %6525 = vmatpush1.bf16.msra.mxu0 0
      %6526 = vmatprep.subr.bf16.mxu0 0
      %6527 = vmatpush1.bf16.msra.mxu0 0
      %6528 = vmatprep.mubr.bf16.mxu0 0
      %6529 = vmatmul.mubr.bf16.gmra.mrb[0].mxu0 %v6494
      %v6530 = vpop.f32.mrb[0].mxu0
      %v6531 = vadd.f32 %v6479, %v6530
      %v6532 = vpop.f32.mrb[0].mxu0
      %v6533 = vpop.f32.mrb[0].mxu0
      %v6534 = vadd.f32 %v6479, %v6533
      %v6535 = vpop.f32.mrb[0].mxu0
      %6536 = vdwg.mxu0
      %v6537 = vmax.f32 %v6531, 0.0
      %v6538 = vmax.f32 %v6534, 0.0
      %s6539 = scalar_lea.vmem %s20, 96
      %v6540 = vld [vmem:[%s6539] sm:$0xf]
      %v6541 = vld [vmem:[%s6539 + $0x4] sm:$0xf]
      %v6542 = vld [vmem:[%s6539 + $0x8] sm:$0xf]
      %v6543 = vld [vmem:[%s6539 + $0xc] sm:$0xf]
      %v6544 = vld [vmem:[%s6539 + $0x10] sm:$0xf]
      %v6545 = vld [vmem:[%s6539 + $0x14] sm:$0xf]
      %v6546 = vld [vmem:[%s6539 + $0x18] sm:$0xf]
      %v6547 = vld [vmem:[%s6539 + $0x1c] sm:$0xf]
      %v6548 = vpack.c.bf16 %v6538, %v6537
      %s6549 = scalar_lea.vmem %s21, 3
      %v6550 = vld [vmem:[%s6549] sm:$0x1]
      %v6552 = vlaneseq
      %v6553 = vshrl.u32 %v6552, 7
      %v6554 = vsub.s32 0, %v6553
      %v6555 = vrot.slane %v6550, %v6554
      %v6565 = vunpack.c.l.b16 %v6540
      %v6566 = vunpack.c.l.b16 %v6541
      %v6567 = vunpack.c.l.b16 %v6542
      %v6568 = vunpack.c.l.b16 %v6543
      %v6569 = vunpack.c.l.b16 %v6544
      %v6570 = vunpack.c.l.b16 %v6545
      %v6571 = vunpack.c.l.b16 %v6546
      %v6572 = vunpack.c.l.b16 %v6547
      %v6573 = vpack.c.b16 %v6566, %v6565
      %v6574 = vpack.c.b16 %v6568, %v6567
      %v6575 = vpack.c.b16 %v6570, %v6569
      %v6576 = vpack.c.b16 %v6572, %v6571
      %v6582 = vsel %vm1153, %v6548, 0
      %6584 = vmatprep.subr.bf16.mxu0 0
      %6585 = vmatpush1.bf16.msra.mxu0 %v6573
      %6586 = vmatprep.subr.bf16.mxu0 0
      %6587 = vmatpush1.bf16.msra.mxu0 %v6574
      %6588 = vmatprep.subr.bf16.mxu0 0
      %6589 = vmatpush1.bf16.msra.mxu0 %v6575
      %6590 = vmatprep.subr.bf16.mxu0 0
      %6591 = vmatpush1.bf16.msra.mxu0 %v6576
      %6592 = vmatprep.subr.bf16.mxu0 0
      %6593 = vmatpush1.bf16.msra.mxu0 0
      %6594 = vmatprep.subr.bf16.mxu0 0
      %6595 = vmatpush1.bf16.msra.mxu0 0
      %6596 = vmatprep.subr.bf16.mxu0 0
      %6597 = vmatpush1.bf16.msra.mxu0 0
      %6598 = vmatprep.subr.bf16.mxu0 0
      %6599 = vmatpush1.bf16.msra.mxu0 0
      %6600 = vmatprep.subr.bf16.mxu0 0
      %6601 = vmatpush1.bf16.msra.mxu0 0
      %6602 = vmatprep.subr.bf16.mxu0 0
      %6603 = vmatpush1.bf16.msra.mxu0 0
      %6604 = vmatprep.subr.bf16.mxu0 0
      %6605 = vmatpush1.bf16.msra.mxu0 0
      %6606 = vmatprep.subr.bf16.mxu0 0
      %6607 = vmatpush1.bf16.msra.mxu0 0
      %6608 = vmatprep.subr.bf16.mxu0 0
      %6609 = vmatpush1.bf16.msra.mxu0 0
      %6610 = vmatprep.subr.bf16.mxu0 0
      %6611 = vmatpush1.bf16.msra.mxu0 0
      %6612 = vmatprep.subr.bf16.mxu0 0
      %6613 = vmatpush1.bf16.msra.mxu0 0
      %6614 = vmatprep.subr.bf16.mxu0 0
      %6615 = vmatpush1.bf16.msra.mxu0 0
      %6616 = vmatprep.mubr.bf16.mxu0 0
      %6617 = vmatmul.mubr.bf16.gmra.mrb[0].mxu0 %v6582
      %v6618 = vpop.f32.mrb[0].mxu0
      %v6619 = vadd.f32 %v6555, %v6618
      %v6620 = vpop.f32.mrb[0].mxu0
      %v6621 = vpop.f32.mrb[0].mxu0
      %v6622 = vadd.f32 %v6555, %v6621
      %v6623 = vpop.f32.mrb[0].mxu0
      %6624 = vdwg.mxu0
      %v6625 = vadd.f32 %v6465, %v6619
      %v6626 = vadd.f32 %v6466, %v6622
      %s6627 = scalar_lea.vmem %s22, 18
      %v6628 = vld [vmem:[%s6627] sm:$0x1]
      %s6629 = scalar_lea.vmem %s22, 19
      %v6630 = vld [vmem:[%s6629] sm:$0x1]
      %v6631 = vsel %vm1103, %v6625, 0.0
      %6632 = vadd.xlane.f32.xlu0 %v6631
      %v6633 = vpop.xlane.xlu0 %6632
      %v6634 = vsel %vm2162, %v6626, 0.0
      %6635 = vadd.xlane.f32.xlu0 %v6634
      %v6636 = vpop.xlane.xlu0 %6635
      %v6637 = vmul.f32 %v6633, %v2166
      %v6638 = vmul.f32 %v6636, %v2166
      %v6639 = vsub.f32 %v6625, %v6637
      %v6640 = vsub.f32 %v6626, %v6638
      %v6641 = vmul.f32 %v6639, %v6639
      %v6642 = vmul.f32 %v6640, %v6640
      %v6643 = vsel %vm1103, %v6641, 0.0
      %6644 = vadd.xlane.f32.xlu0 %v6643
      %v6645 = vpop.xlane.xlu0 %6644
      %v6646 = vsel %vm2162, %v6642, 0.0
      %6647 = vadd.xlane.f32.xlu0 %v6646
      %v6648 = vpop.xlane.xlu0 %6647
      %v6649 = vmul.f32 %v6645, %v2166
      %v6650 = vmul.f32 %v6648, %v2166
      %v6651 = vadd.f32 %v6649, 1e-05
      %v6652 = vadd.f32 %v6650, 1e-05
      %v6653 = vrsqrt.pop %v6651
      %v6654 = vrsqrt.pop %v6652
      %v6655 = vmul.f32 %v6639, %v6653
      %v6656 = vmul.f32 %v6640, %v6654
      %v6658 = vlaneseq
      %v6659 = vshrl.u32 %v6658, 7
      %v6660 = vsub.s32 0, %v6659
      %v6661 = vrot.slane %v6628, %v6660
      %v6663 = vmul.f32 %v6655, %v6661
      %v6664 = vmul.f32 %v6656, %v6661
      %v6666 = vlaneseq
      %v6667 = vshrl.u32 %v6666, 7
      %v6668 = vsub.s32 0, %v6667
      %v6669 = vrot.slane %v6630, %v6668
      %v6671 = vadd.f32 %v6663, %v6669
      %v6672 = vadd.f32 %v6664, %v6669
      %s6673 = scalar_lea.vmem %s23, 2
      %v6674 = vld [vmem:[%s6673] sm:$0x1]
      %s6675 = scalar_lea.vmem %s23, 3
      %v6676 = vld [vmem:[%s6675] sm:$0x1]
      %v6677 = vsel %vm1103, %v6671, 0.0
      %6678 = vadd.xlane.f32.xlu0 %v6677
      %v6679 = vpop.xlane.xlu0 %6678
      %v6680 = vsel %vm2162, %v6672, 0.0
      %6681 = vadd.xlane.f32.xlu0 %v6680
      %v6682 = vpop.xlane.xlu0 %6681
      %v6683 = vmul.f32 %v6679, %v2166
      %v6684 = vmul.f32 %v6682, %v2166
      %v6685 = vsub.f32 %v6671, %v6683
      %v6686 = vsub.f32 %v6672, %v6684
      %v6687 = vmul.f32 %v6685, %v6685
      %v6688 = vmul.f32 %v6686, %v6686
      %v6689 = vsel %vm1103, %v6687, 0.0
      %6690 = vadd.xlane.f32.xlu0 %v6689
      %v6691 = vpop.xlane.xlu0 %6690
      %v6692 = vsel %vm2162, %v6688, 0.0
      %6693 = vadd.xlane.f32.xlu0 %v6692
      %v6694 = vpop.xlane.xlu0 %6693
      %v6695 = vmul.f32 %v6691, %v2166
      %v6696 = vmul.f32 %v6694, %v2166
      %v6697 = vadd.f32 %v6695, 1e-05
      %v6698 = vadd.f32 %v6696, 1e-05
      %v6699 = vrsqrt.pop %v6697
      %v6700 = vrsqrt.pop %v6698
      %v6701 = vmul.f32 %v6685, %v6699
      %v6702 = vmul.f32 %v6686, %v6700
      %v6704 = vlaneseq
      %v6705 = vshrl.u32 %v6704, 7
      %v6706 = vsub.s32 0, %v6705
      %v6707 = vrot.slane %v6674, %v6706
      %v6709 = vmul.f32 %v6701, %v6707
      %v6710 = vmul.f32 %v6702, %v6707
      %v6712 = vlaneseq
      %v6713 = vshrl.u32 %v6712, 7
      %v6714 = vsub.s32 0, %v6713
      %v6715 = vrot.slane %v6676, %v6714
      %v6717 = vadd.f32 %v6709, %v6715
      %v6718 = vadd.f32 %v6710, %v6715
      %v6719 = vld [vmem:[%s24] sm:$0xf]
      %v6720 = vld [vmem:[%s24 + $0x4] sm:$0xf]
      %v6721 = vld [vmem:[%s24 + $0x8] sm:$0xf]
      %v6722 = vld [vmem:[%s24 + $0xc] sm:$0xf]
      %v6723 = vpack.c.bf16 %v6718, %v6717
      %v6724 = vld [vmem:[%s25] sm:$0x1]
      %v6726 = vlaneseq
      %v6727 = vshrl.u32 %v6726, 7
      %v6728 = vsub.s32 0, %v6727
      %v6729 = vrot.slane %v6724, %v6728
      %v6735 = vunpack.c.l.b16 %v6719
      %v6736 = vunpack.c.l.b16 %v6720
      %v6737 = vunpack.c.l.b16 %v6721
      %v6738 = vunpack.c.l.b16 %v6722
      %v6739 = vpack.c.b16 %v6736, %v6735
      %v6740 = vpack.c.b16 %v6738, %v6737
      %v6744 = vsel %vm1103, %v6723, 0
      %6746 = vmatprep.subr.bf16.mxu0 0
      %6747 = vmatpush1.bf16.msra.mxu0 %v6739
      %6748 = vmatprep.subr.bf16.mxu0 0
      %6749 = vmatpush1.bf16.msra.mxu0 %v6740
      %6750 = vmatprep.subr.bf16.mxu0 0
      %6751 = vmatpush1.bf16.msra.mxu0 0
      %6752 = vmatprep.subr.bf16.mxu0 0
      %6753 = vmatpush1.bf16.msra.mxu0 0
      %6754 = vmatprep.subr.bf16.mxu0 0
      %6755 = vmatpush1.bf16.msra.mxu0 0
      %6756 = vmatprep.subr.bf16.mxu0 0
      %6757 = vmatpush1.bf16.msra.mxu0 0
      %6758 = vmatprep.subr.bf16.mxu0 0
      %6759 = vmatpush1.bf16.msra.mxu0 0
      %6760 = vmatprep.subr.bf16.mxu0 0
      %6761 = vmatpush1.bf16.msra.mxu0 0
      %6762 = vmatprep.subr.bf16.mxu0 0
      %6763 = vmatpush1.bf16.msra.mxu0 0
      %6764 = vmatprep.subr.bf16.mxu0 0
      %6765 = vmatpush1.bf16.msra.mxu0 0
      %6766 = vmatprep.subr.bf16.mxu0 0
      %6767 = vmatpush1.bf16.msra.mxu0 0
      %6768 = vmatprep.subr.bf16.mxu0 0
      %6769 = vmatpush1.bf16.msra.mxu0 0
      %6770 = vmatprep.subr.bf16.mxu0 0
      %6771 = vmatpush1.bf16.msra.mxu0 0
      %6772 = vmatprep.subr.bf16.mxu0 0
      %6773 = vmatpush1.bf16.msra.mxu0 0
      %6774 = vmatprep.subr.bf16.mxu0 0
      %6775 = vmatpush1.bf16.msra.mxu0 0
      %6776 = vmatprep.subr.bf16.mxu0 0
      %6777 = vmatpush1.bf16.msra.mxu0 0
      %6778 = vmatprep.mubr.bf16.mxu0 0
      %6779 = vmatmul.mubr.bf16.gmra.mrb[0].mxu0 %v6744
      %v6780 = vpop.f32.mrb[0].mxu0
      %v6781 = vadd.f32 %v6729, %v6780
      %v6782 = vpop.f32.mrb[0].mxu0
      %v6783 = vpop.f32.mrb[0].mxu0
      %v6784 = vadd.f32 %v6729, %v6783
      %v6785 = vpop.f32.mrb[0].mxu0
      %6786 = vdwg.mxu0
      %v6787 = vmax.f32 %v6781, 0.0
      %v6788 = vmax.f32 %v6784, 0.0
      %s6789 = scalar_lea.vmem %s24, 16
      %v6790 = vld [vmem:[%s6789] sm:$0xf]
      %v6791 = vld [vmem:[%s6789 + $0x4] sm:$0xf]
      %v6792 = vld [vmem:[%s6789 + $0x8] sm:$0xf]
      %v6793 = vld [vmem:[%s6789 + $0xc] sm:$0xf]
      %v6794 = vpack.c.bf16 %v6788, %v6787
      %s6795 = scalar_lea.vmem %s25, 1
      %v6796 = vld [vmem:[%s6795] sm:$0x1]
      %v6798 = vlaneseq
      %v6799 = vshrl.u32 %v6798, 7
      %v6800 = vsub.s32 0, %v6799
      %v6801 = vrot.slane %v6796, %v6800
      %v6807 = vunpack.c.l.b16 %v6790
      %v6808 = vunpack.c.l.b16 %v6791
      %v6809 = vunpack.c.l.b16 %v6792
      %v6810 = vunpack.c.l.b16 %v6793
      %v6811 = vpack.c.b16 %v6808, %v6807
      %v6812 = vpack.c.b16 %v6810, %v6809
      %v6816 = vsel %vm1103, %v6794, 0
      %6818 = vmatprep.subr.bf16.mxu0 0
      %6819 = vmatpush1.bf16.msra.mxu0 %v6811
      %6820 = vmatprep.subr.bf16.mxu0 0
      %6821 = vmatpush1.bf16.msra.mxu0 %v6812
      %6822 = vmatprep.subr.bf16.mxu0 0
      %6823 = vmatpush1.bf16.msra.mxu0 0
      %6824 = vmatprep.subr.bf16.mxu0 0
      %6825 = vmatpush1.bf16.msra.mxu0 0
      %6826 = vmatprep.subr.bf16.mxu0 0
      %6827 = vmatpush1.bf16.msra.mxu0 0
      %6828 = vmatprep.subr.bf16.mxu0 0
      %6829 = vmatpush1.bf16.msra.mxu0 0
      %6830 = vmatprep.subr.bf16.mxu0 0
      %6831 = vmatpush1.bf16.msra.mxu0 0
      %6832 = vmatprep.subr.bf16.mxu0 0
      %6833 = vmatpush1.bf16.msra.mxu0 0
      %6834 = vmatprep.subr.bf16.mxu0 0
      %6835 = vmatpush1.bf16.msra.mxu0 0
      %6836 = vmatprep.subr.bf16.mxu0 0
      %6837 = vmatpush1.bf16.msra.mxu0 0
      %6838 = vmatprep.subr.bf16.mxu0 0
      %6839 = vmatpush1.bf16.msra.mxu0 0
      %6840 = vmatprep.subr.bf16.mxu0 0
      %6841 = vmatpush1.bf16.msra.mxu0 0
      %6842 = vmatprep.subr.bf16.mxu0 0
      %6843 = vmatpush1.bf16.msra.mxu0 0
      %6844 = vmatprep.subr.bf16.mxu0 0
      %6845 = vmatpush1.bf16.msra.mxu0 0
      %6846 = vmatprep.subr.bf16.mxu0 0
      %6847 = vmatpush1.bf16.msra.mxu0 0
      %6848 = vmatprep.subr.bf16.mxu0 0
      %6849 = vmatpush1.bf16.msra.mxu0 0
      %6850 = vmatprep.mubr.bf16.mxu0 0
      %6851 = vmatmul.mubr.bf16.gmra.mrb[0].mxu0 %v6816
      %v6852 = vpop.f32.mrb[0].mxu0
      %v6853 = vadd.f32 %v6801, %v6852
      %v6854 = vpop.f32.mrb[0].mxu0
      %v6855 = vpop.f32.mrb[0].mxu0
      %v6856 = vadd.f32 %v6801, %v6855
      %v6857 = vpop.f32.mrb[0].mxu0
      %6858 = vdwg.mxu0
      %v6859 = vmax.f32 %v6853, 0.0
      %v6860 = vmax.f32 %v6856, 0.0
      %v6861 = vld [vmem:[%s26] sm:$0xf]
      %v6862 = vld [vmem:[%s26 + $0x4] sm:$0xf]
      %v6863 = vld [vmem:[%s26 + $0x8] sm:$0xf]
      %v6864 = vld [vmem:[%s26 + $0xc] sm:$0xf]
      %v6865 = vpack.c.bf16 %v6860, %v6859
      %v6870 = vunpack.c.l.b16 %v6861
      %v6871 = vunpack.c.l.b16 %v6862
      %v6872 = vunpack.c.l.b16 %v6863
      %v6873 = vunpack.c.l.b16 %v6864
      %v6874 = vpack.c.b16 %v6871, %v6870
      %v6875 = vpack.c.b16 %v6873, %v6872
      %v6879 = vsel %vm1103, %v6865, 0
      %6881 = vmatprep.subr.bf16.mxu0 0
      %6882 = vmatpush1.bf16.msra.mxu0 %v6874
      %6883 = vmatprep.subr.bf16.mxu0 0
      %6884 = vmatpush1.bf16.msra.mxu0 %v6875
      %6885 = vmatprep.subr.bf16.mxu0 0
      %6886 = vmatpush1.bf16.msra.mxu0 0
      %6887 = vmatprep.subr.bf16.mxu0 0
      %6888 = vmatpush1.bf16.msra.mxu0 0
      %6889 = vmatprep.subr.bf16.mxu0 0
      %6890 = vmatpush1.bf16.msra.mxu0 0
      %6891 = vmatprep.subr.bf16.mxu0 0
      %6892 = vmatpush1.bf16.msra.mxu0 0
      %6893 = vmatprep.subr.bf16.mxu0 0
      %6894 = vmatpush1.bf16.msra.mxu0 0
      %6895 = vmatprep.subr.bf16.mxu0 0
      %6896 = vmatpush1.bf16.msra.mxu0 0
      %6897 = vmatprep.subr.bf16.mxu0 0
      %6898 = vmatpush1.bf16.msra.mxu0 0
      %6899 = vmatprep.subr.bf16.mxu0 0
      %6900 = vmatpush1.bf16.msra.mxu0 0
      %6901 = vmatprep.subr.bf16.mxu0 0
      %6902 = vmatpush1.bf16.msra.mxu0 0
      %6903 = vmatprep.subr.bf16.mxu0 0
      %6904 = vmatpush1.bf16.msra.mxu0 0
      %6905 = vmatprep.subr.bf16.mxu0 0
      %6906 = vmatpush1.bf16.msra.mxu0 0
      %6907 = vmatprep.subr.bf16.mxu0 0
      %6908 = vmatpush1.bf16.msra.mxu0 0
      %6909 = vmatprep.subr.bf16.mxu0 0
      %6910 = vmatpush1.bf16.msra.mxu0 0
      %6911 = vmatprep.subr.bf16.mxu0 0
      %6912 = vmatpush1.bf16.msra.mxu0 0
      %6913 = vmatprep.mubr.bf16.mxu0 0
      %6914 = vmatmul.mubr.bf16.gmra.mrb[0].mxu0 %v6879
      %v6915 = vpop.f32.mrb[0].mxu0
      %v6916 = vadd.f32 0.0, %v6915
      %v6917 = vpop.f32.mrb[0].mxu0
      %v6918 = vpop.f32.mrb[0].mxu0
      %v6919 = vadd.f32 0.0, %v6918
      %v6920 = vpop.f32.mrb[0].mxu0
      %6921 = vdwg.mxu0
      %v6922 = vadd.f32 %v893, %v6916
      %v6923 = vadd.f32 %v894, %v6919
      %v6924 = vld [vmem:[%s27] sm:$0x1]
      %v6926 = vlaneseq
      %v6927 = vshrl.u32 %v6926, 7
      %v6928 = vsub.s32 0, %v6927
      %v6929 = vrot.slane %v6924, %v6928
      %v6931 = vadd.f32 %v6922, %v6929
      %v6932 = vadd.f32 %v6923, %v6929
      %s6933 = smul.u32 %s44, 16
      %s6934 = scalar_lea.vmem %s877, %s6933
      %6935 = vst.msk [vmem:[%s6934] sm:$0xff] %vm1427, %v6931
      %vm6936 = vcmask 25600
      %6937 = vst.msk [vmem:[%s6934 + $0x8] sm:$0x3] %vm6936, %v6932
      %6938 = vst.msk [vmem:[#allocation3] sm:$0xff] %vm1427, %v6931
      %6939 = vst.msk [vmem:[#allocation3 + $0x8] sm:$0x3] %vm6936, %v6932
      %6940 = vst.msk [vmem:[#allocation2] sm:$0xff] %vm1103, %v6717
      %6941 = vst.msk [vmem:[#allocation2 + $0x8] sm:$0x3] %vm2162, %v6718
      %p6942 = scmp.lt.s32.totalorder %s43, 0
      %s6943 = scalar_select %p6942, %s43, 0
      %s6944 = smul.addr %s6943, 8
      %s6945 = smul.addr %s6944, 8
      %s6946 = scalar_lea.vmem %s28, %s6945
      // Predicated region
      $region137: #{graph_rnn_decoder_forward.1} parent=131 // pred_check
        %p6947 = pneg %p667
      $region138: #{graph_rnn_decoder_forward.1} parent=131 // pred_check_branch
        %6949 = sbr.rel (%p6947) target = $region140
      $region139: #{graph_rnn_decoder_forward.1} parent=131 // pred_region
        _
      $region140: #{graph_rnn_decoder_forward.1} parent=131 // pred_fallthru
        _
      // Predicated region
      $region141: #{graph_rnn_decoder_forward.1} parent=131 // pred_check
        %p6950 = pneg %p667
      $region142: #{graph_rnn_decoder_forward.1} parent=131 // pred_check_branch
        %6952 = sbr.rel (%p6950) target = $region144
      $region143: #{graph_rnn_decoder_forward.1} parent=131 // pred_region
        %p6953 = scmp.lt.s32.totalorder %s43, 0
        %s6954 = scalar_select %p6953, %s43, 0
        %s6955 = smul.addr %s6954, 8
        %s6956 = smul.addr %s6955, 8
        %s6957 = scalar_lea.vmem %s28, %s6956
      $region144: #{graph_rnn_decoder_forward.1} parent=131 // pred_fallthru
        _
    $region132: #{graph_rnn_decoder_forward.1} parent=5 // pred_fallthru
      _
    %p6958 = scmp.le.s32.totalorder 2, %s34
    // Predicated region
    $region145: #{graph_rnn_decoder_forward.1} parent=5 // pred_check
      %p6959 = pneg %p6958
    $region146: #{graph_rnn_decoder_forward.1} parent=5 // pred_check_branch
      %6961 = sbr.rel (%p6959) target = $region148
    $region147: #{graph_rnn_decoder_forward.1} parent=5 // pred_region
      %s6962 = ssub.s32 %s34, 2
    $region148: #{graph_rnn_decoder_forward.1} parent=5 // pred_fallthru
      _
  $region6: #{graph_rnn_decoder_forward.1} parent=0 // loop_footer
    %s38 = sadd.s32 1, %s34
  $region7: #{graph_rnn_decoder_forward.1} parent=0 // loop_footer_branch
    %33 = sbr.rel target = $region3
  $region8: #{graph_rnn_decoder_forward.1} parent=0 // loop_exit
    _

</llo_original>
